<compile_context>
chip_gen: v7x
topology: tpu7x:2x2x1
jax: 0.10.0
libtpu: 0.0.40
codegen_flags: <defaults>
</compile_context>

<pallas_src>
import functools

import jax
import jax.numpy as jnp
from jax.experimental import pallas as pl
from jax.experimental.pallas import tpu as pltpu


# ----------------------------------------------------------------------------
# Pallas kernel: fused (M, K) @ (K, N) + bias + activation
# ----------------------------------------------------------------------------
def _matmul_bias_act_kernel(x_ref, w_ref, b_ref, o_ref, *, activation):
    y = jnp.dot(x_ref[...], w_ref[...], preferred_element_type=jnp.float32)
    y = y + b_ref[...]
    if activation == "relu":
        y = jnp.maximum(y, 0.0)
    elif activation == "sigmoid":
        y = 1.0 / (1.0 + jnp.exp(-y))
    o_ref[...] = y.astype(o_ref.dtype)


def _round_up(x, m):
    return ((x + m - 1) // m) * m


def _fused_matmul_bias_act(cols, w_mat, bias, activation, tile_m=512):
    """cols: (M, K) f32, w_mat: (K, N), bias: (1, N) -> act(cols @ w_mat + bias)."""
    M, Kd = cols.shape
    N = w_mat.shape[1]

    # Lane-dense output: pad N up to a multiple of 128 (unmasked vst).
    n_pad = _round_up(N, 128)
    if n_pad != N:
        w_mat = jnp.pad(w_mat, ((0, 0), (0, n_pad - N)))
        bias = jnp.pad(bias, ((0, 0), (0, n_pad - N)))

    # Large M tiles to amortize per-grid-step overhead; handle any M by padding.
    tm = min(tile_m, _round_up(M, 8))
    m_pad = _round_up(M, tm)
    if m_pad != M:
        cols = jnp.pad(cols, ((0, m_pad - M), (0, 0)))

    grid = (m_pad // tm,)
    kernel = functools.partial(_matmul_bias_act_kernel, activation=activation)

    out = pl.pallas_call(
        kernel,
        out_shape=jax.ShapeDtypeStruct((m_pad, n_pad), cols.dtype),
        grid_spec=pltpu.PrefetchScalarGridSpec(
            num_scalar_prefetch=0,
            grid=grid,
            in_specs=[
                pl.BlockSpec((tm, Kd), lambda i: (i, 0)),      # streaming rows
                pl.BlockSpec((Kd, n_pad), lambda i: (0, 0)),   # weights resident
                pl.BlockSpec((1, n_pad), lambda i: (0, 0)),    # bias resident
            ],
            out_specs=pl.BlockSpec((tm, n_pad), lambda i: (i, 0)),
        ),
        compiler_params=pltpu.CompilerParams(
            dimension_semantics=("parallel",)),
        cost_estimate=pl.CostEstimate(
            flops=2 * m_pad * Kd * n_pad,
            transcendentals=m_pad * n_pad if activation == "sigmoid" else 0,
            bytes_accessed=4 * (m_pad * Kd + Kd * n_pad + m_pad * n_pad)),
    )(cols, w_mat, bias)
    return out[:M, :N]


# ----------------------------------------------------------------------------
# ConvTranspose2d(k=4, s=2, p=1) as (3x3 conv over padded input) -> 4 phases
# ----------------------------------------------------------------------------
# For output row oy = 2m + r, the contributing kernel row for padded-input row
# (m + u) is _KY[r][u] (-1 = no contribution).  Same table for columns.
_KY = ((3, 1, -1), (-1, 2, 0))


def prepare_deconv_params(w_pt, b_pt):
    """PyTorch ConvTranspose2d weights (Cin, Cout, 4, 4), bias (Cout,) ->
    matmul weights (9*Cin, 4*Cout) and bias (1, 4*Cout)."""
    cin, cout = w_pt.shape[0], w_pt.shape[1]
    k = jnp.zeros((3, 3, cin, 2, 2, cout), dtype=w_pt.dtype)
    for r in range(2):
        for s in range(2):
            for u in range(3):
                for v in range(3):
                    ky, kx = _KY[r][u], _KY[s][v]
                    if ky >= 0 and kx >= 0:
                        k = k.at[u, v, :, r, s, :].set(w_pt[:, :, ky, kx])
    w_mat = k.reshape(9 * cin, 4 * cout)
    bias4 = jnp.tile(b_pt, 4).reshape(1, 4 * cout)
    return w_mat, bias4


def deconv4x4_s2_layer(x_nhwc, w_mat, bias4, activation, tile_m=512):
    """One ConvTranspose2d(k=4, s=2, p=1) + activation.  NHWC in/out."""
    B, H, W, cin = x_nhwc.shape
    cout = bias4.shape[1] // 4

    # Layout plumbing (XLA): pad + 3x3 im2col -> (B*H*W, 9*Cin)
    xp = jnp.pad(x_nhwc, ((0, 0), (1, 1), (1, 1), (0, 0)))
    cols = jnp.stack(
        [xp[:, u:u + H, v:v + W, :] for u in range(3) for v in range(3)],
        axis=3)
    cols = cols.reshape(B * H * W, 9 * cin)

    # Fused matmul + bias + activation on the MXU (all 4 output phases per row).
    y = _fused_matmul_bias_act(cols, w_mat, bias4, activation, tile_m=tile_m)

    # Depth-to-space: (B, H, W, r, s, Cout) -> (B, 2H, 2W, Cout)
    y = y.reshape(B, H, W, 2, 2, cout)
    y = y.transpose(0, 1, 3, 2, 4, 5).reshape(B, 2 * H, 2 * W, cout)
    return y


def image_decoder_forward(x_nchw, params, tile_m=512):
    """params: list of (w_mat, bias4) from prepare_deconv_params, in layer order."""
    x = jnp.transpose(x_nchw, (0, 2, 3, 1)).astype(jnp.float32)  # NHWC
    n_layers = len(params)
    for i, (w_mat, bias4) in enumerate(params):
        act = "sigmoid" if i == n_layers - 1 else "relu"
        x = deconv4x4_s2_layer(x, w_mat, bias4, act, tile_m=tile_m)
    return jnp.transpose(x, (0, 3, 1, 2))  # back to NCHW


# ----------------------------------------------------------------------------
# Pure-JAX reference (lax.conv_general_dilated) and deterministic init
# ----------------------------------------------------------------------------
def _conv_transpose_ref(x_nhwc, w_pt, b_pt):
    rhs = jnp.transpose(jnp.flip(w_pt, axis=(2, 3)), (2, 3, 0, 1))  # HWIO
    y = jax.lax.conv_general_dilated(
        x_nhwc, rhs, window_strides=(1, 1), padding=((2, 2), (2, 2)),
        lhs_dilation=(2, 2), rhs_dilation=(1, 1),
        dimension_numbers=("NHWC", "HWIO", "NHWC"))
    return y + b_pt.reshape(1, 1, 1, -1)


def _decoder_ref(x_nchw, pt_params):
    x = jnp.transpose(x_nchw, (0, 2, 3, 1)).astype(jnp.float32)
    n = len(pt_params)
    for i, (w, b) in enumerate(pt_params):
        x = _conv_transpose_ref(x, w, b)
        x = jax.nn.sigmoid(x) if i == n - 1 else jnp.maximum(x, 0.0)
    return jnp.transpose(x, (0, 3, 1, 2))


def _init_pt_params(key, channels=(64, 128, 64, 32, 3), k=4):
    """Deterministic init in PyTorch ConvTranspose2d layout (Cin, Cout, k, k)."""
    params = []
    for i in range(len(channels) - 1):
        cin, cout = channels[i], channels[i + 1]
        key, kw, kb = jax.random.split(key, 3)
        bound = 1.0 / jnp.sqrt(cin * k * k)
        w = jax.random.uniform(kw, (cin, cout, k, k), jnp.float32, -bound, bound)
        b = jax.random.uniform(kb, (cout,), jnp.float32, -bound, bound)
        params.append((w, b))
    return params


if __name__ == "__main__":
    key = jax.random.PRNGKey(0)
    kx, kp = jax.random.split(key)

    B, latent_dim, H0, W0 = 2, 64, 4, 4
    x = jax.random.normal(kx, (B, latent_dim, H0, W0), jnp.float32)

    pt_params = _init_pt_params(kp)
    kernel_params = [prepare_deconv_params(w, b) for (w, b) in pt_params]

    fwd = jax.jit(image_decoder_forward)
    out = fwd(x, kernel_params)
    out = jax.block_until_ready(out)

    ref = _decoder_ref(x, pt_params)
    assert out.shape == (B, 3, 16 * H0, 16 * W0), out.shape
    err = float(jnp.max(jnp.abs(out - ref)))
    assert jnp.allclose(out, ref, atol=2e-3, rtol=2e-3), f"max abs err {err}"

    print("KERNEL_OK")
</pallas_src>

<mosaic_0001>
module attributes {stable_mosaic.version = 11 : i64} {
  func.func @_matmul_bias_act_kernel(%arg0: i32, %arg1: memref<32x576xf32, #tpu.memory_space<vmem>>, %arg2: memref<576x512xf32, #tpu.memory_space<vmem>>, %arg3: memref<1x512xf32, #tpu.memory_space<vmem>>, %arg4: memref<32x512xf32, #tpu.memory_space<vmem>>) attributes {dimension_semantics = [#tpu.dimension_semantics<parallel>], iteration_bounds = array<i64: 1>, scalar_prefetch = 0 : i64, scratch_operands = 0 : i64, tpu.core_type = #tpu.core_type<tc>, window_params = [{transform_indices = @transform_0, window_bounds = array<i64: 32, 576>}, {pipeline_mode = #tpu.pipeline_mode<synchronous>, transform_indices = @transform_1, window_bounds = array<i64: 576, 512>}, {pipeline_mode = #tpu.pipeline_mode<synchronous>, transform_indices = @transform_2, window_bounds = array<i64: 1, 512>}, {transform_indices = @transform_3, window_bounds = array<i64: 32, 512>}]} {
    %c0 = arith.constant 0 : index
    %c0_0 = arith.constant 0 : index
    %0 = vector.load %arg1[%c0, %c0_0] : memref<32x576xf32, #tpu.memory_space<vmem>>, vector<32x576xf32>
    %c0_1 = arith.constant 0 : index
    %c0_2 = arith.constant 0 : index
    %1 = vector.load %arg2[%c0_1, %c0_2] : memref<576x512xf32, #tpu.memory_space<vmem>>, vector<576x512xf32>
    %cst = arith.constant dense<0.000000e+00> : vector<32x512xf32>
    %2 = tpu.matmul %0, %1, %cst {dimension_numbers = #tpu.dot_dimension_numbers<[1], [0], [0], [1], [0, 0, 1, 1], [], []>} : vector<32x576xf32>, vector<576x512xf32>, vector<32x512xf32> -> vector<32x512xf32>
    %c0_3 = arith.constant 0 : index
    %c0_4 = arith.constant 0 : index
    %3 = vector.load %arg3[%c0_3, %c0_4] : memref<1x512xf32, #tpu.memory_space<vmem>>, vector<1x512xf32>
    %4 = vector.broadcast %3 : vector<1x512xf32> to vector<32x512xf32>
    %5 = arith.addf %2, %4 : vector<32x512xf32>
    %cst_5 = arith.constant 0.000000e+00 : f32
    %6 = vector.broadcast %cst_5 : f32 to vector<32x512xf32>
    %7 = arith.maximumf %5, %6 : vector<32x512xf32>
    %c0_6 = arith.constant 0 : index
    %c0_7 = arith.constant 0 : index
    %8 = vector.load %arg4[%c0_6, %c0_7] : memref<32x512xf32, #tpu.memory_space<vmem>>, vector<32x512xf32>
    tpu.vector_store %arg4[%c0_6, %c0_7], %7 {strides = array<i32>} : memref<32x512xf32, #tpu.memory_space<vmem>>, vector<32x512xf32>,
    return
  }
  func.func @transform_0(%arg0: i32) -> (i32, i32) {
    %c0_i32 = arith.constant 0 : i32
    %c0_i32_0 = arith.constant 0 : i32
    return %arg0, %c0_i32 : i32, i32
  }
  func.func @transform_1(%arg0: i32) -> (i32, i32) {
    %c0_i32 = arith.constant 0 : i32
    %c0_i32_0 = arith.constant 0 : i32
    %c0_i32_1 = arith.constant 0 : i32
    return %c0_i32, %c0_i32_0 : i32, i32
  }
  func.func @transform_2(%arg0: i32) -> (i32, i32) {
    %c0_i32 = arith.constant 0 : i32
    %c0_i32_0 = arith.constant 0 : i32
    %c0_i32_1 = arith.constant 0 : i32
    return %c0_i32, %c0_i32_0 : i32, i32
  }
  func.func @transform_3(%arg0: i32) -> (i32, i32) {
    %c0_i32 = arith.constant 0 : i32
    %c0_i32_0 = arith.constant 0 : i32
    return %arg0, %c0_i32 : i32, i32
  }
}

module attributes {stable_mosaic.version = 11 : i64} {
  func.func @_matmul_bias_act_kernel(%arg0: i32, %arg1: memref<128x1152xf32, #tpu.memory_space<vmem>>, %arg2: memref<1152x256xf32, #tpu.memory_space<vmem>>, %arg3: memref<1x256xf32, #tpu.memory_space<vmem>>, %arg4: memref<128x256xf32, #tpu.memory_space<vmem>>) attributes {dimension_semantics = [#tpu.dimension_semantics<parallel>], iteration_bounds = array<i64: 1>, scalar_prefetch = 0 : i64, scratch_operands = 0 : i64, tpu.core_type = #tpu.core_type<tc>, window_params = [{transform_indices = @transform_0, window_bounds = array<i64: 128, 1152>}, {pipeline_mode = #tpu.pipeline_mode<synchronous>, transform_indices = @transform_1, window_bounds = array<i64: 1152, 256>}, {pipeline_mode = #tpu.pipeline_mode<synchronous>, transform_indices = @transform_2, window_bounds = array<i64: 1, 256>}, {transform_indices = @transform_3, window_bounds = array<i64: 128, 256>}]} {
    %c0 = arith.constant 0 : index
    %c0_0 = arith.constant 0 : index
    %0 = vector.load %arg1[%c0, %c0_0] : memref<128x1152xf32, #tpu.memory_space<vmem>>, vector<128x1152xf32>
    %c0_1 = arith.constant 0 : index
    %c0_2 = arith.constant 0 : index
    %1 = vector.load %arg2[%c0_1, %c0_2] : memref<1152x256xf32, #tpu.memory_space<vmem>>, vector<1152x256xf32>
    %cst = arith.constant dense<0.000000e+00> : vector<128x256xf32>
    %2 = tpu.matmul %0, %1, %cst {dimension_numbers = #tpu.dot_dimension_numbers<[1], [0], [0], [1], [0, 0, 1, 1], [], []>} : vector<128x1152xf32>, vector<1152x256xf32>, vector<128x256xf32> -> vector<128x256xf32>
    %c0_3 = arith.constant 0 : index
    %c0_4 = arith.constant 0 : index
    %3 = vector.load %arg3[%c0_3, %c0_4] : memref<1x256xf32, #tpu.memory_space<vmem>>, vector<1x256xf32>
    %4 = vector.broadcast %3 : vector<1x256xf32> to vector<128x256xf32>
    %5 = arith.addf %2, %4 : vector<128x256xf32>
    %cst_5 = arith.constant 0.000000e+00 : f32
    %6 = vector.broadcast %cst_5 : f32 to vector<128x256xf32>
    %7 = arith.maximumf %5, %6 : vector<128x256xf32>
    %c0_6 = arith.constant 0 : index
    %c0_7 = arith.constant 0 : index
    %8 = vector.load %arg4[%c0_6, %c0_7] : memref<128x256xf32, #tpu.memory_space<vmem>>, vector<128x256xf32>
    tpu.vector_store %arg4[%c0_6, %c0_7], %7 {strides = array<i32>} : memref<128x256xf32, #tpu.memory_space<vmem>>, vector<128x256xf32>,
    return
  }
  func.func @transform_0(%arg0: i32) -> (i32, i32) {
    %c0_i32 = arith.constant 0 : i32
    %c0_i32_0 = arith.constant 0 : i32
    return %arg0, %c0_i32 : i32, i32
  }
  func.func @transform_1(%arg0: i32) -> (i32, i32) {
    %c0_i32 = arith.constant 0 : i32
    %c0_i32_0 = arith.constant 0 : i32
    %c0_i32_1 = arith.constant 0 : i32
    return %c0_i32, %c0_i32_0 : i32, i32
  }
  func.func @transform_2(%arg0: i32) -> (i32, i32) {
    %c0_i32 = arith.constant 0 : i32
    %c0_i32_0 = arith.constant 0 : i32
    %c0_i32_1 = arith.constant 0 : i32
    return %c0_i32, %c0_i32_0 : i32, i32
  }
  func.func @transform_3(%arg0: i32) -> (i32, i32) {
    %c0_i32 = arith.constant 0 : i32
    %c0_i32_0 = arith.constant 0 : i32
    return %arg0, %c0_i32 : i32, i32
  }
}

module attributes {stable_mosaic.version = 11 : i64} {
  func.func @_matmul_bias_act_kernel(%arg0: i32, %arg1: memref<512x576xf32, #tpu.memory_space<vmem>>, %arg2: memref<576x128xf32, #tpu.memory_space<vmem>>, %arg3: memref<1x128xf32, #tpu.memory_space<vmem>>, %arg4: memref<512x128xf32, #tpu.memory_space<vmem>>) attributes {dimension_semantics = [#tpu.dimension_semantics<parallel>], iteration_bounds = array<i64: 1>, scalar_prefetch = 0 : i64, scratch_operands = 0 : i64, tpu.core_type = #tpu.core_type<tc>, window_params = [{transform_indices = @transform_0, window_bounds = array<i64: 512, 576>}, {pipeline_mode = #tpu.pipeline_mode<synchronous>, transform_indices = @transform_1, window_bounds = array<i64: 576, 128>}, {pipeline_mode = #tpu.pipeline_mode<synchronous>, transform_indices = @transform_2, window_bounds = array<i64: 1, 128>}, {transform_indices = @transform_3, window_bounds = array<i64: 512, 128>}]} {
    %c0 = arith.constant 0 : index
    %c0_0 = arith.constant 0 : index
    %0 = vector.load %arg1[%c0, %c0_0] : memref<512x576xf32, #tpu.memory_space<vmem>>, vector<512x576xf32>
    %c0_1 = arith.constant 0 : index
    %c0_2 = arith.constant 0 : index
    %1 = vector.load %arg2[%c0_1, %c0_2] : memref<576x128xf32, #tpu.memory_space<vmem>>, vector<576x128xf32>
    %cst = arith.constant dense<0.000000e+00> : vector<512x128xf32>
    %2 = tpu.matmul %0, %1, %cst {dimension_numbers = #tpu.dot_dimension_numbers<[1], [0], [0], [1], [0, 0, 1, 1], [], []>} : vector<512x576xf32>, vector<576x128xf32>, vector<512x128xf32> -> vector<512x128xf32>
    %c0_3 = arith.constant 0 : index
    %c0_4 = arith.constant 0 : index
    %3 = vector.load %arg3[%c0_3, %c0_4] : memref<1x128xf32, #tpu.memory_space<vmem>>, vector<1x128xf32>
    %4 = vector.broadcast %3 : vector<1x128xf32> to vector<512x128xf32>
    %5 = arith.addf %2, %4 : vector<512x128xf32>
    %cst_5 = arith.constant 0.000000e+00 : f32
    %6 = vector.broadcast %cst_5 : f32 to vector<512x128xf32>
    %7 = arith.maximumf %5, %6 : vector<512x128xf32>
    %c0_6 = arith.constant 0 : index
    %c0_7 = arith.constant 0 : index
    %8 = vector.load %arg4[%c0_6, %c0_7] : memref<512x128xf32, #tpu.memory_space<vmem>>, vector<512x128xf32>
    tpu.vector_store %arg4[%c0_6, %c0_7], %7 {strides = array<i32>} : memref<512x128xf32, #tpu.memory_space<vmem>>, vector<512x128xf32>,
    return
  }
  func.func @transform_0(%arg0: i32) -> (i32, i32) {
    %c0_i32 = arith.constant 0 : i32
    %c0_i32_0 = arith.constant 0 : i32
    return %arg0, %c0_i32 : i32, i32
  }
  func.func @transform_1(%arg0: i32) -> (i32, i32) {
    %c0_i32 = arith.constant 0 : i32
    %c0_i32_0 = arith.constant 0 : i32
    %c0_i32_1 = arith.constant 0 : i32
    return %c0_i32, %c0_i32_0 : i32, i32
  }
  func.func @transform_2(%arg0: i32) -> (i32, i32) {
    %c0_i32 = arith.constant 0 : i32
    %c0_i32_0 = arith.constant 0 : i32
    %c0_i32_1 = arith.constant 0 : i32
    return %c0_i32, %c0_i32_0 : i32, i32
  }
  func.func @transform_3(%arg0: i32) -> (i32, i32) {
    %c0_i32 = arith.constant 0 : i32
    %c0_i32_0 = arith.constant 0 : i32
    return %arg0, %c0_i32 : i32, i32
  }
}

module attributes {stable_mosaic.version = 11 : i64} {
  func.func @_matmul_bias_act_kernel(%arg0: i32, %arg1: memref<512x288xf32, #tpu.memory_space<vmem>>, %arg2: memref<288x128xf32, #tpu.memory_space<vmem>>, %arg3: memref<1x128xf32, #tpu.memory_space<vmem>>, %arg4: memref<512x128xf32, #tpu.memory_space<vmem>>) attributes {dimension_semantics = [#tpu.dimension_semantics<parallel>], iteration_bounds = array<i64: 4>, scalar_prefetch = 0 : i64, scratch_operands = 0 : i64, tpu.core_type = #tpu.core_type<tc>, window_params = [{transform_indices = @transform_0, window_bounds = array<i64: 512, 288>}, {pipeline_mode = #tpu.pipeline_mode<synchronous>, transform_indices = @transform_1, window_bounds = array<i64: 288, 128>}, {pipeline_mode = #tpu.pipeline_mode<synchronous>, transform_indices = @transform_2, window_bounds = array<i64: 1, 128>}, {transform_indices = @transform_3, window_bounds = array<i64: 512, 128>}]} {
    %c0 = arith.constant 0 : index
    %c0_0 = arith.constant 0 : index
    %0 = vector.load %arg1[%c0, %c0_0] : memref<512x288xf32, #tpu.memory_space<vmem>>, vector<512x288xf32>
    %c0_1 = arith.constant 0 : index
    %c0_2 = arith.constant 0 : index
    %1 = vector.load %arg2[%c0_1, %c0_2] : memref<288x128xf32, #tpu.memory_space<vmem>>, vector<288x128xf32>
    %cst = arith.constant dense<0.000000e+00> : vector<512x128xf32>
    %2 = tpu.matmul %0, %1, %cst {dimension_numbers = #tpu.dot_dimension_numbers<[1], [0], [0], [1], [0, 0, 1, 1], [], []>} : vector<512x288xf32>, vector<288x128xf32>, vector<512x128xf32> -> vector<512x128xf32>
    %c0_3 = arith.constant 0 : index
    %c0_4 = arith.constant 0 : index
    %3 = vector.load %arg3[%c0_3, %c0_4] : memref<1x128xf32, #tpu.memory_space<vmem>>, vector<1x128xf32>
    %4 = vector.broadcast %3 : vector<1x128xf32> to vector<512x128xf32>
    %5 = arith.addf %2, %4 : vector<512x128xf32>
    %cst_5 = arith.constant 0.000000e+00 : f32
    %6 = vector.broadcast %cst_5 : f32 to vector<512x128xf32>
    %7 = arith.subf %6, %5 : vector<512x128xf32>
    %8 = math.exp %7 : vector<512x128xf32>
    %cst_6 = arith.constant 1.000000e+00 : f32
    %9 = vector.broadcast %cst_6 : f32 to vector<512x128xf32>
    %10 = arith.addf %9, %8 : vector<512x128xf32>
    %cst_7 = arith.constant 1.000000e+00 : f32
    %11 = vector.broadcast %cst_7 : f32 to vector<512x128xf32>
    %12 = arith.divf %11, %10 : vector<512x128xf32>
    %c0_8 = arith.constant 0 : index
    %c0_9 = arith.constant 0 : index
    %13 = vector.load %arg4[%c0_8, %c0_9] : memref<512x128xf32, #tpu.memory_space<vmem>>, vector<512x128xf32>
    tpu.vector_store %arg4[%c0_8, %c0_9], %12 {strides = array<i32>} : memref<512x128xf32, #tpu.memory_space<vmem>>, vector<512x128xf32>,
    return
  }
  func.func @transform_0(%arg0: i32) -> (i32, i32) {
    %c0_i32 = arith.constant 0 : i32
    %c0_i32_0 = arith.constant 0 : i32
    return %arg0, %c0_i32 : i32, i32
  }
  func.func @transform_1(%arg0: i32) -> (i32, i32) {
    %c0_i32 = arith.constant 0 : i32
    %c0_i32_0 = arith.constant 0 : i32
    %c0_i32_1 = arith.constant 0 : i32
    return %c0_i32, %c0_i32_0 : i32, i32
  }
  func.func @transform_2(%arg0: i32) -> (i32, i32) {
    %c0_i32 = arith.constant 0 : i32
    %c0_i32_0 = arith.constant 0 : i32
    %c0_i32_1 = arith.constant 0 : i32
    return %c0_i32, %c0_i32_0 : i32, i32
  }
  func.func @transform_3(%arg0: i32) -> (i32, i32) {
    %c0_i32 = arith.constant 0 : i32
    %c0_i32_0 = arith.constant 0 : i32
    return %arg0, %c0_i32 : i32, i32
  }
}

</mosaic_0001>

<llo_original>
// kernel: image_decoder_forward.4
$region0: #{image_decoder_forward.4}
  #allocation0 [shape = 'u32[]', space=smem, size = 0x4, offset = 0x4, fixed_abs, tag = 'smem constant byte address 0x4 - core index']
  #allocation1 [shape = 'u32[144,128]{1,0:T(1,128)}', space=vmem, size = 0x12000, scoped, tag = 'internal scratch']
  %s0 = inlined_call_operand.vmem [shape: f32[32,576], index: 0, kind: input, shape index: {}]
  %s1 = inlined_call_operand.hbm [shape: f32[576,512], index: 1, kind: input, shape index: {}]
  %s2 = inlined_call_operand.hbm [shape: f32[1,512], index: 2, kind: input, shape index: {}]
  %s3 = inlined_call_operand.vmem [shape: f32[32,512], index: 3, kind: output, shape index: {}]
  %s4 = sld [smem:[#allocation0]]
  $region30: #{image_decoder_forward.4} parent=0
    _
  %s6 = ssub.s32 1, %s4
  %s7 = scalar_select 0, %s6, %s4
  $region1: #{image_decoder_forward.4} parent=0
    #allocation2 [shape = 'u8[1179648]{0}', space=vmem, size = 0x120000, scoped, tag = 'input window, operand 1, single buffered']
    #allocation3 [shape = 's32[1]{0}', space=sflag, size = 0x4, scoped, tag = 'scoped memory for image_decoder_forward.4']
    #allocation4 [shape = 'u8[2048]{0}', space=vmem, size = 0x800, scoped, tag = 'input window, operand 2, single buffered']
    #allocation5 [shape = 's32[1]{0}', space=sflag, size = 0x4, scoped, tag = 'scoped memory for image_decoder_forward.4']
    %8 = vsyncpa [#allocation3], 0
    %9 = vsyncpa [#allocation5], 0
    // Predicated region
    $region2: #{image_decoder_forward.4} parent=1 // pred_check
      _
    $region3: #{image_decoder_forward.4} parent=1 // pred_check_branch
      %11 = sbr.rel (0) target = $region5
    $region4: #{image_decoder_forward.4} parent=1 // pred_region
      _
    $region5: #{image_decoder_forward.4} parent=1 // pred_fallthru
      _
    // Predicated region
    $region6: #{image_decoder_forward.4} parent=1 // pred_check
      _
    $region7: #{image_decoder_forward.4} parent=1 // pred_check_branch
      %13 = sbr.rel (0) target = $region9
    $region8: #{image_decoder_forward.4} parent=1 // pred_region
      %s15 = ssub.s32 36864, 36864
      %16 = vsyncadd [#allocation3], %s15
      %s17 = sshll.u32 [#allocation2], 4
      %s18 = int_to_ptr.vmem [resolvable:$true] %s17
      %23 = dma.hbm_to_vmem [thread:$0]  %s1, 36864, %s18, [#allocation3], 512, 512, 32
    $region9: #{image_decoder_forward.4} parent=1 // pred_fallthru
      _
    // Predicated region
    $region10: #{image_decoder_forward.4} parent=1 // pred_check
      _
    $region11: #{image_decoder_forward.4} parent=1 // pred_check_branch
      %25 = sbr.rel (0) target = $region13
    $region12: #{image_decoder_forward.4} parent=1 // pred_region
      %s27 = ssub.s32 64, 64
      %28 = vsyncadd [#allocation5], %s27
      %s30 = sshll.u32 [#allocation4], 4
      %s31 = int_to_ptr.vmem [resolvable:$true] %s30
      %33 = dma.hbm_to_vmem [thread:$0]  %s2, 64, %s31, [#allocation5]
    $region13: #{image_decoder_forward.4} parent=1 // pred_fallthru
      _
    // Predicated region
    $region14: #{image_decoder_forward.4} parent=1 // pred_check
      _
    $region15: #{image_decoder_forward.4} parent=1 // pred_check_branch
      %35 = sbr.rel (0) target = $region17
    $region16: #{image_decoder_forward.4} parent=1 // pred_region
      %36 = dma.done [#allocation3], 36864
    $region17: #{image_decoder_forward.4} parent=1 // pred_fallthru
      _
    // Predicated region
    $region18: #{image_decoder_forward.4} parent=1 // pred_check
      _
    $region19: #{image_decoder_forward.4} parent=1 // pred_check_branch
      %38 = sbr.rel (0) target = $region21
    $region20: #{image_decoder_forward.4} parent=1 // pred_region
      %39 = dma.done [#allocation5], 64
    $region21: #{image_decoder_forward.4} parent=1 // pred_fallthru
      _
    %v40 = vld [vmem:[%s0] sm:$0xff]
    %v41 = vld [vmem:[%s0 + $0x8] sm:$0xff]
    %v42 = vld [vmem:[%s0 + $0x10] sm:$0xff]
    %v43 = vld [vmem:[%s0 + $0x18] sm:$0xff]
    %v44 = vld [vmem:[%s0 + $0x20] sm:$0xff]
    %v45 = vld [vmem:[%s0 + $0x28] sm:$0xff]
    %v46 = vld [vmem:[%s0 + $0x30] sm:$0xff]
    %v47 = vld [vmem:[%s0 + $0x38] sm:$0xff]
    %v48 = vld [vmem:[%s0 + $0x40] sm:$0xff]
    %v49 = vld [vmem:[%s0 + $0x48] sm:$0xff]
    %v50 = vld [vmem:[%s0 + $0x50] sm:$0xff]
    %v51 = vld [vmem:[%s0 + $0x58] sm:$0xff]
    %v52 = vld [vmem:[%s0 + $0x60] sm:$0xff]
    %v53 = vld [vmem:[%s0 + $0x68] sm:$0xff]
    %v54 = vld [vmem:[%s0 + $0x70] sm:$0xff]
    %v55 = vld [vmem:[%s0 + $0x78] sm:$0xff]
    %v56 = vld [vmem:[%s0 + $0x80] sm:$0xff]
    %v57 = vld [vmem:[%s0 + $0x88] sm:$0xff]
    %v58 = vld [vmem:[%s0 + $0x90] sm:$0xff]
    %v59 = vld [vmem:[%s0 + $0x98] sm:$0xff]
    %v60 = vld [vmem:[#allocation2] sm:$0xff]
    %v61 = vld [vmem:[#allocation2 + $0x8] sm:$0xff]
    %v62 = vld [vmem:[#allocation2 + $0x10] sm:$0xff]
    %v63 = vld [vmem:[#allocation2 + $0x18] sm:$0xff]
    %v64 = vld [vmem:[#allocation2 + $0x20] sm:$0xff]
    %v65 = vld [vmem:[#allocation2 + $0x28] sm:$0xff]
    %v66 = vld [vmem:[#allocation2 + $0x30] sm:$0xff]
    %v67 = vld [vmem:[#allocation2 + $0x38] sm:$0xff]
    %v68 = vld [vmem:[#allocation2 + $0x40] sm:$0xff]
    %v69 = vld [vmem:[#allocation2 + $0x48] sm:$0xff]
    %v70 = vld [vmem:[#allocation2 + $0x50] sm:$0xff]
    %v71 = vld [vmem:[#allocation2 + $0x58] sm:$0xff]
    %v72 = vld [vmem:[#allocation2 + $0x60] sm:$0xff]
    %v73 = vld [vmem:[#allocation2 + $0x68] sm:$0xff]
    %v74 = vld [vmem:[#allocation2 + $0x70] sm:$0xff]
    %v75 = vld [vmem:[#allocation2 + $0x78] sm:$0xff]
    %v76 = vld [vmem:[#allocation2 + $0x80] sm:$0xff]
    %v77 = vld [vmem:[#allocation2 + $0x88] sm:$0xff]
    %v78 = vld [vmem:[#allocation2 + $0x90] sm:$0xff]
    %v79 = vld [vmem:[#allocation2 + $0x98] sm:$0xff]
    %v80 = vld [vmem:[#allocation2 + $0xa0] sm:$0xff]
    %v81 = vld [vmem:[#allocation2 + $0xa8] sm:$0xff]
    %v82 = vld [vmem:[#allocation2 + $0xb0] sm:$0xff]
    %v83 = vld [vmem:[#allocation2 + $0xb8] sm:$0xff]
    %v84 = vld [vmem:[#allocation2 + $0xc0] sm:$0xff]
    %v85 = vld [vmem:[#allocation2 + $0xc8] sm:$0xff]
    %v86 = vld [vmem:[#allocation2 + $0xd0] sm:$0xff]
    %v87 = vld [vmem:[#allocation2 + $0xd8] sm:$0xff]
    %v88 = vld [vmem:[#allocation2 + $0xe0] sm:$0xff]
    %v89 = vld [vmem:[#allocation2 + $0xe8] sm:$0xff]
    %v90 = vld [vmem:[#allocation2 + $0xf0] sm:$0xff]
    %v91 = vld [vmem:[#allocation2 + $0xf8] sm:$0xff]
    %v92 = vld [vmem:[#allocation2 + $0x100] sm:$0xff]
    %v93 = vld [vmem:[#allocation2 + $0x108] sm:$0xff]
    %v94 = vld [vmem:[#allocation2 + $0x110] sm:$0xff]
    %v95 = vld [vmem:[#allocation2 + $0x118] sm:$0xff]
    %v96 = vld [vmem:[#allocation2 + $0x120] sm:$0xff]
    %v97 = vld [vmem:[#allocation2 + $0x128] sm:$0xff]
    %v98 = vld [vmem:[#allocation2 + $0x130] sm:$0xff]
    %v99 = vld [vmem:[#allocation2 + $0x138] sm:$0xff]
    %v100 = vld [vmem:[#allocation2 + $0x140] sm:$0xff]
    %v101 = vld [vmem:[#allocation2 + $0x148] sm:$0xff]
    %v102 = vld [vmem:[#allocation2 + $0x150] sm:$0xff]
    %v103 = vld [vmem:[#allocation2 + $0x158] sm:$0xff]
    %v104 = vld [vmem:[#allocation2 + $0x160] sm:$0xff]
    %v105 = vld [vmem:[#allocation2 + $0x168] sm:$0xff]
    %v106 = vld [vmem:[#allocation2 + $0x170] sm:$0xff]
    %v107 = vld [vmem:[#allocation2 + $0x178] sm:$0xff]
    %v108 = vld [vmem:[#allocation2 + $0x180] sm:$0xff]
    %v109 = vld [vmem:[#allocation2 + $0x188] sm:$0xff]
    %v110 = vld [vmem:[#allocation2 + $0x190] sm:$0xff]
    %v111 = vld [vmem:[#allocation2 + $0x198] sm:$0xff]
    %v112 = vld [vmem:[#allocation2 + $0x1a0] sm:$0xff]
    %v113 = vld [vmem:[#allocation2 + $0x1a8] sm:$0xff]
    %v114 = vld [vmem:[#allocation2 + $0x1b0] sm:$0xff]
    %v115 = vld [vmem:[#allocation2 + $0x1b8] sm:$0xff]
    %v116 = vld [vmem:[#allocation2 + $0x1c0] sm:$0xff]
    %v117 = vld [vmem:[#allocation2 + $0x1c8] sm:$0xff]
    %v118 = vld [vmem:[#allocation2 + $0x1d0] sm:$0xff]
    %v119 = vld [vmem:[#allocation2 + $0x1d8] sm:$0xff]
    %v120 = vld [vmem:[#allocation2 + $0x1e0] sm:$0xff]
    %v121 = vld [vmem:[#allocation2 + $0x1e8] sm:$0xff]
    %v122 = vld [vmem:[#allocation2 + $0x1f0] sm:$0xff]
    %v123 = vld [vmem:[#allocation2 + $0x1f8] sm:$0xff]
    %v124 = vld [vmem:[#allocation2 + $0x200] sm:$0xff]
    %v125 = vld [vmem:[#allocation2 + $0x208] sm:$0xff]
    %v126 = vld [vmem:[#allocation2 + $0x210] sm:$0xff]
    %v127 = vld [vmem:[#allocation2 + $0x218] sm:$0xff]
    %v128 = vld [vmem:[#allocation2 + $0x220] sm:$0xff]
    %v129 = vld [vmem:[#allocation2 + $0x228] sm:$0xff]
    %v130 = vld [vmem:[#allocation2 + $0x230] sm:$0xff]
    %v131 = vld [vmem:[#allocation2 + $0x238] sm:$0xff]
    %v132 = vld [vmem:[#allocation2 + $0x240] sm:$0xff]
    %v133 = vld [vmem:[#allocation2 + $0x248] sm:$0xff]
    %v134 = vld [vmem:[#allocation2 + $0x250] sm:$0xff]
    %v135 = vld [vmem:[#allocation2 + $0x258] sm:$0xff]
    %v136 = vld [vmem:[#allocation2 + $0x260] sm:$0xff]
    %v137 = vld [vmem:[#allocation2 + $0x268] sm:$0xff]
    %v138 = vld [vmem:[#allocation2 + $0x270] sm:$0xff]
    %v139 = vld [vmem:[#allocation2 + $0x278] sm:$0xff]
    %v140 = vld [vmem:[#allocation2 + $0x280] sm:$0xff]
    %v141 = vld [vmem:[#allocation2 + $0x288] sm:$0xff]
    %v142 = vld [vmem:[#allocation2 + $0x290] sm:$0xff]
    %v143 = vld [vmem:[#allocation2 + $0x298] sm:$0xff]
    %v144 = vld [vmem:[#allocation2 + $0x2a0] sm:$0xff]
    %v145 = vld [vmem:[#allocation2 + $0x2a8] sm:$0xff]
    %v146 = vld [vmem:[#allocation2 + $0x2b0] sm:$0xff]
    %v147 = vld [vmem:[#allocation2 + $0x2b8] sm:$0xff]
    %v148 = vld [vmem:[#allocation2 + $0x2c0] sm:$0xff]
    %v149 = vld [vmem:[#allocation2 + $0x2c8] sm:$0xff]
    %v150 = vld [vmem:[#allocation2 + $0x2d0] sm:$0xff]
    %v151 = vld [vmem:[#allocation2 + $0x2d8] sm:$0xff]
    %v152 = vld [vmem:[#allocation2 + $0x2e0] sm:$0xff]
    %v153 = vld [vmem:[#allocation2 + $0x2e8] sm:$0xff]
    %v154 = vld [vmem:[#allocation2 + $0x2f0] sm:$0xff]
    %v155 = vld [vmem:[#allocation2 + $0x2f8] sm:$0xff]
    %v156 = vld [vmem:[#allocation2 + $0x300] sm:$0xff]
    %v157 = vld [vmem:[#allocation2 + $0x308] sm:$0xff]
    %v158 = vld [vmem:[#allocation2 + $0x310] sm:$0xff]
    %v159 = vld [vmem:[#allocation2 + $0x318] sm:$0xff]
    %v160 = vld [vmem:[#allocation2 + $0x320] sm:$0xff]
    %v161 = vld [vmem:[#allocation2 + $0x328] sm:$0xff]
    %v162 = vld [vmem:[#allocation2 + $0x330] sm:$0xff]
    %v163 = vld [vmem:[#allocation2 + $0x338] sm:$0xff]
    %v164 = vld [vmem:[#allocation2 + $0x340] sm:$0xff]
    %v165 = vld [vmem:[#allocation2 + $0x348] sm:$0xff]
    %v166 = vld [vmem:[#allocation2 + $0x350] sm:$0xff]
    %v167 = vld [vmem:[#allocation2 + $0x358] sm:$0xff]
    %v168 = vld [vmem:[#allocation2 + $0x360] sm:$0xff]
    %v169 = vld [vmem:[#allocation2 + $0x368] sm:$0xff]
    %v170 = vld [vmem:[#allocation2 + $0x370] sm:$0xff]
    %v171 = vld [vmem:[#allocation2 + $0x378] sm:$0xff]
    %v172 = vld [vmem:[#allocation2 + $0x380] sm:$0xff]
    %v173 = vld [vmem:[#allocation2 + $0x388] sm:$0xff]
    %v174 = vld [vmem:[#allocation2 + $0x390] sm:$0xff]
    %v175 = vld [vmem:[#allocation2 + $0x398] sm:$0xff]
    %v176 = vld [vmem:[#allocation2 + $0x3a0] sm:$0xff]
    %v177 = vld [vmem:[#allocation2 + $0x3a8] sm:$0xff]
    %v178 = vld [vmem:[#allocation2 + $0x3b0] sm:$0xff]
    %v179 = vld [vmem:[#allocation2 + $0x3b8] sm:$0xff]
    %v180 = vld [vmem:[#allocation2 + $0x3c0] sm:$0xff]
    %v181 = vld [vmem:[#allocation2 + $0x3c8] sm:$0xff]
    %v182 = vld [vmem:[#allocation2 + $0x3d0] sm:$0xff]
    %v183 = vld [vmem:[#allocation2 + $0x3d8] sm:$0xff]
    %v184 = vld [vmem:[#allocation2 + $0x3e0] sm:$0xff]
    %v185 = vld [vmem:[#allocation2 + $0x3e8] sm:$0xff]
    %v186 = vld [vmem:[#allocation2 + $0x3f0] sm:$0xff]
    %v187 = vld [vmem:[#allocation2 + $0x3f8] sm:$0xff]
    %v188 = vld [vmem:[#allocation2 + $0x400] sm:$0xff]
    %v189 = vld [vmem:[#allocation2 + $0x408] sm:$0xff]
    %v190 = vld [vmem:[#allocation2 + $0x410] sm:$0xff]
    %v191 = vld [vmem:[#allocation2 + $0x418] sm:$0xff]
    %v192 = vld [vmem:[#allocation2 + $0x420] sm:$0xff]
    %v193 = vld [vmem:[#allocation2 + $0x428] sm:$0xff]
    %v194 = vld [vmem:[#allocation2 + $0x430] sm:$0xff]
    %v195 = vld [vmem:[#allocation2 + $0x438] sm:$0xff]
    %v196 = vld [vmem:[#allocation2 + $0x440] sm:$0xff]
    %v197 = vld [vmem:[#allocation2 + $0x448] sm:$0xff]
    %v198 = vld [vmem:[#allocation2 + $0x450] sm:$0xff]
    %v199 = vld [vmem:[#allocation2 + $0x458] sm:$0xff]
    %v200 = vld [vmem:[#allocation2 + $0x460] sm:$0xff]
    %v201 = vld [vmem:[#allocation2 + $0x468] sm:$0xff]
    %v202 = vld [vmem:[#allocation2 + $0x470] sm:$0xff]
    %v203 = vld [vmem:[#allocation2 + $0x478] sm:$0xff]
    %v204 = vld [vmem:[#allocation2 + $0x480] sm:$0xff]
    %v205 = vld [vmem:[#allocation2 + $0x488] sm:$0xff]
    %v206 = vld [vmem:[#allocation2 + $0x490] sm:$0xff]
    %v207 = vld [vmem:[#allocation2 + $0x498] sm:$0xff]
    %v208 = vld [vmem:[#allocation2 + $0x4a0] sm:$0xff]
    %v209 = vld [vmem:[#allocation2 + $0x4a8] sm:$0xff]
    %v210 = vld [vmem:[#allocation2 + $0x4b0] sm:$0xff]
    %v211 = vld [vmem:[#allocation2 + $0x4b8] sm:$0xff]
    %v212 = vld [vmem:[#allocation2 + $0x4c0] sm:$0xff]
    %v213 = vld [vmem:[#allocation2 + $0x4c8] sm:$0xff]
    %v214 = vld [vmem:[#allocation2 + $0x4d0] sm:$0xff]
    %v215 = vld [vmem:[#allocation2 + $0x4d8] sm:$0xff]
    %v216 = vld [vmem:[#allocation2 + $0x4e0] sm:$0xff]
    %v217 = vld [vmem:[#allocation2 + $0x4e8] sm:$0xff]
    %v218 = vld [vmem:[#allocation2 + $0x4f0] sm:$0xff]
    %v219 = vld [vmem:[#allocation2 + $0x4f8] sm:$0xff]
    %v220 = vld [vmem:[#allocation2 + $0x500] sm:$0xff]
    %v221 = vld [vmem:[#allocation2 + $0x508] sm:$0xff]
    %v222 = vld [vmem:[#allocation2 + $0x510] sm:$0xff]
    %v223 = vld [vmem:[#allocation2 + $0x518] sm:$0xff]
    %v224 = vld [vmem:[#allocation2 + $0x520] sm:$0xff]
    %v225 = vld [vmem:[#allocation2 + $0x528] sm:$0xff]
    %v226 = vld [vmem:[#allocation2 + $0x530] sm:$0xff]
    %v227 = vld [vmem:[#allocation2 + $0x538] sm:$0xff]
    %v228 = vld [vmem:[#allocation2 + $0x540] sm:$0xff]
    %v229 = vld [vmem:[#allocation2 + $0x548] sm:$0xff]
    %v230 = vld [vmem:[#allocation2 + $0x550] sm:$0xff]
    %v231 = vld [vmem:[#allocation2 + $0x558] sm:$0xff]
    %v232 = vld [vmem:[#allocation2 + $0x560] sm:$0xff]
    %v233 = vld [vmem:[#allocation2 + $0x568] sm:$0xff]
    %v234 = vld [vmem:[#allocation2 + $0x570] sm:$0xff]
    %v235 = vld [vmem:[#allocation2 + $0x578] sm:$0xff]
    %v236 = vld [vmem:[#allocation2 + $0x580] sm:$0xff]
    %v237 = vld [vmem:[#allocation2 + $0x588] sm:$0xff]
    %v238 = vld [vmem:[#allocation2 + $0x590] sm:$0xff]
    %v239 = vld [vmem:[#allocation2 + $0x598] sm:$0xff]
    %v240 = vld [vmem:[#allocation2 + $0x5a0] sm:$0xff]
    %v241 = vld [vmem:[#allocation2 + $0x5a8] sm:$0xff]
    %v242 = vld [vmem:[#allocation2 + $0x5b0] sm:$0xff]
    %v243 = vld [vmem:[#allocation2 + $0x5b8] sm:$0xff]
    %v244 = vld [vmem:[#allocation2 + $0x5c0] sm:$0xff]
    %v245 = vld [vmem:[#allocation2 + $0x5c8] sm:$0xff]
    %v246 = vld [vmem:[#allocation2 + $0x5d0] sm:$0xff]
    %v247 = vld [vmem:[#allocation2 + $0x5d8] sm:$0xff]
    %v248 = vld [vmem:[#allocation2 + $0x5e0] sm:$0xff]
    %v249 = vld [vmem:[#allocation2 + $0x5e8] sm:$0xff]
    %v250 = vld [vmem:[#allocation2 + $0x5f0] sm:$0xff]
    %v251 = vld [vmem:[#allocation2 + $0x5f8] sm:$0xff]
    %v252 = vld [vmem:[#allocation2 + $0x600] sm:$0xff]
    %v253 = vld [vmem:[#allocation2 + $0x608] sm:$0xff]
    %v254 = vld [vmem:[#allocation2 + $0x610] sm:$0xff]
    %v255 = vld [vmem:[#allocation2 + $0x618] sm:$0xff]
    %v256 = vld [vmem:[#allocation2 + $0x620] sm:$0xff]
    %v257 = vld [vmem:[#allocation2 + $0x628] sm:$0xff]
    %v258 = vld [vmem:[#allocation2 + $0x630] sm:$0xff]
    %v259 = vld [vmem:[#allocation2 + $0x638] sm:$0xff]
    %v260 = vld [vmem:[#allocation2 + $0x640] sm:$0xff]
    %v261 = vld [vmem:[#allocation2 + $0x648] sm:$0xff]
    %v262 = vld [vmem:[#allocation2 + $0x650] sm:$0xff]
    %v263 = vld [vmem:[#allocation2 + $0x658] sm:$0xff]
    %v264 = vld [vmem:[#allocation2 + $0x660] sm:$0xff]
    %v265 = vld [vmem:[#allocation2 + $0x668] sm:$0xff]
    %v266 = vld [vmem:[#allocation2 + $0x670] sm:$0xff]
    %v267 = vld [vmem:[#allocation2 + $0x678] sm:$0xff]
    %v268 = vld [vmem:[#allocation2 + $0x680] sm:$0xff]
    %v269 = vld [vmem:[#allocation2 + $0x688] sm:$0xff]
    %v270 = vld [vmem:[#allocation2 + $0x690] sm:$0xff]
    %v271 = vld [vmem:[#allocation2 + $0x698] sm:$0xff]
    %v272 = vld [vmem:[#allocation2 + $0x6a0] sm:$0xff]
    %v273 = vld [vmem:[#allocation2 + $0x6a8] sm:$0xff]
    %v274 = vld [vmem:[#allocation2 + $0x6b0] sm:$0xff]
    %v275 = vld [vmem:[#allocation2 + $0x6b8] sm:$0xff]
    %v276 = vld [vmem:[#allocation2 + $0x6c0] sm:$0xff]
    %v277 = vld [vmem:[#allocation2 + $0x6c8] sm:$0xff]
    %v278 = vld [vmem:[#allocation2 + $0x6d0] sm:$0xff]
    %v279 = vld [vmem:[#allocation2 + $0x6d8] sm:$0xff]
    %v280 = vld [vmem:[#allocation2 + $0x6e0] sm:$0xff]
    %v281 = vld [vmem:[#allocation2 + $0x6e8] sm:$0xff]
    %v282 = vld [vmem:[#allocation2 + $0x6f0] sm:$0xff]
    %v283 = vld [vmem:[#allocation2 + $0x6f8] sm:$0xff]
    %v284 = vld [vmem:[#allocation2 + $0x700] sm:$0xff]
    %v285 = vld [vmem:[#allocation2 + $0x708] sm:$0xff]
    %v286 = vld [vmem:[#allocation2 + $0x710] sm:$0xff]
    %v287 = vld [vmem:[#allocation2 + $0x718] sm:$0xff]
    %v288 = vld [vmem:[#allocation2 + $0x720] sm:$0xff]
    %v289 = vld [vmem:[#allocation2 + $0x728] sm:$0xff]
    %v290 = vld [vmem:[#allocation2 + $0x730] sm:$0xff]
    %v291 = vld [vmem:[#allocation2 + $0x738] sm:$0xff]
    %v292 = vld [vmem:[#allocation2 + $0x740] sm:$0xff]
    %v293 = vld [vmem:[#allocation2 + $0x748] sm:$0xff]
    %v294 = vld [vmem:[#allocation2 + $0x750] sm:$0xff]
    %v295 = vld [vmem:[#allocation2 + $0x758] sm:$0xff]
    %v296 = vld [vmem:[#allocation2 + $0x760] sm:$0xff]
    %v297 = vld [vmem:[#allocation2 + $0x768] sm:$0xff]
    %v298 = vld [vmem:[#allocation2 + $0x770] sm:$0xff]
    %v299 = vld [vmem:[#allocation2 + $0x778] sm:$0xff]
    %v300 = vld [vmem:[#allocation2 + $0x780] sm:$0xff]
    %v301 = vld [vmem:[#allocation2 + $0x788] sm:$0xff]
    %v302 = vld [vmem:[#allocation2 + $0x790] sm:$0xff]
    %v303 = vld [vmem:[#allocation2 + $0x798] sm:$0xff]
    %v304 = vld [vmem:[#allocation2 + $0x7a0] sm:$0xff]
    %v305 = vld [vmem:[#allocation2 + $0x7a8] sm:$0xff]
    %v306 = vld [vmem:[#allocation2 + $0x7b0] sm:$0xff]
    %v307 = vld [vmem:[#allocation2 + $0x7b8] sm:$0xff]
    %v308 = vld [vmem:[#allocation2 + $0x7c0] sm:$0xff]
    %v309 = vld [vmem:[#allocation2 + $0x7c8] sm:$0xff]
    %v310 = vld [vmem:[#allocation2 + $0x7d0] sm:$0xff]
    %v311 = vld [vmem:[#allocation2 + $0x7d8] sm:$0xff]
    %v312 = vld [vmem:[#allocation2 + $0x7e0] sm:$0xff]
    %v313 = vld [vmem:[#allocation2 + $0x7e8] sm:$0xff]
    %v314 = vld [vmem:[#allocation2 + $0x7f0] sm:$0xff]
    %v315 = vld [vmem:[#allocation2 + $0x7f8] sm:$0xff]
    %v316 = vld [vmem:[#allocation2 + $0x800] sm:$0xff]
    %v317 = vld [vmem:[#allocation2 + $0x808] sm:$0xff]
    %v318 = vld [vmem:[#allocation2 + $0x810] sm:$0xff]
    %v319 = vld [vmem:[#allocation2 + $0x818] sm:$0xff]
    %v320 = vld [vmem:[#allocation2 + $0x820] sm:$0xff]
    %v321 = vld [vmem:[#allocation2 + $0x828] sm:$0xff]
    %v322 = vld [vmem:[#allocation2 + $0x830] sm:$0xff]
    %v323 = vld [vmem:[#allocation2 + $0x838] sm:$0xff]
    %v324 = vld [vmem:[#allocation2 + $0x840] sm:$0xff]
    %v325 = vld [vmem:[#allocation2 + $0x848] sm:$0xff]
    %v326 = vld [vmem:[#allocation2 + $0x850] sm:$0xff]
    %v327 = vld [vmem:[#allocation2 + $0x858] sm:$0xff]
    %v328 = vld [vmem:[#allocation2 + $0x860] sm:$0xff]
    %v329 = vld [vmem:[#allocation2 + $0x868] sm:$0xff]
    %v330 = vld [vmem:[#allocation2 + $0x870] sm:$0xff]
    %v331 = vld [vmem:[#allocation2 + $0x878] sm:$0xff]
    %v332 = vld [vmem:[#allocation2 + $0x880] sm:$0xff]
    %v333 = vld [vmem:[#allocation2 + $0x888] sm:$0xff]
    %v334 = vld [vmem:[#allocation2 + $0x890] sm:$0xff]
    %v335 = vld [vmem:[#allocation2 + $0x898] sm:$0xff]
    %v336 = vld [vmem:[#allocation2 + $0x8a0] sm:$0xff]
    %v337 = vld [vmem:[#allocation2 + $0x8a8] sm:$0xff]
    %v338 = vld [vmem:[#allocation2 + $0x8b0] sm:$0xff]
    %v339 = vld [vmem:[#allocation2 + $0x8b8] sm:$0xff]
    %v340 = vld [vmem:[#allocation2 + $0x8c0] sm:$0xff]
    %v341 = vld [vmem:[#allocation2 + $0x8c8] sm:$0xff]
    %v342 = vld [vmem:[#allocation2 + $0x8d0] sm:$0xff]
    %v343 = vld [vmem:[#allocation2 + $0x8d8] sm:$0xff]
    %v344 = vld [vmem:[#allocation2 + $0x8e0] sm:$0xff]
    %v345 = vld [vmem:[#allocation2 + $0x8e8] sm:$0xff]
    %v346 = vld [vmem:[#allocation2 + $0x8f0] sm:$0xff]
    %v347 = vld [vmem:[#allocation2 + $0x8f8] sm:$0xff]
    %v348 = vld [vmem:[#allocation4] sm:$0xf]
    %v350 = vlaneseq
    %v351 = vshrl.u32 %v350, 7
    %v352 = vsub.s32 0, %v351
    %v353 = vrot.slane %v348, %v352
    %v354 = vlaneseq
    %v355 = vshrl.u32 %v354, 7
    %v356 = vsub.s32 1, %v355
    %v357 = vrot.slane %v348, %v356
    %v358 = vlaneseq
    %v359 = vshrl.u32 %v358, 7
    %v360 = vsub.s32 2, %v359
    %v361 = vrot.slane %v348, %v360
    %v362 = vlaneseq
    %v363 = vshrl.u32 %v362, 7
    %v364 = vsub.s32 3, %v363
    %v365 = vrot.slane %v348, %v364
    %vm370 = vcmask 523264
    %v372 = vsel %vm370, %v44, 0
    %v375 = vsel %vm370, %v49, 0
    %v378 = vsel %vm370, %v54, 0
    %v381 = vsel %vm370, %v59, 0
    %383 = vmatprep.subr.mxu0 %v61
    %384 = vmatpush1.msra.mxu0 %v60
    %385 = vmatprep.subr.mxu0 %v65
    %386 = vmatpush1.msra.mxu0 %v64
    %387 = vmatprep.subr.mxu0 %v69
    %388 = vmatpush1.msra.mxu0 %v68
    %389 = vmatprep.subr.mxu0 %v73
    %390 = vmatpush1.msra.mxu0 %v72
    %391 = vmatprep.subr.mxu0 %v77
    %392 = vmatpush1.msra.mxu0 %v76
    %393 = vmatprep.subr.mxu0 %v81
    %394 = vmatpush1.msra.mxu0 %v80
    %395 = vmatprep.subr.mxu0 %v85
    %396 = vmatpush1.msra.mxu0 %v84
    %397 = vmatprep.subr.mxu0 %v89
    %398 = vmatpush1.msra.mxu0 %v88
    %399 = vmatprep.subr.mxu0 %v93
    %400 = vmatpush1.msra.mxu0 %v92
    %401 = vmatprep.subr.mxu0 %v97
    %402 = vmatpush1.msra.mxu0 %v96
    %403 = vmatprep.subr.mxu0 %v101
    %404 = vmatpush1.msra.mxu0 %v100
    %405 = vmatprep.subr.mxu0 %v105
    %406 = vmatpush1.msra.mxu0 %v104
    %407 = vmatprep.subr.mxu0 %v109
    %408 = vmatpush1.msra.mxu0 %v108
    %409 = vmatprep.subr.mxu0 %v113
    %410 = vmatpush1.msra.mxu0 %v112
    %411 = vmatprep.subr.mxu0 %v117
    %412 = vmatpush1.msra.mxu0 %v116
    %413 = vmatprep.subr.mxu0 %v121
    %414 = vmatpush1.msra.mxu0 %v120
    %415 = vmatprep.subr.mxu0 %v125
    %416 = vmatpush1.msra.mxu0 %v124
    %417 = vmatprep.subr.mxu0 %v129
    %418 = vmatpush1.msra.mxu0 %v128
    %419 = vmatprep.subr.mxu0 %v133
    %420 = vmatpush1.msra.mxu0 %v132
    %421 = vmatprep.subr.mxu0 %v137
    %422 = vmatpush1.msra.mxu0 %v136
    %423 = vmatprep.subr.mxu0 %v141
    %424 = vmatpush1.msra.mxu0 %v140
    %425 = vmatprep.subr.mxu0 %v145
    %426 = vmatpush1.msra.mxu0 %v144
    %427 = vmatprep.subr.mxu0 %v149
    %428 = vmatpush1.msra.mxu0 %v148
    %429 = vmatprep.subr.mxu0 %v153
    %430 = vmatpush1.msra.mxu0 %v152
    %431 = vmatprep.subr.mxu0 %v157
    %432 = vmatpush1.msra.mxu0 %v156
    %433 = vmatprep.subr.mxu0 %v161
    %434 = vmatpush1.msra.mxu0 %v160
    %435 = vmatprep.subr.mxu0 %v165
    %436 = vmatpush1.msra.mxu0 %v164
    %437 = vmatprep.subr.mxu0 %v169
    %438 = vmatpush1.msra.mxu0 %v168
    %439 = vmatprep.subr.mxu0 %v173
    %440 = vmatpush1.msra.mxu0 %v172
    %441 = vmatprep.subr.mxu0 %v177
    %442 = vmatpush1.msra.mxu0 %v176
    %443 = vmatprep.subr.mxu0 %v181
    %444 = vmatpush1.msra.mxu0 %v180
    %445 = vmatprep.subr.mxu0 %v185
    %446 = vmatpush1.msra.mxu0 %v184
    %447 = vmatprep.mubr.f32.mxu0 %v41
    %448 = vmatmul.mubr.f32.gmra.mrb[0].mxu0 %v40
    %v449 = vpop.f32.mrb[0].mxu0
    %v450 = vadd.f32 %v353, %v449
    %v451 = vpop.f32.mrb[0].mxu0
    %v452 = vadd.f32 %v357, %v451
    %453 = vmatprep.mubr.f32.mxu0 %v46
    %454 = vmatmul.mubr.f32.gmra.mrb[0].mxu0 %v45
    %v455 = vpop.f32.mrb[0].mxu0
    %v456 = vadd.f32 %v353, %v455
    %v457 = vpop.f32.mrb[0].mxu0
    %v458 = vadd.f32 %v357, %v457
    %459 = vmatprep.mubr.f32.mxu0 %v51
    %460 = vmatmul.mubr.f32.gmra.mrb[0].mxu0 %v50
    %v461 = vpop.f32.mrb[0].mxu0
    %v462 = vadd.f32 %v353, %v461
    %v463 = vpop.f32.mrb[0].mxu0
    %v464 = vadd.f32 %v357, %v463
    %465 = vmatprep.mubr.f32.mxu0 %v56
    %466 = vmatmul.mubr.f32.gmra.mrb[0].mxu0 %v55
    %v467 = vpop.f32.mrb[0].mxu0
    %v468 = vadd.f32 %v353, %v467
    %v469 = vpop.f32.mrb[0].mxu0
    %v470 = vadd.f32 %v357, %v469
    %471 = vdwg.mxu0
    %472 = vmatprep.subr.mxu0 %v189
    %473 = vmatpush1.msra.mxu0 %v188
    %474 = vmatprep.subr.mxu0 %v193
    %475 = vmatpush1.msra.mxu0 %v192
    %476 = vmatprep.subr.mxu0 %v197
    %477 = vmatpush1.msra.mxu0 %v196
    %478 = vmatprep.subr.mxu0 %v201
    %479 = vmatpush1.msra.mxu0 %v200
    %480 = vmatprep.subr.mxu0 %v205
    %481 = vmatpush1.msra.mxu0 %v204
    %482 = vmatprep.subr.mxu0 %v209
    %483 = vmatpush1.msra.mxu0 %v208
    %484 = vmatprep.subr.mxu0 %v213
    %485 = vmatpush1.msra.mxu0 %v212
    %486 = vmatprep.subr.mxu0 %v217
    %487 = vmatpush1.msra.mxu0 %v216
    %488 = vmatprep.subr.mxu0 %v221
    %489 = vmatpush1.msra.mxu0 %v220
    %490 = vmatprep.subr.mxu0 %v225
    %491 = vmatpush1.msra.mxu0 %v224
    %492 = vmatprep.subr.mxu0 %v229
    %493 = vmatpush1.msra.mxu0 %v228
    %494 = vmatprep.subr.mxu0 %v233
    %495 = vmatpush1.msra.mxu0 %v232
    %496 = vmatprep.subr.mxu0 %v237
    %497 = vmatpush1.msra.mxu0 %v236
    %498 = vmatprep.subr.mxu0 %v241
    %499 = vmatpush1.msra.mxu0 %v240
    %500 = vmatprep.subr.mxu0 %v245
    %501 = vmatpush1.msra.mxu0 %v244
    %502 = vmatprep.subr.mxu0 %v249
    %503 = vmatpush1.msra.mxu0 %v248
    %504 = vmatprep.subr.mxu0 %v253
    %505 = vmatpush1.msra.mxu0 %v252
    %506 = vmatprep.subr.mxu0 %v257
    %507 = vmatpush1.msra.mxu0 %v256
    %508 = vmatprep.subr.mxu0 %v261
    %509 = vmatpush1.msra.mxu0 %v260
    %510 = vmatprep.subr.mxu0 %v265
    %511 = vmatpush1.msra.mxu0 %v264
    %512 = vmatprep.subr.mxu0 %v269
    %513 = vmatpush1.msra.mxu0 %v268
    %514 = vmatprep.subr.mxu0 %v273
    %515 = vmatpush1.msra.mxu0 %v272
    %516 = vmatprep.subr.mxu0 %v277
    %517 = vmatpush1.msra.mxu0 %v276
    %518 = vmatprep.subr.mxu0 %v281
    %519 = vmatpush1.msra.mxu0 %v280
    %520 = vmatprep.subr.mxu0 %v285
    %521 = vmatpush1.msra.mxu0 %v284
    %522 = vmatprep.subr.mxu0 %v289
    %523 = vmatpush1.msra.mxu0 %v288
    %524 = vmatprep.subr.mxu0 %v293
    %525 = vmatpush1.msra.mxu0 %v292
    %526 = vmatprep.subr.mxu0 %v297
    %527 = vmatpush1.msra.mxu0 %v296
    %528 = vmatprep.subr.mxu0 %v301
    %529 = vmatpush1.msra.mxu0 %v300
    %530 = vmatprep.subr.mxu0 %v305
    %531 = vmatpush1.msra.mxu0 %v304
    %532 = vmatprep.subr.mxu0 %v309
    %533 = vmatpush1.msra.mxu0 %v308
    %534 = vmatprep.subr.mxu0 %v313
    %535 = vmatpush1.msra.mxu0 %v312
    %536 = vmatprep.mubr.f32.mxu0 %v43
    %537 = vmatmul.mubr.f32.gmra.mrb[0].mxu0 %v42
    %v538 = vpop.f32.mrb[0].mxu0
    %v539 = vadd.f32 %v450, %v538
    %v540 = vpop.f32.mrb[0].mxu0
    %v541 = vadd.f32 %v452, %v540
    %542 = vmatprep.mubr.f32.mxu0 %v48
    %543 = vmatmul.mubr.f32.gmra.mrb[0].mxu0 %v47
    %v544 = vpop.f32.mrb[0].mxu0
    %v545 = vadd.f32 %v456, %v544
    %v546 = vpop.f32.mrb[0].mxu0
    %v547 = vadd.f32 %v458, %v546
    %548 = vmatprep.mubr.f32.mxu0 %v53
    %549 = vmatmul.mubr.f32.gmra.mrb[0].mxu0 %v52
    %v550 = vpop.f32.mrb[0].mxu0
    %v551 = vadd.f32 %v462, %v550
    %v552 = vpop.f32.mrb[0].mxu0
    %v553 = vadd.f32 %v464, %v552
    %554 = vmatprep.mubr.f32.mxu0 %v58
    %555 = vmatmul.mubr.f32.gmra.mrb[0].mxu0 %v57
    %v556 = vpop.f32.mrb[0].mxu0
    %v557 = vadd.f32 %v468, %v556
    %v558 = vpop.f32.mrb[0].mxu0
    %v559 = vadd.f32 %v470, %v558
    %560 = vdwg.mxu0
    %561 = vmatprep.subr.mxu0 %v317
    %562 = vmatpush1.msra.mxu0 %v316
    %563 = vmatprep.subr.mxu0 %v321
    %564 = vmatpush1.msra.mxu0 %v320
    %565 = vmatprep.subr.mxu0 %v325
    %566 = vmatpush1.msra.mxu0 %v324
    %567 = vmatprep.subr.mxu0 %v329
    %568 = vmatpush1.msra.mxu0 %v328
    %569 = vmatprep.subr.mxu0 %v333
    %570 = vmatpush1.msra.mxu0 %v332
    %571 = vmatprep.subr.mxu0 %v337
    %572 = vmatpush1.msra.mxu0 %v336
    %573 = vmatprep.subr.mxu0 %v341
    %574 = vmatpush1.msra.mxu0 %v340
    %575 = vmatprep.subr.mxu0 %v345
    %576 = vmatpush1.msra.mxu0 %v344
    %577 = vmatprep.subr.mxu0 0.0
    %578 = vmatpush1.msra.mxu0 0.0
    %579 = vmatprep.subr.mxu0 0.0
    %580 = vmatpush1.msra.mxu0 0.0
    %581 = vmatprep.subr.mxu0 0.0
    %582 = vmatpush1.msra.mxu0 0.0
    %583 = vmatprep.subr.mxu0 0.0
    %584 = vmatpush1.msra.mxu0 0.0
    %585 = vmatprep.subr.mxu0 0.0
    %586 = vmatpush1.msra.mxu0 0.0
    %587 = vmatprep.subr.mxu0 0.0
    %588 = vmatpush1.msra.mxu0 0.0
    %589 = vmatprep.subr.mxu0 0.0
    %590 = vmatpush1.msra.mxu0 0.0
    %591 = vmatprep.subr.mxu0 0.0
    %592 = vmatpush1.msra.mxu0 0.0
    %593 = vmatprep.subr.mxu0 0.0
    %594 = vmatpush1.msra.mxu0 0.0
    %595 = vmatprep.subr.mxu0 0.0
    %596 = vmatpush1.msra.mxu0 0.0
    %597 = vmatprep.subr.mxu0 0.0
    %598 = vmatpush1.msra.mxu0 0.0
    %599 = vmatprep.subr.mxu0 0.0
    %600 = vmatpush1.msra.mxu0 0.0
    %601 = vmatprep.subr.mxu0 0.0
    %602 = vmatpush1.msra.mxu0 0.0
    %603 = vmatprep.subr.mxu0 0.0
    %604 = vmatpush1.msra.mxu0 0.0
    %605 = vmatprep.subr.mxu0 0.0
    %606 = vmatpush1.msra.mxu0 0.0
    %607 = vmatprep.subr.mxu0 0.0
    %608 = vmatpush1.msra.mxu0 0.0
    %609 = vmatprep.subr.mxu0 0.0
    %610 = vmatpush1.msra.mxu0 0.0
    %611 = vmatprep.subr.mxu0 0.0
    %612 = vmatpush1.msra.mxu0 0.0
    %613 = vmatprep.subr.mxu0 0.0
    %614 = vmatpush1.msra.mxu0 0.0
    %615 = vmatprep.subr.mxu0 0.0
    %616 = vmatpush1.msra.mxu0 0.0
    %617 = vmatprep.subr.mxu0 0.0
    %618 = vmatpush1.msra.mxu0 0.0
    %619 = vmatprep.subr.mxu0 0.0
    %620 = vmatpush1.msra.mxu0 0.0
    %621 = vmatprep.subr.mxu0 0.0
    %622 = vmatpush1.msra.mxu0 0.0
    %623 = vmatprep.subr.mxu0 0.0
    %624 = vmatpush1.msra.mxu0 0.0
    %625 = vmatprep.mubr.f32.mxu0 0.0
    %626 = vmatmul.mubr.f32.gmra.mrb[0].mxu0 %v372
    %v627 = vpop.f32.mrb[0].mxu0
    %v628 = vadd.f32 %v539, %v627
    %v629 = vpop.f32.mrb[0].mxu0
    %v630 = vadd.f32 %v541, %v629
    %631 = vmatprep.mubr.f32.mxu0 0.0
    %632 = vmatmul.mubr.f32.gmra.mrb[0].mxu0 %v375
    %v633 = vpop.f32.mrb[0].mxu0
    %v634 = vadd.f32 %v545, %v633
    %v635 = vpop.f32.mrb[0].mxu0
    %v636 = vadd.f32 %v547, %v635
    %637 = vmatprep.mubr.f32.mxu0 0.0
    %638 = vmatmul.mubr.f32.gmra.mrb[0].mxu0 %v378
    %v639 = vpop.f32.mrb[0].mxu0
    %v640 = vadd.f32 %v551, %v639
    %v641 = vpop.f32.mrb[0].mxu0
    %v642 = vadd.f32 %v553, %v641
    %643 = vmatprep.mubr.f32.mxu0 0.0
    %644 = vmatmul.mubr.f32.gmra.mrb[0].mxu0 %v381
    %v645 = vpop.f32.mrb[0].mxu0
    %v646 = vadd.f32 %v557, %v645
    %v647 = vpop.f32.mrb[0].mxu0
    %v648 = vadd.f32 %v559, %v647
    %649 = vdwg.mxu0
    %650 = vmatprep.subr.mxu0 %v63
    %651 = vmatpush1.msra.mxu0 %v62
    %652 = vmatprep.subr.mxu0 %v67
    %653 = vmatpush1.msra.mxu0 %v66
    %654 = vmatprep.subr.mxu0 %v71
    %655 = vmatpush1.msra.mxu0 %v70
    %656 = vmatprep.subr.mxu0 %v75
    %657 = vmatpush1.msra.mxu0 %v74
    %658 = vmatprep.subr.mxu0 %v79
    %659 = vmatpush1.msra.mxu0 %v78
    %660 = vmatprep.subr.mxu0 %v83
    %661 = vmatpush1.msra.mxu0 %v82
    %662 = vmatprep.subr.mxu0 %v87
    %663 = vmatpush1.msra.mxu0 %v86
    %664 = vmatprep.subr.mxu0 %v91
    %665 = vmatpush1.msra.mxu0 %v90
    %666 = vmatprep.subr.mxu0 %v95
    %667 = vmatpush1.msra.mxu0 %v94
    %668 = vmatprep.subr.mxu0 %v99
    %669 = vmatpush1.msra.mxu0 %v98
    %670 = vmatprep.subr.mxu0 %v103
    %671 = vmatpush1.msra.mxu0 %v102
    %672 = vmatprep.subr.mxu0 %v107
    %673 = vmatpush1.msra.mxu0 %v106
    %674 = vmatprep.subr.mxu0 %v111
    %675 = vmatpush1.msra.mxu0 %v110
    %676 = vmatprep.subr.mxu0 %v115
    %677 = vmatpush1.msra.mxu0 %v114
    %678 = vmatprep.subr.mxu0 %v119
    %679 = vmatpush1.msra.mxu0 %v118
    %680 = vmatprep.subr.mxu0 %v123
    %681 = vmatpush1.msra.mxu0 %v122
    %682 = vmatprep.subr.mxu0 %v127
    %683 = vmatpush1.msra.mxu0 %v126
    %684 = vmatprep.subr.mxu0 %v131
    %685 = vmatpush1.msra.mxu0 %v130
    %686 = vmatprep.subr.mxu0 %v135
    %687 = vmatpush1.msra.mxu0 %v134
    %688 = vmatprep.subr.mxu0 %v139
    %689 = vmatpush1.msra.mxu0 %v138
    %690 = vmatprep.subr.mxu0 %v143
    %691 = vmatpush1.msra.mxu0 %v142
    %692 = vmatprep.subr.mxu0 %v147
    %693 = vmatpush1.msra.mxu0 %v146
    %694 = vmatprep.subr.mxu0 %v151
    %695 = vmatpush1.msra.mxu0 %v150
    %696 = vmatprep.subr.mxu0 %v155
    %697 = vmatpush1.msra.mxu0 %v154
    %698 = vmatprep.subr.mxu0 %v159
    %699 = vmatpush1.msra.mxu0 %v158
    %700 = vmatprep.subr.mxu0 %v163
    %701 = vmatpush1.msra.mxu0 %v162
    %702 = vmatprep.subr.mxu0 %v167
    %703 = vmatpush1.msra.mxu0 %v166
    %704 = vmatprep.subr.mxu0 %v171
    %705 = vmatpush1.msra.mxu0 %v170
    %706 = vmatprep.subr.mxu0 %v175
    %707 = vmatpush1.msra.mxu0 %v174
    %708 = vmatprep.subr.mxu0 %v179
    %709 = vmatpush1.msra.mxu0 %v178
    %710 = vmatprep.subr.mxu0 %v183
    %711 = vmatpush1.msra.mxu0 %v182
    %712 = vmatprep.subr.mxu0 %v187
    %713 = vmatpush1.msra.mxu0 %v186
    %714 = vmatprep.mubr.f32.mxu0 %v41
    %715 = vmatmul.mubr.f32.gmra.mrb[0].mxu0 %v40
    %v716 = vpop.f32.mrb[0].mxu0
    %v717 = vadd.f32 %v361, %v716
    %v718 = vpop.f32.mrb[0].mxu0
    %v719 = vadd.f32 %v365, %v718
    %720 = vmatprep.mubr.f32.mxu0 %v46
    %721 = vmatmul.mubr.f32.gmra.mrb[0].mxu0 %v45
    %v722 = vpop.f32.mrb[0].mxu0
    %v723 = vadd.f32 %v361, %v722
    %v724 = vpop.f32.mrb[0].mxu0
    %v725 = vadd.f32 %v365, %v724
    %726 = vmatprep.mubr.f32.mxu0 %v51
    %727 = vmatmul.mubr.f32.gmra.mrb[0].mxu0 %v50
    %v728 = vpop.f32.mrb[0].mxu0
    %v729 = vadd.f32 %v361, %v728
    %v730 = vpop.f32.mrb[0].mxu0
    %v731 = vadd.f32 %v365, %v730
    %732 = vmatprep.mubr.f32.mxu0 %v56
    %733 = vmatmul.mubr.f32.gmra.mrb[0].mxu0 %v55
    %v734 = vpop.f32.mrb[0].mxu0
    %v735 = vadd.f32 %v361, %v734
    %v736 = vpop.f32.mrb[0].mxu0
    %v737 = vadd.f32 %v365, %v736
    %738 = vdwg.mxu0
    %739 = vmatprep.subr.mxu0 %v191
    %740 = vmatpush1.msra.mxu0 %v190
    %741 = vmatprep.subr.mxu0 %v195
    %742 = vmatpush1.msra.mxu0 %v194
    %743 = vmatprep.subr.mxu0 %v199
    %744 = vmatpush1.msra.mxu0 %v198
    %745 = vmatprep.subr.mxu0 %v203
    %746 = vmatpush1.msra.mxu0 %v202
    %747 = vmatprep.subr.mxu0 %v207
    %748 = vmatpush1.msra.mxu0 %v206
    %749 = vmatprep.subr.mxu0 %v211
    %750 = vmatpush1.msra.mxu0 %v210
    %751 = vmatprep.subr.mxu0 %v215
    %752 = vmatpush1.msra.mxu0 %v214
    %753 = vmatprep.subr.mxu0 %v219
    %754 = vmatpush1.msra.mxu0 %v218
    %755 = vmatprep.subr.mxu0 %v223
    %756 = vmatpush1.msra.mxu0 %v222
    %757 = vmatprep.subr.mxu0 %v227
    %758 = vmatpush1.msra.mxu0 %v226
    %759 = vmatprep.subr.mxu0 %v231
    %760 = vmatpush1.msra.mxu0 %v230
    %761 = vmatprep.subr.mxu0 %v235
    %762 = vmatpush1.msra.mxu0 %v234
    %763 = vmatprep.subr.mxu0 %v239
    %764 = vmatpush1.msra.mxu0 %v238
    %765 = vmatprep.subr.mxu0 %v243
    %766 = vmatpush1.msra.mxu0 %v242
    %767 = vmatprep.subr.mxu0 %v247
    %768 = vmatpush1.msra.mxu0 %v246
    %769 = vmatprep.subr.mxu0 %v251
    %770 = vmatpush1.msra.mxu0 %v250
    %771 = vmatprep.subr.mxu0 %v255
    %772 = vmatpush1.msra.mxu0 %v254
    %773 = vmatprep.subr.mxu0 %v259
    %774 = vmatpush1.msra.mxu0 %v258
    %775 = vmatprep.subr.mxu0 %v263
    %776 = vmatpush1.msra.mxu0 %v262
    %777 = vmatprep.subr.mxu0 %v267
    %778 = vmatpush1.msra.mxu0 %v266
    %779 = vmatprep.subr.mxu0 %v271
    %780 = vmatpush1.msra.mxu0 %v270
    %781 = vmatprep.subr.mxu0 %v275
    %782 = vmatpush1.msra.mxu0 %v274
    %783 = vmatprep.subr.mxu0 %v279
    %784 = vmatpush1.msra.mxu0 %v278
    %785 = vmatprep.subr.mxu0 %v283
    %786 = vmatpush1.msra.mxu0 %v282
    %787 = vmatprep.subr.mxu0 %v287
    %788 = vmatpush1.msra.mxu0 %v286
    %789 = vmatprep.subr.mxu0 %v291
    %790 = vmatpush1.msra.mxu0 %v290
    %791 = vmatprep.subr.mxu0 %v295
    %792 = vmatpush1.msra.mxu0 %v294
    %793 = vmatprep.subr.mxu0 %v299
    %794 = vmatpush1.msra.mxu0 %v298
    %795 = vmatprep.subr.mxu0 %v303
    %796 = vmatpush1.msra.mxu0 %v302
    %797 = vmatprep.subr.mxu0 %v307
    %798 = vmatpush1.msra.mxu0 %v306
    %799 = vmatprep.subr.mxu0 %v311
    %800 = vmatpush1.msra.mxu0 %v310
    %801 = vmatprep.subr.mxu0 %v315
    %802 = vmatpush1.msra.mxu0 %v314
    %803 = vmatprep.mubr.f32.mxu0 %v43
    %804 = vmatmul.mubr.f32.gmra.mrb[0].mxu0 %v42
    %v805 = vpop.f32.mrb[0].mxu0
    %v806 = vadd.f32 %v717, %v805
    %v807 = vpop.f32.mrb[0].mxu0
    %v808 = vadd.f32 %v719, %v807
    %809 = vmatprep.mubr.f32.mxu0 %v48
    %810 = vmatmul.mubr.f32.gmra.mrb[0].mxu0 %v47
    %v811 = vpop.f32.mrb[0].mxu0
    %v812 = vadd.f32 %v723, %v811
    %v813 = vpop.f32.mrb[0].mxu0
    %v814 = vadd.f32 %v725, %v813
    %815 = vmatprep.mubr.f32.mxu0 %v53
    %816 = vmatmul.mubr.f32.gmra.mrb[0].mxu0 %v52
    %v817 = vpop.f32.mrb[0].mxu0
    %v818 = vadd.f32 %v729, %v817
    %v819 = vpop.f32.mrb[0].mxu0
    %v820 = vadd.f32 %v731, %v819
    %821 = vmatprep.mubr.f32.mxu0 %v58
    %822 = vmatmul.mubr.f32.gmra.mrb[0].mxu0 %v57
    %v823 = vpop.f32.mrb[0].mxu0
    %v824 = vadd.f32 %v735, %v823
    %v825 = vpop.f32.mrb[0].mxu0
    %v826 = vadd.f32 %v737, %v825
    %827 = vdwg.mxu0
    %828 = vmatprep.subr.mxu0 %v319
    %829 = vmatpush1.msra.mxu0 %v318
    %830 = vmatprep.subr.mxu0 %v323
    %831 = vmatpush1.msra.mxu0 %v322
    %832 = vmatprep.subr.mxu0 %v327
    %833 = vmatpush1.msra.mxu0 %v326
    %834 = vmatprep.subr.mxu0 %v331
    %835 = vmatpush1.msra.mxu0 %v330
    %836 = vmatprep.subr.mxu0 %v335
    %837 = vmatpush1.msra.mxu0 %v334
    %838 = vmatprep.subr.mxu0 %v339
    %839 = vmatpush1.msra.mxu0 %v338
    %840 = vmatprep.subr.mxu0 %v343
    %841 = vmatpush1.msra.mxu0 %v342
    %842 = vmatprep.subr.mxu0 %v347
    %843 = vmatpush1.msra.mxu0 %v346
    %844 = vmatprep.subr.mxu0 0.0
    %845 = vmatpush1.msra.mxu0 0.0
    %846 = vmatprep.subr.mxu0 0.0
    %847 = vmatpush1.msra.mxu0 0.0
    %848 = vmatprep.subr.mxu0 0.0
    %849 = vmatpush1.msra.mxu0 0.0
    %850 = vmatprep.subr.mxu0 0.0
    %851 = vmatpush1.msra.mxu0 0.0
    %852 = vmatprep.subr.mxu0 0.0
    %853 = vmatpush1.msra.mxu0 0.0
    %854 = vmatprep.subr.mxu0 0.0
    %855 = vmatpush1.msra.mxu0 0.0
    %856 = vmatprep.subr.mxu0 0.0
    %857 = vmatpush1.msra.mxu0 0.0
    %858 = vmatprep.subr.mxu0 0.0
    %859 = vmatpush1.msra.mxu0 0.0
    %860 = vmatprep.subr.mxu0 0.0
    %861 = vmatpush1.msra.mxu0 0.0
    %862 = vmatprep.subr.mxu0 0.0
    %863 = vmatpush1.msra.mxu0 0.0
    %864 = vmatprep.subr.mxu0 0.0
    %865 = vmatpush1.msra.mxu0 0.0
    %866 = vmatprep.subr.mxu0 0.0
    %867 = vmatpush1.msra.mxu0 0.0
    %868 = vmatprep.subr.mxu0 0.0
    %869 = vmatpush1.msra.mxu0 0.0
    %870 = vmatprep.subr.mxu0 0.0
    %871 = vmatpush1.msra.mxu0 0.0
    %872 = vmatprep.subr.mxu0 0.0
    %873 = vmatpush1.msra.mxu0 0.0
    %874 = vmatprep.subr.mxu0 0.0
    %875 = vmatpush1.msra.mxu0 0.0
    %876 = vmatprep.subr.mxu0 0.0
    %877 = vmatpush1.msra.mxu0 0.0
    %878 = vmatprep.subr.mxu0 0.0
    %879 = vmatpush1.msra.mxu0 0.0
    %880 = vmatprep.subr.mxu0 0.0
    %881 = vmatpush1.msra.mxu0 0.0
    %882 = vmatprep.subr.mxu0 0.0
    %883 = vmatpush1.msra.mxu0 0.0
    %884 = vmatprep.subr.mxu0 0.0
    %885 = vmatpush1.msra.mxu0 0.0
    %886 = vmatprep.subr.mxu0 0.0
    %887 = vmatpush1.msra.mxu0 0.0
    %888 = vmatprep.subr.mxu0 0.0
    %889 = vmatpush1.msra.mxu0 0.0
    %890 = vmatprep.subr.mxu0 0.0
    %891 = vmatpush1.msra.mxu0 0.0
    %892 = vmatprep.mubr.f32.mxu0 0.0
    %893 = vmatmul.mubr.f32.gmra.mrb[0].mxu0 %v372
    %v894 = vpop.f32.mrb[0].mxu0
    %v895 = vadd.f32 %v806, %v894
    %v896 = vpop.f32.mrb[0].mxu0
    %v897 = vadd.f32 %v808, %v896
    %898 = vmatprep.mubr.f32.mxu0 0.0
    %899 = vmatmul.mubr.f32.gmra.mrb[0].mxu0 %v375
    %v900 = vpop.f32.mrb[0].mxu0
    %v901 = vadd.f32 %v812, %v900
    %v902 = vpop.f32.mrb[0].mxu0
    %v903 = vadd.f32 %v814, %v902
    %904 = vmatprep.mubr.f32.mxu0 0.0
    %905 = vmatmul.mubr.f32.gmra.mrb[0].mxu0 %v378
    %v906 = vpop.f32.mrb[0].mxu0
    %v907 = vadd.f32 %v818, %v906
    %v908 = vpop.f32.mrb[0].mxu0
    %v909 = vadd.f32 %v820, %v908
    %910 = vmatprep.mubr.f32.mxu0 0.0
    %911 = vmatmul.mubr.f32.gmra.mrb[0].mxu0 %v381
    %v912 = vpop.f32.mrb[0].mxu0
    %v913 = vadd.f32 %v824, %v912
    %v914 = vpop.f32.mrb[0].mxu0
    %v915 = vadd.f32 %v826, %v914
    %916 = vdwg.mxu0
    %v917 = vmax.f32 %v628, 0.0
    %v918 = vmax.f32 %v630, 0.0
    %v919 = vmax.f32 %v895, 0.0
    %v920 = vmax.f32 %v897, 0.0
    %v921 = vmax.f32 %v634, 0.0
    %v922 = vmax.f32 %v636, 0.0
    %v923 = vmax.f32 %v901, 0.0
    %v924 = vmax.f32 %v903, 0.0
    %v925 = vmax.f32 %v640, 0.0
    %v926 = vmax.f32 %v642, 0.0
    %v927 = vmax.f32 %v907, 0.0
    %v928 = vmax.f32 %v909, 0.0
    %v929 = vmax.f32 %v646, 0.0
    %v930 = vmax.f32 %v648, 0.0
    %v931 = vmax.f32 %v913, 0.0
    %v932 = vmax.f32 %v915, 0.0
    %933 = vst [vmem:[%s3] sm:$0xff] %v917
    %934 = vst [vmem:[%s3 + $0x8] sm:$0xff] %v918
    %935 = vst [vmem:[%s3 + $0x10] sm:$0xff] %v919
    %936 = vst [vmem:[%s3 + $0x18] sm:$0xff] %v920
    %937 = vst [vmem:[%s3 + $0x20] sm:$0xff] %v921
    %938 = vst [vmem:[%s3 + $0x28] sm:$0xff] %v922
    %939 = vst [vmem:[%s3 + $0x30] sm:$0xff] %v923
    %940 = vst [vmem:[%s3 + $0x38] sm:$0xff] %v924
    %941 = vst [vmem:[%s3 + $0x40] sm:$0xff] %v925
    %942 = vst [vmem:[%s3 + $0x48] sm:$0xff] %v926
    %943 = vst [vmem:[%s3 + $0x50] sm:$0xff] %v927
    %944 = vst [vmem:[%s3 + $0x58] sm:$0xff] %v928
    %945 = vst [vmem:[%s3 + $0x60] sm:$0xff] %v929
    %946 = vst [vmem:[%s3 + $0x68] sm:$0xff] %v930
    %947 = vst [vmem:[%s3 + $0x70] sm:$0xff] %v931
    %948 = vst [vmem:[%s3 + $0x78] sm:$0xff] %v932
    // Predicated region
    $region22: #{image_decoder_forward.4} parent=1 // pred_check
      _
    $region23: #{image_decoder_forward.4} parent=1 // pred_check_branch
      %950 = sbr.rel (0) target = $region25
    $region24: #{image_decoder_forward.4} parent=1 // pred_region
      _
    $region25: #{image_decoder_forward.4} parent=1 // pred_fallthru
      _
    // Predicated region
    $region26: #{image_decoder_forward.4} parent=1 // pred_check
      _
    $region27: #{image_decoder_forward.4} parent=1 // pred_check_branch
      %952 = sbr.rel (0) target = $region29
    $region28: #{image_decoder_forward.4} parent=1 // pred_region
      _
    $region29: #{image_decoder_forward.4} parent=1 // pred_fallthru
      _
    %953 = vsyncpa [#allocation3], 1
    %954 = vsyncpa [#allocation5], 1

// kernel: image_decoder_forward.5
$region0: #{image_decoder_forward.5}
  #allocation0 [shape = 'u32[]', space=smem, size = 0x4, offset = 0x4, fixed_abs, tag = 'smem constant byte address 0x4 - core index']
  #allocation1 [shape = 'u32[144,128]{1,0:T(1,128)}', space=vmem, size = 0x12000, scoped, tag = 'internal scratch']
  %s0 = inlined_call_operand.vmem [shape: f32[128,1152], index: 0, kind: input, shape index: {}]
  %s1 = inlined_call_operand.hbm [shape: f32[1152,256], index: 1, kind: input, shape index: {}]
  %s2 = inlined_call_operand.hbm [shape: f32[1,256], index: 2, kind: input, shape index: {}]
  %s3 = inlined_call_operand.vmem [shape: f32[128,256], index: 3, kind: output, shape index: {}]
  %s4 = sld [smem:[#allocation0]]
  $region30: #{image_decoder_forward.5} parent=0
    _
  %s6 = ssub.s32 1, %s4
  %s7 = scalar_select 0, %s6, %s4
  $region1: #{image_decoder_forward.5} parent=0
    #allocation2 [shape = 'u8[1179648]{0}', space=vmem, size = 0x120000, scoped, tag = 'input window, operand 1, single buffered']
    #allocation3 [shape = 's32[1]{0}', space=sflag, size = 0x4, scoped, tag = 'scoped memory for image_decoder_forward.5']
    #allocation4 [shape = 'u8[1024]{0}', space=vmem, size = 0x400, scoped, tag = 'input window, operand 2, single buffered']
    #allocation5 [shape = 's32[1]{0}', space=sflag, size = 0x4, scoped, tag = 'scoped memory for image_decoder_forward.5']
    %8 = vsyncpa [#allocation3], 0
    %9 = vsyncpa [#allocation5], 0
    // Predicated region
    $region2: #{image_decoder_forward.5} parent=1 // pred_check
      _
    $region3: #{image_decoder_forward.5} parent=1 // pred_check_branch
      %11 = sbr.rel (0) target = $region5
    $region4: #{image_decoder_forward.5} parent=1 // pred_region
      _
    $region5: #{image_decoder_forward.5} parent=1 // pred_fallthru
      _
    // Predicated region
    $region6: #{image_decoder_forward.5} parent=1 // pred_check
      _
    $region7: #{image_decoder_forward.5} parent=1 // pred_check_branch
      %13 = sbr.rel (0) target = $region9
    $region8: #{image_decoder_forward.5} parent=1 // pred_region
      %s15 = ssub.s32 36864, 36864
      %16 = vsyncadd [#allocation3], %s15
      %s17 = sshll.u32 [#allocation2], 4
      %s18 = int_to_ptr.vmem [resolvable:$true] %s17
      %23 = dma.hbm_to_vmem [thread:$0]  %s1, 36864, %s18, [#allocation3], 256, 256, 16
    $region9: #{image_decoder_forward.5} parent=1 // pred_fallthru
      _
    // Predicated region
    $region10: #{image_decoder_forward.5} parent=1 // pred_check
      _
    $region11: #{image_decoder_forward.5} parent=1 // pred_check_branch
      %25 = sbr.rel (0) target = $region13
    $region12: #{image_decoder_forward.5} parent=1 // pred_region
      %s27 = ssub.s32 32, 32
      %28 = vsyncadd [#allocation5], %s27
      %s30 = sshll.u32 [#allocation4], 4
      %s31 = int_to_ptr.vmem [resolvable:$true] %s30
      %33 = dma.hbm_to_vmem [thread:$0]  %s2, 32, %s31, [#allocation5]
    $region13: #{image_decoder_forward.5} parent=1 // pred_fallthru
      _
    // Predicated region
    $region14: #{image_decoder_forward.5} parent=1 // pred_check
      _
    $region15: #{image_decoder_forward.5} parent=1 // pred_check_branch
      %35 = sbr.rel (0) target = $region17
    $region16: #{image_decoder_forward.5} parent=1 // pred_region
      %36 = dma.done [#allocation3], 36864
    $region17: #{image_decoder_forward.5} parent=1 // pred_fallthru
      _
    // Predicated region
    $region18: #{image_decoder_forward.5} parent=1 // pred_check
      _
    $region19: #{image_decoder_forward.5} parent=1 // pred_check_branch
      %38 = sbr.rel (0) target = $region21
    $region20: #{image_decoder_forward.5} parent=1 // pred_region
      %39 = dma.done [#allocation5], 32
    $region21: #{image_decoder_forward.5} parent=1 // pred_fallthru
      _
    %v40 = vld [vmem:[%s0] sm:$0xff]
    %v41 = vld [vmem:[%s0 + $0x8] sm:$0xff]
    %v42 = vld [vmem:[%s0 + $0x10] sm:$0xff]
    %v43 = vld [vmem:[%s0 + $0x18] sm:$0xff]
    %v44 = vld [vmem:[%s0 + $0x20] sm:$0xff]
    %v45 = vld [vmem:[%s0 + $0x28] sm:$0xff]
    %v46 = vld [vmem:[%s0 + $0x30] sm:$0xff]
    %v47 = vld [vmem:[%s0 + $0x38] sm:$0xff]
    %v48 = vld [vmem:[%s0 + $0x40] sm:$0xff]
    %v49 = vld [vmem:[%s0 + $0x48] sm:$0xff]
    %v50 = vld [vmem:[%s0 + $0x50] sm:$0xff]
    %v51 = vld [vmem:[%s0 + $0x58] sm:$0xff]
    %v52 = vld [vmem:[%s0 + $0x60] sm:$0xff]
    %v53 = vld [vmem:[%s0 + $0x68] sm:$0xff]
    %v54 = vld [vmem:[%s0 + $0x70] sm:$0xff]
    %v55 = vld [vmem:[%s0 + $0x78] sm:$0xff]
    %v56 = vld [vmem:[%s0 + $0x80] sm:$0xff]
    %v57 = vld [vmem:[%s0 + $0x88] sm:$0xff]
    %v58 = vld [vmem:[%s0 + $0x90] sm:$0xff]
    %v59 = vld [vmem:[%s0 + $0x98] sm:$0xff]
    %v60 = vld [vmem:[%s0 + $0xa0] sm:$0xff]
    %v61 = vld [vmem:[%s0 + $0xa8] sm:$0xff]
    %v62 = vld [vmem:[%s0 + $0xb0] sm:$0xff]
    %v63 = vld [vmem:[%s0 + $0xb8] sm:$0xff]
    %v64 = vld [vmem:[%s0 + $0xc0] sm:$0xff]
    %v65 = vld [vmem:[%s0 + $0xc8] sm:$0xff]
    %v66 = vld [vmem:[%s0 + $0xd0] sm:$0xff]
    %v67 = vld [vmem:[%s0 + $0xd8] sm:$0xff]
    %v68 = vld [vmem:[%s0 + $0xe0] sm:$0xff]
    %v69 = vld [vmem:[%s0 + $0xe8] sm:$0xff]
    %v70 = vld [vmem:[%s0 + $0xf0] sm:$0xff]
    %v71 = vld [vmem:[%s0 + $0xf8] sm:$0xff]
    %v72 = vld [vmem:[%s0 + $0x100] sm:$0xff]
    %v73 = vld [vmem:[%s0 + $0x108] sm:$0xff]
    %v74 = vld [vmem:[%s0 + $0x110] sm:$0xff]
    %v75 = vld [vmem:[%s0 + $0x118] sm:$0xff]
    %v76 = vld [vmem:[%s0 + $0x120] sm:$0xff]
    %v77 = vld [vmem:[%s0 + $0x128] sm:$0xff]
    %v78 = vld [vmem:[%s0 + $0x130] sm:$0xff]
    %v79 = vld [vmem:[%s0 + $0x138] sm:$0xff]
    %v80 = vld [vmem:[%s0 + $0x140] sm:$0xff]
    %v81 = vld [vmem:[%s0 + $0x148] sm:$0xff]
    %v82 = vld [vmem:[%s0 + $0x150] sm:$0xff]
    %v83 = vld [vmem:[%s0 + $0x158] sm:$0xff]
    %v84 = vld [vmem:[%s0 + $0x160] sm:$0xff]
    %v85 = vld [vmem:[%s0 + $0x168] sm:$0xff]
    %v86 = vld [vmem:[%s0 + $0x170] sm:$0xff]
    %v87 = vld [vmem:[%s0 + $0x178] sm:$0xff]
    %v88 = vld [vmem:[%s0 + $0x180] sm:$0xff]
    %v89 = vld [vmem:[%s0 + $0x188] sm:$0xff]
    %v90 = vld [vmem:[%s0 + $0x190] sm:$0xff]
    %v91 = vld [vmem:[%s0 + $0x198] sm:$0xff]
    %v92 = vld [vmem:[%s0 + $0x1a0] sm:$0xff]
    %v93 = vld [vmem:[%s0 + $0x1a8] sm:$0xff]
    %v94 = vld [vmem:[%s0 + $0x1b0] sm:$0xff]
    %v95 = vld [vmem:[%s0 + $0x1b8] sm:$0xff]
    %v96 = vld [vmem:[%s0 + $0x1c0] sm:$0xff]
    %v97 = vld [vmem:[%s0 + $0x1c8] sm:$0xff]
    %v98 = vld [vmem:[%s0 + $0x1d0] sm:$0xff]
    %v99 = vld [vmem:[%s0 + $0x1d8] sm:$0xff]
    %v100 = vld [vmem:[%s0 + $0x1e0] sm:$0xff]
    %v101 = vld [vmem:[%s0 + $0x1e8] sm:$0xff]
    %v102 = vld [vmem:[%s0 + $0x1f0] sm:$0xff]
    %v103 = vld [vmem:[%s0 + $0x1f8] sm:$0xff]
    %v104 = vld [vmem:[%s0 + $0x200] sm:$0xff]
    %v105 = vld [vmem:[%s0 + $0x208] sm:$0xff]
    %v106 = vld [vmem:[%s0 + $0x210] sm:$0xff]
    %v107 = vld [vmem:[%s0 + $0x218] sm:$0xff]
    %v108 = vld [vmem:[%s0 + $0x220] sm:$0xff]
    %v109 = vld [vmem:[%s0 + $0x228] sm:$0xff]
    %v110 = vld [vmem:[%s0 + $0x230] sm:$0xff]
    %v111 = vld [vmem:[%s0 + $0x238] sm:$0xff]
    %v112 = vld [vmem:[%s0 + $0x240] sm:$0xff]
    %v113 = vld [vmem:[%s0 + $0x248] sm:$0xff]
    %v114 = vld [vmem:[%s0 + $0x250] sm:$0xff]
    %v115 = vld [vmem:[%s0 + $0x258] sm:$0xff]
    %v116 = vld [vmem:[%s0 + $0x260] sm:$0xff]
    %v117 = vld [vmem:[%s0 + $0x268] sm:$0xff]
    %v118 = vld [vmem:[%s0 + $0x270] sm:$0xff]
    %v119 = vld [vmem:[%s0 + $0x278] sm:$0xff]
    %v120 = vld [vmem:[%s0 + $0x280] sm:$0xff]
    %v121 = vld [vmem:[%s0 + $0x288] sm:$0xff]
    %v122 = vld [vmem:[%s0 + $0x290] sm:$0xff]
    %v123 = vld [vmem:[%s0 + $0x298] sm:$0xff]
    %v124 = vld [vmem:[%s0 + $0x2a0] sm:$0xff]
    %v125 = vld [vmem:[%s0 + $0x2a8] sm:$0xff]
    %v126 = vld [vmem:[%s0 + $0x2b0] sm:$0xff]
    %v127 = vld [vmem:[%s0 + $0x2b8] sm:$0xff]
    %v128 = vld [vmem:[%s0 + $0x2c0] sm:$0xff]
    %v129 = vld [vmem:[%s0 + $0x2c8] sm:$0xff]
    %v130 = vld [vmem:[%s0 + $0x2d0] sm:$0xff]
    %v131 = vld [vmem:[%s0 + $0x2d8] sm:$0xff]
    %v132 = vld [vmem:[%s0 + $0x2e0] sm:$0xff]
    %v133 = vld [vmem:[%s0 + $0x2e8] sm:$0xff]
    %v134 = vld [vmem:[%s0 + $0x2f0] sm:$0xff]
    %v135 = vld [vmem:[%s0 + $0x2f8] sm:$0xff]
    %v136 = vld [vmem:[%s0 + $0x300] sm:$0xff]
    %v137 = vld [vmem:[%s0 + $0x308] sm:$0xff]
    %v138 = vld [vmem:[%s0 + $0x310] sm:$0xff]
    %v139 = vld [vmem:[%s0 + $0x318] sm:$0xff]
    %v140 = vld [vmem:[%s0 + $0x320] sm:$0xff]
    %v141 = vld [vmem:[%s0 + $0x328] sm:$0xff]
    %v142 = vld [vmem:[%s0 + $0x330] sm:$0xff]
    %v143 = vld [vmem:[%s0 + $0x338] sm:$0xff]
    %v144 = vld [vmem:[%s0 + $0x340] sm:$0xff]
    %v145 = vld [vmem:[%s0 + $0x348] sm:$0xff]
    %v146 = vld [vmem:[%s0 + $0x350] sm:$0xff]
    %v147 = vld [vmem:[%s0 + $0x358] sm:$0xff]
    %v148 = vld [vmem:[%s0 + $0x360] sm:$0xff]
    %v149 = vld [vmem:[%s0 + $0x368] sm:$0xff]
    %v150 = vld [vmem:[%s0 + $0x370] sm:$0xff]
    %v151 = vld [vmem:[%s0 + $0x378] sm:$0xff]
    %v152 = vld [vmem:[%s0 + $0x380] sm:$0xff]
    %v153 = vld [vmem:[%s0 + $0x388] sm:$0xff]
    %v154 = vld [vmem:[%s0 + $0x390] sm:$0xff]
    %v155 = vld [vmem:[%s0 + $0x398] sm:$0xff]
    %v156 = vld [vmem:[%s0 + $0x3a0] sm:$0xff]
    %v157 = vld [vmem:[%s0 + $0x3a8] sm:$0xff]
    %v158 = vld [vmem:[%s0 + $0x3b0] sm:$0xff]
    %v159 = vld [vmem:[%s0 + $0x3b8] sm:$0xff]
    %v160 = vld [vmem:[%s0 + $0x3c0] sm:$0xff]
    %v161 = vld [vmem:[%s0 + $0x3c8] sm:$0xff]
    %v162 = vld [vmem:[%s0 + $0x3d0] sm:$0xff]
    %v163 = vld [vmem:[%s0 + $0x3d8] sm:$0xff]
    %v164 = vld [vmem:[%s0 + $0x3e0] sm:$0xff]
    %v165 = vld [vmem:[%s0 + $0x3e8] sm:$0xff]
    %v166 = vld [vmem:[%s0 + $0x3f0] sm:$0xff]
    %v167 = vld [vmem:[%s0 + $0x3f8] sm:$0xff]
    %v168 = vld [vmem:[%s0 + $0x400] sm:$0xff]
    %v169 = vld [vmem:[%s0 + $0x408] sm:$0xff]
    %v170 = vld [vmem:[%s0 + $0x410] sm:$0xff]
    %v171 = vld [vmem:[%s0 + $0x418] sm:$0xff]
    %v172 = vld [vmem:[%s0 + $0x420] sm:$0xff]
    %v173 = vld [vmem:[%s0 + $0x428] sm:$0xff]
    %v174 = vld [vmem:[%s0 + $0x430] sm:$0xff]
    %v175 = vld [vmem:[%s0 + $0x438] sm:$0xff]
    %v176 = vld [vmem:[%s0 + $0x440] sm:$0xff]
    %v177 = vld [vmem:[%s0 + $0x448] sm:$0xff]
    %v178 = vld [vmem:[%s0 + $0x450] sm:$0xff]
    %v179 = vld [vmem:[%s0 + $0x458] sm:$0xff]
    %v180 = vld [vmem:[%s0 + $0x460] sm:$0xff]
    %v181 = vld [vmem:[%s0 + $0x468] sm:$0xff]
    %v182 = vld [vmem:[%s0 + $0x470] sm:$0xff]
    %v183 = vld [vmem:[%s0 + $0x478] sm:$0xff]
    %v184 = vld [vmem:[#allocation2] sm:$0xff]
    %v185 = vld [vmem:[#allocation2 + $0x8] sm:$0xff]
    %v186 = vld [vmem:[#allocation2 + $0x10] sm:$0xff]
    %v187 = vld [vmem:[#allocation2 + $0x18] sm:$0xff]
    %v188 = vld [vmem:[#allocation2 + $0x20] sm:$0xff]
    %v189 = vld [vmem:[#allocation2 + $0x28] sm:$0xff]
    %v190 = vld [vmem:[#allocation2 + $0x30] sm:$0xff]
    %v191 = vld [vmem:[#allocation2 + $0x38] sm:$0xff]
    %v192 = vld [vmem:[#allocation2 + $0x40] sm:$0xff]
    %v193 = vld [vmem:[#allocation2 + $0x48] sm:$0xff]
    %v194 = vld [vmem:[#allocation2 + $0x50] sm:$0xff]
    %v195 = vld [vmem:[#allocation2 + $0x58] sm:$0xff]
    %v196 = vld [vmem:[#allocation2 + $0x60] sm:$0xff]
    %v197 = vld [vmem:[#allocation2 + $0x68] sm:$0xff]
    %v198 = vld [vmem:[#allocation2 + $0x70] sm:$0xff]
    %v199 = vld [vmem:[#allocation2 + $0x78] sm:$0xff]
    %v200 = vld [vmem:[#allocation2 + $0x80] sm:$0xff]
    %v201 = vld [vmem:[#allocation2 + $0x88] sm:$0xff]
    %v202 = vld [vmem:[#allocation2 + $0x90] sm:$0xff]
    %v203 = vld [vmem:[#allocation2 + $0x98] sm:$0xff]
    %v204 = vld [vmem:[#allocation2 + $0xa0] sm:$0xff]
    %v205 = vld [vmem:[#allocation2 + $0xa8] sm:$0xff]
    %v206 = vld [vmem:[#allocation2 + $0xb0] sm:$0xff]
    %v207 = vld [vmem:[#allocation2 + $0xb8] sm:$0xff]
    %v208 = vld [vmem:[#allocation2 + $0xc0] sm:$0xff]
    %v209 = vld [vmem:[#allocation2 + $0xc8] sm:$0xff]
    %v210 = vld [vmem:[#allocation2 + $0xd0] sm:$0xff]
    %v211 = vld [vmem:[#allocation2 + $0xd8] sm:$0xff]
    %v212 = vld [vmem:[#allocation2 + $0xe0] sm:$0xff]
    %v213 = vld [vmem:[#allocation2 + $0xe8] sm:$0xff]
    %v214 = vld [vmem:[#allocation2 + $0xf0] sm:$0xff]
    %v215 = vld [vmem:[#allocation2 + $0xf8] sm:$0xff]
    %v216 = vld [vmem:[#allocation2 + $0x100] sm:$0xff]
    %v217 = vld [vmem:[#allocation2 + $0x108] sm:$0xff]
    %v218 = vld [vmem:[#allocation2 + $0x110] sm:$0xff]
    %v219 = vld [vmem:[#allocation2 + $0x118] sm:$0xff]
    %v220 = vld [vmem:[#allocation2 + $0x120] sm:$0xff]
    %v221 = vld [vmem:[#allocation2 + $0x128] sm:$0xff]
    %v222 = vld [vmem:[#allocation2 + $0x130] sm:$0xff]
    %v223 = vld [vmem:[#allocation2 + $0x138] sm:$0xff]
    %v224 = vld [vmem:[#allocation2 + $0x140] sm:$0xff]
    %v225 = vld [vmem:[#allocation2 + $0x148] sm:$0xff]
    %v226 = vld [vmem:[#allocation2 + $0x150] sm:$0xff]
    %v227 = vld [vmem:[#allocation2 + $0x158] sm:$0xff]
    %v228 = vld [vmem:[#allocation2 + $0x160] sm:$0xff]
    %v229 = vld [vmem:[#allocation2 + $0x168] sm:$0xff]
    %v230 = vld [vmem:[#allocation2 + $0x170] sm:$0xff]
    %v231 = vld [vmem:[#allocation2 + $0x178] sm:$0xff]
    %v232 = vld [vmem:[#allocation2 + $0x180] sm:$0xff]
    %v233 = vld [vmem:[#allocation2 + $0x188] sm:$0xff]
    %v234 = vld [vmem:[#allocation2 + $0x190] sm:$0xff]
    %v235 = vld [vmem:[#allocation2 + $0x198] sm:$0xff]
    %v236 = vld [vmem:[#allocation2 + $0x1a0] sm:$0xff]
    %v237 = vld [vmem:[#allocation2 + $0x1a8] sm:$0xff]
    %v238 = vld [vmem:[#allocation2 + $0x1b0] sm:$0xff]
    %v239 = vld [vmem:[#allocation2 + $0x1b8] sm:$0xff]
    %v240 = vld [vmem:[#allocation2 + $0x1c0] sm:$0xff]
    %v241 = vld [vmem:[#allocation2 + $0x1c8] sm:$0xff]
    %v242 = vld [vmem:[#allocation2 + $0x1d0] sm:$0xff]
    %v243 = vld [vmem:[#allocation2 + $0x1d8] sm:$0xff]
    %v244 = vld [vmem:[#allocation2 + $0x1e0] sm:$0xff]
    %v245 = vld [vmem:[#allocation2 + $0x1e8] sm:$0xff]
    %v246 = vld [vmem:[#allocation2 + $0x1f0] sm:$0xff]
    %v247 = vld [vmem:[#allocation2 + $0x1f8] sm:$0xff]
    %v248 = vld [vmem:[#allocation2 + $0x200] sm:$0xff]
    %v249 = vld [vmem:[#allocation2 + $0x208] sm:$0xff]
    %v250 = vld [vmem:[#allocation2 + $0x210] sm:$0xff]
    %v251 = vld [vmem:[#allocation2 + $0x218] sm:$0xff]
    %v252 = vld [vmem:[#allocation2 + $0x220] sm:$0xff]
    %v253 = vld [vmem:[#allocation2 + $0x228] sm:$0xff]
    %v254 = vld [vmem:[#allocation2 + $0x230] sm:$0xff]
    %v255 = vld [vmem:[#allocation2 + $0x238] sm:$0xff]
    %v256 = vld [vmem:[#allocation2 + $0x240] sm:$0xff]
    %v257 = vld [vmem:[#allocation2 + $0x248] sm:$0xff]
    %v258 = vld [vmem:[#allocation2 + $0x250] sm:$0xff]
    %v259 = vld [vmem:[#allocation2 + $0x258] sm:$0xff]
    %v260 = vld [vmem:[#allocation2 + $0x260] sm:$0xff]
    %v261 = vld [vmem:[#allocation2 + $0x268] sm:$0xff]
    %v262 = vld [vmem:[#allocation2 + $0x270] sm:$0xff]
    %v263 = vld [vmem:[#allocation2 + $0x278] sm:$0xff]
    %v264 = vld [vmem:[#allocation2 + $0x280] sm:$0xff]
    %v265 = vld [vmem:[#allocation2 + $0x288] sm:$0xff]
    %v266 = vld [vmem:[#allocation2 + $0x290] sm:$0xff]
    %v267 = vld [vmem:[#allocation2 + $0x298] sm:$0xff]
    %v268 = vld [vmem:[#allocation2 + $0x2a0] sm:$0xff]
    %v269 = vld [vmem:[#allocation2 + $0x2a8] sm:$0xff]
    %v270 = vld [vmem:[#allocation2 + $0x2b0] sm:$0xff]
    %v271 = vld [vmem:[#allocation2 + $0x2b8] sm:$0xff]
    %v272 = vld [vmem:[#allocation2 + $0x2c0] sm:$0xff]
    %v273 = vld [vmem:[#allocation2 + $0x2c8] sm:$0xff]
    %v274 = vld [vmem:[#allocation2 + $0x2d0] sm:$0xff]
    %v275 = vld [vmem:[#allocation2 + $0x2d8] sm:$0xff]
    %v276 = vld [vmem:[#allocation2 + $0x2e0] sm:$0xff]
    %v277 = vld [vmem:[#allocation2 + $0x2e8] sm:$0xff]
    %v278 = vld [vmem:[#allocation2 + $0x2f0] sm:$0xff]
    %v279 = vld [vmem:[#allocation2 + $0x2f8] sm:$0xff]
    %v280 = vld [vmem:[#allocation2 + $0x300] sm:$0xff]
    %v281 = vld [vmem:[#allocation2 + $0x308] sm:$0xff]
    %v282 = vld [vmem:[#allocation2 + $0x310] sm:$0xff]
    %v283 = vld [vmem:[#allocation2 + $0x318] sm:$0xff]
    %v284 = vld [vmem:[#allocation2 + $0x320] sm:$0xff]
    %v285 = vld [vmem:[#allocation2 + $0x328] sm:$0xff]
    %v286 = vld [vmem:[#allocation2 + $0x330] sm:$0xff]
    %v287 = vld [vmem:[#allocation2 + $0x338] sm:$0xff]
    %v288 = vld [vmem:[#allocation2 + $0x340] sm:$0xff]
    %v289 = vld [vmem:[#allocation2 + $0x348] sm:$0xff]
    %v290 = vld [vmem:[#allocation2 + $0x350] sm:$0xff]
    %v291 = vld [vmem:[#allocation2 + $0x358] sm:$0xff]
    %v292 = vld [vmem:[#allocation2 + $0x360] sm:$0xff]
    %v293 = vld [vmem:[#allocation2 + $0x368] sm:$0xff]
    %v294 = vld [vmem:[#allocation2 + $0x370] sm:$0xff]
    %v295 = vld [vmem:[#allocation2 + $0x378] sm:$0xff]
    %v296 = vld [vmem:[#allocation2 + $0x380] sm:$0xff]
    %v297 = vld [vmem:[#allocation2 + $0x388] sm:$0xff]
    %v298 = vld [vmem:[#allocation2 + $0x390] sm:$0xff]
    %v299 = vld [vmem:[#allocation2 + $0x398] sm:$0xff]
    %v300 = vld [vmem:[#allocation2 + $0x3a0] sm:$0xff]
    %v301 = vld [vmem:[#allocation2 + $0x3a8] sm:$0xff]
    %v302 = vld [vmem:[#allocation2 + $0x3b0] sm:$0xff]
    %v303 = vld [vmem:[#allocation2 + $0x3b8] sm:$0xff]
    %v304 = vld [vmem:[#allocation2 + $0x3c0] sm:$0xff]
    %v305 = vld [vmem:[#allocation2 + $0x3c8] sm:$0xff]
    %v306 = vld [vmem:[#allocation2 + $0x3d0] sm:$0xff]
    %v307 = vld [vmem:[#allocation2 + $0x3d8] sm:$0xff]
    %v308 = vld [vmem:[#allocation2 + $0x3e0] sm:$0xff]
    %v309 = vld [vmem:[#allocation2 + $0x3e8] sm:$0xff]
    %v310 = vld [vmem:[#allocation2 + $0x3f0] sm:$0xff]
    %v311 = vld [vmem:[#allocation2 + $0x3f8] sm:$0xff]
    %v312 = vld [vmem:[#allocation2 + $0x400] sm:$0xff]
    %v313 = vld [vmem:[#allocation2 + $0x408] sm:$0xff]
    %v314 = vld [vmem:[#allocation2 + $0x410] sm:$0xff]
    %v315 = vld [vmem:[#allocation2 + $0x418] sm:$0xff]
    %v316 = vld [vmem:[#allocation2 + $0x420] sm:$0xff]
    %v317 = vld [vmem:[#allocation2 + $0x428] sm:$0xff]
    %v318 = vld [vmem:[#allocation2 + $0x430] sm:$0xff]
    %v319 = vld [vmem:[#allocation2 + $0x438] sm:$0xff]
    %v320 = vld [vmem:[#allocation2 + $0x440] sm:$0xff]
    %v321 = vld [vmem:[#allocation2 + $0x448] sm:$0xff]
    %v322 = vld [vmem:[#allocation2 + $0x450] sm:$0xff]
    %v323 = vld [vmem:[#allocation2 + $0x458] sm:$0xff]
    %v324 = vld [vmem:[#allocation2 + $0x460] sm:$0xff]
    %v325 = vld [vmem:[#allocation2 + $0x468] sm:$0xff]
    %v326 = vld [vmem:[#allocation2 + $0x470] sm:$0xff]
    %v327 = vld [vmem:[#allocation2 + $0x478] sm:$0xff]
    %v328 = vld [vmem:[#allocation2 + $0x480] sm:$0xff]
    %v329 = vld [vmem:[#allocation2 + $0x488] sm:$0xff]
    %v330 = vld [vmem:[#allocation2 + $0x490] sm:$0xff]
    %v331 = vld [vmem:[#allocation2 + $0x498] sm:$0xff]
    %v332 = vld [vmem:[#allocation2 + $0x4a0] sm:$0xff]
    %v333 = vld [vmem:[#allocation2 + $0x4a8] sm:$0xff]
    %v334 = vld [vmem:[#allocation2 + $0x4b0] sm:$0xff]
    %v335 = vld [vmem:[#allocation2 + $0x4b8] sm:$0xff]
    %v336 = vld [vmem:[#allocation2 + $0x4c0] sm:$0xff]
    %v337 = vld [vmem:[#allocation2 + $0x4c8] sm:$0xff]
    %v338 = vld [vmem:[#allocation2 + $0x4d0] sm:$0xff]
    %v339 = vld [vmem:[#allocation2 + $0x4d8] sm:$0xff]
    %v340 = vld [vmem:[#allocation2 + $0x4e0] sm:$0xff]
    %v341 = vld [vmem:[#allocation2 + $0x4e8] sm:$0xff]
    %v342 = vld [vmem:[#allocation2 + $0x4f0] sm:$0xff]
    %v343 = vld [vmem:[#allocation2 + $0x4f8] sm:$0xff]
    %v344 = vld [vmem:[#allocation2 + $0x500] sm:$0xff]
    %v345 = vld [vmem:[#allocation2 + $0x508] sm:$0xff]
    %v346 = vld [vmem:[#allocation2 + $0x510] sm:$0xff]
    %v347 = vld [vmem:[#allocation2 + $0x518] sm:$0xff]
    %v348 = vld [vmem:[#allocation2 + $0x520] sm:$0xff]
    %v349 = vld [vmem:[#allocation2 + $0x528] sm:$0xff]
    %v350 = vld [vmem:[#allocation2 + $0x530] sm:$0xff]
    %v351 = vld [vmem:[#allocation2 + $0x538] sm:$0xff]
    %v352 = vld [vmem:[#allocation2 + $0x540] sm:$0xff]
    %v353 = vld [vmem:[#allocation2 + $0x548] sm:$0xff]
    %v354 = vld [vmem:[#allocation2 + $0x550] sm:$0xff]
    %v355 = vld [vmem:[#allocation2 + $0x558] sm:$0xff]
    %v356 = vld [vmem:[#allocation2 + $0x560] sm:$0xff]
    %v357 = vld [vmem:[#allocation2 + $0x568] sm:$0xff]
    %v358 = vld [vmem:[#allocation2 + $0x570] sm:$0xff]
    %v359 = vld [vmem:[#allocation2 + $0x578] sm:$0xff]
    %v360 = vld [vmem:[#allocation2 + $0x580] sm:$0xff]
    %v361 = vld [vmem:[#allocation2 + $0x588] sm:$0xff]
    %v362 = vld [vmem:[#allocation2 + $0x590] sm:$0xff]
    %v363 = vld [vmem:[#allocation2 + $0x598] sm:$0xff]
    %v364 = vld [vmem:[#allocation2 + $0x5a0] sm:$0xff]
    %v365 = vld [vmem:[#allocation2 + $0x5a8] sm:$0xff]
    %v366 = vld [vmem:[#allocation2 + $0x5b0] sm:$0xff]
    %v367 = vld [vmem:[#allocation2 + $0x5b8] sm:$0xff]
    %v368 = vld [vmem:[#allocation2 + $0x5c0] sm:$0xff]
    %v369 = vld [vmem:[#allocation2 + $0x5c8] sm:$0xff]
    %v370 = vld [vmem:[#allocation2 + $0x5d0] sm:$0xff]
    %v371 = vld [vmem:[#allocation2 + $0x5d8] sm:$0xff]
    %v372 = vld [vmem:[#allocation2 + $0x5e0] sm:$0xff]
    %v373 = vld [vmem:[#allocation2 + $0x5e8] sm:$0xff]
    %v374 = vld [vmem:[#allocation2 + $0x5f0] sm:$0xff]
    %v375 = vld [vmem:[#allocation2 + $0x5f8] sm:$0xff]
    %v376 = vld [vmem:[#allocation2 + $0x600] sm:$0xff]
    %v377 = vld [vmem:[#allocation2 + $0x608] sm:$0xff]
    %v378 = vld [vmem:[#allocation2 + $0x610] sm:$0xff]
    %v379 = vld [vmem:[#allocation2 + $0x618] sm:$0xff]
    %v380 = vld [vmem:[#allocation2 + $0x620] sm:$0xff]
    %v381 = vld [vmem:[#allocation2 + $0x628] sm:$0xff]
    %v382 = vld [vmem:[#allocation2 + $0x630] sm:$0xff]
    %v383 = vld [vmem:[#allocation2 + $0x638] sm:$0xff]
    %v384 = vld [vmem:[#allocation2 + $0x640] sm:$0xff]
    %v385 = vld [vmem:[#allocation2 + $0x648] sm:$0xff]
    %v386 = vld [vmem:[#allocation2 + $0x650] sm:$0xff]
    %v387 = vld [vmem:[#allocation2 + $0x658] sm:$0xff]
    %v388 = vld [vmem:[#allocation2 + $0x660] sm:$0xff]
    %v389 = vld [vmem:[#allocation2 + $0x668] sm:$0xff]
    %v390 = vld [vmem:[#allocation2 + $0x670] sm:$0xff]
    %v391 = vld [vmem:[#allocation2 + $0x678] sm:$0xff]
    %v392 = vld [vmem:[#allocation2 + $0x680] sm:$0xff]
    %v393 = vld [vmem:[#allocation2 + $0x688] sm:$0xff]
    %v394 = vld [vmem:[#allocation2 + $0x690] sm:$0xff]
    %v395 = vld [vmem:[#allocation2 + $0x698] sm:$0xff]
    %v396 = vld [vmem:[#allocation2 + $0x6a0] sm:$0xff]
    %v397 = vld [vmem:[#allocation2 + $0x6a8] sm:$0xff]
    %v398 = vld [vmem:[#allocation2 + $0x6b0] sm:$0xff]
    %v399 = vld [vmem:[#allocation2 + $0x6b8] sm:$0xff]
    %v400 = vld [vmem:[#allocation2 + $0x6c0] sm:$0xff]
    %v401 = vld [vmem:[#allocation2 + $0x6c8] sm:$0xff]
    %v402 = vld [vmem:[#allocation2 + $0x6d0] sm:$0xff]
    %v403 = vld [vmem:[#allocation2 + $0x6d8] sm:$0xff]
    %v404 = vld [vmem:[#allocation2 + $0x6e0] sm:$0xff]
    %v405 = vld [vmem:[#allocation2 + $0x6e8] sm:$0xff]
    %v406 = vld [vmem:[#allocation2 + $0x6f0] sm:$0xff]
    %v407 = vld [vmem:[#allocation2 + $0x6f8] sm:$0xff]
    %v408 = vld [vmem:[#allocation2 + $0x700] sm:$0xff]
    %v409 = vld [vmem:[#allocation2 + $0x708] sm:$0xff]
    %v410 = vld [vmem:[#allocation2 + $0x710] sm:$0xff]
    %v411 = vld [vmem:[#allocation2 + $0x718] sm:$0xff]
    %v412 = vld [vmem:[#allocation2 + $0x720] sm:$0xff]
    %v413 = vld [vmem:[#allocation2 + $0x728] sm:$0xff]
    %v414 = vld [vmem:[#allocation2 + $0x730] sm:$0xff]
    %v415 = vld [vmem:[#allocation2 + $0x738] sm:$0xff]
    %v416 = vld [vmem:[#allocation2 + $0x740] sm:$0xff]
    %v417 = vld [vmem:[#allocation2 + $0x748] sm:$0xff]
    %v418 = vld [vmem:[#allocation2 + $0x750] sm:$0xff]
    %v419 = vld [vmem:[#allocation2 + $0x758] sm:$0xff]
    %v420 = vld [vmem:[#allocation2 + $0x760] sm:$0xff]
    %v421 = vld [vmem:[#allocation2 + $0x768] sm:$0xff]
    %v422 = vld [vmem:[#allocation2 + $0x770] sm:$0xff]
    %v423 = vld [vmem:[#allocation2 + $0x778] sm:$0xff]
    %v424 = vld [vmem:[#allocation2 + $0x780] sm:$0xff]
    %v425 = vld [vmem:[#allocation2 + $0x788] sm:$0xff]
    %v426 = vld [vmem:[#allocation2 + $0x790] sm:$0xff]
    %v427 = vld [vmem:[#allocation2 + $0x798] sm:$0xff]
    %v428 = vld [vmem:[#allocation2 + $0x7a0] sm:$0xff]
    %v429 = vld [vmem:[#allocation2 + $0x7a8] sm:$0xff]
    %v430 = vld [vmem:[#allocation2 + $0x7b0] sm:$0xff]
    %v431 = vld [vmem:[#allocation2 + $0x7b8] sm:$0xff]
    %v432 = vld [vmem:[#allocation2 + $0x7c0] sm:$0xff]
    %v433 = vld [vmem:[#allocation2 + $0x7c8] sm:$0xff]
    %v434 = vld [vmem:[#allocation2 + $0x7d0] sm:$0xff]
    %v435 = vld [vmem:[#allocation2 + $0x7d8] sm:$0xff]
    %v436 = vld [vmem:[#allocation2 + $0x7e0] sm:$0xff]
    %v437 = vld [vmem:[#allocation2 + $0x7e8] sm:$0xff]
    %v438 = vld [vmem:[#allocation2 + $0x7f0] sm:$0xff]
    %v439 = vld [vmem:[#allocation2 + $0x7f8] sm:$0xff]
    %v440 = vld [vmem:[#allocation2 + $0x800] sm:$0xff]
    %v441 = vld [vmem:[#allocation2 + $0x808] sm:$0xff]
    %v442 = vld [vmem:[#allocation2 + $0x810] sm:$0xff]
    %v443 = vld [vmem:[#allocation2 + $0x818] sm:$0xff]
    %v444 = vld [vmem:[#allocation2 + $0x820] sm:$0xff]
    %v445 = vld [vmem:[#allocation2 + $0x828] sm:$0xff]
    %v446 = vld [vmem:[#allocation2 + $0x830] sm:$0xff]
    %v447 = vld [vmem:[#allocation2 + $0x838] sm:$0xff]
    %v448 = vld [vmem:[#allocation2 + $0x840] sm:$0xff]
    %v449 = vld [vmem:[#allocation2 + $0x848] sm:$0xff]
    %v450 = vld [vmem:[#allocation2 + $0x850] sm:$0xff]
    %v451 = vld [vmem:[#allocation2 + $0x858] sm:$0xff]
    %v452 = vld [vmem:[#allocation2 + $0x860] sm:$0xff]
    %v453 = vld [vmem:[#allocation2 + $0x868] sm:$0xff]
    %v454 = vld [vmem:[#allocation2 + $0x870] sm:$0xff]
    %v455 = vld [vmem:[#allocation2 + $0x878] sm:$0xff]
    %v456 = vld [vmem:[#allocation2 + $0x880] sm:$0xff]
    %v457 = vld [vmem:[#allocation2 + $0x888] sm:$0xff]
    %v458 = vld [vmem:[#allocation2 + $0x890] sm:$0xff]
    %v459 = vld [vmem:[#allocation2 + $0x898] sm:$0xff]
    %v460 = vld [vmem:[#allocation2 + $0x8a0] sm:$0xff]
    %v461 = vld [vmem:[#allocation2 + $0x8a8] sm:$0xff]
    %v462 = vld [vmem:[#allocation2 + $0x8b0] sm:$0xff]
    %v463 = vld [vmem:[#allocation2 + $0x8b8] sm:$0xff]
    %v464 = vld [vmem:[#allocation2 + $0x8c0] sm:$0xff]
    %v465 = vld [vmem:[#allocation2 + $0x8c8] sm:$0xff]
    %v466 = vld [vmem:[#allocation2 + $0x8d0] sm:$0xff]
    %v467 = vld [vmem:[#allocation2 + $0x8d8] sm:$0xff]
    %v468 = vld [vmem:[#allocation2 + $0x8e0] sm:$0xff]
    %v469 = vld [vmem:[#allocation2 + $0x8e8] sm:$0xff]
    %v470 = vld [vmem:[#allocation2 + $0x8f0] sm:$0xff]
    %v471 = vld [vmem:[#allocation2 + $0x8f8] sm:$0xff]
    %v472 = vld [vmem:[#allocation4] sm:$0x3]
    %v474 = vlaneseq
    %v475 = vshrl.u32 %v474, 7
    %v476 = vsub.s32 0, %v475
    %v477 = vrot.slane %v472, %v476
    %v478 = vlaneseq
    %v479 = vshrl.u32 %v478, 7
    %v480 = vsub.s32 1, %v479
    %v481 = vrot.slane %v472, %v480
    %484 = vmatprep.subr.mxu0 %v185
    %485 = vmatpush1.msra.mxu0 %v184
    %486 = vmatprep.subr.mxu0 %v187
    %487 = vmatpush1.msra.mxu0 %v186
    %488 = vmatprep.subr.mxu0 %v189
    %489 = vmatpush1.msra.mxu0 %v188
    %490 = vmatprep.subr.mxu0 %v191
    %491 = vmatpush1.msra.mxu0 %v190
    %492 = vmatprep.subr.mxu0 %v193
    %493 = vmatpush1.msra.mxu0 %v192
    %494 = vmatprep.subr.mxu0 %v195
    %495 = vmatpush1.msra.mxu0 %v194
    %496 = vmatprep.subr.mxu0 %v197
    %497 = vmatpush1.msra.mxu0 %v196
    %498 = vmatprep.subr.mxu0 %v199
    %499 = vmatpush1.msra.mxu0 %v198
    %500 = vmatprep.subr.mxu0 %v201
    %501 = vmatpush1.msra.mxu0 %v200
    %502 = vmatprep.subr.mxu0 %v203
    %503 = vmatpush1.msra.mxu0 %v202
    %504 = vmatprep.subr.mxu0 %v205
    %505 = vmatpush1.msra.mxu0 %v204
    %506 = vmatprep.subr.mxu0 %v207
    %507 = vmatpush1.msra.mxu0 %v206
    %508 = vmatprep.subr.mxu0 %v209
    %509 = vmatpush1.msra.mxu0 %v208
    %510 = vmatprep.subr.mxu0 %v211
    %511 = vmatpush1.msra.mxu0 %v210
    %512 = vmatprep.subr.mxu0 %v213
    %513 = vmatpush1.msra.mxu0 %v212
    %514 = vmatprep.subr.mxu0 %v215
    %515 = vmatpush1.msra.mxu0 %v214
    %516 = vmatprep.subr.mxu0 %v217
    %517 = vmatpush1.msra.mxu0 %v216
    %518 = vmatprep.subr.mxu0 %v219
    %519 = vmatpush1.msra.mxu0 %v218
    %520 = vmatprep.subr.mxu0 %v221
    %521 = vmatpush1.msra.mxu0 %v220
    %522 = vmatprep.subr.mxu0 %v223
    %523 = vmatpush1.msra.mxu0 %v222
    %524 = vmatprep.subr.mxu0 %v225
    %525 = vmatpush1.msra.mxu0 %v224
    %526 = vmatprep.subr.mxu0 %v227
    %527 = vmatpush1.msra.mxu0 %v226
    %528 = vmatprep.subr.mxu0 %v229
    %529 = vmatpush1.msra.mxu0 %v228
    %530 = vmatprep.subr.mxu0 %v231
    %531 = vmatpush1.msra.mxu0 %v230
    %532 = vmatprep.subr.mxu0 %v233
    %533 = vmatpush1.msra.mxu0 %v232
    %534 = vmatprep.subr.mxu0 %v235
    %535 = vmatpush1.msra.mxu0 %v234
    %536 = vmatprep.subr.mxu0 %v237
    %537 = vmatpush1.msra.mxu0 %v236
    %538 = vmatprep.subr.mxu0 %v239
    %539 = vmatpush1.msra.mxu0 %v238
    %540 = vmatprep.subr.mxu0 %v241
    %541 = vmatpush1.msra.mxu0 %v240
    %542 = vmatprep.subr.mxu0 %v243
    %543 = vmatpush1.msra.mxu0 %v242
    %544 = vmatprep.subr.mxu0 %v245
    %545 = vmatpush1.msra.mxu0 %v244
    %546 = vmatprep.subr.mxu0 %v247
    %547 = vmatpush1.msra.mxu0 %v246
    %548 = vmatprep.mubr.f32.mxu0 %v41
    %549 = vmatmul.mubr.f32.gmra.mrb[0].mxu0 %v40
    %v550 = vpop.f32.mrb[0].mxu0
    %v551 = vadd.f32 %v477, %v550
    %v552 = vpop.f32.mrb[0].mxu0
    %v553 = vadd.f32 %v481, %v552
    %554 = vmatprep.mubr.f32.mxu0 %v50
    %555 = vmatmul.mubr.f32.gmra.mrb[0].mxu0 %v49
    %v556 = vpop.f32.mrb[0].mxu0
    %v557 = vadd.f32 %v477, %v556
    %v558 = vpop.f32.mrb[0].mxu0
    %v559 = vadd.f32 %v481, %v558
    %560 = vmatprep.mubr.f32.mxu0 %v59
    %561 = vmatmul.mubr.f32.gmra.mrb[0].mxu0 %v58
    %v562 = vpop.f32.mrb[0].mxu0
    %v563 = vadd.f32 %v477, %v562
    %v564 = vpop.f32.mrb[0].mxu0
    %v565 = vadd.f32 %v481, %v564
    %566 = vmatprep.mubr.f32.mxu0 %v68
    %567 = vmatmul.mubr.f32.gmra.mrb[0].mxu0 %v67
    %v568 = vpop.f32.mrb[0].mxu0
    %v569 = vadd.f32 %v477, %v568
    %v570 = vpop.f32.mrb[0].mxu0
    %v571 = vadd.f32 %v481, %v570
    %572 = vmatprep.mubr.f32.mxu0 %v77
    %573 = vmatmul.mubr.f32.gmra.mrb[0].mxu0 %v76
    %v574 = vpop.f32.mrb[0].mxu0
    %v575 = vadd.f32 %v477, %v574
    %v576 = vpop.f32.mrb[0].mxu0
    %v577 = vadd.f32 %v481, %v576
    %578 = vmatprep.mubr.f32.mxu0 %v86
    %579 = vmatmul.mubr.f32.gmra.mrb[0].mxu0 %v85
    %v580 = vpop.f32.mrb[0].mxu0
    %v581 = vadd.f32 %v477, %v580
    %v582 = vpop.f32.mrb[0].mxu0
    %v583 = vadd.f32 %v481, %v582
    %584 = vmatprep.mubr.f32.mxu0 %v95
    %585 = vmatmul.mubr.f32.gmra.mrb[0].mxu0 %v94
    %v586 = vpop.f32.mrb[0].mxu0
    %v587 = vadd.f32 %v477, %v586
    %v588 = vpop.f32.mrb[0].mxu0
    %v589 = vadd.f32 %v481, %v588
    %590 = vmatprep.mubr.f32.mxu0 %v104
    %591 = vmatmul.mubr.f32.gmra.mrb[0].mxu0 %v103
    %v592 = vpop.f32.mrb[0].mxu0
    %v593 = vadd.f32 %v477, %v592
    %v594 = vpop.f32.mrb[0].mxu0
    %v595 = vadd.f32 %v481, %v594
    %596 = vmatprep.mubr.f32.mxu0 %v113
    %597 = vmatmul.mubr.f32.gmra.mrb[0].mxu0 %v112
    %v598 = vpop.f32.mrb[0].mxu0
    %v599 = vadd.f32 %v477, %v598
    %v600 = vpop.f32.mrb[0].mxu0
    %v601 = vadd.f32 %v481, %v600
    %602 = vmatprep.mubr.f32.mxu0 %v122
    %603 = vmatmul.mubr.f32.gmra.mrb[0].mxu0 %v121
    %v604 = vpop.f32.mrb[0].mxu0
    %v605 = vadd.f32 %v477, %v604
    %v606 = vpop.f32.mrb[0].mxu0
    %v607 = vadd.f32 %v481, %v606
    %608 = vmatprep.mubr.f32.mxu0 %v131
    %609 = vmatmul.mubr.f32.gmra.mrb[0].mxu0 %v130
    %v610 = vpop.f32.mrb[0].mxu0
    %v611 = vadd.f32 %v477, %v610
    %v612 = vpop.f32.mrb[0].mxu0
    %v613 = vadd.f32 %v481, %v612
    %614 = vmatprep.mubr.f32.mxu0 %v140
    %615 = vmatmul.mubr.f32.gmra.mrb[0].mxu0 %v139
    %v616 = vpop.f32.mrb[0].mxu0
    %v617 = vadd.f32 %v477, %v616
    %v618 = vpop.f32.mrb[0].mxu0
    %v619 = vadd.f32 %v481, %v618
    %620 = vmatprep.mubr.f32.mxu0 %v149
    %621 = vmatmul.mubr.f32.gmra.mrb[0].mxu0 %v148
    %v622 = vpop.f32.mrb[0].mxu0
    %v623 = vadd.f32 %v477, %v622
    %v624 = vpop.f32.mrb[0].mxu0
    %v625 = vadd.f32 %v481, %v624
    %626 = vmatprep.mubr.f32.mxu0 %v158
    %627 = vmatmul.mubr.f32.gmra.mrb[0].mxu0 %v157
    %v628 = vpop.f32.mrb[0].mxu0
    %v629 = vadd.f32 %v477, %v628
    %v630 = vpop.f32.mrb[0].mxu0
    %v631 = vadd.f32 %v481, %v630
    %632 = vmatprep.mubr.f32.mxu0 %v167
    %633 = vmatmul.mubr.f32.gmra.mrb[0].mxu0 %v166
    %v634 = vpop.f32.mrb[0].mxu0
    %v635 = vadd.f32 %v477, %v634
    %v636 = vpop.f32.mrb[0].mxu0
    %v637 = vadd.f32 %v481, %v636
    %638 = vmatprep.mubr.f32.mxu0 %v176
    %639 = vmatmul.mubr.f32.gmra.mrb[0].mxu0 %v175
    %v640 = vpop.f32.mrb[0].mxu0
    %v641 = vadd.f32 %v477, %v640
    %v642 = vpop.f32.mrb[0].mxu0
    %v643 = vadd.f32 %v481, %v642
    %644 = vdwg.mxu0
    %645 = vmatprep.subr.mxu0 %v249
    %646 = vmatpush1.msra.mxu0 %v248
    %647 = vmatprep.subr.mxu0 %v251
    %648 = vmatpush1.msra.mxu0 %v250
    %649 = vmatprep.subr.mxu0 %v253
    %650 = vmatpush1.msra.mxu0 %v252
    %651 = vmatprep.subr.mxu0 %v255
    %652 = vmatpush1.msra.mxu0 %v254
    %653 = vmatprep.subr.mxu0 %v257
    %654 = vmatpush1.msra.mxu0 %v256
    %655 = vmatprep.subr.mxu0 %v259
    %656 = vmatpush1.msra.mxu0 %v258
    %657 = vmatprep.subr.mxu0 %v261
    %658 = vmatpush1.msra.mxu0 %v260
    %659 = vmatprep.subr.mxu0 %v263
    %660 = vmatpush1.msra.mxu0 %v262
    %661 = vmatprep.subr.mxu0 %v265
    %662 = vmatpush1.msra.mxu0 %v264
    %663 = vmatprep.subr.mxu0 %v267
    %664 = vmatpush1.msra.mxu0 %v266
    %665 = vmatprep.subr.mxu0 %v269
    %666 = vmatpush1.msra.mxu0 %v268
    %667 = vmatprep.subr.mxu0 %v271
    %668 = vmatpush1.msra.mxu0 %v270
    %669 = vmatprep.subr.mxu0 %v273
    %670 = vmatpush1.msra.mxu0 %v272
    %671 = vmatprep.subr.mxu0 %v275
    %672 = vmatpush1.msra.mxu0 %v274
    %673 = vmatprep.subr.mxu0 %v277
    %674 = vmatpush1.msra.mxu0 %v276
    %675 = vmatprep.subr.mxu0 %v279
    %676 = vmatpush1.msra.mxu0 %v278
    %677 = vmatprep.subr.mxu0 %v281
    %678 = vmatpush1.msra.mxu0 %v280
    %679 = vmatprep.subr.mxu0 %v283
    %680 = vmatpush1.msra.mxu0 %v282
    %681 = vmatprep.subr.mxu0 %v285
    %682 = vmatpush1.msra.mxu0 %v284
    %683 = vmatprep.subr.mxu0 %v287
    %684 = vmatpush1.msra.mxu0 %v286
    %685 = vmatprep.subr.mxu0 %v289
    %686 = vmatpush1.msra.mxu0 %v288
    %687 = vmatprep.subr.mxu0 %v291
    %688 = vmatpush1.msra.mxu0 %v290
    %689 = vmatprep.subr.mxu0 %v293
    %690 = vmatpush1.msra.mxu0 %v292
    %691 = vmatprep.subr.mxu0 %v295
    %692 = vmatpush1.msra.mxu0 %v294
    %693 = vmatprep.subr.mxu0 %v297
    %694 = vmatpush1.msra.mxu0 %v296
    %695 = vmatprep.subr.mxu0 %v299
    %696 = vmatpush1.msra.mxu0 %v298
    %697 = vmatprep.subr.mxu0 %v301
    %698 = vmatpush1.msra.mxu0 %v300
    %699 = vmatprep.subr.mxu0 %v303
    %700 = vmatpush1.msra.mxu0 %v302
    %701 = vmatprep.subr.mxu0 %v305
    %702 = vmatpush1.msra.mxu0 %v304
    %703 = vmatprep.subr.mxu0 %v307
    %704 = vmatpush1.msra.mxu0 %v306
    %705 = vmatprep.subr.mxu0 %v309
    %706 = vmatpush1.msra.mxu0 %v308
    %707 = vmatprep.subr.mxu0 %v311
    %708 = vmatpush1.msra.mxu0 %v310
    %709 = vmatprep.mubr.f32.mxu0 %v43
    %710 = vmatmul.mubr.f32.gmra.mrb[0].mxu0 %v42
    %v711 = vpop.f32.mrb[0].mxu0
    %v712 = vadd.f32 %v551, %v711
    %v713 = vpop.f32.mrb[0].mxu0
    %v714 = vadd.f32 %v553, %v713
    %715 = vmatprep.mubr.f32.mxu0 %v52
    %716 = vmatmul.mubr.f32.gmra.mrb[0].mxu0 %v51
    %v717 = vpop.f32.mrb[0].mxu0
    %v718 = vadd.f32 %v557, %v717
    %v719 = vpop.f32.mrb[0].mxu0
    %v720 = vadd.f32 %v559, %v719
    %721 = vmatprep.mubr.f32.mxu0 %v61
    %722 = vmatmul.mubr.f32.gmra.mrb[0].mxu0 %v60
    %v723 = vpop.f32.mrb[0].mxu0
    %v724 = vadd.f32 %v563, %v723
    %v725 = vpop.f32.mrb[0].mxu0
    %v726 = vadd.f32 %v565, %v725
    %727 = vmatprep.mubr.f32.mxu0 %v70
    %728 = vmatmul.mubr.f32.gmra.mrb[0].mxu0 %v69
    %v729 = vpop.f32.mrb[0].mxu0
    %v730 = vadd.f32 %v569, %v729
    %v731 = vpop.f32.mrb[0].mxu0
    %v732 = vadd.f32 %v571, %v731
    %733 = vmatprep.mubr.f32.mxu0 %v79
    %734 = vmatmul.mubr.f32.gmra.mrb[0].mxu0 %v78
    %v735 = vpop.f32.mrb[0].mxu0
    %v736 = vadd.f32 %v575, %v735
    %v737 = vpop.f32.mrb[0].mxu0
    %v738 = vadd.f32 %v577, %v737
    %739 = vmatprep.mubr.f32.mxu0 %v88
    %740 = vmatmul.mubr.f32.gmra.mrb[0].mxu0 %v87
    %v741 = vpop.f32.mrb[0].mxu0
    %v742 = vadd.f32 %v581, %v741
    %v743 = vpop.f32.mrb[0].mxu0
    %v744 = vadd.f32 %v583, %v743
    %745 = vmatprep.mubr.f32.mxu0 %v97
    %746 = vmatmul.mubr.f32.gmra.mrb[0].mxu0 %v96
    %v747 = vpop.f32.mrb[0].mxu0
    %v748 = vadd.f32 %v587, %v747
    %v749 = vpop.f32.mrb[0].mxu0
    %v750 = vadd.f32 %v589, %v749
    %751 = vmatprep.mubr.f32.mxu0 %v106
    %752 = vmatmul.mubr.f32.gmra.mrb[0].mxu0 %v105
    %v753 = vpop.f32.mrb[0].mxu0
    %v754 = vadd.f32 %v593, %v753
    %v755 = vpop.f32.mrb[0].mxu0
    %v756 = vadd.f32 %v595, %v755
    %757 = vmatprep.mubr.f32.mxu0 %v115
    %758 = vmatmul.mubr.f32.gmra.mrb[0].mxu0 %v114
    %v759 = vpop.f32.mrb[0].mxu0
    %v760 = vadd.f32 %v599, %v759
    %v761 = vpop.f32.mrb[0].mxu0
    %v762 = vadd.f32 %v601, %v761
    %763 = vmatprep.mubr.f32.mxu0 %v124
    %764 = vmatmul.mubr.f32.gmra.mrb[0].mxu0 %v123
    %v765 = vpop.f32.mrb[0].mxu0
    %v766 = vadd.f32 %v605, %v765
    %v767 = vpop.f32.mrb[0].mxu0
    %v768 = vadd.f32 %v607, %v767
    %769 = vmatprep.mubr.f32.mxu0 %v133
    %770 = vmatmul.mubr.f32.gmra.mrb[0].mxu0 %v132
    %v771 = vpop.f32.mrb[0].mxu0
    %v772 = vadd.f32 %v611, %v771
    %v773 = vpop.f32.mrb[0].mxu0
    %v774 = vadd.f32 %v613, %v773
    %775 = vmatprep.mubr.f32.mxu0 %v142
    %776 = vmatmul.mubr.f32.gmra.mrb[0].mxu0 %v141
    %v777 = vpop.f32.mrb[0].mxu0
    %v778 = vadd.f32 %v617, %v777
    %v779 = vpop.f32.mrb[0].mxu0
    %v780 = vadd.f32 %v619, %v779
    %781 = vmatprep.mubr.f32.mxu0 %v151
    %782 = vmatmul.mubr.f32.gmra.mrb[0].mxu0 %v150
    %v783 = vpop.f32.mrb[0].mxu0
    %v784 = vadd.f32 %v623, %v783
    %v785 = vpop.f32.mrb[0].mxu0
    %v786 = vadd.f32 %v625, %v785
    %787 = vmatprep.mubr.f32.mxu0 %v160
    %788 = vmatmul.mubr.f32.gmra.mrb[0].mxu0 %v159
    %v789 = vpop.f32.mrb[0].mxu0
    %v790 = vadd.f32 %v629, %v789
    %v791 = vpop.f32.mrb[0].mxu0
    %v792 = vadd.f32 %v631, %v791
    %793 = vmatprep.mubr.f32.mxu0 %v169
    %794 = vmatmul.mubr.f32.gmra.mrb[0].mxu0 %v168
    %v795 = vpop.f32.mrb[0].mxu0
    %v796 = vadd.f32 %v635, %v795
    %v797 = vpop.f32.mrb[0].mxu0
    %v798 = vadd.f32 %v637, %v797
    %799 = vmatprep.mubr.f32.mxu0 %v178
    %800 = vmatmul.mubr.f32.gmra.mrb[0].mxu0 %v177
    %v801 = vpop.f32.mrb[0].mxu0
    %v802 = vadd.f32 %v641, %v801
    %v803 = vpop.f32.mrb[0].mxu0
    %v804 = vadd.f32 %v643, %v803
    %805 = vdwg.mxu0
    %806 = vmatprep.subr.mxu0 %v313
    %807 = vmatpush1.msra.mxu0 %v312
    %808 = vmatprep.subr.mxu0 %v315
    %809 = vmatpush1.msra.mxu0 %v314
    %810 = vmatprep.subr.mxu0 %v317
    %811 = vmatpush1.msra.mxu0 %v316
    %812 = vmatprep.subr.mxu0 %v319
    %813 = vmatpush1.msra.mxu0 %v318
    %814 = vmatprep.subr.mxu0 %v321
    %815 = vmatpush1.msra.mxu0 %v320
    %816 = vmatprep.subr.mxu0 %v323
    %817 = vmatpush1.msra.mxu0 %v322
    %818 = vmatprep.subr.mxu0 %v325
    %819 = vmatpush1.msra.mxu0 %v324
    %820 = vmatprep.subr.mxu0 %v327
    %821 = vmatpush1.msra.mxu0 %v326
    %822 = vmatprep.subr.mxu0 %v329
    %823 = vmatpush1.msra.mxu0 %v328
    %824 = vmatprep.subr.mxu0 %v331
    %825 = vmatpush1.msra.mxu0 %v330
    %826 = vmatprep.subr.mxu0 %v333
    %827 = vmatpush1.msra.mxu0 %v332
    %828 = vmatprep.subr.mxu0 %v335
    %829 = vmatpush1.msra.mxu0 %v334
    %830 = vmatprep.subr.mxu0 %v337
    %831 = vmatpush1.msra.mxu0 %v336
    %832 = vmatprep.subr.mxu0 %v339
    %833 = vmatpush1.msra.mxu0 %v338
    %834 = vmatprep.subr.mxu0 %v341
    %835 = vmatpush1.msra.mxu0 %v340
    %836 = vmatprep.subr.mxu0 %v343
    %837 = vmatpush1.msra.mxu0 %v342
    %838 = vmatprep.subr.mxu0 %v345
    %839 = vmatpush1.msra.mxu0 %v344
    %840 = vmatprep.subr.mxu0 %v347
    %841 = vmatpush1.msra.mxu0 %v346
    %842 = vmatprep.subr.mxu0 %v349
    %843 = vmatpush1.msra.mxu0 %v348
    %844 = vmatprep.subr.mxu0 %v351
    %845 = vmatpush1.msra.mxu0 %v350
    %846 = vmatprep.subr.mxu0 %v353
    %847 = vmatpush1.msra.mxu0 %v352
    %848 = vmatprep.subr.mxu0 %v355
    %849 = vmatpush1.msra.mxu0 %v354
    %850 = vmatprep.subr.mxu0 %v357
    %851 = vmatpush1.msra.mxu0 %v356
    %852 = vmatprep.subr.mxu0 %v359
    %853 = vmatpush1.msra.mxu0 %v358
    %854 = vmatprep.subr.mxu0 %v361
    %855 = vmatpush1.msra.mxu0 %v360
    %856 = vmatprep.subr.mxu0 %v363
    %857 = vmatpush1.msra.mxu0 %v362
    %858 = vmatprep.subr.mxu0 %v365
    %859 = vmatpush1.msra.mxu0 %v364
    %860 = vmatprep.subr.mxu0 %v367
    %861 = vmatpush1.msra.mxu0 %v366
    %862 = vmatprep.subr.mxu0 %v369
    %863 = vmatpush1.msra.mxu0 %v368
    %864 = vmatprep.subr.mxu0 %v371
    %865 = vmatpush1.msra.mxu0 %v370
    %866 = vmatprep.subr.mxu0 %v373
    %867 = vmatpush1.msra.mxu0 %v372
    %868 = vmatprep.subr.mxu0 %v375
    %869 = vmatpush1.msra.mxu0 %v374
    %870 = vmatprep.mubr.f32.mxu0 %v45
    %871 = vmatmul.mubr.f32.gmra.mrb[0].mxu0 %v44
    %v872 = vpop.f32.mrb[0].mxu0
    %v873 = vadd.f32 %v712, %v872
    %v874 = vpop.f32.mrb[0].mxu0
    %v875 = vadd.f32 %v714, %v874
    %876 = vmatprep.mubr.f32.mxu0 %v54
    %877 = vmatmul.mubr.f32.gmra.mrb[0].mxu0 %v53
    %v878 = vpop.f32.mrb[0].mxu0
    %v879 = vadd.f32 %v718, %v878
    %v880 = vpop.f32.mrb[0].mxu0
    %v881 = vadd.f32 %v720, %v880
    %882 = vmatprep.mubr.f32.mxu0 %v63
    %883 = vmatmul.mubr.f32.gmra.mrb[0].mxu0 %v62
    %v884 = vpop.f32.mrb[0].mxu0
    %v885 = vadd.f32 %v724, %v884
    %v886 = vpop.f32.mrb[0].mxu0
    %v887 = vadd.f32 %v726, %v886
    %888 = vmatprep.mubr.f32.mxu0 %v72
    %889 = vmatmul.mubr.f32.gmra.mrb[0].mxu0 %v71
    %v890 = vpop.f32.mrb[0].mxu0
    %v891 = vadd.f32 %v730, %v890
    %v892 = vpop.f32.mrb[0].mxu0
    %v893 = vadd.f32 %v732, %v892
    %894 = vmatprep.mubr.f32.mxu0 %v81
    %895 = vmatmul.mubr.f32.gmra.mrb[0].mxu0 %v80
    %v896 = vpop.f32.mrb[0].mxu0
    %v897 = vadd.f32 %v736, %v896
    %v898 = vpop.f32.mrb[0].mxu0
    %v899 = vadd.f32 %v738, %v898
    %900 = vmatprep.mubr.f32.mxu0 %v90
    %901 = vmatmul.mubr.f32.gmra.mrb[0].mxu0 %v89
    %v902 = vpop.f32.mrb[0].mxu0
    %v903 = vadd.f32 %v742, %v902
    %v904 = vpop.f32.mrb[0].mxu0
    %v905 = vadd.f32 %v744, %v904
    %906 = vmatprep.mubr.f32.mxu0 %v99
    %907 = vmatmul.mubr.f32.gmra.mrb[0].mxu0 %v98
    %v908 = vpop.f32.mrb[0].mxu0
    %v909 = vadd.f32 %v748, %v908
    %v910 = vpop.f32.mrb[0].mxu0
    %v911 = vadd.f32 %v750, %v910
    %912 = vmatprep.mubr.f32.mxu0 %v108
    %913 = vmatmul.mubr.f32.gmra.mrb[0].mxu0 %v107
    %v914 = vpop.f32.mrb[0].mxu0
    %v915 = vadd.f32 %v754, %v914
    %v916 = vpop.f32.mrb[0].mxu0
    %v917 = vadd.f32 %v756, %v916
    %918 = vmatprep.mubr.f32.mxu0 %v117
    %919 = vmatmul.mubr.f32.gmra.mrb[0].mxu0 %v116
    %v920 = vpop.f32.mrb[0].mxu0
    %v921 = vadd.f32 %v760, %v920
    %v922 = vpop.f32.mrb[0].mxu0
    %v923 = vadd.f32 %v762, %v922
    %924 = vmatprep.mubr.f32.mxu0 %v126
    %925 = vmatmul.mubr.f32.gmra.mrb[0].mxu0 %v125
    %v926 = vpop.f32.mrb[0].mxu0
    %v927 = vadd.f32 %v766, %v926
    %v928 = vpop.f32.mrb[0].mxu0
    %v929 = vadd.f32 %v768, %v928
    %930 = vmatprep.mubr.f32.mxu0 %v135
    %931 = vmatmul.mubr.f32.gmra.mrb[0].mxu0 %v134
    %v932 = vpop.f32.mrb[0].mxu0
    %v933 = vadd.f32 %v772, %v932
    %v934 = vpop.f32.mrb[0].mxu0
    %v935 = vadd.f32 %v774, %v934
    %936 = vmatprep.mubr.f32.mxu0 %v144
    %937 = vmatmul.mubr.f32.gmra.mrb[0].mxu0 %v143
    %v938 = vpop.f32.mrb[0].mxu0
    %v939 = vadd.f32 %v778, %v938
    %v940 = vpop.f32.mrb[0].mxu0
    %v941 = vadd.f32 %v780, %v940
    %942 = vmatprep.mubr.f32.mxu0 %v153
    %943 = vmatmul.mubr.f32.gmra.mrb[0].mxu0 %v152
    %v944 = vpop.f32.mrb[0].mxu0
    %v945 = vadd.f32 %v784, %v944
    %v946 = vpop.f32.mrb[0].mxu0
    %v947 = vadd.f32 %v786, %v946
    %948 = vmatprep.mubr.f32.mxu0 %v162
    %949 = vmatmul.mubr.f32.gmra.mrb[0].mxu0 %v161
    %v950 = vpop.f32.mrb[0].mxu0
    %v951 = vadd.f32 %v790, %v950
    %v952 = vpop.f32.mrb[0].mxu0
    %v953 = vadd.f32 %v792, %v952
    %954 = vmatprep.mubr.f32.mxu0 %v171
    %955 = vmatmul.mubr.f32.gmra.mrb[0].mxu0 %v170
    %v956 = vpop.f32.mrb[0].mxu0
    %v957 = vadd.f32 %v796, %v956
    %v958 = vpop.f32.mrb[0].mxu0
    %v959 = vadd.f32 %v798, %v958
    %960 = vmatprep.mubr.f32.mxu0 %v180
    %961 = vmatmul.mubr.f32.gmra.mrb[0].mxu0 %v179
    %v962 = vpop.f32.mrb[0].mxu0
    %v963 = vadd.f32 %v802, %v962
    %v964 = vpop.f32.mrb[0].mxu0
    %v965 = vadd.f32 %v804, %v964
    %966 = vdwg.mxu0
    %967 = vmatprep.subr.mxu0 %v377
    %968 = vmatpush1.msra.mxu0 %v376
    %969 = vmatprep.subr.mxu0 %v379
    %970 = vmatpush1.msra.mxu0 %v378
    %971 = vmatprep.subr.mxu0 %v381
    %972 = vmatpush1.msra.mxu0 %v380
    %973 = vmatprep.subr.mxu0 %v383
    %974 = vmatpush1.msra.mxu0 %v382
    %975 = vmatprep.subr.mxu0 %v385
    %976 = vmatpush1.msra.mxu0 %v384
    %977 = vmatprep.subr.mxu0 %v387
    %978 = vmatpush1.msra.mxu0 %v386
    %979 = vmatprep.subr.mxu0 %v389
    %980 = vmatpush1.msra.mxu0 %v388
    %981 = vmatprep.subr.mxu0 %v391
    %982 = vmatpush1.msra.mxu0 %v390
    %983 = vmatprep.subr.mxu0 %v393
    %984 = vmatpush1.msra.mxu0 %v392
    %985 = vmatprep.subr.mxu0 %v395
    %986 = vmatpush1.msra.mxu0 %v394
    %987 = vmatprep.subr.mxu0 %v397
    %988 = vmatpush1.msra.mxu0 %v396
    %989 = vmatprep.subr.mxu0 %v399
    %990 = vmatpush1.msra.mxu0 %v398
    %991 = vmatprep.subr.mxu0 %v401
    %992 = vmatpush1.msra.mxu0 %v400
    %993 = vmatprep.subr.mxu0 %v403
    %994 = vmatpush1.msra.mxu0 %v402
    %995 = vmatprep.subr.mxu0 %v405
    %996 = vmatpush1.msra.mxu0 %v404
    %997 = vmatprep.subr.mxu0 %v407
    %998 = vmatpush1.msra.mxu0 %v406
    %999 = vmatprep.subr.mxu0 %v409
    %1000 = vmatpush1.msra.mxu0 %v408
    %1001 = vmatprep.subr.mxu0 %v411
    %1002 = vmatpush1.msra.mxu0 %v410
    %1003 = vmatprep.subr.mxu0 %v413
    %1004 = vmatpush1.msra.mxu0 %v412
    %1005 = vmatprep.subr.mxu0 %v415
    %1006 = vmatpush1.msra.mxu0 %v414
    %1007 = vmatprep.subr.mxu0 %v417
    %1008 = vmatpush1.msra.mxu0 %v416
    %1009 = vmatprep.subr.mxu0 %v419
    %1010 = vmatpush1.msra.mxu0 %v418
    %1011 = vmatprep.subr.mxu0 %v421
    %1012 = vmatpush1.msra.mxu0 %v420
    %1013 = vmatprep.subr.mxu0 %v423
    %1014 = vmatpush1.msra.mxu0 %v422
    %1015 = vmatprep.subr.mxu0 %v425
    %1016 = vmatpush1.msra.mxu0 %v424
    %1017 = vmatprep.subr.mxu0 %v427
    %1018 = vmatpush1.msra.mxu0 %v426
    %1019 = vmatprep.subr.mxu0 %v429
    %1020 = vmatpush1.msra.mxu0 %v428
    %1021 = vmatprep.subr.mxu0 %v431
    %1022 = vmatpush1.msra.mxu0 %v430
    %1023 = vmatprep.subr.mxu0 %v433
    %1024 = vmatpush1.msra.mxu0 %v432
    %1025 = vmatprep.subr.mxu0 %v435
    %1026 = vmatpush1.msra.mxu0 %v434
    %1027 = vmatprep.subr.mxu0 %v437
    %1028 = vmatpush1.msra.mxu0 %v436
    %1029 = vmatprep.subr.mxu0 %v439
    %1030 = vmatpush1.msra.mxu0 %v438
    %1031 = vmatprep.mubr.f32.mxu0 %v47
    %1032 = vmatmul.mubr.f32.gmra.mrb[0].mxu0 %v46
    %v1033 = vpop.f32.mrb[0].mxu0
    %v1034 = vadd.f32 %v873, %v1033
    %v1035 = vpop.f32.mrb[0].mxu0
    %v1036 = vadd.f32 %v875, %v1035
    %1037 = vmatprep.mubr.f32.mxu0 %v56
    %1038 = vmatmul.mubr.f32.gmra.mrb[0].mxu0 %v55
    %v1039 = vpop.f32.mrb[0].mxu0
    %v1040 = vadd.f32 %v879, %v1039
    %v1041 = vpop.f32.mrb[0].mxu0
    %v1042 = vadd.f32 %v881, %v1041
    %1043 = vmatprep.mubr.f32.mxu0 %v65
    %1044 = vmatmul.mubr.f32.gmra.mrb[0].mxu0 %v64
    %v1045 = vpop.f32.mrb[0].mxu0
    %v1046 = vadd.f32 %v885, %v1045
    %v1047 = vpop.f32.mrb[0].mxu0
    %v1048 = vadd.f32 %v887, %v1047
    %1049 = vmatprep.mubr.f32.mxu0 %v74
    %1050 = vmatmul.mubr.f32.gmra.mrb[0].mxu0 %v73
    %v1051 = vpop.f32.mrb[0].mxu0
    %v1052 = vadd.f32 %v891, %v1051
    %v1053 = vpop.f32.mrb[0].mxu0
    %v1054 = vadd.f32 %v893, %v1053
    %1055 = vmatprep.mubr.f32.mxu0 %v83
    %1056 = vmatmul.mubr.f32.gmra.mrb[0].mxu0 %v82
    %v1057 = vpop.f32.mrb[0].mxu0
    %v1058 = vadd.f32 %v897, %v1057
    %v1059 = vpop.f32.mrb[0].mxu0
    %v1060 = vadd.f32 %v899, %v1059
    %1061 = vmatprep.mubr.f32.mxu0 %v92
    %1062 = vmatmul.mubr.f32.gmra.mrb[0].mxu0 %v91
    %v1063 = vpop.f32.mrb[0].mxu0
    %v1064 = vadd.f32 %v903, %v1063
    %v1065 = vpop.f32.mrb[0].mxu0
    %v1066 = vadd.f32 %v905, %v1065
    %1067 = vmatprep.mubr.f32.mxu0 %v101
    %1068 = vmatmul.mubr.f32.gmra.mrb[0].mxu0 %v100
    %v1069 = vpop.f32.mrb[0].mxu0
    %v1070 = vadd.f32 %v909, %v1069
    %v1071 = vpop.f32.mrb[0].mxu0
    %v1072 = vadd.f32 %v911, %v1071
    %1073 = vmatprep.mubr.f32.mxu0 %v110
    %1074 = vmatmul.mubr.f32.gmra.mrb[0].mxu0 %v109
    %v1075 = vpop.f32.mrb[0].mxu0
    %v1076 = vadd.f32 %v915, %v1075
    %v1077 = vpop.f32.mrb[0].mxu0
    %v1078 = vadd.f32 %v917, %v1077
    %1079 = vmatprep.mubr.f32.mxu0 %v119
    %1080 = vmatmul.mubr.f32.gmra.mrb[0].mxu0 %v118
    %v1081 = vpop.f32.mrb[0].mxu0
    %v1082 = vadd.f32 %v921, %v1081
    %v1083 = vpop.f32.mrb[0].mxu0
    %v1084 = vadd.f32 %v923, %v1083
    %1085 = vmatprep.mubr.f32.mxu0 %v128
    %1086 = vmatmul.mubr.f32.gmra.mrb[0].mxu0 %v127
    %v1087 = vpop.f32.mrb[0].mxu0
    %v1088 = vadd.f32 %v927, %v1087
    %v1089 = vpop.f32.mrb[0].mxu0
    %v1090 = vadd.f32 %v929, %v1089
    %1091 = vmatprep.mubr.f32.mxu0 %v137
    %1092 = vmatmul.mubr.f32.gmra.mrb[0].mxu0 %v136
    %v1093 = vpop.f32.mrb[0].mxu0
    %v1094 = vadd.f32 %v933, %v1093
    %v1095 = vpop.f32.mrb[0].mxu0
    %v1096 = vadd.f32 %v935, %v1095
    %1097 = vmatprep.mubr.f32.mxu0 %v146
    %1098 = vmatmul.mubr.f32.gmra.mrb[0].mxu0 %v145
    %v1099 = vpop.f32.mrb[0].mxu0
    %v1100 = vadd.f32 %v939, %v1099
    %v1101 = vpop.f32.mrb[0].mxu0
    %v1102 = vadd.f32 %v941, %v1101
    %1103 = vmatprep.mubr.f32.mxu0 %v155
    %1104 = vmatmul.mubr.f32.gmra.mrb[0].mxu0 %v154
    %v1105 = vpop.f32.mrb[0].mxu0
    %v1106 = vadd.f32 %v945, %v1105
    %v1107 = vpop.f32.mrb[0].mxu0
    %v1108 = vadd.f32 %v947, %v1107
    %1109 = vmatprep.mubr.f32.mxu0 %v164
    %1110 = vmatmul.mubr.f32.gmra.mrb[0].mxu0 %v163
    %v1111 = vpop.f32.mrb[0].mxu0
    %v1112 = vadd.f32 %v951, %v1111
    %v1113 = vpop.f32.mrb[0].mxu0
    %v1114 = vadd.f32 %v953, %v1113
    %1115 = vmatprep.mubr.f32.mxu0 %v173
    %1116 = vmatmul.mubr.f32.gmra.mrb[0].mxu0 %v172
    %v1117 = vpop.f32.mrb[0].mxu0
    %v1118 = vadd.f32 %v957, %v1117
    %v1119 = vpop.f32.mrb[0].mxu0
    %v1120 = vadd.f32 %v959, %v1119
    %1121 = vmatprep.mubr.f32.mxu0 %v182
    %1122 = vmatmul.mubr.f32.gmra.mrb[0].mxu0 %v181
    %v1123 = vpop.f32.mrb[0].mxu0
    %v1124 = vadd.f32 %v963, %v1123
    %v1125 = vpop.f32.mrb[0].mxu0
    %v1126 = vadd.f32 %v965, %v1125
    %1127 = vdwg.mxu0
    %1128 = vmatprep.subr.mxu0 %v441
    %1129 = vmatpush1.msra.mxu0 %v440
    %1130 = vmatprep.subr.mxu0 %v443
    %1131 = vmatpush1.msra.mxu0 %v442
    %1132 = vmatprep.subr.mxu0 %v445
    %1133 = vmatpush1.msra.mxu0 %v444
    %1134 = vmatprep.subr.mxu0 %v447
    %1135 = vmatpush1.msra.mxu0 %v446
    %1136 = vmatprep.subr.mxu0 %v449
    %1137 = vmatpush1.msra.mxu0 %v448
    %1138 = vmatprep.subr.mxu0 %v451
    %1139 = vmatpush1.msra.mxu0 %v450
    %1140 = vmatprep.subr.mxu0 %v453
    %1141 = vmatpush1.msra.mxu0 %v452
    %1142 = vmatprep.subr.mxu0 %v455
    %1143 = vmatpush1.msra.mxu0 %v454
    %1144 = vmatprep.subr.mxu0 %v457
    %1145 = vmatpush1.msra.mxu0 %v456
    %1146 = vmatprep.subr.mxu0 %v459
    %1147 = vmatpush1.msra.mxu0 %v458
    %1148 = vmatprep.subr.mxu0 %v461
    %1149 = vmatpush1.msra.mxu0 %v460
    %1150 = vmatprep.subr.mxu0 %v463
    %1151 = vmatpush1.msra.mxu0 %v462
    %1152 = vmatprep.subr.mxu0 %v465
    %1153 = vmatpush1.msra.mxu0 %v464
    %1154 = vmatprep.subr.mxu0 %v467
    %1155 = vmatpush1.msra.mxu0 %v466
    %1156 = vmatprep.subr.mxu0 %v469
    %1157 = vmatpush1.msra.mxu0 %v468
    %1158 = vmatprep.subr.mxu0 %v471
    %1159 = vmatpush1.msra.mxu0 %v470
    %1160 = vmatprep.subr.mxu0 0.0
    %1161 = vmatpush1.msra.mxu0 0.0
    %1162 = vmatprep.subr.mxu0 0.0
    %1163 = vmatpush1.msra.mxu0 0.0
    %1164 = vmatprep.subr.mxu0 0.0
    %1165 = vmatpush1.msra.mxu0 0.0
    %1166 = vmatprep.subr.mxu0 0.0
    %1167 = vmatpush1.msra.mxu0 0.0
    %1168 = vmatprep.subr.mxu0 0.0
    %1169 = vmatpush1.msra.mxu0 0.0
    %1170 = vmatprep.subr.mxu0 0.0
    %1171 = vmatpush1.msra.mxu0 0.0
    %1172 = vmatprep.subr.mxu0 0.0
    %1173 = vmatpush1.msra.mxu0 0.0
    %1174 = vmatprep.subr.mxu0 0.0
    %1175 = vmatpush1.msra.mxu0 0.0
    %1176 = vmatprep.subr.mxu0 0.0
    %1177 = vmatpush1.msra.mxu0 0.0
    %1178 = vmatprep.subr.mxu0 0.0
    %1179 = vmatpush1.msra.mxu0 0.0
    %1180 = vmatprep.subr.mxu0 0.0
    %1181 = vmatpush1.msra.mxu0 0.0
    %1182 = vmatprep.subr.mxu0 0.0
    %1183 = vmatpush1.msra.mxu0 0.0
    %1184 = vmatprep.subr.mxu0 0.0
    %1185 = vmatpush1.msra.mxu0 0.0
    %1186 = vmatprep.subr.mxu0 0.0
    %1187 = vmatpush1.msra.mxu0 0.0
    %1188 = vmatprep.subr.mxu0 0.0
    %1189 = vmatpush1.msra.mxu0 0.0
    %1190 = vmatprep.subr.mxu0 0.0
    %1191 = vmatpush1.msra.mxu0 0.0
    %1192 = vmatprep.mubr.f32.mxu0 0.0
    %1193 = vmatmul.mubr.f32.gmra.mrb[0].mxu0 %v48
    %v1194 = vpop.f32.mrb[0].mxu0
    %v1195 = vadd.f32 %v1034, %v1194
    %v1196 = vpop.f32.mrb[0].mxu0
    %v1197 = vadd.f32 %v1036, %v1196
    %1198 = vmatprep.mubr.f32.mxu0 0.0
    %1199 = vmatmul.mubr.f32.gmra.mrb[0].mxu0 %v57
    %v1200 = vpop.f32.mrb[0].mxu0
    %v1201 = vadd.f32 %v1040, %v1200
    %v1202 = vpop.f32.mrb[0].mxu0
    %v1203 = vadd.f32 %v1042, %v1202
    %1204 = vmatprep.mubr.f32.mxu0 0.0
    %1205 = vmatmul.mubr.f32.gmra.mrb[0].mxu0 %v66
    %v1206 = vpop.f32.mrb[0].mxu0
    %v1207 = vadd.f32 %v1046, %v1206
    %v1208 = vpop.f32.mrb[0].mxu0
    %v1209 = vadd.f32 %v1048, %v1208
    %1210 = vmatprep.mubr.f32.mxu0 0.0
    %1211 = vmatmul.mubr.f32.gmra.mrb[0].mxu0 %v75
    %v1212 = vpop.f32.mrb[0].mxu0
    %v1213 = vadd.f32 %v1052, %v1212
    %v1214 = vpop.f32.mrb[0].mxu0
    %v1215 = vadd.f32 %v1054, %v1214
    %1216 = vmatprep.mubr.f32.mxu0 0.0
    %1217 = vmatmul.mubr.f32.gmra.mrb[0].mxu0 %v84
    %v1218 = vpop.f32.mrb[0].mxu0
    %v1219 = vadd.f32 %v1058, %v1218
    %v1220 = vpop.f32.mrb[0].mxu0
    %v1221 = vadd.f32 %v1060, %v1220
    %1222 = vmatprep.mubr.f32.mxu0 0.0
    %1223 = vmatmul.mubr.f32.gmra.mrb[0].mxu0 %v93
    %v1224 = vpop.f32.mrb[0].mxu0
    %v1225 = vadd.f32 %v1064, %v1224
    %v1226 = vpop.f32.mrb[0].mxu0
    %v1227 = vadd.f32 %v1066, %v1226
    %1228 = vmatprep.mubr.f32.mxu0 0.0
    %1229 = vmatmul.mubr.f32.gmra.mrb[0].mxu0 %v102
    %v1230 = vpop.f32.mrb[0].mxu0
    %v1231 = vadd.f32 %v1070, %v1230
    %v1232 = vpop.f32.mrb[0].mxu0
    %v1233 = vadd.f32 %v1072, %v1232
    %1234 = vmatprep.mubr.f32.mxu0 0.0
    %1235 = vmatmul.mubr.f32.gmra.mrb[0].mxu0 %v111
    %v1236 = vpop.f32.mrb[0].mxu0
    %v1237 = vadd.f32 %v1076, %v1236
    %v1238 = vpop.f32.mrb[0].mxu0
    %v1239 = vadd.f32 %v1078, %v1238
    %1240 = vmatprep.mubr.f32.mxu0 0.0
    %1241 = vmatmul.mubr.f32.gmra.mrb[0].mxu0 %v120
    %v1242 = vpop.f32.mrb[0].mxu0
    %v1243 = vadd.f32 %v1082, %v1242
    %v1244 = vpop.f32.mrb[0].mxu0
    %v1245 = vadd.f32 %v1084, %v1244
    %1246 = vmatprep.mubr.f32.mxu0 0.0
    %1247 = vmatmul.mubr.f32.gmra.mrb[0].mxu0 %v129
    %v1248 = vpop.f32.mrb[0].mxu0
    %v1249 = vadd.f32 %v1088, %v1248
    %v1250 = vpop.f32.mrb[0].mxu0
    %v1251 = vadd.f32 %v1090, %v1250
    %1252 = vmatprep.mubr.f32.mxu0 0.0
    %1253 = vmatmul.mubr.f32.gmra.mrb[0].mxu0 %v138
    %v1254 = vpop.f32.mrb[0].mxu0
    %v1255 = vadd.f32 %v1094, %v1254
    %v1256 = vpop.f32.mrb[0].mxu0
    %v1257 = vadd.f32 %v1096, %v1256
    %1258 = vmatprep.mubr.f32.mxu0 0.0
    %1259 = vmatmul.mubr.f32.gmra.mrb[0].mxu0 %v147
    %v1260 = vpop.f32.mrb[0].mxu0
    %v1261 = vadd.f32 %v1100, %v1260
    %v1262 = vpop.f32.mrb[0].mxu0
    %v1263 = vadd.f32 %v1102, %v1262
    %1264 = vmatprep.mubr.f32.mxu0 0.0
    %1265 = vmatmul.mubr.f32.gmra.mrb[0].mxu0 %v156
    %v1266 = vpop.f32.mrb[0].mxu0
    %v1267 = vadd.f32 %v1106, %v1266
    %v1268 = vpop.f32.mrb[0].mxu0
    %v1269 = vadd.f32 %v1108, %v1268
    %1270 = vmatprep.mubr.f32.mxu0 0.0
    %1271 = vmatmul.mubr.f32.gmra.mrb[0].mxu0 %v165
    %v1272 = vpop.f32.mrb[0].mxu0
    %v1273 = vadd.f32 %v1112, %v1272
    %v1274 = vpop.f32.mrb[0].mxu0
    %v1275 = vadd.f32 %v1114, %v1274
    %1276 = vmatprep.mubr.f32.mxu0 0.0
    %1277 = vmatmul.mubr.f32.gmra.mrb[0].mxu0 %v174
    %v1278 = vpop.f32.mrb[0].mxu0
    %v1279 = vadd.f32 %v1118, %v1278
    %v1280 = vpop.f32.mrb[0].mxu0
    %v1281 = vadd.f32 %v1120, %v1280
    %1282 = vmatprep.mubr.f32.mxu0 0.0
    %1283 = vmatmul.mubr.f32.gmra.mrb[0].mxu0 %v183
    %v1284 = vpop.f32.mrb[0].mxu0
    %v1285 = vadd.f32 %v1124, %v1284
    %v1286 = vpop.f32.mrb[0].mxu0
    %v1287 = vadd.f32 %v1126, %v1286
    %1288 = vdwg.mxu0
    %v1289 = vmax.f32 %v1195, 0.0
    %v1290 = vmax.f32 %v1197, 0.0
    %v1291 = vmax.f32 %v1201, 0.0
    %v1292 = vmax.f32 %v1203, 0.0
    %v1293 = vmax.f32 %v1207, 0.0
    %v1294 = vmax.f32 %v1209, 0.0
    %v1295 = vmax.f32 %v1213, 0.0
    %v1296 = vmax.f32 %v1215, 0.0
    %v1297 = vmax.f32 %v1219, 0.0
    %v1298 = vmax.f32 %v1221, 0.0
    %v1299 = vmax.f32 %v1225, 0.0
    %v1300 = vmax.f32 %v1227, 0.0
    %v1301 = vmax.f32 %v1231, 0.0
    %v1302 = vmax.f32 %v1233, 0.0
    %v1303 = vmax.f32 %v1237, 0.0
    %v1304 = vmax.f32 %v1239, 0.0
    %v1305 = vmax.f32 %v1243, 0.0
    %v1306 = vmax.f32 %v1245, 0.0
    %v1307 = vmax.f32 %v1249, 0.0
    %v1308 = vmax.f32 %v1251, 0.0
    %v1309 = vmax.f32 %v1255, 0.0
    %v1310 = vmax.f32 %v1257, 0.0
    %v1311 = vmax.f32 %v1261, 0.0
    %v1312 = vmax.f32 %v1263, 0.0
    %v1313 = vmax.f32 %v1267, 0.0
    %v1314 = vmax.f32 %v1269, 0.0
    %v1315 = vmax.f32 %v1273, 0.0
    %v1316 = vmax.f32 %v1275, 0.0
    %v1317 = vmax.f32 %v1279, 0.0
    %v1318 = vmax.f32 %v1281, 0.0
    %v1319 = vmax.f32 %v1285, 0.0
    %v1320 = vmax.f32 %v1287, 0.0
    %1321 = vst [vmem:[%s3] sm:$0xff] %v1289
    %1322 = vst [vmem:[%s3 + $0x8] sm:$0xff] %v1290
    %1323 = vst [vmem:[%s3 + $0x10] sm:$0xff] %v1291
    %1324 = vst [vmem:[%s3 + $0x18] sm:$0xff] %v1292
    %1325 = vst [vmem:[%s3 + $0x20] sm:$0xff] %v1293
    %1326 = vst [vmem:[%s3 + $0x28] sm:$0xff] %v1294
    %1327 = vst [vmem:[%s3 + $0x30] sm:$0xff] %v1295
    %1328 = vst [vmem:[%s3 + $0x38] sm:$0xff] %v1296
    %1329 = vst [vmem:[%s3 + $0x40] sm:$0xff] %v1297
    %1330 = vst [vmem:[%s3 + $0x48] sm:$0xff] %v1298
    %1331 = vst [vmem:[%s3 + $0x50] sm:$0xff] %v1299
    %1332 = vst [vmem:[%s3 + $0x58] sm:$0xff] %v1300
    %1333 = vst [vmem:[%s3 + $0x60] sm:$0xff] %v1301
    %1334 = vst [vmem:[%s3 + $0x68] sm:$0xff] %v1302
    %1335 = vst [vmem:[%s3 + $0x70] sm:$0xff] %v1303
    %1336 = vst [vmem:[%s3 + $0x78] sm:$0xff] %v1304
    %1337 = vst [vmem:[%s3 + $0x80] sm:$0xff] %v1305
    %1338 = vst [vmem:[%s3 + $0x88] sm:$0xff] %v1306
    %1339 = vst [vmem:[%s3 + $0x90] sm:$0xff] %v1307
    %1340 = vst [vmem:[%s3 + $0x98] sm:$0xff] %v1308
    %1341 = vst [vmem:[%s3 + $0xa0] sm:$0xff] %v1309
    %1342 = vst [vmem:[%s3 + $0xa8] sm:$0xff] %v1310
    %1343 = vst [vmem:[%s3 + $0xb0] sm:$0xff] %v1311
    %1344 = vst [vmem:[%s3 + $0xb8] sm:$0xff] %v1312
    %1345 = vst [vmem:[%s3 + $0xc0] sm:$0xff] %v1313
    %1346 = vst [vmem:[%s3 + $0xc8] sm:$0xff] %v1314
    %1347 = vst [vmem:[%s3 + $0xd0] sm:$0xff] %v1315
    %1348 = vst [vmem:[%s3 + $0xd8] sm:$0xff] %v1316
    %1349 = vst [vmem:[%s3 + $0xe0] sm:$0xff] %v1317
    %1350 = vst [vmem:[%s3 + $0xe8] sm:$0xff] %v1318
    %1351 = vst [vmem:[%s3 + $0xf0] sm:$0xff] %v1319
    %1352 = vst [vmem:[%s3 + $0xf8] sm:$0xff] %v1320
    // Predicated region
    $region22: #{image_decoder_forward.5} parent=1 // pred_check
      _
    $region23: #{image_decoder_forward.5} parent=1 // pred_check_branch
      %1354 = sbr.rel (0) target = $region25
    $region24: #{image_decoder_forward.5} parent=1 // pred_region
      _
    $region25: #{image_decoder_forward.5} parent=1 // pred_fallthru
      _
    // Predicated region
    $region26: #{image_decoder_forward.5} parent=1 // pred_check
      _
    $region27: #{image_decoder_forward.5} parent=1 // pred_check_branch
      %1356 = sbr.rel (0) target = $region29
    $region28: #{image_decoder_forward.5} parent=1 // pred_region
      _
    $region29: #{image_decoder_forward.5} parent=1 // pred_fallthru
      _
    %1357 = vsyncpa [#allocation3], 1
    %1358 = vsyncpa [#allocation5], 1

// kernel: image_decoder_forward.6
$region0: #{image_decoder_forward.6}
  #allocation0 [shape = 'u32[]', space=smem, size = 0x4, offset = 0x4, fixed_abs, tag = 'smem constant byte address 0x4 - core index']
  #allocation1 [shape = 'u32[144,128]{1,0:T(1,128)}', space=vmem, size = 0x12000, scoped, tag = 'internal scratch']
  %s0 = inlined_call_operand.vmem [shape: f32[512,576], index: 0, kind: input, shape index: {}]
  %s1 = inlined_call_operand.vmem [shape: f32[576,128], index: 1, kind: input, shape index: {}]
  %s2 = inlined_call_operand.vmem [shape: f32[1,128], index: 2, kind: input, shape index: {}]
  %s3 = inlined_call_operand.vmem [shape: f32[512,128], index: 3, kind: output, shape index: {}]
  %s4 = sld [smem:[#allocation0]]
  $region22: #{image_decoder_forward.6} parent=0
    _
  %s6 = ssub.s32 1, %s4
  %s7 = scalar_select 0, %s6, %s4
  // Predicated region
  $region2: #{image_decoder_forward.6} parent=0 // pred_check
    _
  $region3: #{image_decoder_forward.6} parent=0 // pred_check_branch
    %9 = sbr.rel (0) target = $region5
  $region4: #{image_decoder_forward.6} parent=0 // pred_region
    _
  $region5: #{image_decoder_forward.6} parent=0 // pred_fallthru
    _
  // Predicated region
  $region6: #{image_decoder_forward.6} parent=0 // pred_check
    _
  $region7: #{image_decoder_forward.6} parent=0 // pred_check_branch
    %11 = sbr.rel (0) target = $region9
  $region8: #{image_decoder_forward.6} parent=0 // pred_region
    _
  $region9: #{image_decoder_forward.6} parent=0 // pred_fallthru
    _
  // Predicated region
  $region10: #{image_decoder_forward.6} parent=0 // pred_check
    _
  $region11: #{image_decoder_forward.6} parent=0 // pred_check_branch
    %13 = sbr.rel (0) target = $region13
  $region12: #{image_decoder_forward.6} parent=0 // pred_region
    _
  $region13: #{image_decoder_forward.6} parent=0 // pred_fallthru
    _
  %v14 = vld [vmem:[%s0] sm:$0xff]
  %v15 = vld [vmem:[%s0 + $0x8] sm:$0xff]
  %v16 = vld [vmem:[%s0 + $0x10] sm:$0xff]
  %v17 = vld [vmem:[%s0 + $0x18] sm:$0xff]
  %v18 = vld [vmem:[%s0 + $0x20] sm:$0xff]
  %v19 = vld [vmem:[%s0 + $0x28] sm:$0xff]
  %v20 = vld [vmem:[%s0 + $0x30] sm:$0xff]
  %v21 = vld [vmem:[%s0 + $0x38] sm:$0xff]
  %v22 = vld [vmem:[%s0 + $0x40] sm:$0xff]
  %v23 = vld [vmem:[%s0 + $0x48] sm:$0xff]
  %v24 = vld [vmem:[%s0 + $0x50] sm:$0xff]
  %v25 = vld [vmem:[%s0 + $0x58] sm:$0xff]
  %v26 = vld [vmem:[%s0 + $0x60] sm:$0xff]
  %v27 = vld [vmem:[%s0 + $0x68] sm:$0xff]
  %v28 = vld [vmem:[%s0 + $0x70] sm:$0xff]
  %v29 = vld [vmem:[%s0 + $0x78] sm:$0xff]
  %v30 = vld [vmem:[%s0 + $0x80] sm:$0xff]
  %v31 = vld [vmem:[%s0 + $0x88] sm:$0xff]
  %v32 = vld [vmem:[%s0 + $0x90] sm:$0xff]
  %v33 = vld [vmem:[%s0 + $0x98] sm:$0xff]
  %v34 = vld [vmem:[%s0 + $0xa0] sm:$0xff]
  %v35 = vld [vmem:[%s0 + $0xa8] sm:$0xff]
  %v36 = vld [vmem:[%s0 + $0xb0] sm:$0xff]
  %v37 = vld [vmem:[%s0 + $0xb8] sm:$0xff]
  %v38 = vld [vmem:[%s0 + $0xc0] sm:$0xff]
  %v39 = vld [vmem:[%s0 + $0xc8] sm:$0xff]
  %v40 = vld [vmem:[%s0 + $0xd0] sm:$0xff]
  %v41 = vld [vmem:[%s0 + $0xd8] sm:$0xff]
  %v42 = vld [vmem:[%s0 + $0xe0] sm:$0xff]
  %v43 = vld [vmem:[%s0 + $0xe8] sm:$0xff]
  %v44 = vld [vmem:[%s0 + $0xf0] sm:$0xff]
  %v45 = vld [vmem:[%s0 + $0xf8] sm:$0xff]
  %v46 = vld [vmem:[%s0 + $0x100] sm:$0xff]
  %v47 = vld [vmem:[%s0 + $0x108] sm:$0xff]
  %v48 = vld [vmem:[%s0 + $0x110] sm:$0xff]
  %v49 = vld [vmem:[%s0 + $0x118] sm:$0xff]
  %v50 = vld [vmem:[%s0 + $0x120] sm:$0xff]
  %v51 = vld [vmem:[%s0 + $0x128] sm:$0xff]
  %v52 = vld [vmem:[%s0 + $0x130] sm:$0xff]
  %v53 = vld [vmem:[%s0 + $0x138] sm:$0xff]
  %v54 = vld [vmem:[%s0 + $0x140] sm:$0xff]
  %v55 = vld [vmem:[%s0 + $0x148] sm:$0xff]
  %v56 = vld [vmem:[%s0 + $0x150] sm:$0xff]
  %v57 = vld [vmem:[%s0 + $0x158] sm:$0xff]
  %v58 = vld [vmem:[%s0 + $0x160] sm:$0xff]
  %v59 = vld [vmem:[%s0 + $0x168] sm:$0xff]
  %v60 = vld [vmem:[%s0 + $0x170] sm:$0xff]
  %v61 = vld [vmem:[%s0 + $0x178] sm:$0xff]
  %v62 = vld [vmem:[%s0 + $0x180] sm:$0xff]
  %v63 = vld [vmem:[%s0 + $0x188] sm:$0xff]
  %v64 = vld [vmem:[%s0 + $0x190] sm:$0xff]
  %v65 = vld [vmem:[%s0 + $0x198] sm:$0xff]
  %v66 = vld [vmem:[%s0 + $0x1a0] sm:$0xff]
  %v67 = vld [vmem:[%s0 + $0x1a8] sm:$0xff]
  %v68 = vld [vmem:[%s0 + $0x1b0] sm:$0xff]
  %v69 = vld [vmem:[%s0 + $0x1b8] sm:$0xff]
  %v70 = vld [vmem:[%s0 + $0x1c0] sm:$0xff]
  %v71 = vld [vmem:[%s0 + $0x1c8] sm:$0xff]
  %v72 = vld [vmem:[%s0 + $0x1d0] sm:$0xff]
  %v73 = vld [vmem:[%s0 + $0x1d8] sm:$0xff]
  %v74 = vld [vmem:[%s0 + $0x1e0] sm:$0xff]
  %v75 = vld [vmem:[%s0 + $0x1e8] sm:$0xff]
  %v76 = vld [vmem:[%s0 + $0x1f0] sm:$0xff]
  %v77 = vld [vmem:[%s0 + $0x1f8] sm:$0xff]
  %v78 = vld [vmem:[%s0 + $0x200] sm:$0xff]
  %v79 = vld [vmem:[%s0 + $0x208] sm:$0xff]
  %v80 = vld [vmem:[%s0 + $0x210] sm:$0xff]
  %v81 = vld [vmem:[%s0 + $0x218] sm:$0xff]
  %v82 = vld [vmem:[%s0 + $0x220] sm:$0xff]
  %v83 = vld [vmem:[%s0 + $0x228] sm:$0xff]
  %v84 = vld [vmem:[%s0 + $0x230] sm:$0xff]
  %v85 = vld [vmem:[%s0 + $0x238] sm:$0xff]
  %v86 = vld [vmem:[%s0 + $0x240] sm:$0xff]
  %v87 = vld [vmem:[%s0 + $0x248] sm:$0xff]
  %v88 = vld [vmem:[%s0 + $0x250] sm:$0xff]
  %v89 = vld [vmem:[%s0 + $0x258] sm:$0xff]
  %v90 = vld [vmem:[%s0 + $0x260] sm:$0xff]
  %v91 = vld [vmem:[%s0 + $0x268] sm:$0xff]
  %v92 = vld [vmem:[%s0 + $0x270] sm:$0xff]
  %v93 = vld [vmem:[%s0 + $0x278] sm:$0xff]
  %v94 = vld [vmem:[%s0 + $0x280] sm:$0xff]
  %v95 = vld [vmem:[%s0 + $0x288] sm:$0xff]
  %v96 = vld [vmem:[%s0 + $0x290] sm:$0xff]
  %v97 = vld [vmem:[%s0 + $0x298] sm:$0xff]
  %v98 = vld [vmem:[%s0 + $0x2a0] sm:$0xff]
  %v99 = vld [vmem:[%s0 + $0x2a8] sm:$0xff]
  %v100 = vld [vmem:[%s0 + $0x2b0] sm:$0xff]
  %v101 = vld [vmem:[%s0 + $0x2b8] sm:$0xff]
  %v102 = vld [vmem:[%s0 + $0x2c0] sm:$0xff]
  %v103 = vld [vmem:[%s0 + $0x2c8] sm:$0xff]
  %v104 = vld [vmem:[%s0 + $0x2d0] sm:$0xff]
  %v105 = vld [vmem:[%s0 + $0x2d8] sm:$0xff]
  %v106 = vld [vmem:[%s0 + $0x2e0] sm:$0xff]
  %v107 = vld [vmem:[%s0 + $0x2e8] sm:$0xff]
  %v108 = vld [vmem:[%s0 + $0x2f0] sm:$0xff]
  %v109 = vld [vmem:[%s0 + $0x2f8] sm:$0xff]
  %v110 = vld [vmem:[%s0 + $0x300] sm:$0xff]
  %v111 = vld [vmem:[%s0 + $0x308] sm:$0xff]
  %v112 = vld [vmem:[%s0 + $0x310] sm:$0xff]
  %v113 = vld [vmem:[%s0 + $0x318] sm:$0xff]
  %v114 = vld [vmem:[%s0 + $0x320] sm:$0xff]
  %v115 = vld [vmem:[%s0 + $0x328] sm:$0xff]
  %v116 = vld [vmem:[%s0 + $0x330] sm:$0xff]
  %v117 = vld [vmem:[%s0 + $0x338] sm:$0xff]
  %v118 = vld [vmem:[%s0 + $0x340] sm:$0xff]
  %v119 = vld [vmem:[%s0 + $0x348] sm:$0xff]
  %v120 = vld [vmem:[%s0 + $0x350] sm:$0xff]
  %v121 = vld [vmem:[%s0 + $0x358] sm:$0xff]
  %v122 = vld [vmem:[%s0 + $0x360] sm:$0xff]
  %v123 = vld [vmem:[%s0 + $0x368] sm:$0xff]
  %v124 = vld [vmem:[%s0 + $0x370] sm:$0xff]
  %v125 = vld [vmem:[%s0 + $0x378] sm:$0xff]
  %v126 = vld [vmem:[%s0 + $0x380] sm:$0xff]
  %v127 = vld [vmem:[%s0 + $0x388] sm:$0xff]
  %v128 = vld [vmem:[%s0 + $0x390] sm:$0xff]
  %v129 = vld [vmem:[%s0 + $0x398] sm:$0xff]
  %v130 = vld [vmem:[%s0 + $0x3a0] sm:$0xff]
  %v131 = vld [vmem:[%s0 + $0x3a8] sm:$0xff]
  %v132 = vld [vmem:[%s0 + $0x3b0] sm:$0xff]
  %v133 = vld [vmem:[%s0 + $0x3b8] sm:$0xff]
  %v134 = vld [vmem:[%s0 + $0x3c0] sm:$0xff]
  %v135 = vld [vmem:[%s0 + $0x3c8] sm:$0xff]
  %v136 = vld [vmem:[%s0 + $0x3d0] sm:$0xff]
  %v137 = vld [vmem:[%s0 + $0x3d8] sm:$0xff]
  %v138 = vld [vmem:[%s0 + $0x3e0] sm:$0xff]
  %v139 = vld [vmem:[%s0 + $0x3e8] sm:$0xff]
  %v140 = vld [vmem:[%s0 + $0x3f0] sm:$0xff]
  %v141 = vld [vmem:[%s0 + $0x3f8] sm:$0xff]
  %v142 = vld [vmem:[%s0 + $0x400] sm:$0xff]
  %v143 = vld [vmem:[%s0 + $0x408] sm:$0xff]
  %v144 = vld [vmem:[%s0 + $0x410] sm:$0xff]
  %v145 = vld [vmem:[%s0 + $0x418] sm:$0xff]
  %v146 = vld [vmem:[%s0 + $0x420] sm:$0xff]
  %v147 = vld [vmem:[%s0 + $0x428] sm:$0xff]
  %v148 = vld [vmem:[%s0 + $0x430] sm:$0xff]
  %v149 = vld [vmem:[%s0 + $0x438] sm:$0xff]
  %v150 = vld [vmem:[%s0 + $0x440] sm:$0xff]
  %v151 = vld [vmem:[%s0 + $0x448] sm:$0xff]
  %v152 = vld [vmem:[%s0 + $0x450] sm:$0xff]
  %v153 = vld [vmem:[%s0 + $0x458] sm:$0xff]
  %v154 = vld [vmem:[%s0 + $0x460] sm:$0xff]
  %v155 = vld [vmem:[%s0 + $0x468] sm:$0xff]
  %v156 = vld [vmem:[%s0 + $0x470] sm:$0xff]
  %v157 = vld [vmem:[%s0 + $0x478] sm:$0xff]
  %v158 = vld [vmem:[%s0 + $0x480] sm:$0xff]
  %v159 = vld [vmem:[%s0 + $0x488] sm:$0xff]
  %v160 = vld [vmem:[%s0 + $0x490] sm:$0xff]
  %v161 = vld [vmem:[%s0 + $0x498] sm:$0xff]
  %v162 = vld [vmem:[%s0 + $0x4a0] sm:$0xff]
  %v163 = vld [vmem:[%s0 + $0x4a8] sm:$0xff]
  %v164 = vld [vmem:[%s0 + $0x4b0] sm:$0xff]
  %v165 = vld [vmem:[%s0 + $0x4b8] sm:$0xff]
  %v166 = vld [vmem:[%s0 + $0x4c0] sm:$0xff]
  %v167 = vld [vmem:[%s0 + $0x4c8] sm:$0xff]
  %v168 = vld [vmem:[%s0 + $0x4d0] sm:$0xff]
  %v169 = vld [vmem:[%s0 + $0x4d8] sm:$0xff]
  %v170 = vld [vmem:[%s0 + $0x4e0] sm:$0xff]
  %v171 = vld [vmem:[%s0 + $0x4e8] sm:$0xff]
  %v172 = vld [vmem:[%s0 + $0x4f0] sm:$0xff]
  %v173 = vld [vmem:[%s0 + $0x4f8] sm:$0xff]
  %v174 = vld [vmem:[%s0 + $0x500] sm:$0xff]
  %v175 = vld [vmem:[%s0 + $0x508] sm:$0xff]
  %v176 = vld [vmem:[%s0 + $0x510] sm:$0xff]
  %v177 = vld [vmem:[%s0 + $0x518] sm:$0xff]
  %v178 = vld [vmem:[%s0 + $0x520] sm:$0xff]
  %v179 = vld [vmem:[%s0 + $0x528] sm:$0xff]
  %v180 = vld [vmem:[%s0 + $0x530] sm:$0xff]
  %v181 = vld [vmem:[%s0 + $0x538] sm:$0xff]
  %v182 = vld [vmem:[%s0 + $0x540] sm:$0xff]
  %v183 = vld [vmem:[%s0 + $0x548] sm:$0xff]
  %v184 = vld [vmem:[%s0 + $0x550] sm:$0xff]
  %v185 = vld [vmem:[%s0 + $0x558] sm:$0xff]
  %v186 = vld [vmem:[%s0 + $0x560] sm:$0xff]
  %v187 = vld [vmem:[%s0 + $0x568] sm:$0xff]
  %v188 = vld [vmem:[%s0 + $0x570] sm:$0xff]
  %v189 = vld [vmem:[%s0 + $0x578] sm:$0xff]
  %v190 = vld [vmem:[%s0 + $0x580] sm:$0xff]
  %v191 = vld [vmem:[%s0 + $0x588] sm:$0xff]
  %v192 = vld [vmem:[%s0 + $0x590] sm:$0xff]
  %v193 = vld [vmem:[%s0 + $0x598] sm:$0xff]
  %v194 = vld [vmem:[%s0 + $0x5a0] sm:$0xff]
  %v195 = vld [vmem:[%s0 + $0x5a8] sm:$0xff]
  %v196 = vld [vmem:[%s0 + $0x5b0] sm:$0xff]
  %v197 = vld [vmem:[%s0 + $0x5b8] sm:$0xff]
  %v198 = vld [vmem:[%s0 + $0x5c0] sm:$0xff]
  %v199 = vld [vmem:[%s0 + $0x5c8] sm:$0xff]
  %v200 = vld [vmem:[%s0 + $0x5d0] sm:$0xff]
  %v201 = vld [vmem:[%s0 + $0x5d8] sm:$0xff]
  %v202 = vld [vmem:[%s0 + $0x5e0] sm:$0xff]
  %v203 = vld [vmem:[%s0 + $0x5e8] sm:$0xff]
  %v204 = vld [vmem:[%s0 + $0x5f0] sm:$0xff]
  %v205 = vld [vmem:[%s0 + $0x5f8] sm:$0xff]
  %v206 = vld [vmem:[%s0 + $0x600] sm:$0xff]
  %v207 = vld [vmem:[%s0 + $0x608] sm:$0xff]
  %v208 = vld [vmem:[%s0 + $0x610] sm:$0xff]
  %v209 = vld [vmem:[%s0 + $0x618] sm:$0xff]
  %v210 = vld [vmem:[%s0 + $0x620] sm:$0xff]
  %v211 = vld [vmem:[%s0 + $0x628] sm:$0xff]
  %v212 = vld [vmem:[%s0 + $0x630] sm:$0xff]
  %v213 = vld [vmem:[%s0 + $0x638] sm:$0xff]
  %v214 = vld [vmem:[%s0 + $0x640] sm:$0xff]
  %v215 = vld [vmem:[%s0 + $0x648] sm:$0xff]
  %v216 = vld [vmem:[%s0 + $0x650] sm:$0xff]
  %v217 = vld [vmem:[%s0 + $0x658] sm:$0xff]
  %v218 = vld [vmem:[%s0 + $0x660] sm:$0xff]
  %v219 = vld [vmem:[%s0 + $0x668] sm:$0xff]
  %v220 = vld [vmem:[%s0 + $0x670] sm:$0xff]
  %v221 = vld [vmem:[%s0 + $0x678] sm:$0xff]
  %v222 = vld [vmem:[%s0 + $0x680] sm:$0xff]
  %v223 = vld [vmem:[%s0 + $0x688] sm:$0xff]
  %v224 = vld [vmem:[%s0 + $0x690] sm:$0xff]
  %v225 = vld [vmem:[%s0 + $0x698] sm:$0xff]
  %v226 = vld [vmem:[%s0 + $0x6a0] sm:$0xff]
  %v227 = vld [vmem:[%s0 + $0x6a8] sm:$0xff]
  %v228 = vld [vmem:[%s0 + $0x6b0] sm:$0xff]
  %v229 = vld [vmem:[%s0 + $0x6b8] sm:$0xff]
  %v230 = vld [vmem:[%s0 + $0x6c0] sm:$0xff]
  %v231 = vld [vmem:[%s0 + $0x6c8] sm:$0xff]
  %v232 = vld [vmem:[%s0 + $0x6d0] sm:$0xff]
  %v233 = vld [vmem:[%s0 + $0x6d8] sm:$0xff]
  %v234 = vld [vmem:[%s0 + $0x6e0] sm:$0xff]
  %v235 = vld [vmem:[%s0 + $0x6e8] sm:$0xff]
  %v236 = vld [vmem:[%s0 + $0x6f0] sm:$0xff]
  %v237 = vld [vmem:[%s0 + $0x6f8] sm:$0xff]
  %v238 = vld [vmem:[%s0 + $0x700] sm:$0xff]
  %v239 = vld [vmem:[%s0 + $0x708] sm:$0xff]
  %v240 = vld [vmem:[%s0 + $0x710] sm:$0xff]
  %v241 = vld [vmem:[%s0 + $0x718] sm:$0xff]
  %v242 = vld [vmem:[%s0 + $0x720] sm:$0xff]
  %v243 = vld [vmem:[%s0 + $0x728] sm:$0xff]
  %v244 = vld [vmem:[%s0 + $0x730] sm:$0xff]
  %v245 = vld [vmem:[%s0 + $0x738] sm:$0xff]
  %v246 = vld [vmem:[%s0 + $0x740] sm:$0xff]
  %v247 = vld [vmem:[%s0 + $0x748] sm:$0xff]
  %v248 = vld [vmem:[%s0 + $0x750] sm:$0xff]
  %v249 = vld [vmem:[%s0 + $0x758] sm:$0xff]
  %v250 = vld [vmem:[%s0 + $0x760] sm:$0xff]
  %v251 = vld [vmem:[%s0 + $0x768] sm:$0xff]
  %v252 = vld [vmem:[%s0 + $0x770] sm:$0xff]
  %v253 = vld [vmem:[%s0 + $0x778] sm:$0xff]
  %v254 = vld [vmem:[%s0 + $0x780] sm:$0xff]
  %v255 = vld [vmem:[%s0 + $0x788] sm:$0xff]
  %v256 = vld [vmem:[%s0 + $0x790] sm:$0xff]
  %v257 = vld [vmem:[%s0 + $0x798] sm:$0xff]
  %v258 = vld [vmem:[%s0 + $0x7a0] sm:$0xff]
  %v259 = vld [vmem:[%s0 + $0x7a8] sm:$0xff]
  %v260 = vld [vmem:[%s0 + $0x7b0] sm:$0xff]
  %v261 = vld [vmem:[%s0 + $0x7b8] sm:$0xff]
  %v262 = vld [vmem:[%s0 + $0x7c0] sm:$0xff]
  %v263 = vld [vmem:[%s0 + $0x7c8] sm:$0xff]
  %v264 = vld [vmem:[%s0 + $0x7d0] sm:$0xff]
  %v265 = vld [vmem:[%s0 + $0x7d8] sm:$0xff]
  %v266 = vld [vmem:[%s0 + $0x7e0] sm:$0xff]
  %v267 = vld [vmem:[%s0 + $0x7e8] sm:$0xff]
  %v268 = vld [vmem:[%s0 + $0x7f0] sm:$0xff]
  %v269 = vld [vmem:[%s0 + $0x7f8] sm:$0xff]
  %v270 = vld [vmem:[%s0 + $0x800] sm:$0xff]
  %v271 = vld [vmem:[%s0 + $0x808] sm:$0xff]
  %v272 = vld [vmem:[%s0 + $0x810] sm:$0xff]
  %v273 = vld [vmem:[%s0 + $0x818] sm:$0xff]
  %v274 = vld [vmem:[%s0 + $0x820] sm:$0xff]
  %v275 = vld [vmem:[%s0 + $0x828] sm:$0xff]
  %v276 = vld [vmem:[%s0 + $0x830] sm:$0xff]
  %v277 = vld [vmem:[%s0 + $0x838] sm:$0xff]
  %v278 = vld [vmem:[%s0 + $0x840] sm:$0xff]
  %v279 = vld [vmem:[%s0 + $0x848] sm:$0xff]
  %v280 = vld [vmem:[%s0 + $0x850] sm:$0xff]
  %v281 = vld [vmem:[%s0 + $0x858] sm:$0xff]
  %v282 = vld [vmem:[%s0 + $0x860] sm:$0xff]
  %v283 = vld [vmem:[%s0 + $0x868] sm:$0xff]
  %v284 = vld [vmem:[%s0 + $0x870] sm:$0xff]
  %v285 = vld [vmem:[%s0 + $0x878] sm:$0xff]
  %v286 = vld [vmem:[%s0 + $0x880] sm:$0xff]
  %v287 = vld [vmem:[%s0 + $0x888] sm:$0xff]
  %v288 = vld [vmem:[%s0 + $0x890] sm:$0xff]
  %v289 = vld [vmem:[%s0 + $0x898] sm:$0xff]
  %v290 = vld [vmem:[%s0 + $0x8a0] sm:$0xff]
  %v291 = vld [vmem:[%s0 + $0x8a8] sm:$0xff]
  %v292 = vld [vmem:[%s0 + $0x8b0] sm:$0xff]
  %v293 = vld [vmem:[%s0 + $0x8b8] sm:$0xff]
  %v294 = vld [vmem:[%s0 + $0x8c0] sm:$0xff]
  %v295 = vld [vmem:[%s0 + $0x8c8] sm:$0xff]
  %v296 = vld [vmem:[%s0 + $0x8d0] sm:$0xff]
  %v297 = vld [vmem:[%s0 + $0x8d8] sm:$0xff]
  %v298 = vld [vmem:[%s0 + $0x8e0] sm:$0xff]
  %v299 = vld [vmem:[%s0 + $0x8e8] sm:$0xff]
  %v300 = vld [vmem:[%s0 + $0x8f0] sm:$0xff]
  %v301 = vld [vmem:[%s0 + $0x8f8] sm:$0xff]
  %v302 = vld [vmem:[%s0 + $0x900] sm:$0xff]
  %v303 = vld [vmem:[%s0 + $0x908] sm:$0xff]
  %v304 = vld [vmem:[%s0 + $0x910] sm:$0xff]
  %v305 = vld [vmem:[%s0 + $0x918] sm:$0xff]
  %v306 = vld [vmem:[%s0 + $0x920] sm:$0xff]
  %v307 = vld [vmem:[%s0 + $0x928] sm:$0xff]
  %v308 = vld [vmem:[%s0 + $0x930] sm:$0xff]
  %v309 = vld [vmem:[%s0 + $0x938] sm:$0xff]
  %v310 = vld [vmem:[%s0 + $0x940] sm:$0xff]
  %v311 = vld [vmem:[%s0 + $0x948] sm:$0xff]
  %v312 = vld [vmem:[%s0 + $0x950] sm:$0xff]
  %v313 = vld [vmem:[%s0 + $0x958] sm:$0xff]
  %v314 = vld [vmem:[%s0 + $0x960] sm:$0xff]
  %v315 = vld [vmem:[%s0 + $0x968] sm:$0xff]
  %v316 = vld [vmem:[%s0 + $0x970] sm:$0xff]
  %v317 = vld [vmem:[%s0 + $0x978] sm:$0xff]
  %v318 = vld [vmem:[%s0 + $0x980] sm:$0xff]
  %v319 = vld [vmem:[%s0 + $0x988] sm:$0xff]
  %v320 = vld [vmem:[%s0 + $0x990] sm:$0xff]
  %v321 = vld [vmem:[%s0 + $0x998] sm:$0xff]
  %v322 = vld [vmem:[%s0 + $0x9a0] sm:$0xff]
  %v323 = vld [vmem:[%s0 + $0x9a8] sm:$0xff]
  %v324 = vld [vmem:[%s0 + $0x9b0] sm:$0xff]
  %v325 = vld [vmem:[%s0 + $0x9b8] sm:$0xff]
  %v326 = vld [vmem:[%s0 + $0x9c0] sm:$0xff]
  %v327 = vld [vmem:[%s0 + $0x9c8] sm:$0xff]
  %v328 = vld [vmem:[%s0 + $0x9d0] sm:$0xff]
  %v329 = vld [vmem:[%s0 + $0x9d8] sm:$0xff]
  %v330 = vld [vmem:[%s0 + $0x9e0] sm:$0xff]
  %v331 = vld [vmem:[%s0 + $0x9e8] sm:$0xff]
  %v332 = vld [vmem:[%s0 + $0x9f0] sm:$0xff]
  %v333 = vld [vmem:[%s0 + $0x9f8] sm:$0xff]
  %v334 = vld [vmem:[%s1] sm:$0xff]
  %v335 = vld [vmem:[%s1 + $0x8] sm:$0xff]
  %v336 = vld [vmem:[%s1 + $0x10] sm:$0xff]
  %v337 = vld [vmem:[%s1 + $0x18] sm:$0xff]
  %v338 = vld [vmem:[%s1 + $0x20] sm:$0xff]
  %v339 = vld [vmem:[%s1 + $0x28] sm:$0xff]
  %v340 = vld [vmem:[%s1 + $0x30] sm:$0xff]
  %v341 = vld [vmem:[%s1 + $0x38] sm:$0xff]
  %v342 = vld [vmem:[%s1 + $0x40] sm:$0xff]
  %v343 = vld [vmem:[%s1 + $0x48] sm:$0xff]
  %v344 = vld [vmem:[%s1 + $0x50] sm:$0xff]
  %v345 = vld [vmem:[%s1 + $0x58] sm:$0xff]
  %v346 = vld [vmem:[%s1 + $0x60] sm:$0xff]
  %v347 = vld [vmem:[%s1 + $0x68] sm:$0xff]
  %v348 = vld [vmem:[%s1 + $0x70] sm:$0xff]
  %v349 = vld [vmem:[%s1 + $0x78] sm:$0xff]
  %v350 = vld [vmem:[%s1 + $0x80] sm:$0xff]
  %v351 = vld [vmem:[%s1 + $0x88] sm:$0xff]
  %v352 = vld [vmem:[%s1 + $0x90] sm:$0xff]
  %v353 = vld [vmem:[%s1 + $0x98] sm:$0xff]
  %v354 = vld [vmem:[%s1 + $0xa0] sm:$0xff]
  %v355 = vld [vmem:[%s1 + $0xa8] sm:$0xff]
  %v356 = vld [vmem:[%s1 + $0xb0] sm:$0xff]
  %v357 = vld [vmem:[%s1 + $0xb8] sm:$0xff]
  %v358 = vld [vmem:[%s1 + $0xc0] sm:$0xff]
  %v359 = vld [vmem:[%s1 + $0xc8] sm:$0xff]
  %v360 = vld [vmem:[%s1 + $0xd0] sm:$0xff]
  %v361 = vld [vmem:[%s1 + $0xd8] sm:$0xff]
  %v362 = vld [vmem:[%s1 + $0xe0] sm:$0xff]
  %v363 = vld [vmem:[%s1 + $0xe8] sm:$0xff]
  %v364 = vld [vmem:[%s1 + $0xf0] sm:$0xff]
  %v365 = vld [vmem:[%s1 + $0xf8] sm:$0xff]
  %v366 = vld [vmem:[%s1 + $0x100] sm:$0xff]
  %v367 = vld [vmem:[%s1 + $0x108] sm:$0xff]
  %v368 = vld [vmem:[%s1 + $0x110] sm:$0xff]
  %v369 = vld [vmem:[%s1 + $0x118] sm:$0xff]
  %v370 = vld [vmem:[%s1 + $0x120] sm:$0xff]
  %v371 = vld [vmem:[%s1 + $0x128] sm:$0xff]
  %v372 = vld [vmem:[%s1 + $0x130] sm:$0xff]
  %v373 = vld [vmem:[%s1 + $0x138] sm:$0xff]
  %v374 = vld [vmem:[%s1 + $0x140] sm:$0xff]
  %v375 = vld [vmem:[%s1 + $0x148] sm:$0xff]
  %v376 = vld [vmem:[%s1 + $0x150] sm:$0xff]
  %v377 = vld [vmem:[%s1 + $0x158] sm:$0xff]
  %v378 = vld [vmem:[%s1 + $0x160] sm:$0xff]
  %v379 = vld [vmem:[%s1 + $0x168] sm:$0xff]
  %v380 = vld [vmem:[%s1 + $0x170] sm:$0xff]
  %v381 = vld [vmem:[%s1 + $0x178] sm:$0xff]
  %v382 = vld [vmem:[%s1 + $0x180] sm:$0xff]
  %v383 = vld [vmem:[%s1 + $0x188] sm:$0xff]
  %v384 = vld [vmem:[%s1 + $0x190] sm:$0xff]
  %v385 = vld [vmem:[%s1 + $0x198] sm:$0xff]
  %v386 = vld [vmem:[%s1 + $0x1a0] sm:$0xff]
  %v387 = vld [vmem:[%s1 + $0x1a8] sm:$0xff]
  %v388 = vld [vmem:[%s1 + $0x1b0] sm:$0xff]
  %v389 = vld [vmem:[%s1 + $0x1b8] sm:$0xff]
  %v390 = vld [vmem:[%s1 + $0x1c0] sm:$0xff]
  %v391 = vld [vmem:[%s1 + $0x1c8] sm:$0xff]
  %v392 = vld [vmem:[%s1 + $0x1d0] sm:$0xff]
  %v393 = vld [vmem:[%s1 + $0x1d8] sm:$0xff]
  %v394 = vld [vmem:[%s1 + $0x1e0] sm:$0xff]
  %v395 = vld [vmem:[%s1 + $0x1e8] sm:$0xff]
  %v396 = vld [vmem:[%s1 + $0x1f0] sm:$0xff]
  %v397 = vld [vmem:[%s1 + $0x1f8] sm:$0xff]
  %v398 = vld [vmem:[%s1 + $0x200] sm:$0xff]
  %v399 = vld [vmem:[%s1 + $0x208] sm:$0xff]
  %v400 = vld [vmem:[%s1 + $0x210] sm:$0xff]
  %v401 = vld [vmem:[%s1 + $0x218] sm:$0xff]
  %v402 = vld [vmem:[%s1 + $0x220] sm:$0xff]
  %v403 = vld [vmem:[%s1 + $0x228] sm:$0xff]
  %v404 = vld [vmem:[%s1 + $0x230] sm:$0xff]
  %v405 = vld [vmem:[%s1 + $0x238] sm:$0xff]
  %v406 = vld [vmem:[%s2] sm:$0x1]
  %v408 = vlaneseq
  %v409 = vshrl.u32 %v408, 7
  %v410 = vsub.s32 0, %v409
  %v411 = vrot.slane %v406, %v410
  %vm413 = vcmask 523264
  %v415 = vsel %vm413, %v18, 0
  %v418 = vsel %vm413, %v23, 0
  %v421 = vsel %vm413, %v28, 0
  %v424 = vsel %vm413, %v33, 0
  %v427 = vsel %vm413, %v38, 0
  %v430 = vsel %vm413, %v43, 0
  %v433 = vsel %vm413, %v48, 0
  %v436 = vsel %vm413, %v53, 0
  %v439 = vsel %vm413, %v58, 0
  %v442 = vsel %vm413, %v63, 0
  %v445 = vsel %vm413, %v68, 0
  %v448 = vsel %vm413, %v73, 0
  %v451 = vsel %vm413, %v78, 0
  %v454 = vsel %vm413, %v83, 0
  %v457 = vsel %vm413, %v88, 0
  %v460 = vsel %vm413, %v93, 0
  %v463 = vsel %vm413, %v98, 0
  %v466 = vsel %vm413, %v103, 0
  %v469 = vsel %vm413, %v108, 0
  %v472 = vsel %vm413, %v113, 0
  %v475 = vsel %vm413, %v118, 0
  %v478 = vsel %vm413, %v123, 0
  %v481 = vsel %vm413, %v128, 0
  %v484 = vsel %vm413, %v133, 0
  %v487 = vsel %vm413, %v138, 0
  %v490 = vsel %vm413, %v143, 0
  %v493 = vsel %vm413, %v148, 0
  %v496 = vsel %vm413, %v153, 0
  %v499 = vsel %vm413, %v158, 0
  %v502 = vsel %vm413, %v163, 0
  %v505 = vsel %vm413, %v168, 0
  %v508 = vsel %vm413, %v173, 0
  %v511 = vsel %vm413, %v178, 0
  %v514 = vsel %vm413, %v183, 0
  %v517 = vsel %vm413, %v188, 0
  %v520 = vsel %vm413, %v193, 0
  %v523 = vsel %vm413, %v198, 0
  %v526 = vsel %vm413, %v203, 0
  %v529 = vsel %vm413, %v208, 0
  %v532 = vsel %vm413, %v213, 0
  %v535 = vsel %vm413, %v218, 0
  %v538 = vsel %vm413, %v223, 0
  %v541 = vsel %vm413, %v228, 0
  %v544 = vsel %vm413, %v233, 0
  %v547 = vsel %vm413, %v238, 0
  %v550 = vsel %vm413, %v243, 0
  %v553 = vsel %vm413, %v248, 0
  %v556 = vsel %vm413, %v253, 0
  %v559 = vsel %vm413, %v258, 0
  %v562 = vsel %vm413, %v263, 0
  %v565 = vsel %vm413, %v268, 0
  %v568 = vsel %vm413, %v273, 0
  %v571 = vsel %vm413, %v278, 0
  %v574 = vsel %vm413, %v283, 0
  %v577 = vsel %vm413, %v288, 0
  %v580 = vsel %vm413, %v293, 0
  %v583 = vsel %vm413, %v298, 0
  %v586 = vsel %vm413, %v303, 0
  %v589 = vsel %vm413, %v308, 0
  %v592 = vsel %vm413, %v313, 0
  %v595 = vsel %vm413, %v318, 0
  %v598 = vsel %vm413, %v323, 0
  %v601 = vsel %vm413, %v328, 0
  %v604 = vsel %vm413, %v333, 0
  %606 = vmatprep.subr.mxu0 0.0
  %607 = vmatpush1.msra.mxu0 %v334
  %608 = vmatprep.subr.mxu0 0.0
  %609 = vmatpush1.msra.mxu0 %v335
  %610 = vmatprep.subr.mxu0 0.0
  %611 = vmatpush1.msra.mxu0 %v336
  %612 = vmatprep.subr.mxu0 0.0
  %613 = vmatpush1.msra.mxu0 %v337
  %614 = vmatprep.subr.mxu0 0.0
  %615 = vmatpush1.msra.mxu0 %v338
  %616 = vmatprep.subr.mxu0 0.0
  %617 = vmatpush1.msra.mxu0 %v339
  %618 = vmatprep.subr.mxu0 0.0
  %619 = vmatpush1.msra.mxu0 %v340
  %620 = vmatprep.subr.mxu0 0.0
  %621 = vmatpush1.msra.mxu0 %v341
  %622 = vmatprep.subr.mxu0 0.0
  %623 = vmatpush1.msra.mxu0 %v342
  %624 = vmatprep.subr.mxu0 0.0
  %625 = vmatpush1.msra.mxu0 %v343
  %626 = vmatprep.subr.mxu0 0.0
  %627 = vmatpush1.msra.mxu0 %v344
  %628 = vmatprep.subr.mxu0 0.0
  %629 = vmatpush1.msra.mxu0 %v345
  %630 = vmatprep.subr.mxu0 0.0
  %631 = vmatpush1.msra.mxu0 %v346
  %632 = vmatprep.subr.mxu0 0.0
  %633 = vmatpush1.msra.mxu0 %v347
  %634 = vmatprep.subr.mxu0 0.0
  %635 = vmatpush1.msra.mxu0 %v348
  %636 = vmatprep.subr.mxu0 0.0
  %637 = vmatpush1.msra.mxu0 %v349
  %638 = vmatprep.subr.mxu0 0.0
  %639 = vmatpush1.msra.mxu0 %v350
  %640 = vmatprep.subr.mxu0 0.0
  %641 = vmatpush1.msra.mxu0 %v351
  %642 = vmatprep.subr.mxu0 0.0
  %643 = vmatpush1.msra.mxu0 %v352
  %644 = vmatprep.subr.mxu0 0.0
  %645 = vmatpush1.msra.mxu0 %v353
  %646 = vmatprep.subr.mxu0 0.0
  %647 = vmatpush1.msra.mxu0 %v354
  %648 = vmatprep.subr.mxu0 0.0
  %649 = vmatpush1.msra.mxu0 %v355
  %650 = vmatprep.subr.mxu0 0.0
  %651 = vmatpush1.msra.mxu0 %v356
  %652 = vmatprep.subr.mxu0 0.0
  %653 = vmatpush1.msra.mxu0 %v357
  %654 = vmatprep.subr.mxu0 0.0
  %655 = vmatpush1.msra.mxu0 %v358
  %656 = vmatprep.subr.mxu0 0.0
  %657 = vmatpush1.msra.mxu0 %v359
  %658 = vmatprep.subr.mxu0 0.0
  %659 = vmatpush1.msra.mxu0 %v360
  %660 = vmatprep.subr.mxu0 0.0
  %661 = vmatpush1.msra.mxu0 %v361
  %662 = vmatprep.subr.mxu0 0.0
  %663 = vmatpush1.msra.mxu0 %v362
  %664 = vmatprep.subr.mxu0 0.0
  %665 = vmatpush1.msra.mxu0 %v363
  %666 = vmatprep.subr.mxu0 0.0
  %667 = vmatpush1.msra.mxu0 %v364
  %668 = vmatprep.subr.mxu0 0.0
  %669 = vmatpush1.msra.mxu0 %v365
  %670 = vmatprep.mubr.f32.mxu0 %v15
  %671 = vmatmul.mubr.f32.gmra.mrb[0].mxu0 %v14
  %v672 = vpop.f32.mrb[0].mxu0
  %v673 = vadd.f32 %v411, %v672
  %v674 = vpop.f32.mrb[0].mxu0
  %675 = vmatprep.mubr.f32.mxu0 %v20
  %676 = vmatmul.mubr.f32.gmra.mrb[0].mxu0 %v19
  %v677 = vpop.f32.mrb[0].mxu0
  %v678 = vadd.f32 %v411, %v677
  %v679 = vpop.f32.mrb[0].mxu0
  %680 = vmatprep.mubr.f32.mxu0 %v25
  %681 = vmatmul.mubr.f32.gmra.mrb[0].mxu0 %v24
  %v682 = vpop.f32.mrb[0].mxu0
  %v683 = vadd.f32 %v411, %v682
  %v684 = vpop.f32.mrb[0].mxu0
  %685 = vmatprep.mubr.f32.mxu0 %v30
  %686 = vmatmul.mubr.f32.gmra.mrb[0].mxu0 %v29
  %v687 = vpop.f32.mrb[0].mxu0
  %v688 = vadd.f32 %v411, %v687
  %v689 = vpop.f32.mrb[0].mxu0
  %690 = vmatprep.mubr.f32.mxu0 %v35
  %691 = vmatmul.mubr.f32.gmra.mrb[0].mxu0 %v34
  %v692 = vpop.f32.mrb[0].mxu0
  %v693 = vadd.f32 %v411, %v692
  %v694 = vpop.f32.mrb[0].mxu0
  %695 = vmatprep.mubr.f32.mxu0 %v40
  %696 = vmatmul.mubr.f32.gmra.mrb[0].mxu0 %v39
  %v697 = vpop.f32.mrb[0].mxu0
  %v698 = vadd.f32 %v411, %v697
  %v699 = vpop.f32.mrb[0].mxu0
  %700 = vmatprep.mubr.f32.mxu0 %v45
  %701 = vmatmul.mubr.f32.gmra.mrb[0].mxu0 %v44
  %v702 = vpop.f32.mrb[0].mxu0
  %v703 = vadd.f32 %v411, %v702
  %v704 = vpop.f32.mrb[0].mxu0
  %705 = vmatprep.mubr.f32.mxu0 %v50
  %706 = vmatmul.mubr.f32.gmra.mrb[0].mxu0 %v49
  %v707 = vpop.f32.mrb[0].mxu0
  %v708 = vadd.f32 %v411, %v707
  %v709 = vpop.f32.mrb[0].mxu0
  %710 = vmatprep.mubr.f32.mxu0 %v55
  %711 = vmatmul.mubr.f32.gmra.mrb[0].mxu0 %v54
  %v712 = vpop.f32.mrb[0].mxu0
  %v713 = vadd.f32 %v411, %v712
  %v714 = vpop.f32.mrb[0].mxu0
  %715 = vmatprep.mubr.f32.mxu0 %v60
  %716 = vmatmul.mubr.f32.gmra.mrb[0].mxu0 %v59
  %v717 = vpop.f32.mrb[0].mxu0
  %v718 = vadd.f32 %v411, %v717
  %v719 = vpop.f32.mrb[0].mxu0
  %720 = vmatprep.mubr.f32.mxu0 %v65
  %721 = vmatmul.mubr.f32.gmra.mrb[0].mxu0 %v64
  %v722 = vpop.f32.mrb[0].mxu0
  %v723 = vadd.f32 %v411, %v722
  %v724 = vpop.f32.mrb[0].mxu0
  %725 = vmatprep.mubr.f32.mxu0 %v70
  %726 = vmatmul.mubr.f32.gmra.mrb[0].mxu0 %v69
  %v727 = vpop.f32.mrb[0].mxu0
  %v728 = vadd.f32 %v411, %v727
  %v729 = vpop.f32.mrb[0].mxu0
  %730 = vmatprep.mubr.f32.mxu0 %v75
  %731 = vmatmul.mubr.f32.gmra.mrb[0].mxu0 %v74
  %v732 = vpop.f32.mrb[0].mxu0
  %v733 = vadd.f32 %v411, %v732
  %v734 = vpop.f32.mrb[0].mxu0
  %735 = vmatprep.mubr.f32.mxu0 %v80
  %736 = vmatmul.mubr.f32.gmra.mrb[0].mxu0 %v79
  %v737 = vpop.f32.mrb[0].mxu0
  %v738 = vadd.f32 %v411, %v737
  %v739 = vpop.f32.mrb[0].mxu0
  %740 = vmatprep.mubr.f32.mxu0 %v85
  %741 = vmatmul.mubr.f32.gmra.mrb[0].mxu0 %v84
  %v742 = vpop.f32.mrb[0].mxu0
  %v743 = vadd.f32 %v411, %v742
  %v744 = vpop.f32.mrb[0].mxu0
  %745 = vmatprep.mubr.f32.mxu0 %v90
  %746 = vmatmul.mubr.f32.gmra.mrb[0].mxu0 %v89
  %v747 = vpop.f32.mrb[0].mxu0
  %v748 = vadd.f32 %v411, %v747
  %v749 = vpop.f32.mrb[0].mxu0
  %750 = vmatprep.mubr.f32.mxu0 %v95
  %751 = vmatmul.mubr.f32.gmra.mrb[0].mxu0 %v94
  %v752 = vpop.f32.mrb[0].mxu0
  %v753 = vadd.f32 %v411, %v752
  %v754 = vpop.f32.mrb[0].mxu0
  %755 = vmatprep.mubr.f32.mxu0 %v100
  %756 = vmatmul.mubr.f32.gmra.mrb[0].mxu0 %v99
  %v757 = vpop.f32.mrb[0].mxu0
  %v758 = vadd.f32 %v411, %v757
  %v759 = vpop.f32.mrb[0].mxu0
  %760 = vmatprep.mubr.f32.mxu0 %v105
  %761 = vmatmul.mubr.f32.gmra.mrb[0].mxu0 %v104
  %v762 = vpop.f32.mrb[0].mxu0
  %v763 = vadd.f32 %v411, %v762
  %v764 = vpop.f32.mrb[0].mxu0
  %765 = vmatprep.mubr.f32.mxu0 %v110
  %766 = vmatmul.mubr.f32.gmra.mrb[0].mxu0 %v109
  %v767 = vpop.f32.mrb[0].mxu0
  %v768 = vadd.f32 %v411, %v767
  %v769 = vpop.f32.mrb[0].mxu0
  %770 = vmatprep.mubr.f32.mxu0 %v115
  %771 = vmatmul.mubr.f32.gmra.mrb[0].mxu0 %v114
  %v772 = vpop.f32.mrb[0].mxu0
  %v773 = vadd.f32 %v411, %v772
  %v774 = vpop.f32.mrb[0].mxu0
  %775 = vmatprep.mubr.f32.mxu0 %v120
  %776 = vmatmul.mubr.f32.gmra.mrb[0].mxu0 %v119
  %v777 = vpop.f32.mrb[0].mxu0
  %v778 = vadd.f32 %v411, %v777
  %v779 = vpop.f32.mrb[0].mxu0
  %780 = vmatprep.mubr.f32.mxu0 %v125
  %781 = vmatmul.mubr.f32.gmra.mrb[0].mxu0 %v124
  %v782 = vpop.f32.mrb[0].mxu0
  %v783 = vadd.f32 %v411, %v782
  %v784 = vpop.f32.mrb[0].mxu0
  %785 = vmatprep.mubr.f32.mxu0 %v130
  %786 = vmatmul.mubr.f32.gmra.mrb[0].mxu0 %v129
  %v787 = vpop.f32.mrb[0].mxu0
  %v788 = vadd.f32 %v411, %v787
  %v789 = vpop.f32.mrb[0].mxu0
  %790 = vmatprep.mubr.f32.mxu0 %v135
  %791 = vmatmul.mubr.f32.gmra.mrb[0].mxu0 %v134
  %v792 = vpop.f32.mrb[0].mxu0
  %v793 = vadd.f32 %v411, %v792
  %v794 = vpop.f32.mrb[0].mxu0
  %795 = vmatprep.mubr.f32.mxu0 %v140
  %796 = vmatmul.mubr.f32.gmra.mrb[0].mxu0 %v139
  %v797 = vpop.f32.mrb[0].mxu0
  %v798 = vadd.f32 %v411, %v797
  %v799 = vpop.f32.mrb[0].mxu0
  %800 = vmatprep.mubr.f32.mxu0 %v145
  %801 = vmatmul.mubr.f32.gmra.mrb[0].mxu0 %v144
  %v802 = vpop.f32.mrb[0].mxu0
  %v803 = vadd.f32 %v411, %v802
  %v804 = vpop.f32.mrb[0].mxu0
  %805 = vmatprep.mubr.f32.mxu0 %v150
  %806 = vmatmul.mubr.f32.gmra.mrb[0].mxu0 %v149
  %v807 = vpop.f32.mrb[0].mxu0
  %v808 = vadd.f32 %v411, %v807
  %v809 = vpop.f32.mrb[0].mxu0
  %810 = vmatprep.mubr.f32.mxu0 %v155
  %811 = vmatmul.mubr.f32.gmra.mrb[0].mxu0 %v154
  %v812 = vpop.f32.mrb[0].mxu0
  %v813 = vadd.f32 %v411, %v812
  %v814 = vpop.f32.mrb[0].mxu0
  %815 = vmatprep.mubr.f32.mxu0 %v160
  %816 = vmatmul.mubr.f32.gmra.mrb[0].mxu0 %v159
  %v817 = vpop.f32.mrb[0].mxu0
  %v818 = vadd.f32 %v411, %v817
  %v819 = vpop.f32.mrb[0].mxu0
  %820 = vmatprep.mubr.f32.mxu0 %v165
  %821 = vmatmul.mubr.f32.gmra.mrb[0].mxu0 %v164
  %v822 = vpop.f32.mrb[0].mxu0
  %v823 = vadd.f32 %v411, %v822
  %v824 = vpop.f32.mrb[0].mxu0
  %825 = vmatprep.mubr.f32.mxu0 %v170
  %826 = vmatmul.mubr.f32.gmra.mrb[0].mxu0 %v169
  %v827 = vpop.f32.mrb[0].mxu0
  %v828 = vadd.f32 %v411, %v827
  %v829 = vpop.f32.mrb[0].mxu0
  %830 = vmatprep.mubr.f32.mxu0 %v175
  %831 = vmatmul.mubr.f32.gmra.mrb[0].mxu0 %v174
  %v832 = vpop.f32.mrb[0].mxu0
  %v833 = vadd.f32 %v411, %v832
  %v834 = vpop.f32.mrb[0].mxu0
  %835 = vmatprep.mubr.f32.mxu0 %v180
  %836 = vmatmul.mubr.f32.gmra.mrb[0].mxu0 %v179
  %v837 = vpop.f32.mrb[0].mxu0
  %v838 = vadd.f32 %v411, %v837
  %v839 = vpop.f32.mrb[0].mxu0
  %840 = vmatprep.mubr.f32.mxu0 %v185
  %841 = vmatmul.mubr.f32.gmra.mrb[0].mxu0 %v184
  %v842 = vpop.f32.mrb[0].mxu0
  %v843 = vadd.f32 %v411, %v842
  %v844 = vpop.f32.mrb[0].mxu0
  %845 = vmatprep.mubr.f32.mxu0 %v190
  %846 = vmatmul.mubr.f32.gmra.mrb[0].mxu0 %v189
  %v847 = vpop.f32.mrb[0].mxu0
  %v848 = vadd.f32 %v411, %v847
  %v849 = vpop.f32.mrb[0].mxu0
  %850 = vmatprep.mubr.f32.mxu0 %v195
  %851 = vmatmul.mubr.f32.gmra.mrb[0].mxu0 %v194
  %v852 = vpop.f32.mrb[0].mxu0
  %v853 = vadd.f32 %v411, %v852
  %v854 = vpop.f32.mrb[0].mxu0
  %855 = vmatprep.mubr.f32.mxu0 %v200
  %856 = vmatmul.mubr.f32.gmra.mrb[0].mxu0 %v199
  %v857 = vpop.f32.mrb[0].mxu0
  %v858 = vadd.f32 %v411, %v857
  %v859 = vpop.f32.mrb[0].mxu0
  %860 = vmatprep.mubr.f32.mxu0 %v205
  %861 = vmatmul.mubr.f32.gmra.mrb[0].mxu0 %v204
  %v862 = vpop.f32.mrb[0].mxu0
  %v863 = vadd.f32 %v411, %v862
  %v864 = vpop.f32.mrb[0].mxu0
  %865 = vmatprep.mubr.f32.mxu0 %v210
  %866 = vmatmul.mubr.f32.gmra.mrb[0].mxu0 %v209
  %v867 = vpop.f32.mrb[0].mxu0
  %v868 = vadd.f32 %v411, %v867
  %v869 = vpop.f32.mrb[0].mxu0
  %870 = vmatprep.mubr.f32.mxu0 %v215
  %871 = vmatmul.mubr.f32.gmra.mrb[0].mxu0 %v214
  %v872 = vpop.f32.mrb[0].mxu0
  %v873 = vadd.f32 %v411, %v872
  %v874 = vpop.f32.mrb[0].mxu0
  %875 = vmatprep.mubr.f32.mxu0 %v220
  %876 = vmatmul.mubr.f32.gmra.mrb[0].mxu0 %v219
  %v877 = vpop.f32.mrb[0].mxu0
  %v878 = vadd.f32 %v411, %v877
  %v879 = vpop.f32.mrb[0].mxu0
  %880 = vmatprep.mubr.f32.mxu0 %v225
  %881 = vmatmul.mubr.f32.gmra.mrb[0].mxu0 %v224
  %v882 = vpop.f32.mrb[0].mxu0
  %v883 = vadd.f32 %v411, %v882
  %v884 = vpop.f32.mrb[0].mxu0
  %885 = vmatprep.mubr.f32.mxu0 %v230
  %886 = vmatmul.mubr.f32.gmra.mrb[0].mxu0 %v229
  %v887 = vpop.f32.mrb[0].mxu0
  %v888 = vadd.f32 %v411, %v887
  %v889 = vpop.f32.mrb[0].mxu0
  %890 = vmatprep.mubr.f32.mxu0 %v235
  %891 = vmatmul.mubr.f32.gmra.mrb[0].mxu0 %v234
  %v892 = vpop.f32.mrb[0].mxu0
  %v893 = vadd.f32 %v411, %v892
  %v894 = vpop.f32.mrb[0].mxu0
  %895 = vmatprep.mubr.f32.mxu0 %v240
  %896 = vmatmul.mubr.f32.gmra.mrb[0].mxu0 %v239
  %v897 = vpop.f32.mrb[0].mxu0
  %v898 = vadd.f32 %v411, %v897
  %v899 = vpop.f32.mrb[0].mxu0
  %900 = vmatprep.mubr.f32.mxu0 %v245
  %901 = vmatmul.mubr.f32.gmra.mrb[0].mxu0 %v244
  %v902 = vpop.f32.mrb[0].mxu0
  %v903 = vadd.f32 %v411, %v902
  %v904 = vpop.f32.mrb[0].mxu0
  %905 = vmatprep.mubr.f32.mxu0 %v250
  %906 = vmatmul.mubr.f32.gmra.mrb[0].mxu0 %v249
  %v907 = vpop.f32.mrb[0].mxu0
  %v908 = vadd.f32 %v411, %v907
  %v909 = vpop.f32.mrb[0].mxu0
  %910 = vmatprep.mubr.f32.mxu0 %v255
  %911 = vmatmul.mubr.f32.gmra.mrb[0].mxu0 %v254
  %v912 = vpop.f32.mrb[0].mxu0
  %v913 = vadd.f32 %v411, %v912
  %v914 = vpop.f32.mrb[0].mxu0
  %915 = vmatprep.mubr.f32.mxu0 %v260
  %916 = vmatmul.mubr.f32.gmra.mrb[0].mxu0 %v259
  %v917 = vpop.f32.mrb[0].mxu0
  %v918 = vadd.f32 %v411, %v917
  %v919 = vpop.f32.mrb[0].mxu0
  %920 = vmatprep.mubr.f32.mxu0 %v265
  %921 = vmatmul.mubr.f32.gmra.mrb[0].mxu0 %v264
  %v922 = vpop.f32.mrb[0].mxu0
  %v923 = vadd.f32 %v411, %v922
  %v924 = vpop.f32.mrb[0].mxu0
  %925 = vmatprep.mubr.f32.mxu0 %v270
  %926 = vmatmul.mubr.f32.gmra.mrb[0].mxu0 %v269
  %v927 = vpop.f32.mrb[0].mxu0
  %v928 = vadd.f32 %v411, %v927
  %v929 = vpop.f32.mrb[0].mxu0
  %930 = vmatprep.mubr.f32.mxu0 %v275
  %931 = vmatmul.mubr.f32.gmra.mrb[0].mxu0 %v274
  %v932 = vpop.f32.mrb[0].mxu0
  %v933 = vadd.f32 %v411, %v932
  %v934 = vpop.f32.mrb[0].mxu0
  %935 = vmatprep.mubr.f32.mxu0 %v280
  %936 = vmatmul.mubr.f32.gmra.mrb[0].mxu0 %v279
  %v937 = vpop.f32.mrb[0].mxu0
  %v938 = vadd.f32 %v411, %v937
  %v939 = vpop.f32.mrb[0].mxu0
  %940 = vmatprep.mubr.f32.mxu0 %v285
  %941 = vmatmul.mubr.f32.gmra.mrb[0].mxu0 %v284
  %v942 = vpop.f32.mrb[0].mxu0
  %v943 = vadd.f32 %v411, %v942
  %v944 = vpop.f32.mrb[0].mxu0
  %945 = vmatprep.mubr.f32.mxu0 %v290
  %946 = vmatmul.mubr.f32.gmra.mrb[0].mxu0 %v289
  %v947 = vpop.f32.mrb[0].mxu0
  %v948 = vadd.f32 %v411, %v947
  %v949 = vpop.f32.mrb[0].mxu0
  %950 = vmatprep.mubr.f32.mxu0 %v295
  %951 = vmatmul.mubr.f32.gmra.mrb[0].mxu0 %v294
  %v952 = vpop.f32.mrb[0].mxu0
  %v953 = vadd.f32 %v411, %v952
  %v954 = vpop.f32.mrb[0].mxu0
  %955 = vmatprep.mubr.f32.mxu0 %v300
  %956 = vmatmul.mubr.f32.gmra.mrb[0].mxu0 %v299
  %v957 = vpop.f32.mrb[0].mxu0
  %v958 = vadd.f32 %v411, %v957
  %v959 = vpop.f32.mrb[0].mxu0
  %960 = vmatprep.mubr.f32.mxu0 %v305
  %961 = vmatmul.mubr.f32.gmra.mrb[0].mxu0 %v304
  %v962 = vpop.f32.mrb[0].mxu0
  %v963 = vadd.f32 %v411, %v962
  %v964 = vpop.f32.mrb[0].mxu0
  %965 = vmatprep.mubr.f32.mxu0 %v310
  %966 = vmatmul.mubr.f32.gmra.mrb[0].mxu0 %v309
  %v967 = vpop.f32.mrb[0].mxu0
  %v968 = vadd.f32 %v411, %v967
  %v969 = vpop.f32.mrb[0].mxu0
  %970 = vmatprep.mubr.f32.mxu0 %v315
  %971 = vmatmul.mubr.f32.gmra.mrb[0].mxu0 %v314
  %v972 = vpop.f32.mrb[0].mxu0
  %v973 = vadd.f32 %v411, %v972
  %v974 = vpop.f32.mrb[0].mxu0
  %975 = vmatprep.mubr.f32.mxu0 %v320
  %976 = vmatmul.mubr.f32.gmra.mrb[0].mxu0 %v319
  %v977 = vpop.f32.mrb[0].mxu0
  %v978 = vadd.f32 %v411, %v977
  %v979 = vpop.f32.mrb[0].mxu0
  %980 = vmatprep.mubr.f32.mxu0 %v325
  %981 = vmatmul.mubr.f32.gmra.mrb[0].mxu0 %v324
  %v982 = vpop.f32.mrb[0].mxu0
  %v983 = vadd.f32 %v411, %v982
  %v984 = vpop.f32.mrb[0].mxu0
  %985 = vmatprep.mubr.f32.mxu0 %v330
  %986 = vmatmul.mubr.f32.gmra.mrb[0].mxu0 %v329
  %v987 = vpop.f32.mrb[0].mxu0
  %v988 = vadd.f32 %v411, %v987
  %v989 = vpop.f32.mrb[0].mxu0
  %990 = vdwg.mxu0
  %991 = vmatprep.subr.mxu0 0.0
  %992 = vmatpush1.msra.mxu0 %v366
  %993 = vmatprep.subr.mxu0 0.0
  %994 = vmatpush1.msra.mxu0 %v367
  %995 = vmatprep.subr.mxu0 0.0
  %996 = vmatpush1.msra.mxu0 %v368
  %997 = vmatprep.subr.mxu0 0.0
  %998 = vmatpush1.msra.mxu0 %v369
  %999 = vmatprep.subr.mxu0 0.0
  %1000 = vmatpush1.msra.mxu0 %v370
  %1001 = vmatprep.subr.mxu0 0.0
  %1002 = vmatpush1.msra.mxu0 %v371
  %1003 = vmatprep.subr.mxu0 0.0
  %1004 = vmatpush1.msra.mxu0 %v372
  %1005 = vmatprep.subr.mxu0 0.0
  %1006 = vmatpush1.msra.mxu0 %v373
  %1007 = vmatprep.subr.mxu0 0.0
  %1008 = vmatpush1.msra.mxu0 %v374
  %1009 = vmatprep.subr.mxu0 0.0
  %1010 = vmatpush1.msra.mxu0 %v375
  %1011 = vmatprep.subr.mxu0 0.0
  %1012 = vmatpush1.msra.mxu0 %v376
  %1013 = vmatprep.subr.mxu0 0.0
  %1014 = vmatpush1.msra.mxu0 %v377
  %1015 = vmatprep.subr.mxu0 0.0
  %1016 = vmatpush1.msra.mxu0 %v378
  %1017 = vmatprep.subr.mxu0 0.0
  %1018 = vmatpush1.msra.mxu0 %v379
  %1019 = vmatprep.subr.mxu0 0.0
  %1020 = vmatpush1.msra.mxu0 %v380
  %1021 = vmatprep.subr.mxu0 0.0
  %1022 = vmatpush1.msra.mxu0 %v381
  %1023 = vmatprep.subr.mxu0 0.0
  %1024 = vmatpush1.msra.mxu0 %v382
  %1025 = vmatprep.subr.mxu0 0.0
  %1026 = vmatpush1.msra.mxu0 %v383
  %1027 = vmatprep.subr.mxu0 0.0
  %1028 = vmatpush1.msra.mxu0 %v384
  %1029 = vmatprep.subr.mxu0 0.0
  %1030 = vmatpush1.msra.mxu0 %v385
  %1031 = vmatprep.subr.mxu0 0.0
  %1032 = vmatpush1.msra.mxu0 %v386
  %1033 = vmatprep.subr.mxu0 0.0
  %1034 = vmatpush1.msra.mxu0 %v387
  %1035 = vmatprep.subr.mxu0 0.0
  %1036 = vmatpush1.msra.mxu0 %v388
  %1037 = vmatprep.subr.mxu0 0.0
  %1038 = vmatpush1.msra.mxu0 %v389
  %1039 = vmatprep.subr.mxu0 0.0
  %1040 = vmatpush1.msra.mxu0 %v390
  %1041 = vmatprep.subr.mxu0 0.0
  %1042 = vmatpush1.msra.mxu0 %v391
  %1043 = vmatprep.subr.mxu0 0.0
  %1044 = vmatpush1.msra.mxu0 %v392
  %1045 = vmatprep.subr.mxu0 0.0
  %1046 = vmatpush1.msra.mxu0 %v393
  %1047 = vmatprep.subr.mxu0 0.0
  %1048 = vmatpush1.msra.mxu0 %v394
  %1049 = vmatprep.subr.mxu0 0.0
  %1050 = vmatpush1.msra.mxu0 %v395
  %1051 = vmatprep.subr.mxu0 0.0
  %1052 = vmatpush1.msra.mxu0 %v396
  %1053 = vmatprep.subr.mxu0 0.0
  %1054 = vmatpush1.msra.mxu0 %v397
  %1055 = vmatprep.mubr.f32.mxu0 %v17
  %1056 = vmatmul.mubr.f32.gmra.mrb[0].mxu0 %v16
  %v1057 = vpop.f32.mrb[0].mxu0
  %v1058 = vadd.f32 %v673, %v1057
  %v1059 = vpop.f32.mrb[0].mxu0
  %1060 = vmatprep.mubr.f32.mxu0 %v22
  %1061 = vmatmul.mubr.f32.gmra.mrb[0].mxu0 %v21
  %v1062 = vpop.f32.mrb[0].mxu0
  %v1063 = vadd.f32 %v678, %v1062
  %v1064 = vpop.f32.mrb[0].mxu0
  %1065 = vmatprep.mubr.f32.mxu0 %v27
  %1066 = vmatmul.mubr.f32.gmra.mrb[0].mxu0 %v26
  %v1067 = vpop.f32.mrb[0].mxu0
  %v1068 = vadd.f32 %v683, %v1067
  %v1069 = vpop.f32.mrb[0].mxu0
  %1070 = vmatprep.mubr.f32.mxu0 %v32
  %1071 = vmatmul.mubr.f32.gmra.mrb[0].mxu0 %v31
  %v1072 = vpop.f32.mrb[0].mxu0
  %v1073 = vadd.f32 %v688, %v1072
  %v1074 = vpop.f32.mrb[0].mxu0
  %1075 = vmatprep.mubr.f32.mxu0 %v37
  %1076 = vmatmul.mubr.f32.gmra.mrb[0].mxu0 %v36
  %v1077 = vpop.f32.mrb[0].mxu0
  %v1078 = vadd.f32 %v693, %v1077
  %v1079 = vpop.f32.mrb[0].mxu0
  %1080 = vmatprep.mubr.f32.mxu0 %v42
  %1081 = vmatmul.mubr.f32.gmra.mrb[0].mxu0 %v41
  %v1082 = vpop.f32.mrb[0].mxu0
  %v1083 = vadd.f32 %v698, %v1082
  %v1084 = vpop.f32.mrb[0].mxu0
  %1085 = vmatprep.mubr.f32.mxu0 %v47
  %1086 = vmatmul.mubr.f32.gmra.mrb[0].mxu0 %v46
  %v1087 = vpop.f32.mrb[0].mxu0
  %v1088 = vadd.f32 %v703, %v1087
  %v1089 = vpop.f32.mrb[0].mxu0
  %1090 = vmatprep.mubr.f32.mxu0 %v52
  %1091 = vmatmul.mubr.f32.gmra.mrb[0].mxu0 %v51
  %v1092 = vpop.f32.mrb[0].mxu0
  %v1093 = vadd.f32 %v708, %v1092
  %v1094 = vpop.f32.mrb[0].mxu0
  %1095 = vmatprep.mubr.f32.mxu0 %v57
  %1096 = vmatmul.mubr.f32.gmra.mrb[0].mxu0 %v56
  %v1097 = vpop.f32.mrb[0].mxu0
  %v1098 = vadd.f32 %v713, %v1097
  %v1099 = vpop.f32.mrb[0].mxu0
  %1100 = vmatprep.mubr.f32.mxu0 %v62
  %1101 = vmatmul.mubr.f32.gmra.mrb[0].mxu0 %v61
  %v1102 = vpop.f32.mrb[0].mxu0
  %v1103 = vadd.f32 %v718, %v1102
  %v1104 = vpop.f32.mrb[0].mxu0
  %1105 = vmatprep.mubr.f32.mxu0 %v67
  %1106 = vmatmul.mubr.f32.gmra.mrb[0].mxu0 %v66
  %v1107 = vpop.f32.mrb[0].mxu0
  %v1108 = vadd.f32 %v723, %v1107
  %v1109 = vpop.f32.mrb[0].mxu0
  %1110 = vmatprep.mubr.f32.mxu0 %v72
  %1111 = vmatmul.mubr.f32.gmra.mrb[0].mxu0 %v71
  %v1112 = vpop.f32.mrb[0].mxu0
  %v1113 = vadd.f32 %v728, %v1112
  %v1114 = vpop.f32.mrb[0].mxu0
  %1115 = vmatprep.mubr.f32.mxu0 %v77
  %1116 = vmatmul.mubr.f32.gmra.mrb[0].mxu0 %v76
  %v1117 = vpop.f32.mrb[0].mxu0
  %v1118 = vadd.f32 %v733, %v1117
  %v1119 = vpop.f32.mrb[0].mxu0
  %1120 = vmatprep.mubr.f32.mxu0 %v82
  %1121 = vmatmul.mubr.f32.gmra.mrb[0].mxu0 %v81
  %v1122 = vpop.f32.mrb[0].mxu0
  %v1123 = vadd.f32 %v738, %v1122
  %v1124 = vpop.f32.mrb[0].mxu0
  %1125 = vmatprep.mubr.f32.mxu0 %v87
  %1126 = vmatmul.mubr.f32.gmra.mrb[0].mxu0 %v86
  %v1127 = vpop.f32.mrb[0].mxu0
  %v1128 = vadd.f32 %v743, %v1127
  %v1129 = vpop.f32.mrb[0].mxu0
  %1130 = vmatprep.mubr.f32.mxu0 %v92
  %1131 = vmatmul.mubr.f32.gmra.mrb[0].mxu0 %v91
  %v1132 = vpop.f32.mrb[0].mxu0
  %v1133 = vadd.f32 %v748, %v1132
  %v1134 = vpop.f32.mrb[0].mxu0
  %1135 = vmatprep.mubr.f32.mxu0 %v97
  %1136 = vmatmul.mubr.f32.gmra.mrb[0].mxu0 %v96
  %v1137 = vpop.f32.mrb[0].mxu0
  %v1138 = vadd.f32 %v753, %v1137
  %v1139 = vpop.f32.mrb[0].mxu0
  %1140 = vmatprep.mubr.f32.mxu0 %v102
  %1141 = vmatmul.mubr.f32.gmra.mrb[0].mxu0 %v101
  %v1142 = vpop.f32.mrb[0].mxu0
  %v1143 = vadd.f32 %v758, %v1142
  %v1144 = vpop.f32.mrb[0].mxu0
  %1145 = vmatprep.mubr.f32.mxu0 %v107
  %1146 = vmatmul.mubr.f32.gmra.mrb[0].mxu0 %v106
  %v1147 = vpop.f32.mrb[0].mxu0
  %v1148 = vadd.f32 %v763, %v1147
  %v1149 = vpop.f32.mrb[0].mxu0
  %1150 = vmatprep.mubr.f32.mxu0 %v112
  %1151 = vmatmul.mubr.f32.gmra.mrb[0].mxu0 %v111
  %v1152 = vpop.f32.mrb[0].mxu0
  %v1153 = vadd.f32 %v768, %v1152
  %v1154 = vpop.f32.mrb[0].mxu0
  %1155 = vmatprep.mubr.f32.mxu0 %v117
  %1156 = vmatmul.mubr.f32.gmra.mrb[0].mxu0 %v116
  %v1157 = vpop.f32.mrb[0].mxu0
  %v1158 = vadd.f32 %v773, %v1157
  %v1159 = vpop.f32.mrb[0].mxu0
  %1160 = vmatprep.mubr.f32.mxu0 %v122
  %1161 = vmatmul.mubr.f32.gmra.mrb[0].mxu0 %v121
  %v1162 = vpop.f32.mrb[0].mxu0
  %v1163 = vadd.f32 %v778, %v1162
  %v1164 = vpop.f32.mrb[0].mxu0
  %1165 = vmatprep.mubr.f32.mxu0 %v127
  %1166 = vmatmul.mubr.f32.gmra.mrb[0].mxu0 %v126
  %v1167 = vpop.f32.mrb[0].mxu0
  %v1168 = vadd.f32 %v783, %v1167
  %v1169 = vpop.f32.mrb[0].mxu0
  %1170 = vmatprep.mubr.f32.mxu0 %v132
  %1171 = vmatmul.mubr.f32.gmra.mrb[0].mxu0 %v131
  %v1172 = vpop.f32.mrb[0].mxu0
  %v1173 = vadd.f32 %v788, %v1172
  %v1174 = vpop.f32.mrb[0].mxu0
  %1175 = vmatprep.mubr.f32.mxu0 %v137
  %1176 = vmatmul.mubr.f32.gmra.mrb[0].mxu0 %v136
  %v1177 = vpop.f32.mrb[0].mxu0
  %v1178 = vadd.f32 %v793, %v1177
  %v1179 = vpop.f32.mrb[0].mxu0
  %1180 = vmatprep.mubr.f32.mxu0 %v142
  %1181 = vmatmul.mubr.f32.gmra.mrb[0].mxu0 %v141
  %v1182 = vpop.f32.mrb[0].mxu0
  %v1183 = vadd.f32 %v798, %v1182
  %v1184 = vpop.f32.mrb[0].mxu0
  %1185 = vmatprep.mubr.f32.mxu0 %v147
  %1186 = vmatmul.mubr.f32.gmra.mrb[0].mxu0 %v146
  %v1187 = vpop.f32.mrb[0].mxu0
  %v1188 = vadd.f32 %v803, %v1187
  %v1189 = vpop.f32.mrb[0].mxu0
  %1190 = vmatprep.mubr.f32.mxu0 %v152
  %1191 = vmatmul.mubr.f32.gmra.mrb[0].mxu0 %v151
  %v1192 = vpop.f32.mrb[0].mxu0
  %v1193 = vadd.f32 %v808, %v1192
  %v1194 = vpop.f32.mrb[0].mxu0
  %1195 = vmatprep.mubr.f32.mxu0 %v157
  %1196 = vmatmul.mubr.f32.gmra.mrb[0].mxu0 %v156
  %v1197 = vpop.f32.mrb[0].mxu0
  %v1198 = vadd.f32 %v813, %v1197
  %v1199 = vpop.f32.mrb[0].mxu0
  %1200 = vmatprep.mubr.f32.mxu0 %v162
  %1201 = vmatmul.mubr.f32.gmra.mrb[0].mxu0 %v161
  %v1202 = vpop.f32.mrb[0].mxu0
  %v1203 = vadd.f32 %v818, %v1202
  %v1204 = vpop.f32.mrb[0].mxu0
  %1205 = vmatprep.mubr.f32.mxu0 %v167
  %1206 = vmatmul.mubr.f32.gmra.mrb[0].mxu0 %v166
  %v1207 = vpop.f32.mrb[0].mxu0
  %v1208 = vadd.f32 %v823, %v1207
  %v1209 = vpop.f32.mrb[0].mxu0
  %1210 = vmatprep.mubr.f32.mxu0 %v172
  %1211 = vmatmul.mubr.f32.gmra.mrb[0].mxu0 %v171
  %v1212 = vpop.f32.mrb[0].mxu0
  %v1213 = vadd.f32 %v828, %v1212
  %v1214 = vpop.f32.mrb[0].mxu0
  %1215 = vmatprep.mubr.f32.mxu0 %v177
  %1216 = vmatmul.mubr.f32.gmra.mrb[0].mxu0 %v176
  %v1217 = vpop.f32.mrb[0].mxu0
  %v1218 = vadd.f32 %v833, %v1217
  %v1219 = vpop.f32.mrb[0].mxu0
  %1220 = vmatprep.mubr.f32.mxu0 %v182
  %1221 = vmatmul.mubr.f32.gmra.mrb[0].mxu0 %v181
  %v1222 = vpop.f32.mrb[0].mxu0
  %v1223 = vadd.f32 %v838, %v1222
  %v1224 = vpop.f32.mrb[0].mxu0
  %1225 = vmatprep.mubr.f32.mxu0 %v187
  %1226 = vmatmul.mubr.f32.gmra.mrb[0].mxu0 %v186
  %v1227 = vpop.f32.mrb[0].mxu0
  %v1228 = vadd.f32 %v843, %v1227
  %v1229 = vpop.f32.mrb[0].mxu0
  %1230 = vmatprep.mubr.f32.mxu0 %v192
  %1231 = vmatmul.mubr.f32.gmra.mrb[0].mxu0 %v191
  %v1232 = vpop.f32.mrb[0].mxu0
  %v1233 = vadd.f32 %v848, %v1232
  %v1234 = vpop.f32.mrb[0].mxu0
  %1235 = vmatprep.mubr.f32.mxu0 %v197
  %1236 = vmatmul.mubr.f32.gmra.mrb[0].mxu0 %v196
  %v1237 = vpop.f32.mrb[0].mxu0
  %v1238 = vadd.f32 %v853, %v1237
  %v1239 = vpop.f32.mrb[0].mxu0
  %1240 = vmatprep.mubr.f32.mxu0 %v202
  %1241 = vmatmul.mubr.f32.gmra.mrb[0].mxu0 %v201
  %v1242 = vpop.f32.mrb[0].mxu0
  %v1243 = vadd.f32 %v858, %v1242
  %v1244 = vpop.f32.mrb[0].mxu0
  %1245 = vmatprep.mubr.f32.mxu0 %v207
  %1246 = vmatmul.mubr.f32.gmra.mrb[0].mxu0 %v206
  %v1247 = vpop.f32.mrb[0].mxu0
  %v1248 = vadd.f32 %v863, %v1247
  %v1249 = vpop.f32.mrb[0].mxu0
  %1250 = vmatprep.mubr.f32.mxu0 %v212
  %1251 = vmatmul.mubr.f32.gmra.mrb[0].mxu0 %v211
  %v1252 = vpop.f32.mrb[0].mxu0
  %v1253 = vadd.f32 %v868, %v1252
  %v1254 = vpop.f32.mrb[0].mxu0
  %1255 = vmatprep.mubr.f32.mxu0 %v217
  %1256 = vmatmul.mubr.f32.gmra.mrb[0].mxu0 %v216
  %v1257 = vpop.f32.mrb[0].mxu0
  %v1258 = vadd.f32 %v873, %v1257
  %v1259 = vpop.f32.mrb[0].mxu0
  %1260 = vmatprep.mubr.f32.mxu0 %v222
  %1261 = vmatmul.mubr.f32.gmra.mrb[0].mxu0 %v221
  %v1262 = vpop.f32.mrb[0].mxu0
  %v1263 = vadd.f32 %v878, %v1262
  %v1264 = vpop.f32.mrb[0].mxu0
  %1265 = vmatprep.mubr.f32.mxu0 %v227
  %1266 = vmatmul.mubr.f32.gmra.mrb[0].mxu0 %v226
  %v1267 = vpop.f32.mrb[0].mxu0
  %v1268 = vadd.f32 %v883, %v1267
  %v1269 = vpop.f32.mrb[0].mxu0
  %1270 = vmatprep.mubr.f32.mxu0 %v232
  %1271 = vmatmul.mubr.f32.gmra.mrb[0].mxu0 %v231
  %v1272 = vpop.f32.mrb[0].mxu0
  %v1273 = vadd.f32 %v888, %v1272
  %v1274 = vpop.f32.mrb[0].mxu0
  %1275 = vmatprep.mubr.f32.mxu0 %v237
  %1276 = vmatmul.mubr.f32.gmra.mrb[0].mxu0 %v236
  %v1277 = vpop.f32.mrb[0].mxu0
  %v1278 = vadd.f32 %v893, %v1277
  %v1279 = vpop.f32.mrb[0].mxu0
  %1280 = vmatprep.mubr.f32.mxu0 %v242
  %1281 = vmatmul.mubr.f32.gmra.mrb[0].mxu0 %v241
  %v1282 = vpop.f32.mrb[0].mxu0
  %v1283 = vadd.f32 %v898, %v1282
  %v1284 = vpop.f32.mrb[0].mxu0
  %1285 = vmatprep.mubr.f32.mxu0 %v247
  %1286 = vmatmul.mubr.f32.gmra.mrb[0].mxu0 %v246
  %v1287 = vpop.f32.mrb[0].mxu0
  %v1288 = vadd.f32 %v903, %v1287
  %v1289 = vpop.f32.mrb[0].mxu0
  %1290 = vmatprep.mubr.f32.mxu0 %v252
  %1291 = vmatmul.mubr.f32.gmra.mrb[0].mxu0 %v251
  %v1292 = vpop.f32.mrb[0].mxu0
  %v1293 = vadd.f32 %v908, %v1292
  %v1294 = vpop.f32.mrb[0].mxu0
  %1295 = vmatprep.mubr.f32.mxu0 %v257
  %1296 = vmatmul.mubr.f32.gmra.mrb[0].mxu0 %v256
  %v1297 = vpop.f32.mrb[0].mxu0
  %v1298 = vadd.f32 %v913, %v1297
  %v1299 = vpop.f32.mrb[0].mxu0
  %1300 = vmatprep.mubr.f32.mxu0 %v262
  %1301 = vmatmul.mubr.f32.gmra.mrb[0].mxu0 %v261
  %v1302 = vpop.f32.mrb[0].mxu0
  %v1303 = vadd.f32 %v918, %v1302
  %v1304 = vpop.f32.mrb[0].mxu0
  %1305 = vmatprep.mubr.f32.mxu0 %v267
  %1306 = vmatmul.mubr.f32.gmra.mrb[0].mxu0 %v266
  %v1307 = vpop.f32.mrb[0].mxu0
  %v1308 = vadd.f32 %v923, %v1307
  %v1309 = vpop.f32.mrb[0].mxu0
  %1310 = vmatprep.mubr.f32.mxu0 %v272
  %1311 = vmatmul.mubr.f32.gmra.mrb[0].mxu0 %v271
  %v1312 = vpop.f32.mrb[0].mxu0
  %v1313 = vadd.f32 %v928, %v1312
  %v1314 = vpop.f32.mrb[0].mxu0
  %1315 = vmatprep.mubr.f32.mxu0 %v277
  %1316 = vmatmul.mubr.f32.gmra.mrb[0].mxu0 %v276
  %v1317 = vpop.f32.mrb[0].mxu0
  %v1318 = vadd.f32 %v933, %v1317
  %v1319 = vpop.f32.mrb[0].mxu0
  %1320 = vmatprep.mubr.f32.mxu0 %v282
  %1321 = vmatmul.mubr.f32.gmra.mrb[0].mxu0 %v281
  %v1322 = vpop.f32.mrb[0].mxu0
  %v1323 = vadd.f32 %v938, %v1322
  %v1324 = vpop.f32.mrb[0].mxu0
  %1325 = vmatprep.mubr.f32.mxu0 %v287
  %1326 = vmatmul.mubr.f32.gmra.mrb[0].mxu0 %v286
  %v1327 = vpop.f32.mrb[0].mxu0
  %v1328 = vadd.f32 %v943, %v1327
  %v1329 = vpop.f32.mrb[0].mxu0
  %1330 = vmatprep.mubr.f32.mxu0 %v292
  %1331 = vmatmul.mubr.f32.gmra.mrb[0].mxu0 %v291
  %v1332 = vpop.f32.mrb[0].mxu0
  %v1333 = vadd.f32 %v948, %v1332
  %v1334 = vpop.f32.mrb[0].mxu0
  %1335 = vmatprep.mubr.f32.mxu0 %v297
  %1336 = vmatmul.mubr.f32.gmra.mrb[0].mxu0 %v296
  %v1337 = vpop.f32.mrb[0].mxu0
  %v1338 = vadd.f32 %v953, %v1337
  %v1339 = vpop.f32.mrb[0].mxu0
  %1340 = vmatprep.mubr.f32.mxu0 %v302
  %1341 = vmatmul.mubr.f32.gmra.mrb[0].mxu0 %v301
  %v1342 = vpop.f32.mrb[0].mxu0
  %v1343 = vadd.f32 %v958, %v1342
  %v1344 = vpop.f32.mrb[0].mxu0
  %1345 = vmatprep.mubr.f32.mxu0 %v307
  %1346 = vmatmul.mubr.f32.gmra.mrb[0].mxu0 %v306
  %v1347 = vpop.f32.mrb[0].mxu0
  %v1348 = vadd.f32 %v963, %v1347
  %v1349 = vpop.f32.mrb[0].mxu0
  %1350 = vmatprep.mubr.f32.mxu0 %v312
  %1351 = vmatmul.mubr.f32.gmra.mrb[0].mxu0 %v311
  %v1352 = vpop.f32.mrb[0].mxu0
  %v1353 = vadd.f32 %v968, %v1352
  %v1354 = vpop.f32.mrb[0].mxu0
  %1355 = vmatprep.mubr.f32.mxu0 %v317
  %1356 = vmatmul.mubr.f32.gmra.mrb[0].mxu0 %v316
  %v1357 = vpop.f32.mrb[0].mxu0
  %v1358 = vadd.f32 %v973, %v1357
  %v1359 = vpop.f32.mrb[0].mxu0
  %1360 = vmatprep.mubr.f32.mxu0 %v322
  %1361 = vmatmul.mubr.f32.gmra.mrb[0].mxu0 %v321
  %v1362 = vpop.f32.mrb[0].mxu0
  %v1363 = vadd.f32 %v978, %v1362
  %v1364 = vpop.f32.mrb[0].mxu0
  %1365 = vmatprep.mubr.f32.mxu0 %v327
  %1366 = vmatmul.mubr.f32.gmra.mrb[0].mxu0 %v326
  %v1367 = vpop.f32.mrb[0].mxu0
  %v1368 = vadd.f32 %v983, %v1367
  %v1369 = vpop.f32.mrb[0].mxu0
  %1370 = vmatprep.mubr.f32.mxu0 %v332
  %1371 = vmatmul.mubr.f32.gmra.mrb[0].mxu0 %v331
  %v1372 = vpop.f32.mrb[0].mxu0
  %v1373 = vadd.f32 %v988, %v1372
  %v1374 = vpop.f32.mrb[0].mxu0
  %1375 = vdwg.mxu0
  %1376 = vmatprep.subr.mxu0 0.0
  %1377 = vmatpush1.msra.mxu0 %v398
  %1378 = vmatprep.subr.mxu0 0.0
  %1379 = vmatpush1.msra.mxu0 %v399
  %1380 = vmatprep.subr.mxu0 0.0
  %1381 = vmatpush1.msra.mxu0 %v400
  %1382 = vmatprep.subr.mxu0 0.0
  %1383 = vmatpush1.msra.mxu0 %v401
  %1384 = vmatprep.subr.mxu0 0.0
  %1385 = vmatpush1.msra.mxu0 %v402
  %1386 = vmatprep.subr.mxu0 0.0
  %1387 = vmatpush1.msra.mxu0 %v403
  %1388 = vmatprep.subr.mxu0 0.0
  %1389 = vmatpush1.msra.mxu0 %v404
  %1390 = vmatprep.subr.mxu0 0.0
  %1391 = vmatpush1.msra.mxu0 %v405
  %1392 = vmatprep.subr.mxu0 0.0
  %1393 = vmatpush1.msra.mxu0 0.0
  %1394 = vmatprep.subr.mxu0 0.0
  %1395 = vmatpush1.msra.mxu0 0.0
  %1396 = vmatprep.subr.mxu0 0.0
  %1397 = vmatpush1.msra.mxu0 0.0
  %1398 = vmatprep.subr.mxu0 0.0
  %1399 = vmatpush1.msra.mxu0 0.0
  %1400 = vmatprep.subr.mxu0 0.0
  %1401 = vmatpush1.msra.mxu0 0.0
  %1402 = vmatprep.subr.mxu0 0.0
  %1403 = vmatpush1.msra.mxu0 0.0
  %1404 = vmatprep.subr.mxu0 0.0
  %1405 = vmatpush1.msra.mxu0 0.0
  %1406 = vmatprep.subr.mxu0 0.0
  %1407 = vmatpush1.msra.mxu0 0.0
  %1408 = vmatprep.subr.mxu0 0.0
  %1409 = vmatpush1.msra.mxu0 0.0
  %1410 = vmatprep.subr.mxu0 0.0
  %1411 = vmatpush1.msra.mxu0 0.0
  %1412 = vmatprep.subr.mxu0 0.0
  %1413 = vmatpush1.msra.mxu0 0.0
  %1414 = vmatprep.subr.mxu0 0.0
  %1415 = vmatpush1.msra.mxu0 0.0
  %1416 = vmatprep.subr.mxu0 0.0
  %1417 = vmatpush1.msra.mxu0 0.0
  %1418 = vmatprep.subr.mxu0 0.0
  %1419 = vmatpush1.msra.mxu0 0.0
  %1420 = vmatprep.subr.mxu0 0.0
  %1421 = vmatpush1.msra.mxu0 0.0
  %1422 = vmatprep.subr.mxu0 0.0
  %1423 = vmatpush1.msra.mxu0 0.0
  %1424 = vmatprep.subr.mxu0 0.0
  %1425 = vmatpush1.msra.mxu0 0.0
  %1426 = vmatprep.subr.mxu0 0.0
  %1427 = vmatpush1.msra.mxu0 0.0
  %1428 = vmatprep.subr.mxu0 0.0
  %1429 = vmatpush1.msra.mxu0 0.0
  %1430 = vmatprep.subr.mxu0 0.0
  %1431 = vmatpush1.msra.mxu0 0.0
  %1432 = vmatprep.subr.mxu0 0.0
  %1433 = vmatpush1.msra.mxu0 0.0
  %1434 = vmatprep.subr.mxu0 0.0
  %1435 = vmatpush1.msra.mxu0 0.0
  %1436 = vmatprep.subr.mxu0 0.0
  %1437 = vmatpush1.msra.mxu0 0.0
  %1438 = vmatprep.subr.mxu0 0.0
  %1439 = vmatpush1.msra.mxu0 0.0
  %1440 = vmatprep.mubr.f32.mxu0 0.0
  %1441 = vmatmul.mubr.f32.gmra.mrb[0].mxu0 %v415
  %v1442 = vpop.f32.mrb[0].mxu0
  %v1443 = vadd.f32 %v1058, %v1442
  %v1444 = vpop.f32.mrb[0].mxu0
  %1445 = vmatprep.mubr.f32.mxu0 0.0
  %1446 = vmatmul.mubr.f32.gmra.mrb[0].mxu0 %v418
  %v1447 = vpop.f32.mrb[0].mxu0
  %v1448 = vadd.f32 %v1063, %v1447
  %v1449 = vpop.f32.mrb[0].mxu0
  %1450 = vmatprep.mubr.f32.mxu0 0.0
  %1451 = vmatmul.mubr.f32.gmra.mrb[0].mxu0 %v421
  %v1452 = vpop.f32.mrb[0].mxu0
  %v1453 = vadd.f32 %v1068, %v1452
  %v1454 = vpop.f32.mrb[0].mxu0
  %1455 = vmatprep.mubr.f32.mxu0 0.0
  %1456 = vmatmul.mubr.f32.gmra.mrb[0].mxu0 %v424
  %v1457 = vpop.f32.mrb[0].mxu0
  %v1458 = vadd.f32 %v1073, %v1457
  %v1459 = vpop.f32.mrb[0].mxu0
  %1460 = vmatprep.mubr.f32.mxu0 0.0
  %1461 = vmatmul.mubr.f32.gmra.mrb[0].mxu0 %v427
  %v1462 = vpop.f32.mrb[0].mxu0
  %v1463 = vadd.f32 %v1078, %v1462
  %v1464 = vpop.f32.mrb[0].mxu0
  %1465 = vmatprep.mubr.f32.mxu0 0.0
  %1466 = vmatmul.mubr.f32.gmra.mrb[0].mxu0 %v430
  %v1467 = vpop.f32.mrb[0].mxu0
  %v1468 = vadd.f32 %v1083, %v1467
  %v1469 = vpop.f32.mrb[0].mxu0
  %1470 = vmatprep.mubr.f32.mxu0 0.0
  %1471 = vmatmul.mubr.f32.gmra.mrb[0].mxu0 %v433
  %v1472 = vpop.f32.mrb[0].mxu0
  %v1473 = vadd.f32 %v1088, %v1472
  %v1474 = vpop.f32.mrb[0].mxu0
  %1475 = vmatprep.mubr.f32.mxu0 0.0
  %1476 = vmatmul.mubr.f32.gmra.mrb[0].mxu0 %v436
  %v1477 = vpop.f32.mrb[0].mxu0
  %v1478 = vadd.f32 %v1093, %v1477
  %v1479 = vpop.f32.mrb[0].mxu0
  %1480 = vmatprep.mubr.f32.mxu0 0.0
  %1481 = vmatmul.mubr.f32.gmra.mrb[0].mxu0 %v439
  %v1482 = vpop.f32.mrb[0].mxu0
  %v1483 = vadd.f32 %v1098, %v1482
  %v1484 = vpop.f32.mrb[0].mxu0
  %1485 = vmatprep.mubr.f32.mxu0 0.0
  %1486 = vmatmul.mubr.f32.gmra.mrb[0].mxu0 %v442
  %v1487 = vpop.f32.mrb[0].mxu0
  %v1488 = vadd.f32 %v1103, %v1487
  %v1489 = vpop.f32.mrb[0].mxu0
  %1490 = vmatprep.mubr.f32.mxu0 0.0
  %1491 = vmatmul.mubr.f32.gmra.mrb[0].mxu0 %v445
  %v1492 = vpop.f32.mrb[0].mxu0
  %v1493 = vadd.f32 %v1108, %v1492
  %v1494 = vpop.f32.mrb[0].mxu0
  %1495 = vmatprep.mubr.f32.mxu0 0.0
  %1496 = vmatmul.mubr.f32.gmra.mrb[0].mxu0 %v448
  %v1497 = vpop.f32.mrb[0].mxu0
  %v1498 = vadd.f32 %v1113, %v1497
  %v1499 = vpop.f32.mrb[0].mxu0
  %1500 = vmatprep.mubr.f32.mxu0 0.0
  %1501 = vmatmul.mubr.f32.gmra.mrb[0].mxu0 %v451
  %v1502 = vpop.f32.mrb[0].mxu0
  %v1503 = vadd.f32 %v1118, %v1502
  %v1504 = vpop.f32.mrb[0].mxu0
  %1505 = vmatprep.mubr.f32.mxu0 0.0
  %1506 = vmatmul.mubr.f32.gmra.mrb[0].mxu0 %v454
  %v1507 = vpop.f32.mrb[0].mxu0
  %v1508 = vadd.f32 %v1123, %v1507
  %v1509 = vpop.f32.mrb[0].mxu0
  %1510 = vmatprep.mubr.f32.mxu0 0.0
  %1511 = vmatmul.mubr.f32.gmra.mrb[0].mxu0 %v457
  %v1512 = vpop.f32.mrb[0].mxu0
  %v1513 = vadd.f32 %v1128, %v1512
  %v1514 = vpop.f32.mrb[0].mxu0
  %1515 = vmatprep.mubr.f32.mxu0 0.0
  %1516 = vmatmul.mubr.f32.gmra.mrb[0].mxu0 %v460
  %v1517 = vpop.f32.mrb[0].mxu0
  %v1518 = vadd.f32 %v1133, %v1517
  %v1519 = vpop.f32.mrb[0].mxu0
  %1520 = vmatprep.mubr.f32.mxu0 0.0
  %1521 = vmatmul.mubr.f32.gmra.mrb[0].mxu0 %v463
  %v1522 = vpop.f32.mrb[0].mxu0
  %v1523 = vadd.f32 %v1138, %v1522
  %v1524 = vpop.f32.mrb[0].mxu0
  %1525 = vmatprep.mubr.f32.mxu0 0.0
  %1526 = vmatmul.mubr.f32.gmra.mrb[0].mxu0 %v466
  %v1527 = vpop.f32.mrb[0].mxu0
  %v1528 = vadd.f32 %v1143, %v1527
  %v1529 = vpop.f32.mrb[0].mxu0
  %1530 = vmatprep.mubr.f32.mxu0 0.0
  %1531 = vmatmul.mubr.f32.gmra.mrb[0].mxu0 %v469
  %v1532 = vpop.f32.mrb[0].mxu0
  %v1533 = vadd.f32 %v1148, %v1532
  %v1534 = vpop.f32.mrb[0].mxu0
  %1535 = vmatprep.mubr.f32.mxu0 0.0
  %1536 = vmatmul.mubr.f32.gmra.mrb[0].mxu0 %v472
  %v1537 = vpop.f32.mrb[0].mxu0
  %v1538 = vadd.f32 %v1153, %v1537
  %v1539 = vpop.f32.mrb[0].mxu0
  %1540 = vmatprep.mubr.f32.mxu0 0.0
  %1541 = vmatmul.mubr.f32.gmra.mrb[0].mxu0 %v475
  %v1542 = vpop.f32.mrb[0].mxu0
  %v1543 = vadd.f32 %v1158, %v1542
  %v1544 = vpop.f32.mrb[0].mxu0
  %1545 = vmatprep.mubr.f32.mxu0 0.0
  %1546 = vmatmul.mubr.f32.gmra.mrb[0].mxu0 %v478
  %v1547 = vpop.f32.mrb[0].mxu0
  %v1548 = vadd.f32 %v1163, %v1547
  %v1549 = vpop.f32.mrb[0].mxu0
  %1550 = vmatprep.mubr.f32.mxu0 0.0
  %1551 = vmatmul.mubr.f32.gmra.mrb[0].mxu0 %v481
  %v1552 = vpop.f32.mrb[0].mxu0
  %v1553 = vadd.f32 %v1168, %v1552
  %v1554 = vpop.f32.mrb[0].mxu0
  %1555 = vmatprep.mubr.f32.mxu0 0.0
  %1556 = vmatmul.mubr.f32.gmra.mrb[0].mxu0 %v484
  %v1557 = vpop.f32.mrb[0].mxu0
  %v1558 = vadd.f32 %v1173, %v1557
  %v1559 = vpop.f32.mrb[0].mxu0
  %1560 = vmatprep.mubr.f32.mxu0 0.0
  %1561 = vmatmul.mubr.f32.gmra.mrb[0].mxu0 %v487
  %v1562 = vpop.f32.mrb[0].mxu0
  %v1563 = vadd.f32 %v1178, %v1562
  %v1564 = vpop.f32.mrb[0].mxu0
  %1565 = vmatprep.mubr.f32.mxu0 0.0
  %1566 = vmatmul.mubr.f32.gmra.mrb[0].mxu0 %v490
  %v1567 = vpop.f32.mrb[0].mxu0
  %v1568 = vadd.f32 %v1183, %v1567
  %v1569 = vpop.f32.mrb[0].mxu0
  %1570 = vmatprep.mubr.f32.mxu0 0.0
  %1571 = vmatmul.mubr.f32.gmra.mrb[0].mxu0 %v493
  %v1572 = vpop.f32.mrb[0].mxu0
  %v1573 = vadd.f32 %v1188, %v1572
  %v1574 = vpop.f32.mrb[0].mxu0
  %1575 = vmatprep.mubr.f32.mxu0 0.0
  %1576 = vmatmul.mubr.f32.gmra.mrb[0].mxu0 %v496
  %v1577 = vpop.f32.mrb[0].mxu0
  %v1578 = vadd.f32 %v1193, %v1577
  %v1579 = vpop.f32.mrb[0].mxu0
  %1580 = vmatprep.mubr.f32.mxu0 0.0
  %1581 = vmatmul.mubr.f32.gmra.mrb[0].mxu0 %v499
  %v1582 = vpop.f32.mrb[0].mxu0
  %v1583 = vadd.f32 %v1198, %v1582
  %v1584 = vpop.f32.mrb[0].mxu0
  %1585 = vmatprep.mubr.f32.mxu0 0.0
  %1586 = vmatmul.mubr.f32.gmra.mrb[0].mxu0 %v502
  %v1587 = vpop.f32.mrb[0].mxu0
  %v1588 = vadd.f32 %v1203, %v1587
  %v1589 = vpop.f32.mrb[0].mxu0
  %1590 = vmatprep.mubr.f32.mxu0 0.0
  %1591 = vmatmul.mubr.f32.gmra.mrb[0].mxu0 %v505
  %v1592 = vpop.f32.mrb[0].mxu0
  %v1593 = vadd.f32 %v1208, %v1592
  %v1594 = vpop.f32.mrb[0].mxu0
  %1595 = vmatprep.mubr.f32.mxu0 0.0
  %1596 = vmatmul.mubr.f32.gmra.mrb[0].mxu0 %v508
  %v1597 = vpop.f32.mrb[0].mxu0
  %v1598 = vadd.f32 %v1213, %v1597
  %v1599 = vpop.f32.mrb[0].mxu0
  %1600 = vmatprep.mubr.f32.mxu0 0.0
  %1601 = vmatmul.mubr.f32.gmra.mrb[0].mxu0 %v511
  %v1602 = vpop.f32.mrb[0].mxu0
  %v1603 = vadd.f32 %v1218, %v1602
  %v1604 = vpop.f32.mrb[0].mxu0
  %1605 = vmatprep.mubr.f32.mxu0 0.0
  %1606 = vmatmul.mubr.f32.gmra.mrb[0].mxu0 %v514
  %v1607 = vpop.f32.mrb[0].mxu0
  %v1608 = vadd.f32 %v1223, %v1607
  %v1609 = vpop.f32.mrb[0].mxu0
  %1610 = vmatprep.mubr.f32.mxu0 0.0
  %1611 = vmatmul.mubr.f32.gmra.mrb[0].mxu0 %v517
  %v1612 = vpop.f32.mrb[0].mxu0
  %v1613 = vadd.f32 %v1228, %v1612
  %v1614 = vpop.f32.mrb[0].mxu0
  %1615 = vmatprep.mubr.f32.mxu0 0.0
  %1616 = vmatmul.mubr.f32.gmra.mrb[0].mxu0 %v520
  %v1617 = vpop.f32.mrb[0].mxu0
  %v1618 = vadd.f32 %v1233, %v1617
  %v1619 = vpop.f32.mrb[0].mxu0
  %1620 = vmatprep.mubr.f32.mxu0 0.0
  %1621 = vmatmul.mubr.f32.gmra.mrb[0].mxu0 %v523
  %v1622 = vpop.f32.mrb[0].mxu0
  %v1623 = vadd.f32 %v1238, %v1622
  %v1624 = vpop.f32.mrb[0].mxu0
  %1625 = vmatprep.mubr.f32.mxu0 0.0
  %1626 = vmatmul.mubr.f32.gmra.mrb[0].mxu0 %v526
  %v1627 = vpop.f32.mrb[0].mxu0
  %v1628 = vadd.f32 %v1243, %v1627
  %v1629 = vpop.f32.mrb[0].mxu0
  %1630 = vmatprep.mubr.f32.mxu0 0.0
  %1631 = vmatmul.mubr.f32.gmra.mrb[0].mxu0 %v529
  %v1632 = vpop.f32.mrb[0].mxu0
  %v1633 = vadd.f32 %v1248, %v1632
  %v1634 = vpop.f32.mrb[0].mxu0
  %1635 = vmatprep.mubr.f32.mxu0 0.0
  %1636 = vmatmul.mubr.f32.gmra.mrb[0].mxu0 %v532
  %v1637 = vpop.f32.mrb[0].mxu0
  %v1638 = vadd.f32 %v1253, %v1637
  %v1639 = vpop.f32.mrb[0].mxu0
  %1640 = vmatprep.mubr.f32.mxu0 0.0
  %1641 = vmatmul.mubr.f32.gmra.mrb[0].mxu0 %v535
  %v1642 = vpop.f32.mrb[0].mxu0
  %v1643 = vadd.f32 %v1258, %v1642
  %v1644 = vpop.f32.mrb[0].mxu0
  %1645 = vmatprep.mubr.f32.mxu0 0.0
  %1646 = vmatmul.mubr.f32.gmra.mrb[0].mxu0 %v538
  %v1647 = vpop.f32.mrb[0].mxu0
  %v1648 = vadd.f32 %v1263, %v1647
  %v1649 = vpop.f32.mrb[0].mxu0
  %1650 = vmatprep.mubr.f32.mxu0 0.0
  %1651 = vmatmul.mubr.f32.gmra.mrb[0].mxu0 %v541
  %v1652 = vpop.f32.mrb[0].mxu0
  %v1653 = vadd.f32 %v1268, %v1652
  %v1654 = vpop.f32.mrb[0].mxu0
  %1655 = vmatprep.mubr.f32.mxu0 0.0
  %1656 = vmatmul.mubr.f32.gmra.mrb[0].mxu0 %v544
  %v1657 = vpop.f32.mrb[0].mxu0
  %v1658 = vadd.f32 %v1273, %v1657
  %v1659 = vpop.f32.mrb[0].mxu0
  %1660 = vmatprep.mubr.f32.mxu0 0.0
  %1661 = vmatmul.mubr.f32.gmra.mrb[0].mxu0 %v547
  %v1662 = vpop.f32.mrb[0].mxu0
  %v1663 = vadd.f32 %v1278, %v1662
  %v1664 = vpop.f32.mrb[0].mxu0
  %1665 = vmatprep.mubr.f32.mxu0 0.0
  %1666 = vmatmul.mubr.f32.gmra.mrb[0].mxu0 %v550
  %v1667 = vpop.f32.mrb[0].mxu0
  %v1668 = vadd.f32 %v1283, %v1667
  %v1669 = vpop.f32.mrb[0].mxu0
  %1670 = vmatprep.mubr.f32.mxu0 0.0
  %1671 = vmatmul.mubr.f32.gmra.mrb[0].mxu0 %v553
  %v1672 = vpop.f32.mrb[0].mxu0
  %v1673 = vadd.f32 %v1288, %v1672
  %v1674 = vpop.f32.mrb[0].mxu0
  %1675 = vmatprep.mubr.f32.mxu0 0.0
  %1676 = vmatmul.mubr.f32.gmra.mrb[0].mxu0 %v556
  %v1677 = vpop.f32.mrb[0].mxu0
  %v1678 = vadd.f32 %v1293, %v1677
  %v1679 = vpop.f32.mrb[0].mxu0
  %1680 = vmatprep.mubr.f32.mxu0 0.0
  %1681 = vmatmul.mubr.f32.gmra.mrb[0].mxu0 %v559
  %v1682 = vpop.f32.mrb[0].mxu0
  %v1683 = vadd.f32 %v1298, %v1682
  %v1684 = vpop.f32.mrb[0].mxu0
  %1685 = vmatprep.mubr.f32.mxu0 0.0
  %1686 = vmatmul.mubr.f32.gmra.mrb[0].mxu0 %v562
  %v1687 = vpop.f32.mrb[0].mxu0
  %v1688 = vadd.f32 %v1303, %v1687
  %v1689 = vpop.f32.mrb[0].mxu0
  %1690 = vmatprep.mubr.f32.mxu0 0.0
  %1691 = vmatmul.mubr.f32.gmra.mrb[0].mxu0 %v565
  %v1692 = vpop.f32.mrb[0].mxu0
  %v1693 = vadd.f32 %v1308, %v1692
  %v1694 = vpop.f32.mrb[0].mxu0
  %1695 = vmatprep.mubr.f32.mxu0 0.0
  %1696 = vmatmul.mubr.f32.gmra.mrb[0].mxu0 %v568
  %v1697 = vpop.f32.mrb[0].mxu0
  %v1698 = vadd.f32 %v1313, %v1697
  %v1699 = vpop.f32.mrb[0].mxu0
  %1700 = vmatprep.mubr.f32.mxu0 0.0
  %1701 = vmatmul.mubr.f32.gmra.mrb[0].mxu0 %v571
  %v1702 = vpop.f32.mrb[0].mxu0
  %v1703 = vadd.f32 %v1318, %v1702
  %v1704 = vpop.f32.mrb[0].mxu0
  %1705 = vmatprep.mubr.f32.mxu0 0.0
  %1706 = vmatmul.mubr.f32.gmra.mrb[0].mxu0 %v574
  %v1707 = vpop.f32.mrb[0].mxu0
  %v1708 = vadd.f32 %v1323, %v1707
  %v1709 = vpop.f32.mrb[0].mxu0
  %1710 = vmatprep.mubr.f32.mxu0 0.0
  %1711 = vmatmul.mubr.f32.gmra.mrb[0].mxu0 %v577
  %v1712 = vpop.f32.mrb[0].mxu0
  %v1713 = vadd.f32 %v1328, %v1712
  %v1714 = vpop.f32.mrb[0].mxu0
  %1715 = vmatprep.mubr.f32.mxu0 0.0
  %1716 = vmatmul.mubr.f32.gmra.mrb[0].mxu0 %v580
  %v1717 = vpop.f32.mrb[0].mxu0
  %v1718 = vadd.f32 %v1333, %v1717
  %v1719 = vpop.f32.mrb[0].mxu0
  %1720 = vmatprep.mubr.f32.mxu0 0.0
  %1721 = vmatmul.mubr.f32.gmra.mrb[0].mxu0 %v583
  %v1722 = vpop.f32.mrb[0].mxu0
  %v1723 = vadd.f32 %v1338, %v1722
  %v1724 = vpop.f32.mrb[0].mxu0
  %1725 = vmatprep.mubr.f32.mxu0 0.0
  %1726 = vmatmul.mubr.f32.gmra.mrb[0].mxu0 %v586
  %v1727 = vpop.f32.mrb[0].mxu0
  %v1728 = vadd.f32 %v1343, %v1727
  %v1729 = vpop.f32.mrb[0].mxu0
  %1730 = vmatprep.mubr.f32.mxu0 0.0
  %1731 = vmatmul.mubr.f32.gmra.mrb[0].mxu0 %v589
  %v1732 = vpop.f32.mrb[0].mxu0
  %v1733 = vadd.f32 %v1348, %v1732
  %v1734 = vpop.f32.mrb[0].mxu0
  %1735 = vmatprep.mubr.f32.mxu0 0.0
  %1736 = vmatmul.mubr.f32.gmra.mrb[0].mxu0 %v592
  %v1737 = vpop.f32.mrb[0].mxu0
  %v1738 = vadd.f32 %v1353, %v1737
  %v1739 = vpop.f32.mrb[0].mxu0
  %1740 = vmatprep.mubr.f32.mxu0 0.0
  %1741 = vmatmul.mubr.f32.gmra.mrb[0].mxu0 %v595
  %v1742 = vpop.f32.mrb[0].mxu0
  %v1743 = vadd.f32 %v1358, %v1742
  %v1744 = vpop.f32.mrb[0].mxu0
  %1745 = vmatprep.mubr.f32.mxu0 0.0
  %1746 = vmatmul.mubr.f32.gmra.mrb[0].mxu0 %v598
  %v1747 = vpop.f32.mrb[0].mxu0
  %v1748 = vadd.f32 %v1363, %v1747
  %v1749 = vpop.f32.mrb[0].mxu0
  %1750 = vmatprep.mubr.f32.mxu0 0.0
  %1751 = vmatmul.mubr.f32.gmra.mrb[0].mxu0 %v601
  %v1752 = vpop.f32.mrb[0].mxu0
  %v1753 = vadd.f32 %v1368, %v1752
  %v1754 = vpop.f32.mrb[0].mxu0
  %1755 = vmatprep.mubr.f32.mxu0 0.0
  %1756 = vmatmul.mubr.f32.gmra.mrb[0].mxu0 %v604
  %v1757 = vpop.f32.mrb[0].mxu0
  %v1758 = vadd.f32 %v1373, %v1757
  %v1759 = vpop.f32.mrb[0].mxu0
  %1760 = vdwg.mxu0
  %v1761 = vmax.f32 %v1443, 0.0
  %v1762 = vmax.f32 %v1448, 0.0
  %v1763 = vmax.f32 %v1453, 0.0
  %v1764 = vmax.f32 %v1458, 0.0
  %v1765 = vmax.f32 %v1463, 0.0
  %v1766 = vmax.f32 %v1468, 0.0
  %v1767 = vmax.f32 %v1473, 0.0
  %v1768 = vmax.f32 %v1478, 0.0
  %v1769 = vmax.f32 %v1483, 0.0
  %v1770 = vmax.f32 %v1488, 0.0
  %v1771 = vmax.f32 %v1493, 0.0
  %v1772 = vmax.f32 %v1498, 0.0
  %v1773 = vmax.f32 %v1503, 0.0
  %v1774 = vmax.f32 %v1508, 0.0
  %v1775 = vmax.f32 %v1513, 0.0
  %v1776 = vmax.f32 %v1518, 0.0
  %v1777 = vmax.f32 %v1523, 0.0
  %v1778 = vmax.f32 %v1528, 0.0
  %v1779 = vmax.f32 %v1533, 0.0
  %v1780 = vmax.f32 %v1538, 0.0
  %v1781 = vmax.f32 %v1543, 0.0
  %v1782 = vmax.f32 %v1548, 0.0
  %v1783 = vmax.f32 %v1553, 0.0
  %v1784 = vmax.f32 %v1558, 0.0
  %v1785 = vmax.f32 %v1563, 0.0
  %v1786 = vmax.f32 %v1568, 0.0
  %v1787 = vmax.f32 %v1573, 0.0
  %v1788 = vmax.f32 %v1578, 0.0
  %v1789 = vmax.f32 %v1583, 0.0
  %v1790 = vmax.f32 %v1588, 0.0
  %v1791 = vmax.f32 %v1593, 0.0
  %v1792 = vmax.f32 %v1598, 0.0
  %v1793 = vmax.f32 %v1603, 0.0
  %v1794 = vmax.f32 %v1608, 0.0
  %v1795 = vmax.f32 %v1613, 0.0
  %v1796 = vmax.f32 %v1618, 0.0
  %v1797 = vmax.f32 %v1623, 0.0
  %v1798 = vmax.f32 %v1628, 0.0
  %v1799 = vmax.f32 %v1633, 0.0
  %v1800 = vmax.f32 %v1638, 0.0
  %v1801 = vmax.f32 %v1643, 0.0
  %v1802 = vmax.f32 %v1648, 0.0
  %v1803 = vmax.f32 %v1653, 0.0
  %v1804 = vmax.f32 %v1658, 0.0
  %v1805 = vmax.f32 %v1663, 0.0
  %v1806 = vmax.f32 %v1668, 0.0
  %v1807 = vmax.f32 %v1673, 0.0
  %v1808 = vmax.f32 %v1678, 0.0
  %v1809 = vmax.f32 %v1683, 0.0
  %v1810 = vmax.f32 %v1688, 0.0
  %v1811 = vmax.f32 %v1693, 0.0
  %v1812 = vmax.f32 %v1698, 0.0
  %v1813 = vmax.f32 %v1703, 0.0
  %v1814 = vmax.f32 %v1708, 0.0
  %v1815 = vmax.f32 %v1713, 0.0
  %v1816 = vmax.f32 %v1718, 0.0
  %v1817 = vmax.f32 %v1723, 0.0
  %v1818 = vmax.f32 %v1728, 0.0
  %v1819 = vmax.f32 %v1733, 0.0
  %v1820 = vmax.f32 %v1738, 0.0
  %v1821 = vmax.f32 %v1743, 0.0
  %v1822 = vmax.f32 %v1748, 0.0
  %v1823 = vmax.f32 %v1753, 0.0
  %v1824 = vmax.f32 %v1758, 0.0
  %1825 = vst [vmem:[%s3] sm:$0xff] %v1761
  %1826 = vst [vmem:[%s3 + $0x8] sm:$0xff] %v1762
  %1827 = vst [vmem:[%s3 + $0x10] sm:$0xff] %v1763
  %1828 = vst [vmem:[%s3 + $0x18] sm:$0xff] %v1764
  %1829 = vst [vmem:[%s3 + $0x20] sm:$0xff] %v1765
  %1830 = vst [vmem:[%s3 + $0x28] sm:$0xff] %v1766
  %1831 = vst [vmem:[%s3 + $0x30] sm:$0xff] %v1767
  %1832 = vst [vmem:[%s3 + $0x38] sm:$0xff] %v1768
  %1833 = vst [vmem:[%s3 + $0x40] sm:$0xff] %v1769
  %1834 = vst [vmem:[%s3 + $0x48] sm:$0xff] %v1770
  %1835 = vst [vmem:[%s3 + $0x50] sm:$0xff] %v1771
  %1836 = vst [vmem:[%s3 + $0x58] sm:$0xff] %v1772
  %1837 = vst [vmem:[%s3 + $0x60] sm:$0xff] %v1773
  %1838 = vst [vmem:[%s3 + $0x68] sm:$0xff] %v1774
  %1839 = vst [vmem:[%s3 + $0x70] sm:$0xff] %v1775
  %1840 = vst [vmem:[%s3 + $0x78] sm:$0xff] %v1776
  %1841 = vst [vmem:[%s3 + $0x80] sm:$0xff] %v1777
  %1842 = vst [vmem:[%s3 + $0x88] sm:$0xff] %v1778
  %1843 = vst [vmem:[%s3 + $0x90] sm:$0xff] %v1779
  %1844 = vst [vmem:[%s3 + $0x98] sm:$0xff] %v1780
  %1845 = vst [vmem:[%s3 + $0xa0] sm:$0xff] %v1781
  %1846 = vst [vmem:[%s3 + $0xa8] sm:$0xff] %v1782
  %1847 = vst [vmem:[%s3 + $0xb0] sm:$0xff] %v1783
  %1848 = vst [vmem:[%s3 + $0xb8] sm:$0xff] %v1784
  %1849 = vst [vmem:[%s3 + $0xc0] sm:$0xff] %v1785
  %1850 = vst [vmem:[%s3 + $0xc8] sm:$0xff] %v1786
  %1851 = vst [vmem:[%s3 + $0xd0] sm:$0xff] %v1787
  %1852 = vst [vmem:[%s3 + $0xd8] sm:$0xff] %v1788
  %1853 = vst [vmem:[%s3 + $0xe0] sm:$0xff] %v1789
  %1854 = vst [vmem:[%s3 + $0xe8] sm:$0xff] %v1790
  %1855 = vst [vmem:[%s3 + $0xf0] sm:$0xff] %v1791
  %1856 = vst [vmem:[%s3 + $0xf8] sm:$0xff] %v1792
  %1857 = vst [vmem:[%s3 + $0x100] sm:$0xff] %v1793
  %1858 = vst [vmem:[%s3 + $0x108] sm:$0xff] %v1794
  %1859 = vst [vmem:[%s3 + $0x110] sm:$0xff] %v1795
  %1860 = vst [vmem:[%s3 + $0x118] sm:$0xff] %v1796
  %1861 = vst [vmem:[%s3 + $0x120] sm:$0xff] %v1797
  %1862 = vst [vmem:[%s3 + $0x128] sm:$0xff] %v1798
  %1863 = vst [vmem:[%s3 + $0x130] sm:$0xff] %v1799
  %1864 = vst [vmem:[%s3 + $0x138] sm:$0xff] %v1800
  %1865 = vst [vmem:[%s3 + $0x140] sm:$0xff] %v1801
  %1866 = vst [vmem:[%s3 + $0x148] sm:$0xff] %v1802
  %1867 = vst [vmem:[%s3 + $0x150] sm:$0xff] %v1803
  %1868 = vst [vmem:[%s3 + $0x158] sm:$0xff] %v1804
  %1869 = vst [vmem:[%s3 + $0x160] sm:$0xff] %v1805
  %1870 = vst [vmem:[%s3 + $0x168] sm:$0xff] %v1806
  %1871 = vst [vmem:[%s3 + $0x170] sm:$0xff] %v1807
  %1872 = vst [vmem:[%s3 + $0x178] sm:$0xff] %v1808
  %1873 = vst [vmem:[%s3 + $0x180] sm:$0xff] %v1809
  %1874 = vst [vmem:[%s3 + $0x188] sm:$0xff] %v1810
  %1875 = vst [vmem:[%s3 + $0x190] sm:$0xff] %v1811
  %1876 = vst [vmem:[%s3 + $0x198] sm:$0xff] %v1812
  %1877 = vst [vmem:[%s3 + $0x1a0] sm:$0xff] %v1813
  %1878 = vst [vmem:[%s3 + $0x1a8] sm:$0xff] %v1814
  %1879 = vst [vmem:[%s3 + $0x1b0] sm:$0xff] %v1815
  %1880 = vst [vmem:[%s3 + $0x1b8] sm:$0xff] %v1816
  %1881 = vst [vmem:[%s3 + $0x1c0] sm:$0xff] %v1817
  %1882 = vst [vmem:[%s3 + $0x1c8] sm:$0xff] %v1818
  %1883 = vst [vmem:[%s3 + $0x1d0] sm:$0xff] %v1819
  %1884 = vst [vmem:[%s3 + $0x1d8] sm:$0xff] %v1820
  %1885 = vst [vmem:[%s3 + $0x1e0] sm:$0xff] %v1821
  %1886 = vst [vmem:[%s3 + $0x1e8] sm:$0xff] %v1822
  %1887 = vst [vmem:[%s3 + $0x1f0] sm:$0xff] %v1823
  %1888 = vst [vmem:[%s3 + $0x1f8] sm:$0xff] %v1824
  // Predicated region
  $region14: #{image_decoder_forward.6} parent=0 // pred_check
    _
  $region15: #{image_decoder_forward.6} parent=0 // pred_check_branch
    %1890 = sbr.rel (0) target = $region17
  $region16: #{image_decoder_forward.6} parent=0 // pred_region
    _
  $region17: #{image_decoder_forward.6} parent=0 // pred_fallthru
    _
  // Predicated region
  $region18: #{image_decoder_forward.6} parent=0 // pred_check
    _
  $region19: #{image_decoder_forward.6} parent=0 // pred_check_branch
    %1892 = sbr.rel (0) target = $region21
  $region20: #{image_decoder_forward.6} parent=0 // pred_region
    _
  $region21: #{image_decoder_forward.6} parent=0 // pred_fallthru
    _

// kernel: image_decoder_forward.7
$region0: #{image_decoder_forward.7}
  #allocation0 [shape = 'u32[]', space=smem, size = 0x4, offset = 0x4, fixed_abs, tag = 'smem constant byte address 0x4 - core index']
  #allocation1 [shape = 'u32[144,128]{1,0:T(1,128)}', space=vmem, size = 0x12000, scoped, tag = 'internal scratch']
  %s0 = inlined_call_operand.vmem [shape: f32[2048,288], index: 0, kind: input, shape index: {}]
  %s1 = inlined_call_operand.vmem [shape: f32[288,128], index: 1, kind: input, shape index: {}]
  %s2 = inlined_call_operand.vmem [shape: f32[1,128], index: 2, kind: input, shape index: {}]
  %s3 = inlined_call_operand.vmem [shape: f32[2048,128], index: 3, kind: output, shape index: {}]
  %s4 = sld [smem:[#allocation0]]
  $region45: #{image_decoder_forward.7} parent=0
    _
  %s6 = ssub.s32 1, %s4
  %s7 = scalar_select 0, %s6, %s4
  loop: start=0, step=1, limit=6
  $region2: #{image_decoder_forward.7} parent=0 // loop_pre_header
    _
  $region3: #{image_decoder_forward.7} parent=0 // loop_header
    %s9 = sphi 0, %s13
    %p10 = scmp.ge.s32.totalorder %s9, 6
    %s19 = sphi 0, %s21
    %s22 = sphi 0, %s19
    %s23 = sphi 0, %s22
    %s39 = sphi 0, %s23
    %s43 = sphi 0, %s43
    %s45 = sphi 0, %s43
    %s46 = sphi 0, %s45
    %s60 = sphi 0, %s46
    %s64 = sphi 0, %s64
    %s66 = sphi 0, %s64
    %s67 = sphi 0, %s66
    %s81 = sphi 0, %s67
    %s87 = sphi 0, %s89
    %s90 = sphi 0, %s87
    %s91 = sphi 0, %s90
    %s107 = sphi 0, %s91
  $region4: #{image_decoder_forward.7} parent=0 // loop_header_branch
    %12 = sbr.rel (%p10) target = $region8
  $region5: #{image_decoder_forward.7} parent=0 // loop_body
    %s14 = ssub.s32 %s9, 1
    %s15 = ssub.s32 %s9, 2
    %s16 = sadd.s32 %s9, 1
    %s17 = ssub.s32 %s9, %s16
    %p18 = scmp.eq.s32.totalorder %s17, 0
    %s20 = sadd.s32 %s19, 1
    %s21 = scalar_select %p18, %s19, %s20
    %p24 = pneg %p18
    %p25 = scmp.eq.s32.totalorder %s9, 3
    %p26 = por %p24, %p25
    %p27 = scmp.ne.s32.totalorder %s19, %s22
    %p28 = scmp.eq.s32.totalorder %s9, 0
    %p29 = por %p27, %p28
    %p30 = scmp.ne.s32.totalorder %s19, %s22
    %p31 = scmp.eq.s32.totalorder %s14, 3
    %p32 = por %p30, %p31
    %p33 = scmp.ne.s32.totalorder %s22, %s23
    %p34 = scmp.eq.s32.totalorder %s14, 0
    %p35 = por %p33, %p34
    %p36 = scmp.ne.s32.totalorder %s22, %s23
    %p37 = scmp.eq.s32.totalorder %s15, 3
    %p38 = por %p36, %p37
    %p40 = scmp.ne.s32.totalorder %s23, %s39
    %p41 = scmp.eq.s32.totalorder %s15, 0
    %p42 = por %p40, %p41
    %s44 = sadd.s32 %s43, 1
    %p47 = scmp.eq.s32.totalorder %s9, 3
    %p48 = scmp.ne.s32.totalorder %s43, %s45
    %p49 = scmp.eq.s32.totalorder %s9, 0
    %p50 = por %p48, %p49
    %p51 = scmp.ne.s32.totalorder %s43, %s45
    %p52 = scmp.eq.s32.totalorder %s14, 3
    %p53 = por %p51, %p52
    %p54 = scmp.ne.s32.totalorder %s45, %s46
    %p55 = scmp.eq.s32.totalorder %s14, 0
    %p56 = por %p54, %p55
    %p57 = scmp.ne.s32.totalorder %s45, %s46
    %p58 = scmp.eq.s32.totalorder %s15, 3
    %p59 = por %p57, %p58
    %p61 = scmp.ne.s32.totalorder %s46, %s60
    %p62 = scmp.eq.s32.totalorder %s15, 0
    %p63 = por %p61, %p62
    %s65 = sadd.s32 %s64, 1
    %p68 = scmp.eq.s32.totalorder %s9, 3
    %p69 = scmp.ne.s32.totalorder %s64, %s66
    %p70 = scmp.eq.s32.totalorder %s9, 0
    %p71 = por %p69, %p70
    %p72 = scmp.ne.s32.totalorder %s64, %s66
    %p73 = scmp.eq.s32.totalorder %s14, 3
    %p74 = por %p72, %p73
    %p75 = scmp.ne.s32.totalorder %s66, %s67
    %p76 = scmp.eq.s32.totalorder %s14, 0
    %p77 = por %p75, %p76
    %p78 = scmp.ne.s32.totalorder %s66, %s67
    %p79 = scmp.eq.s32.totalorder %s15, 3
    %p80 = por %p78, %p79
    %p82 = scmp.ne.s32.totalorder %s67, %s81
    %p83 = scmp.eq.s32.totalorder %s15, 0
    %p84 = por %p82, %p83
    %s85 = ssub.s32 %s9, %s16
    %p86 = scmp.eq.s32.totalorder %s85, 0
    %s88 = sadd.s32 %s87, 1
    %s89 = scalar_select %p86, %s87, %s88
    %p92 = pneg %p86
    %p93 = scmp.eq.s32.totalorder %s9, 3
    %p94 = por %p92, %p93
    %p95 = scmp.ne.s32.totalorder %s87, %s90
    %p96 = scmp.eq.s32.totalorder %s9, 0
    %p97 = por %p95, %p96
    %p98 = scmp.ne.s32.totalorder %s87, %s90
    %p99 = scmp.eq.s32.totalorder %s14, 3
    %p100 = por %p98, %p99
    %p101 = scmp.ne.s32.totalorder %s90, %s91
    %p102 = scmp.eq.s32.totalorder %s14, 0
    %p103 = por %p101, %p102
    %p104 = scmp.ne.s32.totalorder %s90, %s91
    %p105 = scmp.eq.s32.totalorder %s15, 3
    %p106 = por %p104, %p105
    %p108 = scmp.ne.s32.totalorder %s91, %s107
    %p109 = scmp.eq.s32.totalorder %s15, 0
    %p110 = por %p108, %p109
    %p111 = scmp.le.s32.totalorder 1, %s9
    %p112 = scmp.lt.s32.totalorder %s9, 5
    %p113 = pnand %p111, %p112
    %p114 = pneg %p113
    // Predicated region
    $region9: #{image_decoder_forward.7} parent=5 // pred_check
      _
    $region10: #{image_decoder_forward.7} parent=5 // pred_check_branch
      %116 = sbr.rel (%p113) target = $region12
    $region11: #{image_decoder_forward.7} parent=5 // pred_region
      %s117 = ssub.s32 %s9, 1
      // Predicated region
      $region13: #{image_decoder_forward.7} parent=11 // pred_check
        %p118 = pneg %p56
      $region14: #{image_decoder_forward.7} parent=11 // pred_check_branch
        %120 = sbr.rel (%p118) target = $region16
      $region15: #{image_decoder_forward.7} parent=11 // pred_region
        _
      $region16: #{image_decoder_forward.7} parent=11 // pred_fallthru
        _
      // Predicated region
      $region17: #{image_decoder_forward.7} parent=11 // pred_check
        %p121 = pneg %p77
      $region18: #{image_decoder_forward.7} parent=11 // pred_check_branch
        %123 = sbr.rel (%p121) target = $region20
      $region19: #{image_decoder_forward.7} parent=11 // pred_region
        _
      $region20: #{image_decoder_forward.7} parent=11 // pred_fallthru
        _
    $region12: #{image_decoder_forward.7} parent=5 // pred_fallthru
      _
    %p124 = scmp.lt.s32.totalorder %s9, 4
    // Predicated region
    $region21: #{image_decoder_forward.7} parent=5 // pred_check
      %p125 = pneg %p124
    $region22: #{image_decoder_forward.7} parent=5 // pred_check_branch
      %127 = sbr.rel (%p125) target = $region24
    $region23: #{image_decoder_forward.7} parent=5 // pred_region
      // Predicated region
      $region25: #{image_decoder_forward.7} parent=23 // pred_check
        %p128 = pneg %p29
      $region26: #{image_decoder_forward.7} parent=23 // pred_check_branch
        %130 = sbr.rel (%p128) target = $region28
      $region27: #{image_decoder_forward.7} parent=23 // pred_region
        %s131 = smul.u32 64, %s9
        %p132 = scmp.lt.s32.totalorder %s131, 255
        %s133 = scalar_select %p132, %s131, 255
        %s134 = smul.addr %s133, 3
        %s135 = smul.addr %s134, 8
        %s136 = scalar_lea.vmem %s0, %s135
        %s137 = smul.u32 64, %s9
      $region28: #{image_decoder_forward.7} parent=23 // pred_fallthru
        _
    $region24: #{image_decoder_forward.7} parent=5 // pred_fallthru
      _
    %p138 = scmp.le.s32.totalorder 1, %s9
    %p139 = scmp.lt.s32.totalorder %s9, 5
    %p140 = pnand %p138, %p139
    %p141 = pneg %p140
    // Predicated region
    $region29: #{image_decoder_forward.7} parent=5 // pred_check
      _
    $region30: #{image_decoder_forward.7} parent=5 // pred_check_branch
      %143 = sbr.rel (%p140) target = $region32
    $region31: #{image_decoder_forward.7} parent=5 // pred_region
      %s144 = ssub.s32 %s9, 1
      %s145 = smul.u32 64, %s14
      %p146 = scmp.lt.s32.totalorder %s145, 255
      %s147 = scalar_select %p146, %s145, 255
      %s148 = smul.addr %s147, 3
      %s149 = smul.addr %s148, 8
      %s150 = scalar_lea.vmem %s0, %s149
      %p151 = pneg %p35
      %p152 = pneg %p32
      %p153 = pneg %p56
      %p154 = pneg %p53
      %p155 = pneg %p77
      %p156 = pneg %p74
      %p157 = pneg %p103
      %p158 = pneg %p100
      %s159 = smul.u32 64, %s14
      %p160 = scmp.lt.s32.totalorder %s159, 255
      %s161 = scalar_select %p160, %s159, 255
      %s162 = smul.addr %s161, 8
      %s163 = scalar_lea.vmem %s3, %s162
      %s164 = smul.u32 64, %s14
      %p165 = scmp.lt.s32.totalorder %s164, 255
      %s166 = scalar_select %p165, %s164, 255
      %s167 = smul.addr %s166, 3
      %s168 = smul.addr %s167, 8
      %s169 = scalar_lea.vmem %s0, %s168
      %s170 = smul.u32 64, %s14
      %s171 = smul.u32 64, %s14
      %p172 = scmp.lt.s32.totalorder %s171, 255
      %s173 = scalar_select %p172, %s171, 255
      %s174 = smul.addr %s173, 8
      %s175 = scalar_lea.vmem %s3, %s174
      %s176 = smul.u32 64, %s14
      %v177 = vld [vmem:[%s169] sm:$0xff]
      %v178 = vld [vmem:[%s169 + $0x8] sm:$0xff]
      %v179 = vld [vmem:[%s169 + $0x10] sm:$0xff]
      %v180 = vld [vmem:[%s169 + $0x18] sm:$0xff]
      %v181 = vld [vmem:[%s169 + $0x20] sm:$0xff]
      %v182 = vld [vmem:[%s169 + $0x28] sm:$0xff]
      %v183 = vld [vmem:[%s169 + $0x30] sm:$0xff]
      %v184 = vld [vmem:[%s169 + $0x38] sm:$0xff]
      %v185 = vld [vmem:[%s169 + $0x40] sm:$0xff]
      %v186 = vld [vmem:[%s169 + $0x48] sm:$0xff]
      %v187 = vld [vmem:[%s169 + $0x50] sm:$0xff]
      %v188 = vld [vmem:[%s169 + $0x58] sm:$0xff]
      %v189 = vld [vmem:[%s169 + $0x60] sm:$0xff]
      %v190 = vld [vmem:[%s169 + $0x68] sm:$0xff]
      %v191 = vld [vmem:[%s169 + $0x70] sm:$0xff]
      %v192 = vld [vmem:[%s169 + $0x78] sm:$0xff]
      %v193 = vld [vmem:[%s169 + $0x80] sm:$0xff]
      %v194 = vld [vmem:[%s169 + $0x88] sm:$0xff]
      %v195 = vld [vmem:[%s169 + $0x90] sm:$0xff]
      %v196 = vld [vmem:[%s169 + $0x98] sm:$0xff]
      %v197 = vld [vmem:[%s169 + $0xa0] sm:$0xff]
      %v198 = vld [vmem:[%s169 + $0xa8] sm:$0xff]
      %v199 = vld [vmem:[%s169 + $0xb0] sm:$0xff]
      %v200 = vld [vmem:[%s169 + $0xb8] sm:$0xff]
      %v201 = vld [vmem:[%s169 + $0xc0] sm:$0xff]
      %v202 = vld [vmem:[%s169 + $0xc8] sm:$0xff]
      %v203 = vld [vmem:[%s169 + $0xd0] sm:$0xff]
      %v204 = vld [vmem:[%s169 + $0xd8] sm:$0xff]
      %v205 = vld [vmem:[%s169 + $0xe0] sm:$0xff]
      %v206 = vld [vmem:[%s169 + $0xe8] sm:$0xff]
      %v207 = vld [vmem:[%s169 + $0xf0] sm:$0xff]
      %v208 = vld [vmem:[%s169 + $0xf8] sm:$0xff]
      %v209 = vld [vmem:[%s169 + $0x100] sm:$0xff]
      %v210 = vld [vmem:[%s169 + $0x108] sm:$0xff]
      %v211 = vld [vmem:[%s169 + $0x110] sm:$0xff]
      %v212 = vld [vmem:[%s169 + $0x118] sm:$0xff]
      %v213 = vld [vmem:[%s169 + $0x120] sm:$0xff]
      %v214 = vld [vmem:[%s169 + $0x128] sm:$0xff]
      %v215 = vld [vmem:[%s169 + $0x130] sm:$0xff]
      %v216 = vld [vmem:[%s169 + $0x138] sm:$0xff]
      %v217 = vld [vmem:[%s169 + $0x140] sm:$0xff]
      %v218 = vld [vmem:[%s169 + $0x148] sm:$0xff]
      %v219 = vld [vmem:[%s169 + $0x150] sm:$0xff]
      %v220 = vld [vmem:[%s169 + $0x158] sm:$0xff]
      %v221 = vld [vmem:[%s169 + $0x160] sm:$0xff]
      %v222 = vld [vmem:[%s169 + $0x168] sm:$0xff]
      %v223 = vld [vmem:[%s169 + $0x170] sm:$0xff]
      %v224 = vld [vmem:[%s169 + $0x178] sm:$0xff]
      %v225 = vld [vmem:[%s169 + $0x180] sm:$0xff]
      %v226 = vld [vmem:[%s169 + $0x188] sm:$0xff]
      %v227 = vld [vmem:[%s169 + $0x190] sm:$0xff]
      %v228 = vld [vmem:[%s169 + $0x198] sm:$0xff]
      %v229 = vld [vmem:[%s169 + $0x1a0] sm:$0xff]
      %v230 = vld [vmem:[%s169 + $0x1a8] sm:$0xff]
      %v231 = vld [vmem:[%s169 + $0x1b0] sm:$0xff]
      %v232 = vld [vmem:[%s169 + $0x1b8] sm:$0xff]
      %v233 = vld [vmem:[%s169 + $0x1c0] sm:$0xff]
      %v234 = vld [vmem:[%s169 + $0x1c8] sm:$0xff]
      %v235 = vld [vmem:[%s169 + $0x1d0] sm:$0xff]
      %v236 = vld [vmem:[%s169 + $0x1d8] sm:$0xff]
      %v237 = vld [vmem:[%s169 + $0x1e0] sm:$0xff]
      %v238 = vld [vmem:[%s169 + $0x1e8] sm:$0xff]
      %v239 = vld [vmem:[%s169 + $0x1f0] sm:$0xff]
      %v240 = vld [vmem:[%s169 + $0x1f8] sm:$0xff]
      %v241 = vld [vmem:[%s169 + $0x200] sm:$0xff]
      %v242 = vld [vmem:[%s169 + $0x208] sm:$0xff]
      %v243 = vld [vmem:[%s169 + $0x210] sm:$0xff]
      %v244 = vld [vmem:[%s169 + $0x218] sm:$0xff]
      %v245 = vld [vmem:[%s169 + $0x220] sm:$0xff]
      %v246 = vld [vmem:[%s169 + $0x228] sm:$0xff]
      %v247 = vld [vmem:[%s169 + $0x230] sm:$0xff]
      %v248 = vld [vmem:[%s169 + $0x238] sm:$0xff]
      %v249 = vld [vmem:[%s169 + $0x240] sm:$0xff]
      %v250 = vld [vmem:[%s169 + $0x248] sm:$0xff]
      %v251 = vld [vmem:[%s169 + $0x250] sm:$0xff]
      %v252 = vld [vmem:[%s169 + $0x258] sm:$0xff]
      %v253 = vld [vmem:[%s169 + $0x260] sm:$0xff]
      %v254 = vld [vmem:[%s169 + $0x268] sm:$0xff]
      %v255 = vld [vmem:[%s169 + $0x270] sm:$0xff]
      %v256 = vld [vmem:[%s169 + $0x278] sm:$0xff]
      %v257 = vld [vmem:[%s169 + $0x280] sm:$0xff]
      %v258 = vld [vmem:[%s169 + $0x288] sm:$0xff]
      %v259 = vld [vmem:[%s169 + $0x290] sm:$0xff]
      %v260 = vld [vmem:[%s169 + $0x298] sm:$0xff]
      %v261 = vld [vmem:[%s169 + $0x2a0] sm:$0xff]
      %v262 = vld [vmem:[%s169 + $0x2a8] sm:$0xff]
      %v263 = vld [vmem:[%s169 + $0x2b0] sm:$0xff]
      %v264 = vld [vmem:[%s169 + $0x2b8] sm:$0xff]
      %v265 = vld [vmem:[%s169 + $0x2c0] sm:$0xff]
      %v266 = vld [vmem:[%s169 + $0x2c8] sm:$0xff]
      %v267 = vld [vmem:[%s169 + $0x2d0] sm:$0xff]
      %v268 = vld [vmem:[%s169 + $0x2d8] sm:$0xff]
      %v269 = vld [vmem:[%s169 + $0x2e0] sm:$0xff]
      %v270 = vld [vmem:[%s169 + $0x2e8] sm:$0xff]
      %v271 = vld [vmem:[%s169 + $0x2f0] sm:$0xff]
      %v272 = vld [vmem:[%s169 + $0x2f8] sm:$0xff]
      %v273 = vld [vmem:[%s169 + $0x300] sm:$0xff]
      %v274 = vld [vmem:[%s169 + $0x308] sm:$0xff]
      %v275 = vld [vmem:[%s169 + $0x310] sm:$0xff]
      %v276 = vld [vmem:[%s169 + $0x318] sm:$0xff]
      %v277 = vld [vmem:[%s169 + $0x320] sm:$0xff]
      %v278 = vld [vmem:[%s169 + $0x328] sm:$0xff]
      %v279 = vld [vmem:[%s169 + $0x330] sm:$0xff]
      %v280 = vld [vmem:[%s169 + $0x338] sm:$0xff]
      %v281 = vld [vmem:[%s169 + $0x340] sm:$0xff]
      %v282 = vld [vmem:[%s169 + $0x348] sm:$0xff]
      %v283 = vld [vmem:[%s169 + $0x350] sm:$0xff]
      %v284 = vld [vmem:[%s169 + $0x358] sm:$0xff]
      %v285 = vld [vmem:[%s169 + $0x360] sm:$0xff]
      %v286 = vld [vmem:[%s169 + $0x368] sm:$0xff]
      %v287 = vld [vmem:[%s169 + $0x370] sm:$0xff]
      %v288 = vld [vmem:[%s169 + $0x378] sm:$0xff]
      %v289 = vld [vmem:[%s169 + $0x380] sm:$0xff]
      %v290 = vld [vmem:[%s169 + $0x388] sm:$0xff]
      %v291 = vld [vmem:[%s169 + $0x390] sm:$0xff]
      %v292 = vld [vmem:[%s169 + $0x398] sm:$0xff]
      %v293 = vld [vmem:[%s169 + $0x3a0] sm:$0xff]
      %v294 = vld [vmem:[%s169 + $0x3a8] sm:$0xff]
      %v295 = vld [vmem:[%s169 + $0x3b0] sm:$0xff]
      %v296 = vld [vmem:[%s169 + $0x3b8] sm:$0xff]
      %v297 = vld [vmem:[%s169 + $0x3c0] sm:$0xff]
      %v298 = vld [vmem:[%s169 + $0x3c8] sm:$0xff]
      %v299 = vld [vmem:[%s169 + $0x3d0] sm:$0xff]
      %v300 = vld [vmem:[%s169 + $0x3d8] sm:$0xff]
      %v301 = vld [vmem:[%s169 + $0x3e0] sm:$0xff]
      %v302 = vld [vmem:[%s169 + $0x3e8] sm:$0xff]
      %v303 = vld [vmem:[%s169 + $0x3f0] sm:$0xff]
      %v304 = vld [vmem:[%s169 + $0x3f8] sm:$0xff]
      %v305 = vld [vmem:[%s169 + $0x400] sm:$0xff]
      %v306 = vld [vmem:[%s169 + $0x408] sm:$0xff]
      %v307 = vld [vmem:[%s169 + $0x410] sm:$0xff]
      %v308 = vld [vmem:[%s169 + $0x418] sm:$0xff]
      %v309 = vld [vmem:[%s169 + $0x420] sm:$0xff]
      %v310 = vld [vmem:[%s169 + $0x428] sm:$0xff]
      %v311 = vld [vmem:[%s169 + $0x430] sm:$0xff]
      %v312 = vld [vmem:[%s169 + $0x438] sm:$0xff]
      %v313 = vld [vmem:[%s169 + $0x440] sm:$0xff]
      %v314 = vld [vmem:[%s169 + $0x448] sm:$0xff]
      %v315 = vld [vmem:[%s169 + $0x450] sm:$0xff]
      %v316 = vld [vmem:[%s169 + $0x458] sm:$0xff]
      %v317 = vld [vmem:[%s169 + $0x460] sm:$0xff]
      %v318 = vld [vmem:[%s169 + $0x468] sm:$0xff]
      %v319 = vld [vmem:[%s169 + $0x470] sm:$0xff]
      %v320 = vld [vmem:[%s169 + $0x478] sm:$0xff]
      %v321 = vld [vmem:[%s169 + $0x480] sm:$0xff]
      %v322 = vld [vmem:[%s169 + $0x488] sm:$0xff]
      %v323 = vld [vmem:[%s169 + $0x490] sm:$0xff]
      %v324 = vld [vmem:[%s169 + $0x498] sm:$0xff]
      %v325 = vld [vmem:[%s169 + $0x4a0] sm:$0xff]
      %v326 = vld [vmem:[%s169 + $0x4a8] sm:$0xff]
      %v327 = vld [vmem:[%s169 + $0x4b0] sm:$0xff]
      %v328 = vld [vmem:[%s169 + $0x4b8] sm:$0xff]
      %v329 = vld [vmem:[%s169 + $0x4c0] sm:$0xff]
      %v330 = vld [vmem:[%s169 + $0x4c8] sm:$0xff]
      %v331 = vld [vmem:[%s169 + $0x4d0] sm:$0xff]
      %v332 = vld [vmem:[%s169 + $0x4d8] sm:$0xff]
      %v333 = vld [vmem:[%s169 + $0x4e0] sm:$0xff]
      %v334 = vld [vmem:[%s169 + $0x4e8] sm:$0xff]
      %v335 = vld [vmem:[%s169 + $0x4f0] sm:$0xff]
      %v336 = vld [vmem:[%s169 + $0x4f8] sm:$0xff]
      %v337 = vld [vmem:[%s169 + $0x500] sm:$0xff]
      %v338 = vld [vmem:[%s169 + $0x508] sm:$0xff]
      %v339 = vld [vmem:[%s169 + $0x510] sm:$0xff]
      %v340 = vld [vmem:[%s169 + $0x518] sm:$0xff]
      %v341 = vld [vmem:[%s169 + $0x520] sm:$0xff]
      %v342 = vld [vmem:[%s169 + $0x528] sm:$0xff]
      %v343 = vld [vmem:[%s169 + $0x530] sm:$0xff]
      %v344 = vld [vmem:[%s169 + $0x538] sm:$0xff]
      %v345 = vld [vmem:[%s169 + $0x540] sm:$0xff]
      %v346 = vld [vmem:[%s169 + $0x548] sm:$0xff]
      %v347 = vld [vmem:[%s169 + $0x550] sm:$0xff]
      %v348 = vld [vmem:[%s169 + $0x558] sm:$0xff]
      %v349 = vld [vmem:[%s169 + $0x560] sm:$0xff]
      %v350 = vld [vmem:[%s169 + $0x568] sm:$0xff]
      %v351 = vld [vmem:[%s169 + $0x570] sm:$0xff]
      %v352 = vld [vmem:[%s169 + $0x578] sm:$0xff]
      %v353 = vld [vmem:[%s169 + $0x580] sm:$0xff]
      %v354 = vld [vmem:[%s169 + $0x588] sm:$0xff]
      %v355 = vld [vmem:[%s169 + $0x590] sm:$0xff]
      %v356 = vld [vmem:[%s169 + $0x598] sm:$0xff]
      %v357 = vld [vmem:[%s169 + $0x5a0] sm:$0xff]
      %v358 = vld [vmem:[%s169 + $0x5a8] sm:$0xff]
      %v359 = vld [vmem:[%s169 + $0x5b0] sm:$0xff]
      %v360 = vld [vmem:[%s169 + $0x5b8] sm:$0xff]
      %v361 = vld [vmem:[%s169 + $0x5c0] sm:$0xff]
      %v362 = vld [vmem:[%s169 + $0x5c8] sm:$0xff]
      %v363 = vld [vmem:[%s169 + $0x5d0] sm:$0xff]
      %v364 = vld [vmem:[%s169 + $0x5d8] sm:$0xff]
      %v365 = vld [vmem:[%s169 + $0x5e0] sm:$0xff]
      %v366 = vld [vmem:[%s169 + $0x5e8] sm:$0xff]
      %v367 = vld [vmem:[%s169 + $0x5f0] sm:$0xff]
      %v368 = vld [vmem:[%s169 + $0x5f8] sm:$0xff]
      %v369 = vld [vmem:[%s1] sm:$0xff]
      %v370 = vld [vmem:[%s1 + $0x8] sm:$0xff]
      %v371 = vld [vmem:[%s1 + $0x10] sm:$0xff]
      %v372 = vld [vmem:[%s1 + $0x18] sm:$0xff]
      %v373 = vld [vmem:[%s1 + $0x20] sm:$0xff]
      %v374 = vld [vmem:[%s1 + $0x28] sm:$0xff]
      %v375 = vld [vmem:[%s1 + $0x30] sm:$0xff]
      %v376 = vld [vmem:[%s1 + $0x38] sm:$0xff]
      %v377 = vld [vmem:[%s1 + $0x40] sm:$0xff]
      %v378 = vld [vmem:[%s1 + $0x48] sm:$0xff]
      %v379 = vld [vmem:[%s1 + $0x50] sm:$0xff]
      %v380 = vld [vmem:[%s1 + $0x58] sm:$0xff]
      %v381 = vld [vmem:[%s1 + $0x60] sm:$0xff]
      %v382 = vld [vmem:[%s1 + $0x68] sm:$0xff]
      %v383 = vld [vmem:[%s1 + $0x70] sm:$0xff]
      %v384 = vld [vmem:[%s1 + $0x78] sm:$0xff]
      %v385 = vld [vmem:[%s1 + $0x80] sm:$0xff]
      %v386 = vld [vmem:[%s1 + $0x88] sm:$0xff]
      %v387 = vld [vmem:[%s1 + $0x90] sm:$0xff]
      %v388 = vld [vmem:[%s1 + $0x98] sm:$0xff]
      %v389 = vld [vmem:[%s1 + $0xa0] sm:$0xff]
      %v390 = vld [vmem:[%s1 + $0xa8] sm:$0xff]
      %v391 = vld [vmem:[%s1 + $0xb0] sm:$0xff]
      %v392 = vld [vmem:[%s1 + $0xb8] sm:$0xff]
      %v393 = vld [vmem:[%s1 + $0xc0] sm:$0xff]
      %v394 = vld [vmem:[%s1 + $0xc8] sm:$0xff]
      %v395 = vld [vmem:[%s1 + $0xd0] sm:$0xff]
      %v396 = vld [vmem:[%s1 + $0xd8] sm:$0xff]
      %v397 = vld [vmem:[%s1 + $0xe0] sm:$0xff]
      %v398 = vld [vmem:[%s1 + $0xe8] sm:$0xff]
      %v399 = vld [vmem:[%s1 + $0xf0] sm:$0xff]
      %v400 = vld [vmem:[%s1 + $0xf8] sm:$0xff]
      %v401 = vld [vmem:[%s1 + $0x100] sm:$0xff]
      %v402 = vld [vmem:[%s1 + $0x108] sm:$0xff]
      %v403 = vld [vmem:[%s1 + $0x110] sm:$0xff]
      %v404 = vld [vmem:[%s1 + $0x118] sm:$0xff]
      %v405 = vld [vmem:[%s2] sm:$0x1]
      %v407 = vlaneseq
      %v408 = vshrl.u32 %v407, 7
      %v409 = vsub.s32 0, %v408
      %v410 = vrot.slane %v405, %v409
      %vm412 = vcmask 261120
      %v414 = vsel %vm412, %v179, 0
      %v417 = vsel %vm412, %v182, 0
      %v420 = vsel %vm412, %v185, 0
      %v423 = vsel %vm412, %v188, 0
      %v426 = vsel %vm412, %v191, 0
      %v429 = vsel %vm412, %v194, 0
      %v432 = vsel %vm412, %v197, 0
      %v435 = vsel %vm412, %v200, 0
      %v438 = vsel %vm412, %v203, 0
      %v441 = vsel %vm412, %v206, 0
      %v444 = vsel %vm412, %v209, 0
      %v447 = vsel %vm412, %v212, 0
      %v450 = vsel %vm412, %v215, 0
      %v453 = vsel %vm412, %v218, 0
      %v456 = vsel %vm412, %v221, 0
      %v459 = vsel %vm412, %v224, 0
      %v462 = vsel %vm412, %v227, 0
      %v465 = vsel %vm412, %v230, 0
      %v468 = vsel %vm412, %v233, 0
      %v471 = vsel %vm412, %v236, 0
      %v474 = vsel %vm412, %v239, 0
      %v477 = vsel %vm412, %v242, 0
      %v480 = vsel %vm412, %v245, 0
      %v483 = vsel %vm412, %v248, 0
      %v486 = vsel %vm412, %v251, 0
      %v489 = vsel %vm412, %v254, 0
      %v492 = vsel %vm412, %v257, 0
      %v495 = vsel %vm412, %v260, 0
      %v498 = vsel %vm412, %v263, 0
      %v501 = vsel %vm412, %v266, 0
      %v504 = vsel %vm412, %v269, 0
      %v507 = vsel %vm412, %v272, 0
      %v510 = vsel %vm412, %v275, 0
      %v513 = vsel %vm412, %v278, 0
      %v516 = vsel %vm412, %v281, 0
      %v519 = vsel %vm412, %v284, 0
      %v522 = vsel %vm412, %v287, 0
      %v525 = vsel %vm412, %v290, 0
      %v528 = vsel %vm412, %v293, 0
      %v531 = vsel %vm412, %v296, 0
      %v534 = vsel %vm412, %v299, 0
      %v537 = vsel %vm412, %v302, 0
      %v540 = vsel %vm412, %v305, 0
      %v543 = vsel %vm412, %v308, 0
      %v546 = vsel %vm412, %v311, 0
      %v549 = vsel %vm412, %v314, 0
      %v552 = vsel %vm412, %v317, 0
      %v555 = vsel %vm412, %v320, 0
      %v558 = vsel %vm412, %v323, 0
      %v561 = vsel %vm412, %v326, 0
      %v564 = vsel %vm412, %v329, 0
      %v567 = vsel %vm412, %v332, 0
      %v570 = vsel %vm412, %v335, 0
      %v573 = vsel %vm412, %v338, 0
      %v576 = vsel %vm412, %v341, 0
      %v579 = vsel %vm412, %v344, 0
      %v582 = vsel %vm412, %v347, 0
      %v585 = vsel %vm412, %v350, 0
      %v588 = vsel %vm412, %v353, 0
      %v591 = vsel %vm412, %v356, 0
      %v594 = vsel %vm412, %v359, 0
      %v597 = vsel %vm412, %v362, 0
      %v600 = vsel %vm412, %v365, 0
      %v603 = vsel %vm412, %v368, 0
      %605 = vmatprep.subr.mxu0 0.0
      %606 = vmatpush1.msra.mxu0 %v369
      %607 = vmatprep.subr.mxu0 0.0
      %608 = vmatpush1.msra.mxu0 %v370
      %609 = vmatprep.subr.mxu0 0.0
      %610 = vmatpush1.msra.mxu0 %v371
      %611 = vmatprep.subr.mxu0 0.0
      %612 = vmatpush1.msra.mxu0 %v372
      %613 = vmatprep.subr.mxu0 0.0
      %614 = vmatpush1.msra.mxu0 %v373
      %615 = vmatprep.subr.mxu0 0.0
      %616 = vmatpush1.msra.mxu0 %v374
      %617 = vmatprep.subr.mxu0 0.0
      %618 = vmatpush1.msra.mxu0 %v375
      %619 = vmatprep.subr.mxu0 0.0
      %620 = vmatpush1.msra.mxu0 %v376
      %621 = vmatprep.subr.mxu0 0.0
      %622 = vmatpush1.msra.mxu0 %v377
      %623 = vmatprep.subr.mxu0 0.0
      %624 = vmatpush1.msra.mxu0 %v378
      %625 = vmatprep.subr.mxu0 0.0
      %626 = vmatpush1.msra.mxu0 %v379
      %627 = vmatprep.subr.mxu0 0.0
      %628 = vmatpush1.msra.mxu0 %v380
      %629 = vmatprep.subr.mxu0 0.0
      %630 = vmatpush1.msra.mxu0 %v381
      %631 = vmatprep.subr.mxu0 0.0
      %632 = vmatpush1.msra.mxu0 %v382
      %633 = vmatprep.subr.mxu0 0.0
      %634 = vmatpush1.msra.mxu0 %v383
      %635 = vmatprep.subr.mxu0 0.0
      %636 = vmatpush1.msra.mxu0 %v384
      %637 = vmatprep.subr.mxu0 0.0
      %638 = vmatpush1.msra.mxu0 %v385
      %639 = vmatprep.subr.mxu0 0.0
      %640 = vmatpush1.msra.mxu0 %v386
      %641 = vmatprep.subr.mxu0 0.0
      %642 = vmatpush1.msra.mxu0 %v387
      %643 = vmatprep.subr.mxu0 0.0
      %644 = vmatpush1.msra.mxu0 %v388
      %645 = vmatprep.subr.mxu0 0.0
      %646 = vmatpush1.msra.mxu0 %v389
      %647 = vmatprep.subr.mxu0 0.0
      %648 = vmatpush1.msra.mxu0 %v390
      %649 = vmatprep.subr.mxu0 0.0
      %650 = vmatpush1.msra.mxu0 %v391
      %651 = vmatprep.subr.mxu0 0.0
      %652 = vmatpush1.msra.mxu0 %v392
      %653 = vmatprep.subr.mxu0 0.0
      %654 = vmatpush1.msra.mxu0 %v393
      %655 = vmatprep.subr.mxu0 0.0
      %656 = vmatpush1.msra.mxu0 %v394
      %657 = vmatprep.subr.mxu0 0.0
      %658 = vmatpush1.msra.mxu0 %v395
      %659 = vmatprep.subr.mxu0 0.0
      %660 = vmatpush1.msra.mxu0 %v396
      %661 = vmatprep.subr.mxu0 0.0
      %662 = vmatpush1.msra.mxu0 %v397
      %663 = vmatprep.subr.mxu0 0.0
      %664 = vmatpush1.msra.mxu0 %v398
      %665 = vmatprep.subr.mxu0 0.0
      %666 = vmatpush1.msra.mxu0 %v399
      %667 = vmatprep.subr.mxu0 0.0
      %668 = vmatpush1.msra.mxu0 %v400
      %669 = vmatprep.mubr.f32.mxu0 %v178
      %670 = vmatmul.mubr.f32.gmra.mrb[0].mxu0 %v177
      %v671 = vpop.f32.mrb[0].mxu0
      %v672 = vadd.f32 %v410, %v671
      %v673 = vpop.f32.mrb[0].mxu0
      %674 = vmatprep.mubr.f32.mxu0 %v181
      %675 = vmatmul.mubr.f32.gmra.mrb[0].mxu0 %v180
      %v676 = vpop.f32.mrb[0].mxu0
      %v677 = vadd.f32 %v410, %v676
      %v678 = vpop.f32.mrb[0].mxu0
      %679 = vmatprep.mubr.f32.mxu0 %v184
      %680 = vmatmul.mubr.f32.gmra.mrb[0].mxu0 %v183
      %v681 = vpop.f32.mrb[0].mxu0
      %v682 = vadd.f32 %v410, %v681
      %v683 = vpop.f32.mrb[0].mxu0
      %684 = vmatprep.mubr.f32.mxu0 %v187
      %685 = vmatmul.mubr.f32.gmra.mrb[0].mxu0 %v186
      %v686 = vpop.f32.mrb[0].mxu0
      %v687 = vadd.f32 %v410, %v686
      %v688 = vpop.f32.mrb[0].mxu0
      %689 = vmatprep.mubr.f32.mxu0 %v190
      %690 = vmatmul.mubr.f32.gmra.mrb[0].mxu0 %v189
      %v691 = vpop.f32.mrb[0].mxu0
      %v692 = vadd.f32 %v410, %v691
      %v693 = vpop.f32.mrb[0].mxu0
      %694 = vmatprep.mubr.f32.mxu0 %v193
      %695 = vmatmul.mubr.f32.gmra.mrb[0].mxu0 %v192
      %v696 = vpop.f32.mrb[0].mxu0
      %v697 = vadd.f32 %v410, %v696
      %v698 = vpop.f32.mrb[0].mxu0
      %699 = vmatprep.mubr.f32.mxu0 %v196
      %700 = vmatmul.mubr.f32.gmra.mrb[0].mxu0 %v195
      %v701 = vpop.f32.mrb[0].mxu0
      %v702 = vadd.f32 %v410, %v701
      %v703 = vpop.f32.mrb[0].mxu0
      %704 = vmatprep.mubr.f32.mxu0 %v199
      %705 = vmatmul.mubr.f32.gmra.mrb[0].mxu0 %v198
      %v706 = vpop.f32.mrb[0].mxu0
      %v707 = vadd.f32 %v410, %v706
      %v708 = vpop.f32.mrb[0].mxu0
      %709 = vmatprep.mubr.f32.mxu0 %v202
      %710 = vmatmul.mubr.f32.gmra.mrb[0].mxu0 %v201
      %v711 = vpop.f32.mrb[0].mxu0
      %v712 = vadd.f32 %v410, %v711
      %v713 = vpop.f32.mrb[0].mxu0
      %714 = vmatprep.mubr.f32.mxu0 %v205
      %715 = vmatmul.mubr.f32.gmra.mrb[0].mxu0 %v204
      %v716 = vpop.f32.mrb[0].mxu0
      %v717 = vadd.f32 %v410, %v716
      %v718 = vpop.f32.mrb[0].mxu0
      %719 = vmatprep.mubr.f32.mxu0 %v208
      %720 = vmatmul.mubr.f32.gmra.mrb[0].mxu0 %v207
      %v721 = vpop.f32.mrb[0].mxu0
      %v722 = vadd.f32 %v410, %v721
      %v723 = vpop.f32.mrb[0].mxu0
      %724 = vmatprep.mubr.f32.mxu0 %v211
      %725 = vmatmul.mubr.f32.gmra.mrb[0].mxu0 %v210
      %v726 = vpop.f32.mrb[0].mxu0
      %v727 = vadd.f32 %v410, %v726
      %v728 = vpop.f32.mrb[0].mxu0
      %729 = vmatprep.mubr.f32.mxu0 %v214
      %730 = vmatmul.mubr.f32.gmra.mrb[0].mxu0 %v213
      %v731 = vpop.f32.mrb[0].mxu0
      %v732 = vadd.f32 %v410, %v731
      %v733 = vpop.f32.mrb[0].mxu0
      %734 = vmatprep.mubr.f32.mxu0 %v217
      %735 = vmatmul.mubr.f32.gmra.mrb[0].mxu0 %v216
      %v736 = vpop.f32.mrb[0].mxu0
      %v737 = vadd.f32 %v410, %v736
      %v738 = vpop.f32.mrb[0].mxu0
      %739 = vmatprep.mubr.f32.mxu0 %v220
      %740 = vmatmul.mubr.f32.gmra.mrb[0].mxu0 %v219
      %v741 = vpop.f32.mrb[0].mxu0
      %v742 = vadd.f32 %v410, %v741
      %v743 = vpop.f32.mrb[0].mxu0
      %744 = vmatprep.mubr.f32.mxu0 %v223
      %745 = vmatmul.mubr.f32.gmra.mrb[0].mxu0 %v222
      %v746 = vpop.f32.mrb[0].mxu0
      %v747 = vadd.f32 %v410, %v746
      %v748 = vpop.f32.mrb[0].mxu0
      %749 = vmatprep.mubr.f32.mxu0 %v226
      %750 = vmatmul.mubr.f32.gmra.mrb[0].mxu0 %v225
      %v751 = vpop.f32.mrb[0].mxu0
      %v752 = vadd.f32 %v410, %v751
      %v753 = vpop.f32.mrb[0].mxu0
      %754 = vmatprep.mubr.f32.mxu0 %v229
      %755 = vmatmul.mubr.f32.gmra.mrb[0].mxu0 %v228
      %v756 = vpop.f32.mrb[0].mxu0
      %v757 = vadd.f32 %v410, %v756
      %v758 = vpop.f32.mrb[0].mxu0
      %759 = vmatprep.mubr.f32.mxu0 %v232
      %760 = vmatmul.mubr.f32.gmra.mrb[0].mxu0 %v231
      %v761 = vpop.f32.mrb[0].mxu0
      %v762 = vadd.f32 %v410, %v761
      %v763 = vpop.f32.mrb[0].mxu0
      %764 = vmatprep.mubr.f32.mxu0 %v235
      %765 = vmatmul.mubr.f32.gmra.mrb[0].mxu0 %v234
      %v766 = vpop.f32.mrb[0].mxu0
      %v767 = vadd.f32 %v410, %v766
      %v768 = vpop.f32.mrb[0].mxu0
      %769 = vmatprep.mubr.f32.mxu0 %v238
      %770 = vmatmul.mubr.f32.gmra.mrb[0].mxu0 %v237
      %v771 = vpop.f32.mrb[0].mxu0
      %v772 = vadd.f32 %v410, %v771
      %v773 = vpop.f32.mrb[0].mxu0
      %774 = vmatprep.mubr.f32.mxu0 %v241
      %775 = vmatmul.mubr.f32.gmra.mrb[0].mxu0 %v240
      %v776 = vpop.f32.mrb[0].mxu0
      %v777 = vadd.f32 %v410, %v776
      %v778 = vpop.f32.mrb[0].mxu0
      %779 = vmatprep.mubr.f32.mxu0 %v244
      %780 = vmatmul.mubr.f32.gmra.mrb[0].mxu0 %v243
      %v781 = vpop.f32.mrb[0].mxu0
      %v782 = vadd.f32 %v410, %v781
      %v783 = vpop.f32.mrb[0].mxu0
      %784 = vmatprep.mubr.f32.mxu0 %v247
      %785 = vmatmul.mubr.f32.gmra.mrb[0].mxu0 %v246
      %v786 = vpop.f32.mrb[0].mxu0
      %v787 = vadd.f32 %v410, %v786
      %v788 = vpop.f32.mrb[0].mxu0
      %789 = vmatprep.mubr.f32.mxu0 %v250
      %790 = vmatmul.mubr.f32.gmra.mrb[0].mxu0 %v249
      %v791 = vpop.f32.mrb[0].mxu0
      %v792 = vadd.f32 %v410, %v791
      %v793 = vpop.f32.mrb[0].mxu0
      %794 = vmatprep.mubr.f32.mxu0 %v253
      %795 = vmatmul.mubr.f32.gmra.mrb[0].mxu0 %v252
      %v796 = vpop.f32.mrb[0].mxu0
      %v797 = vadd.f32 %v410, %v796
      %v798 = vpop.f32.mrb[0].mxu0
      %799 = vmatprep.mubr.f32.mxu0 %v256
      %800 = vmatmul.mubr.f32.gmra.mrb[0].mxu0 %v255
      %v801 = vpop.f32.mrb[0].mxu0
      %v802 = vadd.f32 %v410, %v801
      %v803 = vpop.f32.mrb[0].mxu0
      %804 = vmatprep.mubr.f32.mxu0 %v259
      %805 = vmatmul.mubr.f32.gmra.mrb[0].mxu0 %v258
      %v806 = vpop.f32.mrb[0].mxu0
      %v807 = vadd.f32 %v410, %v806
      %v808 = vpop.f32.mrb[0].mxu0
      %809 = vmatprep.mubr.f32.mxu0 %v262
      %810 = vmatmul.mubr.f32.gmra.mrb[0].mxu0 %v261
      %v811 = vpop.f32.mrb[0].mxu0
      %v812 = vadd.f32 %v410, %v811
      %v813 = vpop.f32.mrb[0].mxu0
      %814 = vmatprep.mubr.f32.mxu0 %v265
      %815 = vmatmul.mubr.f32.gmra.mrb[0].mxu0 %v264
      %v816 = vpop.f32.mrb[0].mxu0
      %v817 = vadd.f32 %v410, %v816
      %v818 = vpop.f32.mrb[0].mxu0
      %819 = vmatprep.mubr.f32.mxu0 %v268
      %820 = vmatmul.mubr.f32.gmra.mrb[0].mxu0 %v267
      %v821 = vpop.f32.mrb[0].mxu0
      %v822 = vadd.f32 %v410, %v821
      %v823 = vpop.f32.mrb[0].mxu0
      %824 = vmatprep.mubr.f32.mxu0 %v271
      %825 = vmatmul.mubr.f32.gmra.mrb[0].mxu0 %v270
      %v826 = vpop.f32.mrb[0].mxu0
      %v827 = vadd.f32 %v410, %v826
      %v828 = vpop.f32.mrb[0].mxu0
      %829 = vmatprep.mubr.f32.mxu0 %v274
      %830 = vmatmul.mubr.f32.gmra.mrb[0].mxu0 %v273
      %v831 = vpop.f32.mrb[0].mxu0
      %v832 = vadd.f32 %v410, %v831
      %v833 = vpop.f32.mrb[0].mxu0
      %834 = vmatprep.mubr.f32.mxu0 %v277
      %835 = vmatmul.mubr.f32.gmra.mrb[0].mxu0 %v276
      %v836 = vpop.f32.mrb[0].mxu0
      %v837 = vadd.f32 %v410, %v836
      %v838 = vpop.f32.mrb[0].mxu0
      %839 = vmatprep.mubr.f32.mxu0 %v280
      %840 = vmatmul.mubr.f32.gmra.mrb[0].mxu0 %v279
      %v841 = vpop.f32.mrb[0].mxu0
      %v842 = vadd.f32 %v410, %v841
      %v843 = vpop.f32.mrb[0].mxu0
      %844 = vmatprep.mubr.f32.mxu0 %v283
      %845 = vmatmul.mubr.f32.gmra.mrb[0].mxu0 %v282
      %v846 = vpop.f32.mrb[0].mxu0
      %v847 = vadd.f32 %v410, %v846
      %v848 = vpop.f32.mrb[0].mxu0
      %849 = vmatprep.mubr.f32.mxu0 %v286
      %850 = vmatmul.mubr.f32.gmra.mrb[0].mxu0 %v285
      %v851 = vpop.f32.mrb[0].mxu0
      %v852 = vadd.f32 %v410, %v851
      %v853 = vpop.f32.mrb[0].mxu0
      %854 = vmatprep.mubr.f32.mxu0 %v289
      %855 = vmatmul.mubr.f32.gmra.mrb[0].mxu0 %v288
      %v856 = vpop.f32.mrb[0].mxu0
      %v857 = vadd.f32 %v410, %v856
      %v858 = vpop.f32.mrb[0].mxu0
      %859 = vmatprep.mubr.f32.mxu0 %v292
      %860 = vmatmul.mubr.f32.gmra.mrb[0].mxu0 %v291
      %v861 = vpop.f32.mrb[0].mxu0
      %v862 = vadd.f32 %v410, %v861
      %v863 = vpop.f32.mrb[0].mxu0
      %864 = vmatprep.mubr.f32.mxu0 %v295
      %865 = vmatmul.mubr.f32.gmra.mrb[0].mxu0 %v294
      %v866 = vpop.f32.mrb[0].mxu0
      %v867 = vadd.f32 %v410, %v866
      %v868 = vpop.f32.mrb[0].mxu0
      %869 = vmatprep.mubr.f32.mxu0 %v298
      %870 = vmatmul.mubr.f32.gmra.mrb[0].mxu0 %v297
      %v871 = vpop.f32.mrb[0].mxu0
      %v872 = vadd.f32 %v410, %v871
      %v873 = vpop.f32.mrb[0].mxu0
      %874 = vmatprep.mubr.f32.mxu0 %v301
      %875 = vmatmul.mubr.f32.gmra.mrb[0].mxu0 %v300
      %v876 = vpop.f32.mrb[0].mxu0
      %v877 = vadd.f32 %v410, %v876
      %v878 = vpop.f32.mrb[0].mxu0
      %879 = vmatprep.mubr.f32.mxu0 %v304
      %880 = vmatmul.mubr.f32.gmra.mrb[0].mxu0 %v303
      %v881 = vpop.f32.mrb[0].mxu0
      %v882 = vadd.f32 %v410, %v881
      %v883 = vpop.f32.mrb[0].mxu0
      %884 = vmatprep.mubr.f32.mxu0 %v307
      %885 = vmatmul.mubr.f32.gmra.mrb[0].mxu0 %v306
      %v886 = vpop.f32.mrb[0].mxu0
      %v887 = vadd.f32 %v410, %v886
      %v888 = vpop.f32.mrb[0].mxu0
      %889 = vmatprep.mubr.f32.mxu0 %v310
      %890 = vmatmul.mubr.f32.gmra.mrb[0].mxu0 %v309
      %v891 = vpop.f32.mrb[0].mxu0
      %v892 = vadd.f32 %v410, %v891
      %v893 = vpop.f32.mrb[0].mxu0
      %894 = vmatprep.mubr.f32.mxu0 %v313
      %895 = vmatmul.mubr.f32.gmra.mrb[0].mxu0 %v312
      %v896 = vpop.f32.mrb[0].mxu0
      %v897 = vadd.f32 %v410, %v896
      %v898 = vpop.f32.mrb[0].mxu0
      %899 = vmatprep.mubr.f32.mxu0 %v316
      %900 = vmatmul.mubr.f32.gmra.mrb[0].mxu0 %v315
      %v901 = vpop.f32.mrb[0].mxu0
      %v902 = vadd.f32 %v410, %v901
      %v903 = vpop.f32.mrb[0].mxu0
      %904 = vmatprep.mubr.f32.mxu0 %v319
      %905 = vmatmul.mubr.f32.gmra.mrb[0].mxu0 %v318
      %v906 = vpop.f32.mrb[0].mxu0
      %v907 = vadd.f32 %v410, %v906
      %v908 = vpop.f32.mrb[0].mxu0
      %909 = vmatprep.mubr.f32.mxu0 %v322
      %910 = vmatmul.mubr.f32.gmra.mrb[0].mxu0 %v321
      %v911 = vpop.f32.mrb[0].mxu0
      %v912 = vadd.f32 %v410, %v911
      %v913 = vpop.f32.mrb[0].mxu0
      %914 = vmatprep.mubr.f32.mxu0 %v325
      %915 = vmatmul.mubr.f32.gmra.mrb[0].mxu0 %v324
      %v916 = vpop.f32.mrb[0].mxu0
      %v917 = vadd.f32 %v410, %v916
      %v918 = vpop.f32.mrb[0].mxu0
      %919 = vmatprep.mubr.f32.mxu0 %v328
      %920 = vmatmul.mubr.f32.gmra.mrb[0].mxu0 %v327
      %v921 = vpop.f32.mrb[0].mxu0
      %v922 = vadd.f32 %v410, %v921
      %v923 = vpop.f32.mrb[0].mxu0
      %924 = vmatprep.mubr.f32.mxu0 %v331
      %925 = vmatmul.mubr.f32.gmra.mrb[0].mxu0 %v330
      %v926 = vpop.f32.mrb[0].mxu0
      %v927 = vadd.f32 %v410, %v926
      %v928 = vpop.f32.mrb[0].mxu0
      %929 = vmatprep.mubr.f32.mxu0 %v334
      %930 = vmatmul.mubr.f32.gmra.mrb[0].mxu0 %v333
      %v931 = vpop.f32.mrb[0].mxu0
      %v932 = vadd.f32 %v410, %v931
      %v933 = vpop.f32.mrb[0].mxu0
      %934 = vmatprep.mubr.f32.mxu0 %v337
      %935 = vmatmul.mubr.f32.gmra.mrb[0].mxu0 %v336
      %v936 = vpop.f32.mrb[0].mxu0
      %v937 = vadd.f32 %v410, %v936
      %v938 = vpop.f32.mrb[0].mxu0
      %939 = vmatprep.mubr.f32.mxu0 %v340
      %940 = vmatmul.mubr.f32.gmra.mrb[0].mxu0 %v339
      %v941 = vpop.f32.mrb[0].mxu0
      %v942 = vadd.f32 %v410, %v941
      %v943 = vpop.f32.mrb[0].mxu0
      %944 = vmatprep.mubr.f32.mxu0 %v343
      %945 = vmatmul.mubr.f32.gmra.mrb[0].mxu0 %v342
      %v946 = vpop.f32.mrb[0].mxu0
      %v947 = vadd.f32 %v410, %v946
      %v948 = vpop.f32.mrb[0].mxu0
      %949 = vmatprep.mubr.f32.mxu0 %v346
      %950 = vmatmul.mubr.f32.gmra.mrb[0].mxu0 %v345
      %v951 = vpop.f32.mrb[0].mxu0
      %v952 = vadd.f32 %v410, %v951
      %v953 = vpop.f32.mrb[0].mxu0
      %954 = vmatprep.mubr.f32.mxu0 %v349
      %955 = vmatmul.mubr.f32.gmra.mrb[0].mxu0 %v348
      %v956 = vpop.f32.mrb[0].mxu0
      %v957 = vadd.f32 %v410, %v956
      %v958 = vpop.f32.mrb[0].mxu0
      %959 = vmatprep.mubr.f32.mxu0 %v352
      %960 = vmatmul.mubr.f32.gmra.mrb[0].mxu0 %v351
      %v961 = vpop.f32.mrb[0].mxu0
      %v962 = vadd.f32 %v410, %v961
      %v963 = vpop.f32.mrb[0].mxu0
      %964 = vmatprep.mubr.f32.mxu0 %v355
      %965 = vmatmul.mubr.f32.gmra.mrb[0].mxu0 %v354
      %v966 = vpop.f32.mrb[0].mxu0
      %v967 = vadd.f32 %v410, %v966
      %v968 = vpop.f32.mrb[0].mxu0
      %969 = vmatprep.mubr.f32.mxu0 %v358
      %970 = vmatmul.mubr.f32.gmra.mrb[0].mxu0 %v357
      %v971 = vpop.f32.mrb[0].mxu0
      %v972 = vadd.f32 %v410, %v971
      %v973 = vpop.f32.mrb[0].mxu0
      %974 = vmatprep.mubr.f32.mxu0 %v361
      %975 = vmatmul.mubr.f32.gmra.mrb[0].mxu0 %v360
      %v976 = vpop.f32.mrb[0].mxu0
      %v977 = vadd.f32 %v410, %v976
      %v978 = vpop.f32.mrb[0].mxu0
      %979 = vmatprep.mubr.f32.mxu0 %v364
      %980 = vmatmul.mubr.f32.gmra.mrb[0].mxu0 %v363
      %v981 = vpop.f32.mrb[0].mxu0
      %v982 = vadd.f32 %v410, %v981
      %v983 = vpop.f32.mrb[0].mxu0
      %984 = vmatprep.mubr.f32.mxu0 %v367
      %985 = vmatmul.mubr.f32.gmra.mrb[0].mxu0 %v366
      %v986 = vpop.f32.mrb[0].mxu0
      %v987 = vadd.f32 %v410, %v986
      %v988 = vpop.f32.mrb[0].mxu0
      %989 = vdwg.mxu0
      %990 = vmatprep.subr.mxu0 0.0
      %991 = vmatpush1.msra.mxu0 %v401
      %992 = vmatprep.subr.mxu0 0.0
      %993 = vmatpush1.msra.mxu0 %v402
      %994 = vmatprep.subr.mxu0 0.0
      %995 = vmatpush1.msra.mxu0 %v403
      %996 = vmatprep.subr.mxu0 0.0
      %997 = vmatpush1.msra.mxu0 %v404
      %998 = vmatprep.subr.mxu0 0.0
      %999 = vmatpush1.msra.mxu0 0.0
      %1000 = vmatprep.subr.mxu0 0.0
      %1001 = vmatpush1.msra.mxu0 0.0
      %1002 = vmatprep.subr.mxu0 0.0
      %1003 = vmatpush1.msra.mxu0 0.0
      %1004 = vmatprep.subr.mxu0 0.0
      %1005 = vmatpush1.msra.mxu0 0.0
      %1006 = vmatprep.subr.mxu0 0.0
      %1007 = vmatpush1.msra.mxu0 0.0
      %1008 = vmatprep.subr.mxu0 0.0
      %1009 = vmatpush1.msra.mxu0 0.0
      %1010 = vmatprep.subr.mxu0 0.0
      %1011 = vmatpush1.msra.mxu0 0.0
      %1012 = vmatprep.subr.mxu0 0.0
      %1013 = vmatpush1.msra.mxu0 0.0
      %1014 = vmatprep.subr.mxu0 0.0
      %1015 = vmatpush1.msra.mxu0 0.0
      %1016 = vmatprep.subr.mxu0 0.0
      %1017 = vmatpush1.msra.mxu0 0.0
      %1018 = vmatprep.subr.mxu0 0.0
      %1019 = vmatpush1.msra.mxu0 0.0
      %1020 = vmatprep.subr.mxu0 0.0
      %1021 = vmatpush1.msra.mxu0 0.0
      %1022 = vmatprep.subr.mxu0 0.0
      %1023 = vmatpush1.msra.mxu0 0.0
      %1024 = vmatprep.subr.mxu0 0.0
      %1025 = vmatpush1.msra.mxu0 0.0
      %1026 = vmatprep.subr.mxu0 0.0
      %1027 = vmatpush1.msra.mxu0 0.0
      %1028 = vmatprep.subr.mxu0 0.0
      %1029 = vmatpush1.msra.mxu0 0.0
      %1030 = vmatprep.subr.mxu0 0.0
      %1031 = vmatpush1.msra.mxu0 0.0
      %1032 = vmatprep.subr.mxu0 0.0
      %1033 = vmatpush1.msra.mxu0 0.0
      %1034 = vmatprep.subr.mxu0 0.0
      %1035 = vmatpush1.msra.mxu0 0.0
      %1036 = vmatprep.subr.mxu0 0.0
      %1037 = vmatpush1.msra.mxu0 0.0
      %1038 = vmatprep.subr.mxu0 0.0
      %1039 = vmatpush1.msra.mxu0 0.0
      %1040 = vmatprep.subr.mxu0 0.0
      %1041 = vmatpush1.msra.mxu0 0.0
      %1042 = vmatprep.subr.mxu0 0.0
      %1043 = vmatpush1.msra.mxu0 0.0
      %1044 = vmatprep.subr.mxu0 0.0
      %1045 = vmatpush1.msra.mxu0 0.0
      %1046 = vmatprep.subr.mxu0 0.0
      %1047 = vmatpush1.msra.mxu0 0.0
      %1048 = vmatprep.subr.mxu0 0.0
      %1049 = vmatpush1.msra.mxu0 0.0
      %1050 = vmatprep.subr.mxu0 0.0
      %1051 = vmatpush1.msra.mxu0 0.0
      %1052 = vmatprep.subr.mxu0 0.0
      %1053 = vmatpush1.msra.mxu0 0.0
      %1054 = vmatprep.mubr.f32.mxu0 0.0
      %1055 = vmatmul.mubr.f32.gmra.mrb[0].mxu0 %v414
      %v1056 = vpop.f32.mrb[0].mxu0
      %v1057 = vadd.f32 %v672, %v1056
      %v1058 = vpop.f32.mrb[0].mxu0
      %1059 = vmatprep.mubr.f32.mxu0 0.0
      %1060 = vmatmul.mubr.f32.gmra.mrb[0].mxu0 %v417
      %v1061 = vpop.f32.mrb[0].mxu0
      %v1062 = vadd.f32 %v677, %v1061
      %v1063 = vpop.f32.mrb[0].mxu0
      %1064 = vmatprep.mubr.f32.mxu0 0.0
      %1065 = vmatmul.mubr.f32.gmra.mrb[0].mxu0 %v420
      %v1066 = vpop.f32.mrb[0].mxu0
      %v1067 = vadd.f32 %v682, %v1066
      %v1068 = vpop.f32.mrb[0].mxu0
      %1069 = vmatprep.mubr.f32.mxu0 0.0
      %1070 = vmatmul.mubr.f32.gmra.mrb[0].mxu0 %v423
      %v1071 = vpop.f32.mrb[0].mxu0
      %v1072 = vadd.f32 %v687, %v1071
      %v1073 = vpop.f32.mrb[0].mxu0
      %1074 = vmatprep.mubr.f32.mxu0 0.0
      %1075 = vmatmul.mubr.f32.gmra.mrb[0].mxu0 %v426
      %v1076 = vpop.f32.mrb[0].mxu0
      %v1077 = vadd.f32 %v692, %v1076
      %v1078 = vpop.f32.mrb[0].mxu0
      %1079 = vmatprep.mubr.f32.mxu0 0.0
      %1080 = vmatmul.mubr.f32.gmra.mrb[0].mxu0 %v429
      %v1081 = vpop.f32.mrb[0].mxu0
      %v1082 = vadd.f32 %v697, %v1081
      %v1083 = vpop.f32.mrb[0].mxu0
      %1084 = vmatprep.mubr.f32.mxu0 0.0
      %1085 = vmatmul.mubr.f32.gmra.mrb[0].mxu0 %v432
      %v1086 = vpop.f32.mrb[0].mxu0
      %v1087 = vadd.f32 %v702, %v1086
      %v1088 = vpop.f32.mrb[0].mxu0
      %1089 = vmatprep.mubr.f32.mxu0 0.0
      %1090 = vmatmul.mubr.f32.gmra.mrb[0].mxu0 %v435
      %v1091 = vpop.f32.mrb[0].mxu0
      %v1092 = vadd.f32 %v707, %v1091
      %v1093 = vpop.f32.mrb[0].mxu0
      %1094 = vmatprep.mubr.f32.mxu0 0.0
      %1095 = vmatmul.mubr.f32.gmra.mrb[0].mxu0 %v438
      %v1096 = vpop.f32.mrb[0].mxu0
      %v1097 = vadd.f32 %v712, %v1096
      %v1098 = vpop.f32.mrb[0].mxu0
      %1099 = vmatprep.mubr.f32.mxu0 0.0
      %1100 = vmatmul.mubr.f32.gmra.mrb[0].mxu0 %v441
      %v1101 = vpop.f32.mrb[0].mxu0
      %v1102 = vadd.f32 %v717, %v1101
      %v1103 = vpop.f32.mrb[0].mxu0
      %1104 = vmatprep.mubr.f32.mxu0 0.0
      %1105 = vmatmul.mubr.f32.gmra.mrb[0].mxu0 %v444
      %v1106 = vpop.f32.mrb[0].mxu0
      %v1107 = vadd.f32 %v722, %v1106
      %v1108 = vpop.f32.mrb[0].mxu0
      %1109 = vmatprep.mubr.f32.mxu0 0.0
      %1110 = vmatmul.mubr.f32.gmra.mrb[0].mxu0 %v447
      %v1111 = vpop.f32.mrb[0].mxu0
      %v1112 = vadd.f32 %v727, %v1111
      %v1113 = vpop.f32.mrb[0].mxu0
      %1114 = vmatprep.mubr.f32.mxu0 0.0
      %1115 = vmatmul.mubr.f32.gmra.mrb[0].mxu0 %v450
      %v1116 = vpop.f32.mrb[0].mxu0
      %v1117 = vadd.f32 %v732, %v1116
      %v1118 = vpop.f32.mrb[0].mxu0
      %1119 = vmatprep.mubr.f32.mxu0 0.0
      %1120 = vmatmul.mubr.f32.gmra.mrb[0].mxu0 %v453
      %v1121 = vpop.f32.mrb[0].mxu0
      %v1122 = vadd.f32 %v737, %v1121
      %v1123 = vpop.f32.mrb[0].mxu0
      %1124 = vmatprep.mubr.f32.mxu0 0.0
      %1125 = vmatmul.mubr.f32.gmra.mrb[0].mxu0 %v456
      %v1126 = vpop.f32.mrb[0].mxu0
      %v1127 = vadd.f32 %v742, %v1126
      %v1128 = vpop.f32.mrb[0].mxu0
      %1129 = vmatprep.mubr.f32.mxu0 0.0
      %1130 = vmatmul.mubr.f32.gmra.mrb[0].mxu0 %v459
      %v1131 = vpop.f32.mrb[0].mxu0
      %v1132 = vadd.f32 %v747, %v1131
      %v1133 = vpop.f32.mrb[0].mxu0
      %1134 = vmatprep.mubr.f32.mxu0 0.0
      %1135 = vmatmul.mubr.f32.gmra.mrb[0].mxu0 %v462
      %v1136 = vpop.f32.mrb[0].mxu0
      %v1137 = vadd.f32 %v752, %v1136
      %v1138 = vpop.f32.mrb[0].mxu0
      %1139 = vmatprep.mubr.f32.mxu0 0.0
      %1140 = vmatmul.mubr.f32.gmra.mrb[0].mxu0 %v465
      %v1141 = vpop.f32.mrb[0].mxu0
      %v1142 = vadd.f32 %v757, %v1141
      %v1143 = vpop.f32.mrb[0].mxu0
      %1144 = vmatprep.mubr.f32.mxu0 0.0
      %1145 = vmatmul.mubr.f32.gmra.mrb[0].mxu0 %v468
      %v1146 = vpop.f32.mrb[0].mxu0
      %v1147 = vadd.f32 %v762, %v1146
      %v1148 = vpop.f32.mrb[0].mxu0
      %1149 = vmatprep.mubr.f32.mxu0 0.0
      %1150 = vmatmul.mubr.f32.gmra.mrb[0].mxu0 %v471
      %v1151 = vpop.f32.mrb[0].mxu0
      %v1152 = vadd.f32 %v767, %v1151
      %v1153 = vpop.f32.mrb[0].mxu0
      %1154 = vmatprep.mubr.f32.mxu0 0.0
      %1155 = vmatmul.mubr.f32.gmra.mrb[0].mxu0 %v474
      %v1156 = vpop.f32.mrb[0].mxu0
      %v1157 = vadd.f32 %v772, %v1156
      %v1158 = vpop.f32.mrb[0].mxu0
      %1159 = vmatprep.mubr.f32.mxu0 0.0
      %1160 = vmatmul.mubr.f32.gmra.mrb[0].mxu0 %v477
      %v1161 = vpop.f32.mrb[0].mxu0
      %v1162 = vadd.f32 %v777, %v1161
      %v1163 = vpop.f32.mrb[0].mxu0
      %1164 = vmatprep.mubr.f32.mxu0 0.0
      %1165 = vmatmul.mubr.f32.gmra.mrb[0].mxu0 %v480
      %v1166 = vpop.f32.mrb[0].mxu0
      %v1167 = vadd.f32 %v782, %v1166
      %v1168 = vpop.f32.mrb[0].mxu0
      %1169 = vmatprep.mubr.f32.mxu0 0.0
      %1170 = vmatmul.mubr.f32.gmra.mrb[0].mxu0 %v483
      %v1171 = vpop.f32.mrb[0].mxu0
      %v1172 = vadd.f32 %v787, %v1171
      %v1173 = vpop.f32.mrb[0].mxu0
      %1174 = vmatprep.mubr.f32.mxu0 0.0
      %1175 = vmatmul.mubr.f32.gmra.mrb[0].mxu0 %v486
      %v1176 = vpop.f32.mrb[0].mxu0
      %v1177 = vadd.f32 %v792, %v1176
      %v1178 = vpop.f32.mrb[0].mxu0
      %1179 = vmatprep.mubr.f32.mxu0 0.0
      %1180 = vmatmul.mubr.f32.gmra.mrb[0].mxu0 %v489
      %v1181 = vpop.f32.mrb[0].mxu0
      %v1182 = vadd.f32 %v797, %v1181
      %v1183 = vpop.f32.mrb[0].mxu0
      %1184 = vmatprep.mubr.f32.mxu0 0.0
      %1185 = vmatmul.mubr.f32.gmra.mrb[0].mxu0 %v492
      %v1186 = vpop.f32.mrb[0].mxu0
      %v1187 = vadd.f32 %v802, %v1186
      %v1188 = vpop.f32.mrb[0].mxu0
      %1189 = vmatprep.mubr.f32.mxu0 0.0
      %1190 = vmatmul.mubr.f32.gmra.mrb[0].mxu0 %v495
      %v1191 = vpop.f32.mrb[0].mxu0
      %v1192 = vadd.f32 %v807, %v1191
      %v1193 = vpop.f32.mrb[0].mxu0
      %1194 = vmatprep.mubr.f32.mxu0 0.0
      %1195 = vmatmul.mubr.f32.gmra.mrb[0].mxu0 %v498
      %v1196 = vpop.f32.mrb[0].mxu0
      %v1197 = vadd.f32 %v812, %v1196
      %v1198 = vpop.f32.mrb[0].mxu0
      %1199 = vmatprep.mubr.f32.mxu0 0.0
      %1200 = vmatmul.mubr.f32.gmra.mrb[0].mxu0 %v501
      %v1201 = vpop.f32.mrb[0].mxu0
      %v1202 = vadd.f32 %v817, %v1201
      %v1203 = vpop.f32.mrb[0].mxu0
      %1204 = vmatprep.mubr.f32.mxu0 0.0
      %1205 = vmatmul.mubr.f32.gmra.mrb[0].mxu0 %v504
      %v1206 = vpop.f32.mrb[0].mxu0
      %v1207 = vadd.f32 %v822, %v1206
      %v1208 = vpop.f32.mrb[0].mxu0
      %1209 = vmatprep.mubr.f32.mxu0 0.0
      %1210 = vmatmul.mubr.f32.gmra.mrb[0].mxu0 %v507
      %v1211 = vpop.f32.mrb[0].mxu0
      %v1212 = vadd.f32 %v827, %v1211
      %v1213 = vpop.f32.mrb[0].mxu0
      %1214 = vmatprep.mubr.f32.mxu0 0.0
      %1215 = vmatmul.mubr.f32.gmra.mrb[0].mxu0 %v510
      %v1216 = vpop.f32.mrb[0].mxu0
      %v1217 = vadd.f32 %v832, %v1216
      %v1218 = vpop.f32.mrb[0].mxu0
      %1219 = vmatprep.mubr.f32.mxu0 0.0
      %1220 = vmatmul.mubr.f32.gmra.mrb[0].mxu0 %v513
      %v1221 = vpop.f32.mrb[0].mxu0
      %v1222 = vadd.f32 %v837, %v1221
      %v1223 = vpop.f32.mrb[0].mxu0
      %1224 = vmatprep.mubr.f32.mxu0 0.0
      %1225 = vmatmul.mubr.f32.gmra.mrb[0].mxu0 %v516
      %v1226 = vpop.f32.mrb[0].mxu0
      %v1227 = vadd.f32 %v842, %v1226
      %v1228 = vpop.f32.mrb[0].mxu0
      %1229 = vmatprep.mubr.f32.mxu0 0.0
      %1230 = vmatmul.mubr.f32.gmra.mrb[0].mxu0 %v519
      %v1231 = vpop.f32.mrb[0].mxu0
      %v1232 = vadd.f32 %v847, %v1231
      %v1233 = vpop.f32.mrb[0].mxu0
      %1234 = vmatprep.mubr.f32.mxu0 0.0
      %1235 = vmatmul.mubr.f32.gmra.mrb[0].mxu0 %v522
      %v1236 = vpop.f32.mrb[0].mxu0
      %v1237 = vadd.f32 %v852, %v1236
      %v1238 = vpop.f32.mrb[0].mxu0
      %1239 = vmatprep.mubr.f32.mxu0 0.0
      %1240 = vmatmul.mubr.f32.gmra.mrb[0].mxu0 %v525
      %v1241 = vpop.f32.mrb[0].mxu0
      %v1242 = vadd.f32 %v857, %v1241
      %v1243 = vpop.f32.mrb[0].mxu0
      %1244 = vmatprep.mubr.f32.mxu0 0.0
      %1245 = vmatmul.mubr.f32.gmra.mrb[0].mxu0 %v528
      %v1246 = vpop.f32.mrb[0].mxu0
      %v1247 = vadd.f32 %v862, %v1246
      %v1248 = vpop.f32.mrb[0].mxu0
      %1249 = vmatprep.mubr.f32.mxu0 0.0
      %1250 = vmatmul.mubr.f32.gmra.mrb[0].mxu0 %v531
      %v1251 = vpop.f32.mrb[0].mxu0
      %v1252 = vadd.f32 %v867, %v1251
      %v1253 = vpop.f32.mrb[0].mxu0
      %1254 = vmatprep.mubr.f32.mxu0 0.0
      %1255 = vmatmul.mubr.f32.gmra.mrb[0].mxu0 %v534
      %v1256 = vpop.f32.mrb[0].mxu0
      %v1257 = vadd.f32 %v872, %v1256
      %v1258 = vpop.f32.mrb[0].mxu0
      %1259 = vmatprep.mubr.f32.mxu0 0.0
      %1260 = vmatmul.mubr.f32.gmra.mrb[0].mxu0 %v537
      %v1261 = vpop.f32.mrb[0].mxu0
      %v1262 = vadd.f32 %v877, %v1261
      %v1263 = vpop.f32.mrb[0].mxu0
      %1264 = vmatprep.mubr.f32.mxu0 0.0
      %1265 = vmatmul.mubr.f32.gmra.mrb[0].mxu0 %v540
      %v1266 = vpop.f32.mrb[0].mxu0
      %v1267 = vadd.f32 %v882, %v1266
      %v1268 = vpop.f32.mrb[0].mxu0
      %1269 = vmatprep.mubr.f32.mxu0 0.0
      %1270 = vmatmul.mubr.f32.gmra.mrb[0].mxu0 %v543
      %v1271 = vpop.f32.mrb[0].mxu0
      %v1272 = vadd.f32 %v887, %v1271
      %v1273 = vpop.f32.mrb[0].mxu0
      %1274 = vmatprep.mubr.f32.mxu0 0.0
      %1275 = vmatmul.mubr.f32.gmra.mrb[0].mxu0 %v546
      %v1276 = vpop.f32.mrb[0].mxu0
      %v1277 = vadd.f32 %v892, %v1276
      %v1278 = vpop.f32.mrb[0].mxu0
      %1279 = vmatprep.mubr.f32.mxu0 0.0
      %1280 = vmatmul.mubr.f32.gmra.mrb[0].mxu0 %v549
      %v1281 = vpop.f32.mrb[0].mxu0
      %v1282 = vadd.f32 %v897, %v1281
      %v1283 = vpop.f32.mrb[0].mxu0
      %1284 = vmatprep.mubr.f32.mxu0 0.0
      %1285 = vmatmul.mubr.f32.gmra.mrb[0].mxu0 %v552
      %v1286 = vpop.f32.mrb[0].mxu0
      %v1287 = vadd.f32 %v902, %v1286
      %v1288 = vpop.f32.mrb[0].mxu0
      %1289 = vmatprep.mubr.f32.mxu0 0.0
      %1290 = vmatmul.mubr.f32.gmra.mrb[0].mxu0 %v555
      %v1291 = vpop.f32.mrb[0].mxu0
      %v1292 = vadd.f32 %v907, %v1291
      %v1293 = vpop.f32.mrb[0].mxu0
      %1294 = vmatprep.mubr.f32.mxu0 0.0
      %1295 = vmatmul.mubr.f32.gmra.mrb[0].mxu0 %v558
      %v1296 = vpop.f32.mrb[0].mxu0
      %v1297 = vadd.f32 %v912, %v1296
      %v1298 = vpop.f32.mrb[0].mxu0
      %1299 = vmatprep.mubr.f32.mxu0 0.0
      %1300 = vmatmul.mubr.f32.gmra.mrb[0].mxu0 %v561
      %v1301 = vpop.f32.mrb[0].mxu0
      %v1302 = vadd.f32 %v917, %v1301
      %v1303 = vpop.f32.mrb[0].mxu0
      %1304 = vmatprep.mubr.f32.mxu0 0.0
      %1305 = vmatmul.mubr.f32.gmra.mrb[0].mxu0 %v564
      %v1306 = vpop.f32.mrb[0].mxu0
      %v1307 = vadd.f32 %v922, %v1306
      %v1308 = vpop.f32.mrb[0].mxu0
      %1309 = vmatprep.mubr.f32.mxu0 0.0
      %1310 = vmatmul.mubr.f32.gmra.mrb[0].mxu0 %v567
      %v1311 = vpop.f32.mrb[0].mxu0
      %v1312 = vadd.f32 %v927, %v1311
      %v1313 = vpop.f32.mrb[0].mxu0
      %1314 = vmatprep.mubr.f32.mxu0 0.0
      %1315 = vmatmul.mubr.f32.gmra.mrb[0].mxu0 %v570
      %v1316 = vpop.f32.mrb[0].mxu0
      %v1317 = vadd.f32 %v932, %v1316
      %v1318 = vpop.f32.mrb[0].mxu0
      %1319 = vmatprep.mubr.f32.mxu0 0.0
      %1320 = vmatmul.mubr.f32.gmra.mrb[0].mxu0 %v573
      %v1321 = vpop.f32.mrb[0].mxu0
      %v1322 = vadd.f32 %v937, %v1321
      %v1323 = vpop.f32.mrb[0].mxu0
      %1324 = vmatprep.mubr.f32.mxu0 0.0
      %1325 = vmatmul.mubr.f32.gmra.mrb[0].mxu0 %v576
      %v1326 = vpop.f32.mrb[0].mxu0
      %v1327 = vadd.f32 %v942, %v1326
      %v1328 = vpop.f32.mrb[0].mxu0
      %1329 = vmatprep.mubr.f32.mxu0 0.0
      %1330 = vmatmul.mubr.f32.gmra.mrb[0].mxu0 %v579
      %v1331 = vpop.f32.mrb[0].mxu0
      %v1332 = vadd.f32 %v947, %v1331
      %v1333 = vpop.f32.mrb[0].mxu0
      %1334 = vmatprep.mubr.f32.mxu0 0.0
      %1335 = vmatmul.mubr.f32.gmra.mrb[0].mxu0 %v582
      %v1336 = vpop.f32.mrb[0].mxu0
      %v1337 = vadd.f32 %v952, %v1336
      %v1338 = vpop.f32.mrb[0].mxu0
      %1339 = vmatprep.mubr.f32.mxu0 0.0
      %1340 = vmatmul.mubr.f32.gmra.mrb[0].mxu0 %v585
      %v1341 = vpop.f32.mrb[0].mxu0
      %v1342 = vadd.f32 %v957, %v1341
      %v1343 = vpop.f32.mrb[0].mxu0
      %1344 = vmatprep.mubr.f32.mxu0 0.0
      %1345 = vmatmul.mubr.f32.gmra.mrb[0].mxu0 %v588
      %v1346 = vpop.f32.mrb[0].mxu0
      %v1347 = vadd.f32 %v962, %v1346
      %v1348 = vpop.f32.mrb[0].mxu0
      %1349 = vmatprep.mubr.f32.mxu0 0.0
      %1350 = vmatmul.mubr.f32.gmra.mrb[0].mxu0 %v591
      %v1351 = vpop.f32.mrb[0].mxu0
      %v1352 = vadd.f32 %v967, %v1351
      %v1353 = vpop.f32.mrb[0].mxu0
      %1354 = vmatprep.mubr.f32.mxu0 0.0
      %1355 = vmatmul.mubr.f32.gmra.mrb[0].mxu0 %v594
      %v1356 = vpop.f32.mrb[0].mxu0
      %v1357 = vadd.f32 %v972, %v1356
      %v1358 = vpop.f32.mrb[0].mxu0
      %1359 = vmatprep.mubr.f32.mxu0 0.0
      %1360 = vmatmul.mubr.f32.gmra.mrb[0].mxu0 %v597
      %v1361 = vpop.f32.mrb[0].mxu0
      %v1362 = vadd.f32 %v977, %v1361
      %v1363 = vpop.f32.mrb[0].mxu0
      %1364 = vmatprep.mubr.f32.mxu0 0.0
      %1365 = vmatmul.mubr.f32.gmra.mrb[0].mxu0 %v600
      %v1366 = vpop.f32.mrb[0].mxu0
      %v1367 = vadd.f32 %v982, %v1366
      %v1368 = vpop.f32.mrb[0].mxu0
      %1369 = vmatprep.mubr.f32.mxu0 0.0
      %1370 = vmatmul.mubr.f32.gmra.mrb[0].mxu0 %v603
      %v1371 = vpop.f32.mrb[0].mxu0
      %v1372 = vadd.f32 %v987, %v1371
      %v1373 = vpop.f32.mrb[0].mxu0
      %1374 = vdwg.mxu0
      %v1375 = vsub.f32 0.0, %v1057
      %v1376 = vsub.f32 0.0, %v1062
      %v1377 = vsub.f32 0.0, %v1067
      %v1378 = vsub.f32 0.0, %v1072
      %v1379 = vsub.f32 0.0, %v1077
      %v1380 = vsub.f32 0.0, %v1082
      %v1381 = vsub.f32 0.0, %v1087
      %v1382 = vsub.f32 0.0, %v1092
      %v1383 = vsub.f32 0.0, %v1097
      %v1384 = vsub.f32 0.0, %v1102
      %v1385 = vsub.f32 0.0, %v1107
      %v1386 = vsub.f32 0.0, %v1112
      %v1387 = vsub.f32 0.0, %v1117
      %v1388 = vsub.f32 0.0, %v1122
      %v1389 = vsub.f32 0.0, %v1127
      %v1390 = vsub.f32 0.0, %v1132
      %v1391 = vsub.f32 0.0, %v1137
      %v1392 = vsub.f32 0.0, %v1142
      %v1393 = vsub.f32 0.0, %v1147
      %v1394 = vsub.f32 0.0, %v1152
      %v1395 = vsub.f32 0.0, %v1157
      %v1396 = vsub.f32 0.0, %v1162
      %v1397 = vsub.f32 0.0, %v1167
      %v1398 = vsub.f32 0.0, %v1172
      %v1399 = vsub.f32 0.0, %v1177
      %v1400 = vsub.f32 0.0, %v1182
      %v1401 = vsub.f32 0.0, %v1187
      %v1402 = vsub.f32 0.0, %v1192
      %v1403 = vsub.f32 0.0, %v1197
      %v1404 = vsub.f32 0.0, %v1202
      %v1405 = vsub.f32 0.0, %v1207
      %v1406 = vsub.f32 0.0, %v1212
      %v1407 = vsub.f32 0.0, %v1217
      %v1408 = vsub.f32 0.0, %v1222
      %v1409 = vsub.f32 0.0, %v1227
      %v1410 = vsub.f32 0.0, %v1232
      %v1411 = vsub.f32 0.0, %v1237
      %v1412 = vsub.f32 0.0, %v1242
      %v1413 = vsub.f32 0.0, %v1247
      %v1414 = vsub.f32 0.0, %v1252
      %v1415 = vsub.f32 0.0, %v1257
      %v1416 = vsub.f32 0.0, %v1262
      %v1417 = vsub.f32 0.0, %v1267
      %v1418 = vsub.f32 0.0, %v1272
      %v1419 = vsub.f32 0.0, %v1277
      %v1420 = vsub.f32 0.0, %v1282
      %v1421 = vsub.f32 0.0, %v1287
      %v1422 = vsub.f32 0.0, %v1292
      %v1423 = vsub.f32 0.0, %v1297
      %v1424 = vsub.f32 0.0, %v1302
      %v1425 = vsub.f32 0.0, %v1307
      %v1426 = vsub.f32 0.0, %v1312
      %v1427 = vsub.f32 0.0, %v1317
      %v1428 = vsub.f32 0.0, %v1322
      %v1429 = vsub.f32 0.0, %v1327
      %v1430 = vsub.f32 0.0, %v1332
      %v1431 = vsub.f32 0.0, %v1337
      %v1432 = vsub.f32 0.0, %v1342
      %v1433 = vsub.f32 0.0, %v1347
      %v1434 = vsub.f32 0.0, %v1352
      %v1435 = vsub.f32 0.0, %v1357
      %v1436 = vsub.f32 0.0, %v1362
      %v1437 = vsub.f32 0.0, %v1367
      %v1438 = vsub.f32 0.0, %v1372
      %v1439 = vmul.f32 %v1375, 1.442695
      %v1440 = vpow.pop %v1439
      %v1441 = vmul.f32 %v1376, 1.442695
      %v1442 = vpow.pop %v1441
      %v1443 = vmul.f32 %v1377, 1.442695
      %v1444 = vpow.pop %v1443
      %v1445 = vmul.f32 %v1378, 1.442695
      %v1446 = vpow.pop %v1445
      %v1447 = vmul.f32 %v1379, 1.442695
      %v1448 = vpow.pop %v1447
      %v1449 = vmul.f32 %v1380, 1.442695
      %v1450 = vpow.pop %v1449
      %v1451 = vmul.f32 %v1381, 1.442695
      %v1452 = vpow.pop %v1451
      %v1453 = vmul.f32 %v1382, 1.442695
      %v1454 = vpow.pop %v1453
      %v1455 = vmul.f32 %v1383, 1.442695
      %v1456 = vpow.pop %v1455
      %v1457 = vmul.f32 %v1384, 1.442695
      %v1458 = vpow.pop %v1457
      %v1459 = vmul.f32 %v1385, 1.442695
      %v1460 = vpow.pop %v1459
      %v1461 = vmul.f32 %v1386, 1.442695
      %v1462 = vpow.pop %v1461
      %v1463 = vmul.f32 %v1387, 1.442695
      %v1464 = vpow.pop %v1463
      %v1465 = vmul.f32 %v1388, 1.442695
      %v1466 = vpow.pop %v1465
      %v1467 = vmul.f32 %v1389, 1.442695
      %v1468 = vpow.pop %v1467
      %v1469 = vmul.f32 %v1390, 1.442695
      %v1470 = vpow.pop %v1469
      %v1471 = vmul.f32 %v1391, 1.442695
      %v1472 = vpow.pop %v1471
      %v1473 = vmul.f32 %v1392, 1.442695
      %v1474 = vpow.pop %v1473
      %v1475 = vmul.f32 %v1393, 1.442695
      %v1476 = vpow.pop %v1475
      %v1477 = vmul.f32 %v1394, 1.442695
      %v1478 = vpow.pop %v1477
      %v1479 = vmul.f32 %v1395, 1.442695
      %v1480 = vpow.pop %v1479
      %v1481 = vmul.f32 %v1396, 1.442695
      %v1482 = vpow.pop %v1481
      %v1483 = vmul.f32 %v1397, 1.442695
      %v1484 = vpow.pop %v1483
      %v1485 = vmul.f32 %v1398, 1.442695
      %v1486 = vpow.pop %v1485
      %v1487 = vmul.f32 %v1399, 1.442695
      %v1488 = vpow.pop %v1487
      %v1489 = vmul.f32 %v1400, 1.442695
      %v1490 = vpow.pop %v1489
      %v1491 = vmul.f32 %v1401, 1.442695
      %v1492 = vpow.pop %v1491
      %v1493 = vmul.f32 %v1402, 1.442695
      %v1494 = vpow.pop %v1493
      %v1495 = vmul.f32 %v1403, 1.442695
      %v1496 = vpow.pop %v1495
      %v1497 = vmul.f32 %v1404, 1.442695
      %v1498 = vpow.pop %v1497
      %v1499 = vmul.f32 %v1405, 1.442695
      %v1500 = vpow.pop %v1499
      %v1501 = vmul.f32 %v1406, 1.442695
      %v1502 = vpow.pop %v1501
      %v1503 = vmul.f32 %v1407, 1.442695
      %v1504 = vpow.pop %v1503
      %v1505 = vmul.f32 %v1408, 1.442695
      %v1506 = vpow.pop %v1505
      %v1507 = vmul.f32 %v1409, 1.442695
      %v1508 = vpow.pop %v1507
      %v1509 = vmul.f32 %v1410, 1.442695
      %v1510 = vpow.pop %v1509
      %v1511 = vmul.f32 %v1411, 1.442695
      %v1512 = vpow.pop %v1511
      %v1513 = vmul.f32 %v1412, 1.442695
      %v1514 = vpow.pop %v1513
      %v1515 = vmul.f32 %v1413, 1.442695
      %v1516 = vpow.pop %v1515
      %v1517 = vmul.f32 %v1414, 1.442695
      %v1518 = vpow.pop %v1517
      %v1519 = vmul.f32 %v1415, 1.442695
      %v1520 = vpow.pop %v1519
      %v1521 = vmul.f32 %v1416, 1.442695
      %v1522 = vpow.pop %v1521
      %v1523 = vmul.f32 %v1417, 1.442695
      %v1524 = vpow.pop %v1523
      %v1525 = vmul.f32 %v1418, 1.442695
      %v1526 = vpow.pop %v1525
      %v1527 = vmul.f32 %v1419, 1.442695
      %v1528 = vpow.pop %v1527
      %v1529 = vmul.f32 %v1420, 1.442695
      %v1530 = vpow.pop %v1529
      %v1531 = vmul.f32 %v1421, 1.442695
      %v1532 = vpow.pop %v1531
      %v1533 = vmul.f32 %v1422, 1.442695
      %v1534 = vpow.pop %v1533
      %v1535 = vmul.f32 %v1423, 1.442695
      %v1536 = vpow.pop %v1535
      %v1537 = vmul.f32 %v1424, 1.442695
      %v1538 = vpow.pop %v1537
      %v1539 = vmul.f32 %v1425, 1.442695
      %v1540 = vpow.pop %v1539
      %v1541 = vmul.f32 %v1426, 1.442695
      %v1542 = vpow.pop %v1541
      %v1543 = vmul.f32 %v1427, 1.442695
      %v1544 = vpow.pop %v1543
      %v1545 = vmul.f32 %v1428, 1.442695
      %v1546 = vpow.pop %v1545
      %v1547 = vmul.f32 %v1429, 1.442695
      %v1548 = vpow.pop %v1547
      %v1549 = vmul.f32 %v1430, 1.442695
      %v1550 = vpow.pop %v1549
      %v1551 = vmul.f32 %v1431, 1.442695
      %v1552 = vpow.pop %v1551
      %v1553 = vmul.f32 %v1432, 1.442695
      %v1554 = vpow.pop %v1553
      %v1555 = vmul.f32 %v1433, 1.442695
      %v1556 = vpow.pop %v1555
      %v1557 = vmul.f32 %v1434, 1.442695
      %v1558 = vpow.pop %v1557
      %v1559 = vmul.f32 %v1435, 1.442695
      %v1560 = vpow.pop %v1559
      %v1561 = vmul.f32 %v1436, 1.442695
      %v1562 = vpow.pop %v1561
      %v1563 = vmul.f32 %v1437, 1.442695
      %v1564 = vpow.pop %v1563
      %v1565 = vmul.f32 %v1438, 1.442695
      %v1566 = vpow.pop %v1565
      %v1567 = vadd.f32 %v1440, 1.0
      %v1568 = vadd.f32 %v1442, 1.0
      %v1569 = vadd.f32 %v1444, 1.0
      %v1570 = vadd.f32 %v1446, 1.0
      %v1571 = vadd.f32 %v1448, 1.0
      %v1572 = vadd.f32 %v1450, 1.0
      %v1573 = vadd.f32 %v1452, 1.0
      %v1574 = vadd.f32 %v1454, 1.0
      %v1575 = vadd.f32 %v1456, 1.0
      %v1576 = vadd.f32 %v1458, 1.0
      %v1577 = vadd.f32 %v1460, 1.0
      %v1578 = vadd.f32 %v1462, 1.0
      %v1579 = vadd.f32 %v1464, 1.0
      %v1580 = vadd.f32 %v1466, 1.0
      %v1581 = vadd.f32 %v1468, 1.0
      %v1582 = vadd.f32 %v1470, 1.0
      %v1583 = vadd.f32 %v1472, 1.0
      %v1584 = vadd.f32 %v1474, 1.0
      %v1585 = vadd.f32 %v1476, 1.0
      %v1586 = vadd.f32 %v1478, 1.0
      %v1587 = vadd.f32 %v1480, 1.0
      %v1588 = vadd.f32 %v1482, 1.0
      %v1589 = vadd.f32 %v1484, 1.0
      %v1590 = vadd.f32 %v1486, 1.0
      %v1591 = vadd.f32 %v1488, 1.0
      %v1592 = vadd.f32 %v1490, 1.0
      %v1593 = vadd.f32 %v1492, 1.0
      %v1594 = vadd.f32 %v1494, 1.0
      %v1595 = vadd.f32 %v1496, 1.0
      %v1596 = vadd.f32 %v1498, 1.0
      %v1597 = vadd.f32 %v1500, 1.0
      %v1598 = vadd.f32 %v1502, 1.0
      %v1599 = vadd.f32 %v1504, 1.0
      %v1600 = vadd.f32 %v1506, 1.0
      %v1601 = vadd.f32 %v1508, 1.0
      %v1602 = vadd.f32 %v1510, 1.0
      %v1603 = vadd.f32 %v1512, 1.0
      %v1604 = vadd.f32 %v1514, 1.0
      %v1605 = vadd.f32 %v1516, 1.0
      %v1606 = vadd.f32 %v1518, 1.0
      %v1607 = vadd.f32 %v1520, 1.0
      %v1608 = vadd.f32 %v1522, 1.0
      %v1609 = vadd.f32 %v1524, 1.0
      %v1610 = vadd.f32 %v1526, 1.0
      %v1611 = vadd.f32 %v1528, 1.0
      %v1612 = vadd.f32 %v1530, 1.0
      %v1613 = vadd.f32 %v1532, 1.0
      %v1614 = vadd.f32 %v1534, 1.0
      %v1615 = vadd.f32 %v1536, 1.0
      %v1616 = vadd.f32 %v1538, 1.0
      %v1617 = vadd.f32 %v1540, 1.0
      %v1618 = vadd.f32 %v1542, 1.0
      %v1619 = vadd.f32 %v1544, 1.0
      %v1620 = vadd.f32 %v1546, 1.0
      %v1621 = vadd.f32 %v1548, 1.0
      %v1622 = vadd.f32 %v1550, 1.0
      %v1623 = vadd.f32 %v1552, 1.0
      %v1624 = vadd.f32 %v1554, 1.0
      %v1625 = vadd.f32 %v1556, 1.0
      %v1626 = vadd.f32 %v1558, 1.0
      %v1627 = vadd.f32 %v1560, 1.0
      %v1628 = vadd.f32 %v1562, 1.0
      %v1629 = vadd.f32 %v1564, 1.0
      %v1630 = vadd.f32 %v1566, 1.0
      %v1631 = vrcp.pop %v1567
      %v1632 = vmul.f32 1.0, %v1631
      %v1633 = vrcp.pop %v1568
      %v1634 = vmul.f32 1.0, %v1633
      %v1635 = vrcp.pop %v1569
      %v1636 = vmul.f32 1.0, %v1635
      %v1637 = vrcp.pop %v1570
      %v1638 = vmul.f32 1.0, %v1637
      %v1639 = vrcp.pop %v1571
      %v1640 = vmul.f32 1.0, %v1639
      %v1641 = vrcp.pop %v1572
      %v1642 = vmul.f32 1.0, %v1641
      %v1643 = vrcp.pop %v1573
      %v1644 = vmul.f32 1.0, %v1643
      %v1645 = vrcp.pop %v1574
      %v1646 = vmul.f32 1.0, %v1645
      %v1647 = vrcp.pop %v1575
      %v1648 = vmul.f32 1.0, %v1647
      %v1649 = vrcp.pop %v1576
      %v1650 = vmul.f32 1.0, %v1649
      %v1651 = vrcp.pop %v1577
      %v1652 = vmul.f32 1.0, %v1651
      %v1653 = vrcp.pop %v1578
      %v1654 = vmul.f32 1.0, %v1653
      %v1655 = vrcp.pop %v1579
      %v1656 = vmul.f32 1.0, %v1655
      %v1657 = vrcp.pop %v1580
      %v1658 = vmul.f32 1.0, %v1657
      %v1659 = vrcp.pop %v1581
      %v1660 = vmul.f32 1.0, %v1659
      %v1661 = vrcp.pop %v1582
      %v1662 = vmul.f32 1.0, %v1661
      %v1663 = vrcp.pop %v1583
      %v1664 = vmul.f32 1.0, %v1663
      %v1665 = vrcp.pop %v1584
      %v1666 = vmul.f32 1.0, %v1665
      %v1667 = vrcp.pop %v1585
      %v1668 = vmul.f32 1.0, %v1667
      %v1669 = vrcp.pop %v1586
      %v1670 = vmul.f32 1.0, %v1669
      %v1671 = vrcp.pop %v1587
      %v1672 = vmul.f32 1.0, %v1671
      %v1673 = vrcp.pop %v1588
      %v1674 = vmul.f32 1.0, %v1673
      %v1675 = vrcp.pop %v1589
      %v1676 = vmul.f32 1.0, %v1675
      %v1677 = vrcp.pop %v1590
      %v1678 = vmul.f32 1.0, %v1677
      %v1679 = vrcp.pop %v1591
      %v1680 = vmul.f32 1.0, %v1679
      %v1681 = vrcp.pop %v1592
      %v1682 = vmul.f32 1.0, %v1681
      %v1683 = vrcp.pop %v1593
      %v1684 = vmul.f32 1.0, %v1683
      %v1685 = vrcp.pop %v1594
      %v1686 = vmul.f32 1.0, %v1685
      %v1687 = vrcp.pop %v1595
      %v1688 = vmul.f32 1.0, %v1687
      %v1689 = vrcp.pop %v1596
      %v1690 = vmul.f32 1.0, %v1689
      %v1691 = vrcp.pop %v1597
      %v1692 = vmul.f32 1.0, %v1691
      %v1693 = vrcp.pop %v1598
      %v1694 = vmul.f32 1.0, %v1693
      %v1695 = vrcp.pop %v1599
      %v1696 = vmul.f32 1.0, %v1695
      %v1697 = vrcp.pop %v1600
      %v1698 = vmul.f32 1.0, %v1697
      %v1699 = vrcp.pop %v1601
      %v1700 = vmul.f32 1.0, %v1699
      %v1701 = vrcp.pop %v1602
      %v1702 = vmul.f32 1.0, %v1701
      %v1703 = vrcp.pop %v1603
      %v1704 = vmul.f32 1.0, %v1703
      %v1705 = vrcp.pop %v1604
      %v1706 = vmul.f32 1.0, %v1705
      %v1707 = vrcp.pop %v1605
      %v1708 = vmul.f32 1.0, %v1707
      %v1709 = vrcp.pop %v1606
      %v1710 = vmul.f32 1.0, %v1709
      %v1711 = vrcp.pop %v1607
      %v1712 = vmul.f32 1.0, %v1711
      %v1713 = vrcp.pop %v1608
      %v1714 = vmul.f32 1.0, %v1713
      %v1715 = vrcp.pop %v1609
      %v1716 = vmul.f32 1.0, %v1715
      %v1717 = vrcp.pop %v1610
      %v1718 = vmul.f32 1.0, %v1717
      %v1719 = vrcp.pop %v1611
      %v1720 = vmul.f32 1.0, %v1719
      %v1721 = vrcp.pop %v1612
      %v1722 = vmul.f32 1.0, %v1721
      %v1723 = vrcp.pop %v1613
      %v1724 = vmul.f32 1.0, %v1723
      %v1725 = vrcp.pop %v1614
      %v1726 = vmul.f32 1.0, %v1725
      %v1727 = vrcp.pop %v1615
      %v1728 = vmul.f32 1.0, %v1727
      %v1729 = vrcp.pop %v1616
      %v1730 = vmul.f32 1.0, %v1729
      %v1731 = vrcp.pop %v1617
      %v1732 = vmul.f32 1.0, %v1731
      %v1733 = vrcp.pop %v1618
      %v1734 = vmul.f32 1.0, %v1733
      %v1735 = vrcp.pop %v1619
      %v1736 = vmul.f32 1.0, %v1735
      %v1737 = vrcp.pop %v1620
      %v1738 = vmul.f32 1.0, %v1737
      %v1739 = vrcp.pop %v1621
      %v1740 = vmul.f32 1.0, %v1739
      %v1741 = vrcp.pop %v1622
      %v1742 = vmul.f32 1.0, %v1741
      %v1743 = vrcp.pop %v1623
      %v1744 = vmul.f32 1.0, %v1743
      %v1745 = vrcp.pop %v1624
      %v1746 = vmul.f32 1.0, %v1745
      %v1747 = vrcp.pop %v1625
      %v1748 = vmul.f32 1.0, %v1747
      %v1749 = vrcp.pop %v1626
      %v1750 = vmul.f32 1.0, %v1749
      %v1751 = vrcp.pop %v1627
      %v1752 = vmul.f32 1.0, %v1751
      %v1753 = vrcp.pop %v1628
      %v1754 = vmul.f32 1.0, %v1753
      %v1755 = vrcp.pop %v1629
      %v1756 = vmul.f32 1.0, %v1755
      %v1757 = vrcp.pop %v1630
      %v1758 = vmul.f32 1.0, %v1757
      %1759 = vst [vmem:[%s175] sm:$0xff] %v1632
      %1760 = vst [vmem:[%s175 + $0x8] sm:$0xff] %v1634
      %1761 = vst [vmem:[%s175 + $0x10] sm:$0xff] %v1636
      %1762 = vst [vmem:[%s175 + $0x18] sm:$0xff] %v1638
      %1763 = vst [vmem:[%s175 + $0x20] sm:$0xff] %v1640
      %1764 = vst [vmem:[%s175 + $0x28] sm:$0xff] %v1642
      %1765 = vst [vmem:[%s175 + $0x30] sm:$0xff] %v1644
      %1766 = vst [vmem:[%s175 + $0x38] sm:$0xff] %v1646
      %1767 = vst [vmem:[%s175 + $0x40] sm:$0xff] %v1648
      %1768 = vst [vmem:[%s175 + $0x48] sm:$0xff] %v1650
      %1769 = vst [vmem:[%s175 + $0x50] sm:$0xff] %v1652
      %1770 = vst [vmem:[%s175 + $0x58] sm:$0xff] %v1654
      %1771 = vst [vmem:[%s175 + $0x60] sm:$0xff] %v1656
      %1772 = vst [vmem:[%s175 + $0x68] sm:$0xff] %v1658
      %1773 = vst [vmem:[%s175 + $0x70] sm:$0xff] %v1660
      %1774 = vst [vmem:[%s175 + $0x78] sm:$0xff] %v1662
      %1775 = vst [vmem:[%s175 + $0x80] sm:$0xff] %v1664
      %1776 = vst [vmem:[%s175 + $0x88] sm:$0xff] %v1666
      %1777 = vst [vmem:[%s175 + $0x90] sm:$0xff] %v1668
      %1778 = vst [vmem:[%s175 + $0x98] sm:$0xff] %v1670
      %1779 = vst [vmem:[%s175 + $0xa0] sm:$0xff] %v1672
      %1780 = vst [vmem:[%s175 + $0xa8] sm:$0xff] %v1674
      %1781 = vst [vmem:[%s175 + $0xb0] sm:$0xff] %v1676
      %1782 = vst [vmem:[%s175 + $0xb8] sm:$0xff] %v1678
      %1783 = vst [vmem:[%s175 + $0xc0] sm:$0xff] %v1680
      %1784 = vst [vmem:[%s175 + $0xc8] sm:$0xff] %v1682
      %1785 = vst [vmem:[%s175 + $0xd0] sm:$0xff] %v1684
      %1786 = vst [vmem:[%s175 + $0xd8] sm:$0xff] %v1686
      %1787 = vst [vmem:[%s175 + $0xe0] sm:$0xff] %v1688
      %1788 = vst [vmem:[%s175 + $0xe8] sm:$0xff] %v1690
      %1789 = vst [vmem:[%s175 + $0xf0] sm:$0xff] %v1692
      %1790 = vst [vmem:[%s175 + $0xf8] sm:$0xff] %v1694
      %1791 = vst [vmem:[%s175 + $0x100] sm:$0xff] %v1696
      %1792 = vst [vmem:[%s175 + $0x108] sm:$0xff] %v1698
      %1793 = vst [vmem:[%s175 + $0x110] sm:$0xff] %v1700
      %1794 = vst [vmem:[%s175 + $0x118] sm:$0xff] %v1702
      %1795 = vst [vmem:[%s175 + $0x120] sm:$0xff] %v1704
      %1796 = vst [vmem:[%s175 + $0x128] sm:$0xff] %v1706
      %1797 = vst [vmem:[%s175 + $0x130] sm:$0xff] %v1708
      %1798 = vst [vmem:[%s175 + $0x138] sm:$0xff] %v1710
      %1799 = vst [vmem:[%s175 + $0x140] sm:$0xff] %v1712
      %1800 = vst [vmem:[%s175 + $0x148] sm:$0xff] %v1714
      %1801 = vst [vmem:[%s175 + $0x150] sm:$0xff] %v1716
      %1802 = vst [vmem:[%s175 + $0x158] sm:$0xff] %v1718
      %1803 = vst [vmem:[%s175 + $0x160] sm:$0xff] %v1720
      %1804 = vst [vmem:[%s175 + $0x168] sm:$0xff] %v1722
      %1805 = vst [vmem:[%s175 + $0x170] sm:$0xff] %v1724
      %1806 = vst [vmem:[%s175 + $0x178] sm:$0xff] %v1726
      %1807 = vst [vmem:[%s175 + $0x180] sm:$0xff] %v1728
      %1808 = vst [vmem:[%s175 + $0x188] sm:$0xff] %v1730
      %1809 = vst [vmem:[%s175 + $0x190] sm:$0xff] %v1732
      %1810 = vst [vmem:[%s175 + $0x198] sm:$0xff] %v1734
      %1811 = vst [vmem:[%s175 + $0x1a0] sm:$0xff] %v1736
      %1812 = vst [vmem:[%s175 + $0x1a8] sm:$0xff] %v1738
      %1813 = vst [vmem:[%s175 + $0x1b0] sm:$0xff] %v1740
      %1814 = vst [vmem:[%s175 + $0x1b8] sm:$0xff] %v1742
      %1815 = vst [vmem:[%s175 + $0x1c0] sm:$0xff] %v1744
      %1816 = vst [vmem:[%s175 + $0x1c8] sm:$0xff] %v1746
      %1817 = vst [vmem:[%s175 + $0x1d0] sm:$0xff] %v1748
      %1818 = vst [vmem:[%s175 + $0x1d8] sm:$0xff] %v1750
      %1819 = vst [vmem:[%s175 + $0x1e0] sm:$0xff] %v1752
      %1820 = vst [vmem:[%s175 + $0x1e8] sm:$0xff] %v1754
      %1821 = vst [vmem:[%s175 + $0x1f0] sm:$0xff] %v1756
      %1822 = vst [vmem:[%s175 + $0x1f8] sm:$0xff] %v1758
      %s1823 = smul.u32 64, %s14
      %p1824 = scmp.lt.s32.totalorder %s1823, 255
      %s1825 = scalar_select %p1824, %s1823, 255
      %s1826 = smul.addr %s1825, 8
      %s1827 = scalar_lea.vmem %s3, %s1826
      // Predicated region
      $region33: #{image_decoder_forward.7} parent=31 // pred_check
        %p1828 = pneg %p100
      $region34: #{image_decoder_forward.7} parent=31 // pred_check_branch
        %1830 = sbr.rel (%p1828) target = $region36
      $region35: #{image_decoder_forward.7} parent=31 // pred_region
        %s1831 = smul.u32 64, %s14
      $region36: #{image_decoder_forward.7} parent=31 // pred_fallthru
        _
    $region32: #{image_decoder_forward.7} parent=5 // pred_fallthru
      _
    %p1832 = scmp.le.s32.totalorder 2, %s9
    // Predicated region
    $region37: #{image_decoder_forward.7} parent=5 // pred_check
      %p1833 = pneg %p1832
    $region38: #{image_decoder_forward.7} parent=5 // pred_check_branch
      %1835 = sbr.rel (%p1833) target = $region40
    $region39: #{image_decoder_forward.7} parent=5 // pred_region
      %s1836 = ssub.s32 %s9, 2
      // Predicated region
      $region41: #{image_decoder_forward.7} parent=39 // pred_check
        %p1837 = pneg %p106
      $region42: #{image_decoder_forward.7} parent=39 // pred_check_branch
        %1839 = sbr.rel (%p1837) target = $region44
      $region43: #{image_decoder_forward.7} parent=39 // pred_region
        %s1840 = smul.u32 64, %s15
        %p1841 = scmp.lt.s32.totalorder %s1840, 255
        %s1842 = scalar_select %p1841, %s1840, 255
        %s1843 = smul.addr %s1842, 8
        %s1844 = scalar_lea.vmem %s3, %s1843
      $region44: #{image_decoder_forward.7} parent=39 // pred_fallthru
        _
    $region40: #{image_decoder_forward.7} parent=5 // pred_fallthru
      _
  $region6: #{image_decoder_forward.7} parent=0 // loop_footer
    %s13 = sadd.s32 1, %s9
  $region7: #{image_decoder_forward.7} parent=0 // loop_footer_branch
    %8 = sbr.rel target = $region3
  $region8: #{image_decoder_forward.7} parent=0 // loop_exit
    _

</llo_original>
